<compile_context>
chip_gen: v7x
topology: tpu7x:2x2x1
jax: 0.10.0
libtpu: 0.0.40
codegen_flags: <defaults>
</compile_context>

<pallas_src>
import functools

import numpy as np
import jax
import jax.numpy as jnp
from jax.experimental import pallas as pl
from jax.experimental.pallas import tpu as pltpu


# ----------------------------------------------------------------------------
# Fused encoder kernel (one grid step == BLOCK_B images stacked along sublanes)
# ----------------------------------------------------------------------------
def _encoder_kernel(x_ref, mk28, mk14, mk7,
                    w1, b1, w2, b2, w3, b3, w4, b4, w5, b5, w6, b6,
                    m1, m2, a3p, m3, f1w, f1b, f2w, f2b,
                    z_ref, hbuf, *, slope, bt):
    f32 = jnp.float32
    mdt = w1.dtype                      # matmul operand dtype (bf16)

    def conv_lrelu(x, w_ref, b_ref, mk_ref):
        # One fused MXU matmul: the 3 ky taps of the 3x3 conv occupy three
        # 128-lane column groups of w_ref (block-Toeplitz along the kx/width dim).
        t = jnp.dot(x.astype(mdt), w_ref[...], preferred_element_type=f32)   # (R, 384)
        n = t.shape[0]
        # ky=0 tap: contribution to row h comes from row h-1 (zero at image tops).
        up = pltpu.roll(t[:, 0:128], shift=1, axis=0) * mk_ref[0]
        # ky=2 tap: contribution from row h+1 (zero at image bottoms).
        dn = pltpu.roll(t[:, 256:384], shift=n - 1, axis=0) * mk_ref[1]
        acc = t[:, 128:256] + up + dn + b_ref[...]
        return jnp.where(acc >= 0.0, acc, slope * acc)                       # LeakyReLU

    def pool2x2(h, m_ref):
        # AvgPool2d(2, stride 2, count_include_pad=True): row half via stride-2
        # sublane reads from scratch (VPU add), column half via matmul (0.25 folded).
        rows = h.shape[0]
        half = rows // 2
        hbuf[0:rows, :] = h
        s = hbuf[pl.ds(0, half, stride=2), :] + hbuf[pl.ds(1, half, stride=2), :]
        return jnp.dot(s.astype(mdt), m_ref[...], preferred_element_type=f32)

    x = x_ref[...]                                    # (bt*28, 28) bf16

    h = conv_lrelu(x, w1, b1, mk28)                   # (bt*28, 128)
    h = conv_lrelu(h, w2, b2, mk28)
    h = pool2x2(h, m1)                                # (bt*14, 128)
    h = conv_lrelu(h, w3, b3, mk14)
    h = conv_lrelu(h, w4, b4, mk14)
    h = pool2x2(h, m2)                                # (bt*7, 128)
    h = conv_lrelu(h, w5, b5, mk7)
    h = conv_lrelu(h, w6, b6, mk7)                    # (bt*7, 128)

    # Padded 7->4 avg pool (count_include_pad=True).  a3p is block-diagonal over the
    # bt images and permutes output rows to [r*bt + b] so fc1 can slice whole tiles.
    hp = jnp.dot(a3p[...], h.astype(mdt), preferred_element_type=f32)        # (4*bt, 128)
    hp = jnp.dot(hp.astype(mdt), m3[...], preferred_element_type=f32)        # (4*bt, 4*C)

    # fc1 (NCHW flatten pre-baked into f1w) + ReLU + fc2.
    acc = jnp.dot(hp[0:bt, :].astype(mdt), f1w[0], preferred_element_type=f32)
    for r in range(1, 4):
        acc = acc + jnp.dot(hp[r * bt:(r + 1) * bt, :].astype(mdt), f1w[r],
                            preferred_element_type=f32)
    acc = jnp.maximum(acc + f1b[...], 0.0)
    z = jnp.dot(acc.astype(mdt), f2w[...], preferred_element_type=f32) + f2b[...]
    z_ref[...] = z.astype(z_ref.dtype)


def mnist_encoder_forward(x, ops, *, emb, slope, block_b=16):
    """x: (B, 1, 28, 28) NCHW float32.  ops: prepare_operands(...).  Returns (B, emb)."""
    assert block_b % 8 == 0
    B = x.shape[0]
    bp = ((B + block_b - 1) // block_b) * block_b
    x2 = x.reshape(B, 28, 28)
    if bp != B:
        x2 = jnp.concatenate([x2, jnp.zeros((bp - B, 28, 28), x2.dtype)], axis=0)
    x2 = x2.reshape(bp * 28, 28).astype(jnp.bfloat16)

    in_specs = [pl.BlockSpec((block_b * 28, 28), lambda i: (i, 0))]
    for a in ops:   # constant (VMEM-resident) operands: whole array, fixed index map
        in_specs.append(pl.BlockSpec(a.shape, lambda i, _n=a.ndim: (0,) * _n))

    out = pl.pallas_call(
        functools.partial(_encoder_kernel, slope=slope, bt=block_b),
        out_shape=jax.ShapeDtypeStruct((bp, emb), jnp.float32),
        grid=(bp // block_b,),
        in_specs=in_specs,
        out_specs=pl.BlockSpec((block_b, emb), lambda i: (i, 0)),
        scratch_shapes=[pltpu.VMEM((block_b * 28, 128), jnp.float32)],
        compiler_params=pltpu.CompilerParams(dimension_semantics=("parallel",)),
    )(x2, *ops)
    return out[:B]


# ----------------------------------------------------------------------------
# Host-side (one-time) weight preparation
# ----------------------------------------------------------------------------
def _conv_fused(w, b, wsp, kin_pad):
    """(Cout,Cin,3,3) PyTorch conv -> fused block-Toeplitz weight (kin_pad, 3*128)
    with the three ky taps in separate 128-lane groups, plus a (1, 128) bias row."""
    w = np.asarray(w, np.float32)
    b = np.asarray(b, np.float32)
    cout, cin = w.shape[0], w.shape[1]
    assert wsp * cin <= kin_pad and wsp * cout <= 128
    wcat = np.zeros((kin_pad, 3 * 128), np.float32)
    for dy in range(3):
        for dx in range(3):
            blk = w[:, :, dy, dx].T                          # (Cin, Cout)
            for wo in range(wsp):
                wp = wo + dx - 1                             # kx shift, padding=1
                if 0 <= wp < wsp:
                    wcat[wp * cin:(wp + 1) * cin,
                         dy * 128 + wo * cout:dy * 128 + (wo + 1) * cout] = blk
    brow = np.zeros((1, 128), np.float32)
    brow[0, :wsp * cout] = np.tile(b, wsp)                   # layout [w*Cout + c]
    return wcat, brow


def _pool_colmat(win, c):
    """Column half of AvgPool2d(2,2) on [w*C + c] lanes; 0.25 folds the full 2x2 mean."""
    m = np.zeros((128, 128), np.float32)
    for wo in range(win // 2):
        for k in range(2):
            wi = 2 * wo + k
            for ch in range(c):
                m[wi * c + ch, wo * c + ch] = 0.25
    return m


def _pool3_mats(bt, c):
    """AvgPool2d(2, stride 2, padding=1, count_include_pad=True) on 7x7 -> 4x4.
    Row half a3p is block-diagonal over the bt images and permutes output rows to
    [r*bt + b]; column half m3 maps lanes [w*C + c] -> [wo*C + c]."""
    a3p = np.zeros((4 * bt, 7 * bt), np.float32)
    for b in range(bt):
        for r in range(4):
            for k in range(2):
                rin = 2 * r - 1 + k
                if 0 <= rin < 7:
                    a3p[r * bt + b, b * 7 + rin] = 0.5
    m3 = np.zeros((128, 4 * c), np.float32)
    for wo in range(4):
        for k in range(2):
            wi = 2 * wo - 1 + k
            if 0 <= wi < 7:
                for ch in range(c):
                    m3[wi * c + ch, wo * c + ch] = 0.5
    return a3p, m3


def _boundary_masks(bt, h):
    """(2, bt*h, 1): [0] zeroes image-top rows, [1] zeroes image-bottom rows."""
    n = bt * h
    top = np.ones((n, 1), np.float32)
    bot = np.ones((n, 1), np.float32)
    top[np.arange(0, n, h), 0] = 0.0
    bot[np.arange(h - 1, n, h), 0] = 0.0
    return np.stack([top, bot])


def prepare_operands(raw, nf, inter_fc, emb, block_b, mm_dtype=jnp.bfloat16):
    assert 28 * nf <= 128, "lane layout requires 28 * init_num_filters <= 128"
    c4 = 4 * nf
    items = [(_boundary_masks(block_b, 28), False),
             (_boundary_masks(block_b, 14), False),
             (_boundary_masks(block_b, 7), False)]
    for name, wsp, kin in (("c1", 28, 28), ("c2", 28, 128), ("c3", 14, 128),
                           ("c4", 14, 128), ("c5", 7, 128), ("c6", 7, 128)):
        wcat, brow = _conv_fused(*raw[name], wsp, kin)
        items.append((wcat, True))
        items.append((brow, False))
    items.append((_pool_colmat(28, nf), True))
    items.append((_pool_colmat(14, 2 * nf), True))
    a3p, m3 = _pool3_mats(block_b, c4)
    items.append((a3p, True))
    items.append((m3, True))
    # fc1: fold the NCHW flatten (flat = c*16 + h*4 + w) into the weight layout
    w1, b1 = raw["fc1"]
    w1t = np.asarray(w1, np.float32).T.reshape(c4, 4, 4, inter_fc)        # [c,h,w,o]
    f1w = np.transpose(w1t, (1, 2, 0, 3)).reshape(4, 4 * c4, inter_fc)    # [h][w*C+c, o]
    items.append((f1w, True))
    items.append((np.asarray(b1, np.float32)[None, :], False))
    w2, b2 = raw["fc2"]
    items.append((np.asarray(w2, np.float32).T, True))
    items.append((np.asarray(b2, np.float32)[None, :], False))
    return [jnp.asarray(a, mm_dtype if is_mm else jnp.float32) for a, is_mm in items]


# ----------------------------------------------------------------------------
# Parameter init (PyTorch layouts) + pure-JAX reference for validation
# ----------------------------------------------------------------------------
def init_raw_params(key, nf, inter_fc, emb):
    def conv_p(k, cout, cin):
        k1, k2 = jax.random.split(k)
        return (0.1 * jax.random.normal(k1, (cout, cin, 3, 3), jnp.float32),
                0.05 * jax.random.normal(k2, (cout,), jnp.float32))

    def lin_p(k, dout, din):
        k1, k2 = jax.random.split(k)
        return (0.1 * jax.random.normal(k1, (dout, din), jnp.float32),
                0.05 * jax.random.normal(k2, (dout,), jnp.float32))

    ks = jax.random.split(key, 8)
    return {"c1": conv_p(ks[0], nf, 1), "c2": conv_p(ks[1], nf, nf),
            "c3": conv_p(ks[2], 2 * nf, nf), "c4": conv_p(ks[3], 2 * nf, 2 * nf),
            "c5": conv_p(ks[4], 4 * nf, 2 * nf), "c6": conv_p(ks[5], 4 * nf, 4 * nf),
            "fc1": lin_p(ks[6], inter_fc, 4 * nf * 4 * 4),
            "fc2": lin_p(ks[7], emb, inter_fc)}


def ref_encoder(raw, x, slope):
    def conv(h, wb):
        w, b = wb
        out = jax.lax.conv_general_dilated(h, w, (1, 1), ((1, 1), (1, 1)),
                                           dimension_numbers=("NCHW", "OIHW", "NCHW"))
        return out + b.reshape(1, -1, 1, 1)

    def lrelu(t):
        return jnp.where(t >= 0, t, slope * t)

    def pool(h, pad):
        hp = jnp.pad(h, ((0, 0), (0, 0), (pad, pad), (pad, pad)))
        s = jax.lax.reduce_window(hp, 0.0, jax.lax.add, (1, 1, 2, 2), (1, 1, 2, 2), "VALID")
        return 0.25 * s

    h = lrelu(conv(x, raw["c1"]))
    h = lrelu(conv(h, raw["c2"]))
    h = pool(h, 0)
    h = lrelu(conv(h, raw["c3"]))
    h = lrelu(conv(h, raw["c4"]))
    h = pool(h, 0)
    h = lrelu(conv(h, raw["c5"]))
    h = lrelu(conv(h, raw["c6"]))
    h = pool(h, 1)
    flat = h.reshape(h.shape[0], -1)            # NCHW flatten == x.view(-1, 4*nf*16)
    w1, b1 = raw["fc1"]
    w2, b2 = raw["fc2"]
    y = jnp.maximum(flat @ w1.T + b1, 0.0)
    return y @ w2.T + b2


# ----------------------------------------------------------------------------
if __name__ == "__main__":
    # MNISTEncoder(init_num_filters=4, lrelu_slope=0.2, inter_fc_dim=32, embedding_dim=2)
    NF, SLOPE, INTER_FC, EMB = 4, 0.2, 32, 2
    B, BT = 32, 16     # 2 parallel grid steps (v7x: one per TensorCore)

    key = jax.random.PRNGKey(0)
    kp, kx = jax.random.split(key)
    raw = init_raw_params(kp, NF, INTER_FC, EMB)
    ops = prepare_operands(raw, NF, INTER_FC, EMB, BT)   # one-time host-side transform
    x = jax.random.uniform(kx, (B, 1, 28, 28), jnp.float32)

    fwd = jax.jit(functools.partial(mnist_encoder_forward,
                                    emb=EMB, slope=SLOPE, block_b=BT))
    z = fwd(x, ops)
    jax.block_until_ready(z)

    z_ref = ref_encoder(raw, x, SLOPE)
    assert z.shape == (B, EMB), z.shape
    assert bool(jnp.all(jnp.isfinite(z)))
    err = float(jnp.max(jnp.abs(z - z_ref)))
    # bf16 MXU operands with f32 accumulation: allow a small precision gap vs f32 ref.
    assert err < 3e-2, (err, np.asarray(z[:4]), np.asarray(z_ref[:4]))
    print("KERNEL_OK")
</pallas_src>

<mosaic_0001>
module attributes {stable_mosaic.version = 11 : i64} {
  func.func @_encoder_kernel(%arg0: i32, %arg1: memref<448x28xbf16, #tpu.memory_space<vmem>>, %arg2: memref<2x448x1xf32, #tpu.memory_space<vmem>>, %arg3: memref<2x224x1xf32, #tpu.memory_space<vmem>>, %arg4: memref<2x112x1xf32, #tpu.memory_space<vmem>>, %arg5: memref<28x384xbf16, #tpu.memory_space<vmem>>, %arg6: memref<1x128xf32, #tpu.memory_space<vmem>>, %arg7: memref<128x384xbf16, #tpu.memory_space<vmem>>, %arg8: memref<1x128xf32, #tpu.memory_space<vmem>>, %arg9: memref<128x384xbf16, #tpu.memory_space<vmem>>, %arg10: memref<1x128xf32, #tpu.memory_space<vmem>>, %arg11: memref<128x384xbf16, #tpu.memory_space<vmem>>, %arg12: memref<1x128xf32, #tpu.memory_space<vmem>>, %arg13: memref<128x384xbf16, #tpu.memory_space<vmem>>, %arg14: memref<1x128xf32, #tpu.memory_space<vmem>>, %arg15: memref<128x384xbf16, #tpu.memory_space<vmem>>, %arg16: memref<1x128xf32, #tpu.memory_space<vmem>>, %arg17: memref<128x128xbf16, #tpu.memory_space<vmem>>, %arg18: memref<128x128xbf16, #tpu.memory_space<vmem>>, %arg19: memref<64x112xbf16, #tpu.memory_space<vmem>>, %arg20: memref<128x64xbf16, #tpu.memory_space<vmem>>, %arg21: memref<4x64x32xbf16, #tpu.memory_space<vmem>>, %arg22: memref<1x32xf32, #tpu.memory_space<vmem>>, %arg23: memref<32x2xbf16, #tpu.memory_space<vmem>>, %arg24: memref<1x2xf32, #tpu.memory_space<vmem>>, %arg25: memref<16x2xf32, #tpu.memory_space<vmem>>, %arg26: memref<448x128xf32, #tpu.memory_space<vmem>>) attributes {dimension_semantics = [#tpu.dimension_semantics<parallel>], iteration_bounds = array<i64: 2>, scalar_prefetch = 0 : i64, scratch_operands = 1 : i64, tpu.core_type = #tpu.core_type<tc>, window_params = [{transform_indices = @transform_0, window_bounds = array<i64: 448, 28>}, {pipeline_mode = #tpu.pipeline_mode<synchronous>, transform_indices = @transform_1, window_bounds = array<i64: 2, 448, 1>}, {pipeline_mode = #tpu.pipeline_mode<synchronous>, transform_indices = @transform_2, window_bounds = array<i64: 2, 224, 1>}, {pipeline_mode = #tpu.pipeline_mode<synchronous>, transform_indices = @transform_3, window_bounds = array<i64: 2, 112, 1>}, {pipeline_mode = #tpu.pipeline_mode<synchronous>, transform_indices = @transform_4, window_bounds = array<i64: 28, 384>}, {pipeline_mode = #tpu.pipeline_mode<synchronous>, transform_indices = @transform_5, window_bounds = array<i64: 1, 128>}, {pipeline_mode = #tpu.pipeline_mode<synchronous>, transform_indices = @transform_6, window_bounds = array<i64: 128, 384>}, {pipeline_mode = #tpu.pipeline_mode<synchronous>, transform_indices = @transform_7, window_bounds = array<i64: 1, 128>}, {pipeline_mode = #tpu.pipeline_mode<synchronous>, transform_indices = @transform_8, window_bounds = array<i64: 128, 384>}, {pipeline_mode = #tpu.pipeline_mode<synchronous>, transform_indices = @transform_9, window_bounds = array<i64: 1, 128>}, {pipeline_mode = #tpu.pipeline_mode<synchronous>, transform_indices = @transform_10, window_bounds = array<i64: 128, 384>}, {pipeline_mode = #tpu.pipeline_mode<synchronous>, transform_indices = @transform_11, window_bounds = array<i64: 1, 128>}, {pipeline_mode = #tpu.pipeline_mode<synchronous>, transform_indices = @transform_12, window_bounds = array<i64: 128, 384>}, {pipeline_mode = #tpu.pipeline_mode<synchronous>, transform_indices = @transform_13, window_bounds = array<i64: 1, 128>}, {pipeline_mode = #tpu.pipeline_mode<synchronous>, transform_indices = @transform_14, window_bounds = array<i64: 128, 384>}, {pipeline_mode = #tpu.pipeline_mode<synchronous>, transform_indices = @transform_15, window_bounds = array<i64: 1, 128>}, {pipeline_mode = #tpu.pipeline_mode<synchronous>, transform_indices = @transform_16, window_bounds = array<i64: 128, 128>}, {pipeline_mode = #tpu.pipeline_mode<synchronous>, transform_indices = @transform_17, window_bounds = array<i64: 128, 128>}, {pipeline_mode = #tpu.pipeline_mode<synchronous>, transform_indices = @transform_18, window_bounds = array<i64: 64, 112>}, {pipeline_mode = #tpu.pipeline_mode<synchronous>, transform_indices = @transform_19, window_bounds = array<i64: 128, 64>}, {pipeline_mode = #tpu.pipeline_mode<synchronous>, transform_indices = @transform_20, window_bounds = array<i64: 4, 64, 32>}, {pipeline_mode = #tpu.pipeline_mode<synchronous>, transform_indices = @transform_21, window_bounds = array<i64: 1, 32>}, {pipeline_mode = #tpu.pipeline_mode<synchronous>, transform_indices = @transform_22, window_bounds = array<i64: 32, 2>}, {pipeline_mode = #tpu.pipeline_mode<synchronous>, transform_indices = @transform_23, window_bounds = array<i64: 1, 2>}, {transform_indices = @transform_24, window_bounds = array<i64: 16, 2>}]} {
    %c0 = arith.constant 0 : index
    %c0_0 = arith.constant 0 : index
    %0 = vector.load %arg1[%c0, %c0_0] : memref<448x28xbf16, #tpu.memory_space<vmem>>, vector<448x28xbf16>
    %c0_1 = arith.constant 0 : index
    %c0_2 = arith.constant 0 : index
    %1 = vector.load %arg5[%c0_1, %c0_2] : memref<28x384xbf16, #tpu.memory_space<vmem>>, vector<28x384xbf16>
    %cst = arith.constant dense<0.000000e+00> : vector<448x384xf32>
    %2 = tpu.matmul %0, %1, %cst {dimension_numbers = #tpu.dot_dimension_numbers<[1], [0], [0], [1], [0, 0, 1, 1], [], []>} : vector<448x28xbf16>, vector<28x384xbf16>, vector<448x384xf32> -> vector<448x384xf32>
    %3 = vector.extract_strided_slice %2 {offsets = [0, 0], sizes = [448, 128], strides = [1, 1]} : vector<448x384xf32> to vector<448x128xf32>
    %c1_i32 = arith.constant 1 : i32
    %4 = tpu.dynamic_rotate %3 by %c1_i32 dim 0 : vector<448x128xf32>, i32 -> vector<448x128xf32>
    %c0_3 = arith.constant 0 : index
    %c0_4 = arith.constant 0 : index
    %c0_5 = arith.constant 0 : index
    %5 = vector.load %arg2[%c0_3, %c0_4, %c0_5] : memref<2x448x1xf32, #tpu.memory_space<vmem>>, vector<1x448x1xf32>
    %6 = vector.shape_cast %5 : vector<1x448x1xf32> to vector<448x1xf32>
    %7 = vector.broadcast %6 : vector<448x1xf32> to vector<448x128xf32>
    %8 = arith.mulf %4, %7 : vector<448x128xf32>
    %9 = vector.extract_strided_slice %2 {offsets = [0, 256], sizes = [448, 128], strides = [1, 1]} : vector<448x384xf32> to vector<448x128xf32>
    %c447_i32 = arith.constant 447 : i32
    %10 = tpu.dynamic_rotate %9 by %c447_i32 dim 0 : vector<448x128xf32>, i32 -> vector<448x128xf32>
    %c1 = arith.constant 1 : index
    %c0_6 = arith.constant 0 : index
    %c0_7 = arith.constant 0 : index
    %11 = vector.load %arg2[%c1, %c0_6, %c0_7] : memref<2x448x1xf32, #tpu.memory_space<vmem>>, vector<1x448x1xf32>
    %12 = vector.shape_cast %11 : vector<1x448x1xf32> to vector<448x1xf32>
    %13 = vector.broadcast %12 : vector<448x1xf32> to vector<448x128xf32>
    %14 = arith.mulf %10, %13 : vector<448x128xf32>
    %15 = vector.extract_strided_slice %2 {offsets = [0, 128], sizes = [448, 128], strides = [1, 1]} : vector<448x384xf32> to vector<448x128xf32>
    %16 = arith.addf %15, %8 : vector<448x128xf32>
    %17 = arith.addf %16, %14 : vector<448x128xf32>
    %c0_8 = arith.constant 0 : index
    %c0_9 = arith.constant 0 : index
    %18 = vector.load %arg6[%c0_8, %c0_9] : memref<1x128xf32, #tpu.memory_space<vmem>>, vector<1x128xf32>
    %19 = vector.broadcast %18 : vector<1x128xf32> to vector<448x128xf32>
    %20 = arith.addf %17, %19 : vector<448x128xf32>
    %cst_10 = arith.constant 0.000000e+00 : f32
    %21 = vector.broadcast %cst_10 : f32 to vector<448x128xf32>
    %22 = arith.cmpf oge, %20, %21 : vector<448x128xf32>
    %cst_11 = arith.constant 2.000000e-01 : f32
    %23 = vector.broadcast %cst_11 : f32 to vector<448x128xf32>
    %24 = arith.mulf %23, %20 : vector<448x128xf32>
    %25 = arith.select %22, %20, %24 : vector<448x128xi1>, vector<448x128xf32>
    %26 = arith.truncf %25 : vector<448x128xf32> to vector<448x128xbf16>
    %c0_12 = arith.constant 0 : index
    %c0_13 = arith.constant 0 : index
    %27 = vector.load %arg7[%c0_12, %c0_13] : memref<128x384xbf16, #tpu.memory_space<vmem>>, vector<128x384xbf16>
    %cst_14 = arith.constant dense<0.000000e+00> : vector<448x384xf32>
    %28 = tpu.matmul %26, %27, %cst_14 {dimension_numbers = #tpu.dot_dimension_numbers<[1], [0], [0], [1], [0, 0, 1, 1], [], []>} : vector<448x128xbf16>, vector<128x384xbf16>, vector<448x384xf32> -> vector<448x384xf32>
    %29 = vector.extract_strided_slice %28 {offsets = [0, 0], sizes = [448, 128], strides = [1, 1]} : vector<448x384xf32> to vector<448x128xf32>
    %c1_i32_15 = arith.constant 1 : i32
    %30 = tpu.dynamic_rotate %29 by %c1_i32_15 dim 0 : vector<448x128xf32>, i32 -> vector<448x128xf32>
    %c0_16 = arith.constant 0 : index
    %c0_17 = arith.constant 0 : index
    %c0_18 = arith.constant 0 : index
    %31 = vector.load %arg2[%c0_16, %c0_17, %c0_18] : memref<2x448x1xf32, #tpu.memory_space<vmem>>, vector<1x448x1xf32>
    %32 = vector.shape_cast %31 : vector<1x448x1xf32> to vector<448x1xf32>
    %33 = vector.broadcast %32 : vector<448x1xf32> to vector<448x128xf32>
    %34 = arith.mulf %30, %33 : vector<448x128xf32>
    %35 = vector.extract_strided_slice %28 {offsets = [0, 256], sizes = [448, 128], strides = [1, 1]} : vector<448x384xf32> to vector<448x128xf32>
    %c447_i32_19 = arith.constant 447 : i32
    %36 = tpu.dynamic_rotate %35 by %c447_i32_19 dim 0 : vector<448x128xf32>, i32 -> vector<448x128xf32>
    %c1_20 = arith.constant 1 : index
    %c0_21 = arith.constant 0 : index
    %c0_22 = arith.constant 0 : index
    %37 = vector.load %arg2[%c1_20, %c0_21, %c0_22] : memref<2x448x1xf32, #tpu.memory_space<vmem>>, vector<1x448x1xf32>
    %38 = vector.shape_cast %37 : vector<1x448x1xf32> to vector<448x1xf32>
    %39 = vector.broadcast %38 : vector<448x1xf32> to vector<448x128xf32>
    %40 = arith.mulf %36, %39 : vector<448x128xf32>
    %41 = vector.extract_strided_slice %28 {offsets = [0, 128], sizes = [448, 128], strides = [1, 1]} : vector<448x384xf32> to vector<448x128xf32>
    %42 = arith.addf %41, %34 : vector<448x128xf32>
    %43 = arith.addf %42, %40 : vector<448x128xf32>
    %c0_23 = arith.constant 0 : index
    %c0_24 = arith.constant 0 : index
    %44 = vector.load %arg8[%c0_23, %c0_24] : memref<1x128xf32, #tpu.memory_space<vmem>>, vector<1x128xf32>
    %45 = vector.broadcast %44 : vector<1x128xf32> to vector<448x128xf32>
    %46 = arith.addf %43, %45 : vector<448x128xf32>
    %cst_25 = arith.constant 0.000000e+00 : f32
    %47 = vector.broadcast %cst_25 : f32 to vector<448x128xf32>
    %48 = arith.cmpf oge, %46, %47 : vector<448x128xf32>
    %cst_26 = arith.constant 2.000000e-01 : f32
    %49 = vector.broadcast %cst_26 : f32 to vector<448x128xf32>
    %50 = arith.mulf %49, %46 : vector<448x128xf32>
    %51 = arith.select %48, %46, %50 : vector<448x128xi1>, vector<448x128xf32>
    %c0_27 = arith.constant 0 : index
    %c0_28 = arith.constant 0 : index
    %52 = vector.load %arg26[%c0_27, %c0_28] : memref<448x128xf32, #tpu.memory_space<vmem>>, vector<448x128xf32>
    tpu.vector_store %arg26[%c0_27, %c0_28], %51 {strides = array<i32>} : memref<448x128xf32, #tpu.memory_space<vmem>>, vector<448x128xf32>,
    %c0_29 = arith.constant 0 : index
    %c0_30 = arith.constant 0 : index
    %53 = tpu.strided_load %arg26[%c0_29, %c0_30] {strides = array<i32: 2, 1>} : memref<448x128xf32, #tpu.memory_space<vmem>>, vector<224x128xf32>
    %c1_31 = arith.constant 1 : index
    %c0_32 = arith.constant 0 : index
    %54 = tpu.strided_load %arg26[%c1_31, %c0_32] {strides = array<i32: 2, 1>} : memref<448x128xf32, #tpu.memory_space<vmem>>, vector<224x128xf32>
    %55 = arith.addf %53, %54 : vector<224x128xf32>
    %56 = arith.truncf %55 : vector<224x128xf32> to vector<224x128xbf16>
    %c0_33 = arith.constant 0 : index
    %c0_34 = arith.constant 0 : index
    %57 = vector.load %arg17[%c0_33, %c0_34] : memref<128x128xbf16, #tpu.memory_space<vmem>>, vector<128x128xbf16>
    %cst_35 = arith.constant dense<0.000000e+00> : vector<224x128xf32>
    %58 = tpu.matmul %56, %57, %cst_35 {dimension_numbers = #tpu.dot_dimension_numbers<[1], [0], [0], [1], [0, 0, 1, 1], [], []>} : vector<224x128xbf16>, vector<128x128xbf16>, vector<224x128xf32> -> vector<224x128xf32>
    %59 = arith.truncf %58 : vector<224x128xf32> to vector<224x128xbf16>
    %c0_36 = arith.constant 0 : index
    %c0_37 = arith.constant 0 : index
    %60 = vector.load %arg9[%c0_36, %c0_37] : memref<128x384xbf16, #tpu.memory_space<vmem>>, vector<128x384xbf16>
    %cst_38 = arith.constant dense<0.000000e+00> : vector<224x384xf32>
    %61 = tpu.matmul %59, %60, %cst_38 {dimension_numbers = #tpu.dot_dimension_numbers<[1], [0], [0], [1], [0, 0, 1, 1], [], []>} : vector<224x128xbf16>, vector<128x384xbf16>, vector<224x384xf32> -> vector<224x384xf32>
    %62 = vector.extract_strided_slice %61 {offsets = [0, 0], sizes = [224, 128], strides = [1, 1]} : vector<224x384xf32> to vector<224x128xf32>
    %c1_i32_39 = arith.constant 1 : i32
    %63 = tpu.dynamic_rotate %62 by %c1_i32_39 dim 0 : vector<224x128xf32>, i32 -> vector<224x128xf32>
    %c0_40 = arith.constant 0 : index
    %c0_41 = arith.constant 0 : index
    %c0_42 = arith.constant 0 : index
    %64 = vector.load %arg3[%c0_40, %c0_41, %c0_42] : memref<2x224x1xf32, #tpu.memory_space<vmem>>, vector<1x224x1xf32>
    %65 = vector.shape_cast %64 : vector<1x224x1xf32> to vector<224x1xf32>
    %66 = vector.broadcast %65 : vector<224x1xf32> to vector<224x128xf32>
    %67 = arith.mulf %63, %66 : vector<224x128xf32>
    %68 = vector.extract_strided_slice %61 {offsets = [0, 256], sizes = [224, 128], strides = [1, 1]} : vector<224x384xf32> to vector<224x128xf32>
    %c223_i32 = arith.constant 223 : i32
    %69 = tpu.dynamic_rotate %68 by %c223_i32 dim 0 : vector<224x128xf32>, i32 -> vector<224x128xf32>
    %c1_43 = arith.constant 1 : index
    %c0_44 = arith.constant 0 : index
    %c0_45 = arith.constant 0 : index
    %70 = vector.load %arg3[%c1_43, %c0_44, %c0_45] : memref<2x224x1xf32, #tpu.memory_space<vmem>>, vector<1x224x1xf32>
    %71 = vector.shape_cast %70 : vector<1x224x1xf32> to vector<224x1xf32>
    %72 = vector.broadcast %71 : vector<224x1xf32> to vector<224x128xf32>
    %73 = arith.mulf %69, %72 : vector<224x128xf32>
    %74 = vector.extract_strided_slice %61 {offsets = [0, 128], sizes = [224, 128], strides = [1, 1]} : vector<224x384xf32> to vector<224x128xf32>
    %75 = arith.addf %74, %67 : vector<224x128xf32>
    %76 = arith.addf %75, %73 : vector<224x128xf32>
    %c0_46 = arith.constant 0 : index
    %c0_47 = arith.constant 0 : index
    %77 = vector.load %arg10[%c0_46, %c0_47] : memref<1x128xf32, #tpu.memory_space<vmem>>, vector<1x128xf32>
    %78 = vector.broadcast %77 : vector<1x128xf32> to vector<224x128xf32>
    %79 = arith.addf %76, %78 : vector<224x128xf32>
    %cst_48 = arith.constant 0.000000e+00 : f32
    %80 = vector.broadcast %cst_48 : f32 to vector<224x128xf32>
    %81 = arith.cmpf oge, %79, %80 : vector<224x128xf32>
    %cst_49 = arith.constant 2.000000e-01 : f32
    %82 = vector.broadcast %cst_49 : f32 to vector<224x128xf32>
    %83 = arith.mulf %82, %79 : vector<224x128xf32>
    %84 = arith.select %81, %79, %83 : vector<224x128xi1>, vector<224x128xf32>
    %85 = arith.truncf %84 : vector<224x128xf32> to vector<224x128xbf16>
    %c0_50 = arith.constant 0 : index
    %c0_51 = arith.constant 0 : index
    %86 = vector.load %arg11[%c0_50, %c0_51] : memref<128x384xbf16, #tpu.memory_space<vmem>>, vector<128x384xbf16>
    %cst_52 = arith.constant dense<0.000000e+00> : vector<224x384xf32>
    %87 = tpu.matmul %85, %86, %cst_52 {dimension_numbers = #tpu.dot_dimension_numbers<[1], [0], [0], [1], [0, 0, 1, 1], [], []>} : vector<224x128xbf16>, vector<128x384xbf16>, vector<224x384xf32> -> vector<224x384xf32>
    %88 = vector.extract_strided_slice %87 {offsets = [0, 0], sizes = [224, 128], strides = [1, 1]} : vector<224x384xf32> to vector<224x128xf32>
    %c1_i32_53 = arith.constant 1 : i32
    %89 = tpu.dynamic_rotate %88 by %c1_i32_53 dim 0 : vector<224x128xf32>, i32 -> vector<224x128xf32>
    %c0_54 = arith.constant 0 : index
    %c0_55 = arith.constant 0 : index
    %c0_56 = arith.constant 0 : index
    %90 = vector.load %arg3[%c0_54, %c0_55, %c0_56] : memref<2x224x1xf32, #tpu.memory_space<vmem>>, vector<1x224x1xf32>
    %91 = vector.shape_cast %90 : vector<1x224x1xf32> to vector<224x1xf32>
    %92 = vector.broadcast %91 : vector<224x1xf32> to vector<224x128xf32>
    %93 = arith.mulf %89, %92 : vector<224x128xf32>
    %94 = vector.extract_strided_slice %87 {offsets = [0, 256], sizes = [224, 128], strides = [1, 1]} : vector<224x384xf32> to vector<224x128xf32>
    %c223_i32_57 = arith.constant 223 : i32
    %95 = tpu.dynamic_rotate %94 by %c223_i32_57 dim 0 : vector<224x128xf32>, i32 -> vector<224x128xf32>
    %c1_58 = arith.constant 1 : index
    %c0_59 = arith.constant 0 : index
    %c0_60 = arith.constant 0 : index
    %96 = vector.load %arg3[%c1_58, %c0_59, %c0_60] : memref<2x224x1xf32, #tpu.memory_space<vmem>>, vector<1x224x1xf32>
    %97 = vector.shape_cast %96 : vector<1x224x1xf32> to vector<224x1xf32>
    %98 = vector.broadcast %97 : vector<224x1xf32> to vector<224x128xf32>
    %99 = arith.mulf %95, %98 : vector<224x128xf32>
    %100 = vector.extract_strided_slice %87 {offsets = [0, 128], sizes = [224, 128], strides = [1, 1]} : vector<224x384xf32> to vector<224x128xf32>
    %101 = arith.addf %100, %93 : vector<224x128xf32>
    %102 = arith.addf %101, %99 : vector<224x128xf32>
    %c0_61 = arith.constant 0 : index
    %c0_62 = arith.constant 0 : index
    %103 = vector.load %arg12[%c0_61, %c0_62] : memref<1x128xf32, #tpu.memory_space<vmem>>, vector<1x128xf32>
    %104 = vector.broadcast %103 : vector<1x128xf32> to vector<224x128xf32>
    %105 = arith.addf %102, %104 : vector<224x128xf32>
    %cst_63 = arith.constant 0.000000e+00 : f32
    %106 = vector.broadcast %cst_63 : f32 to vector<224x128xf32>
    %107 = arith.cmpf oge, %105, %106 : vector<224x128xf32>
    %cst_64 = arith.constant 2.000000e-01 : f32
    %108 = vector.broadcast %cst_64 : f32 to vector<224x128xf32>
    %109 = arith.mulf %108, %105 : vector<224x128xf32>
    %110 = arith.select %107, %105, %109 : vector<224x128xi1>, vector<224x128xf32>
    %c0_65 = arith.constant 0 : index
    %c0_66 = arith.constant 0 : index
    %111 = vector.load %arg26[%c0_65, %c0_66] : memref<448x128xf32, #tpu.memory_space<vmem>>, vector<224x128xf32>
    tpu.vector_store %arg26[%c0_65, %c0_66], %110 {strides = array<i32>} : memref<448x128xf32, #tpu.memory_space<vmem>>, vector<224x128xf32>,
    %c0_67 = arith.constant 0 : index
    %c0_68 = arith.constant 0 : index
    %112 = tpu.strided_load %arg26[%c0_67, %c0_68] {strides = array<i32: 2, 1>} : memref<448x128xf32, #tpu.memory_space<vmem>>, vector<112x128xf32>
    %c1_69 = arith.constant 1 : index
    %c0_70 = arith.constant 0 : index
    %113 = tpu.strided_load %arg26[%c1_69, %c0_70] {strides = array<i32: 2, 1>} : memref<448x128xf32, #tpu.memory_space<vmem>>, vector<112x128xf32>
    %114 = arith.addf %112, %113 : vector<112x128xf32>
    %115 = arith.truncf %114 : vector<112x128xf32> to vector<112x128xbf16>
    %c0_71 = arith.constant 0 : index
    %c0_72 = arith.constant 0 : index
    %116 = vector.load %arg18[%c0_71, %c0_72] : memref<128x128xbf16, #tpu.memory_space<vmem>>, vector<128x128xbf16>
    %cst_73 = arith.constant dense<0.000000e+00> : vector<112x128xf32>
    %117 = tpu.matmul %115, %116, %cst_73 {dimension_numbers = #tpu.dot_dimension_numbers<[1], [0], [0], [1], [0, 0, 1, 1], [], []>} : vector<112x128xbf16>, vector<128x128xbf16>, vector<112x128xf32> -> vector<112x128xf32>
    %118 = arith.truncf %117 : vector<112x128xf32> to vector<112x128xbf16>
    %c0_74 = arith.constant 0 : index
    %c0_75 = arith.constant 0 : index
    %119 = vector.load %arg13[%c0_74, %c0_75] : memref<128x384xbf16, #tpu.memory_space<vmem>>, vector<128x384xbf16>
    %cst_76 = arith.constant dense<0.000000e+00> : vector<112x384xf32>
    %120 = tpu.matmul %118, %119, %cst_76 {dimension_numbers = #tpu.dot_dimension_numbers<[1], [0], [0], [1], [0, 0, 1, 1], [], []>} : vector<112x128xbf16>, vector<128x384xbf16>, vector<112x384xf32> -> vector<112x384xf32>
    %121 = vector.extract_strided_slice %120 {offsets = [0, 0], sizes = [112, 128], strides = [1, 1]} : vector<112x384xf32> to vector<112x128xf32>
    %c1_i32_77 = arith.constant 1 : i32
    %122 = tpu.dynamic_rotate %121 by %c1_i32_77 dim 0 : vector<112x128xf32>, i32 -> vector<112x128xf32>
    %c0_78 = arith.constant 0 : index
    %c0_79 = arith.constant 0 : index
    %c0_80 = arith.constant 0 : index
    %123 = vector.load %arg4[%c0_78, %c0_79, %c0_80] : memref<2x112x1xf32, #tpu.memory_space<vmem>>, vector<1x112x1xf32>
    %124 = vector.shape_cast %123 : vector<1x112x1xf32> to vector<112x1xf32>
    %125 = vector.broadcast %124 : vector<112x1xf32> to vector<112x128xf32>
    %126 = arith.mulf %122, %125 : vector<112x128xf32>
    %127 = vector.extract_strided_slice %120 {offsets = [0, 256], sizes = [112, 128], strides = [1, 1]} : vector<112x384xf32> to vector<112x128xf32>
    %c111_i32 = arith.constant 111 : i32
    %128 = tpu.dynamic_rotate %127 by %c111_i32 dim 0 : vector<112x128xf32>, i32 -> vector<112x128xf32>
    %c1_81 = arith.constant 1 : index
    %c0_82 = arith.constant 0 : index
    %c0_83 = arith.constant 0 : index
    %129 = vector.load %arg4[%c1_81, %c0_82, %c0_83] : memref<2x112x1xf32, #tpu.memory_space<vmem>>, vector<1x112x1xf32>
    %130 = vector.shape_cast %129 : vector<1x112x1xf32> to vector<112x1xf32>
    %131 = vector.broadcast %130 : vector<112x1xf32> to vector<112x128xf32>
    %132 = arith.mulf %128, %131 : vector<112x128xf32>
    %133 = vector.extract_strided_slice %120 {offsets = [0, 128], sizes = [112, 128], strides = [1, 1]} : vector<112x384xf32> to vector<112x128xf32>
    %134 = arith.addf %133, %126 : vector<112x128xf32>
    %135 = arith.addf %134, %132 : vector<112x128xf32>
    %c0_84 = arith.constant 0 : index
    %c0_85 = arith.constant 0 : index
    %136 = vector.load %arg14[%c0_84, %c0_85] : memref<1x128xf32, #tpu.memory_space<vmem>>, vector<1x128xf32>
    %137 = vector.broadcast %136 : vector<1x128xf32> to vector<112x128xf32>
    %138 = arith.addf %135, %137 : vector<112x128xf32>
    %cst_86 = arith.constant 0.000000e+00 : f32
    %139 = vector.broadcast %cst_86 : f32 to vector<112x128xf32>
    %140 = arith.cmpf oge, %138, %139 : vector<112x128xf32>
    %cst_87 = arith.constant 2.000000e-01 : f32
    %141 = vector.broadcast %cst_87 : f32 to vector<112x128xf32>
    %142 = arith.mulf %141, %138 : vector<112x128xf32>
    %143 = arith.select %140, %138, %142 : vector<112x128xi1>, vector<112x128xf32>
    %144 = arith.truncf %143 : vector<112x128xf32> to vector<112x128xbf16>
    %c0_88 = arith.constant 0 : index
    %c0_89 = arith.constant 0 : index
    %145 = vector.load %arg15[%c0_88, %c0_89] : memref<128x384xbf16, #tpu.memory_space<vmem>>, vector<128x384xbf16>
    %cst_90 = arith.constant dense<0.000000e+00> : vector<112x384xf32>
    %146 = tpu.matmul %144, %145, %cst_90 {dimension_numbers = #tpu.dot_dimension_numbers<[1], [0], [0], [1], [0, 0, 1, 1], [], []>} : vector<112x128xbf16>, vector<128x384xbf16>, vector<112x384xf32> -> vector<112x384xf32>
    %147 = vector.extract_strided_slice %146 {offsets = [0, 0], sizes = [112, 128], strides = [1, 1]} : vector<112x384xf32> to vector<112x128xf32>
    %c1_i32_91 = arith.constant 1 : i32
    %148 = tpu.dynamic_rotate %147 by %c1_i32_91 dim 0 : vector<112x128xf32>, i32 -> vector<112x128xf32>
    %c0_92 = arith.constant 0 : index
    %c0_93 = arith.constant 0 : index
    %c0_94 = arith.constant 0 : index
    %149 = vector.load %arg4[%c0_92, %c0_93, %c0_94] : memref<2x112x1xf32, #tpu.memory_space<vmem>>, vector<1x112x1xf32>
    %150 = vector.shape_cast %149 : vector<1x112x1xf32> to vector<112x1xf32>
    %151 = vector.broadcast %150 : vector<112x1xf32> to vector<112x128xf32>
    %152 = arith.mulf %148, %151 : vector<112x128xf32>
    %153 = vector.extract_strided_slice %146 {offsets = [0, 256], sizes = [112, 128], strides = [1, 1]} : vector<112x384xf32> to vector<112x128xf32>
    %c111_i32_95 = arith.constant 111 : i32
    %154 = tpu.dynamic_rotate %153 by %c111_i32_95 dim 0 : vector<112x128xf32>, i32 -> vector<112x128xf32>
    %c1_96 = arith.constant 1 : index
    %c0_97 = arith.constant 0 : index
    %c0_98 = arith.constant 0 : index
    %155 = vector.load %arg4[%c1_96, %c0_97, %c0_98] : memref<2x112x1xf32, #tpu.memory_space<vmem>>, vector<1x112x1xf32>
    %156 = vector.shape_cast %155 : vector<1x112x1xf32> to vector<112x1xf32>
    %157 = vector.broadcast %156 : vector<112x1xf32> to vector<112x128xf32>
    %158 = arith.mulf %154, %157 : vector<112x128xf32>
    %159 = vector.extract_strided_slice %146 {offsets = [0, 128], sizes = [112, 128], strides = [1, 1]} : vector<112x384xf32> to vector<112x128xf32>
    %160 = arith.addf %159, %152 : vector<112x128xf32>
    %161 = arith.addf %160, %158 : vector<112x128xf32>
    %c0_99 = arith.constant 0 : index
    %c0_100 = arith.constant 0 : index
    %162 = vector.load %arg16[%c0_99, %c0_100] : memref<1x128xf32, #tpu.memory_space<vmem>>, vector<1x128xf32>
    %163 = vector.broadcast %162 : vector<1x128xf32> to vector<112x128xf32>
    %164 = arith.addf %161, %163 : vector<112x128xf32>
    %cst_101 = arith.constant 0.000000e+00 : f32
    %165 = vector.broadcast %cst_101 : f32 to vector<112x128xf32>
    %166 = arith.cmpf oge, %164, %165 : vector<112x128xf32>
    %cst_102 = arith.constant 2.000000e-01 : f32
    %167 = vector.broadcast %cst_102 : f32 to vector<112x128xf32>
    %168 = arith.mulf %167, %164 : vector<112x128xf32>
    %169 = arith.select %166, %164, %168 : vector<112x128xi1>, vector<112x128xf32>
    %c0_103 = arith.constant 0 : index
    %c0_104 = arith.constant 0 : index
    %170 = vector.load %arg19[%c0_103, %c0_104] : memref<64x112xbf16, #tpu.memory_space<vmem>>, vector<64x112xbf16>
    %171 = arith.truncf %169 : vector<112x128xf32> to vector<112x128xbf16>
    %cst_105 = arith.constant dense<0.000000e+00> : vector<64x128xf32>
    %172 = tpu.matmul %170, %171, %cst_105 {dimension_numbers = #tpu.dot_dimension_numbers<[1], [0], [0], [1], [0, 0, 1, 1], [], []>} : vector<64x112xbf16>, vector<112x128xbf16>, vector<64x128xf32> -> vector<64x128xf32>
    %173 = arith.truncf %172 : vector<64x128xf32> to vector<64x128xbf16>
    %c0_106 = arith.constant 0 : index
    %c0_107 = arith.constant 0 : index
    %174 = vector.load %arg20[%c0_106, %c0_107] : memref<128x64xbf16, #tpu.memory_space<vmem>>, vector<128x64xbf16>
    %cst_108 = arith.constant dense<0.000000e+00> : vector<64x64xf32>
    %175 = tpu.matmul %173, %174, %cst_108 {dimension_numbers = #tpu.dot_dimension_numbers<[1], [0], [0], [1], [0, 0, 1, 1], [], []>} : vector<64x128xbf16>, vector<128x64xbf16>, vector<64x64xf32> -> vector<64x64xf32>
    %176 = vector.extract_strided_slice %175 {offsets = [0, 0], sizes = [16, 64], strides = [1, 1]} : vector<64x64xf32> to vector<16x64xf32>
    %177 = arith.truncf %176 : vector<16x64xf32> to vector<16x64xbf16>
    %c0_109 = arith.constant 0 : index
    %c0_110 = arith.constant 0 : index
    %c0_111 = arith.constant 0 : index
    %178 = vector.load %arg21[%c0_109, %c0_110, %c0_111] : memref<4x64x32xbf16, #tpu.memory_space<vmem>>, vector<1x64x32xbf16>
    %179 = vector.shape_cast %178 : vector<1x64x32xbf16> to vector<64x32xbf16>
    %cst_112 = arith.constant dense<0.000000e+00> : vector<16x32xf32>
    %180 = tpu.matmul %177, %179, %cst_112 {dimension_numbers = #tpu.dot_dimension_numbers<[1], [0], [0], [1], [0, 0, 1, 1], [], []>} : vector<16x64xbf16>, vector<64x32xbf16>, vector<16x32xf32> -> vector<16x32xf32>
    %181 = vector.extract_strided_slice %175 {offsets = [16, 0], sizes = [16, 64], strides = [1, 1]} : vector<64x64xf32> to vector<16x64xf32>
    %182 = arith.truncf %181 : vector<16x64xf32> to vector<16x64xbf16>
    %c1_113 = arith.constant 1 : index
    %c0_114 = arith.constant 0 : index
    %c0_115 = arith.constant 0 : index
    %183 = vector.load %arg21[%c1_113, %c0_114, %c0_115] : memref<4x64x32xbf16, #tpu.memory_space<vmem>>, vector<1x64x32xbf16>
    %184 = vector.shape_cast %183 : vector<1x64x32xbf16> to vector<64x32xbf16>
    %cst_116 = arith.constant dense<0.000000e+00> : vector<16x32xf32>
    %185 = tpu.matmul %182, %184, %cst_116 {dimension_numbers = #tpu.dot_dimension_numbers<[1], [0], [0], [1], [0, 0, 1, 1], [], []>} : vector<16x64xbf16>, vector<64x32xbf16>, vector<16x32xf32> -> vector<16x32xf32>
    %186 = arith.addf %180, %185 : vector<16x32xf32>
    %187 = vector.extract_strided_slice %175 {offsets = [32, 0], sizes = [16, 64], strides = [1, 1]} : vector<64x64xf32> to vector<16x64xf32>
    %188 = arith.truncf %187 : vector<16x64xf32> to vector<16x64xbf16>
    %c2 = arith.constant 2 : index
    %c0_117 = arith.constant 0 : index
    %c0_118 = arith.constant 0 : index
    %189 = vector.load %arg21[%c2, %c0_117, %c0_118] : memref<4x64x32xbf16, #tpu.memory_space<vmem>>, vector<1x64x32xbf16>
    %190 = vector.shape_cast %189 : vector<1x64x32xbf16> to vector<64x32xbf16>
    %cst_119 = arith.constant dense<0.000000e+00> : vector<16x32xf32>
    %191 = tpu.matmul %188, %190, %cst_119 {dimension_numbers = #tpu.dot_dimension_numbers<[1], [0], [0], [1], [0, 0, 1, 1], [], []>} : vector<16x64xbf16>, vector<64x32xbf16>, vector<16x32xf32> -> vector<16x32xf32>
    %192 = arith.addf %186, %191 : vector<16x32xf32>
    %193 = vector.extract_strided_slice %175 {offsets = [48, 0], sizes = [16, 64], strides = [1, 1]} : vector<64x64xf32> to vector<16x64xf32>
    %194 = arith.truncf %193 : vector<16x64xf32> to vector<16x64xbf16>
    %c3 = arith.constant 3 : index
    %c0_120 = arith.constant 0 : index
    %c0_121 = arith.constant 0 : index
    %195 = vector.load %arg21[%c3, %c0_120, %c0_121] : memref<4x64x32xbf16, #tpu.memory_space<vmem>>, vector<1x64x32xbf16>
    %196 = vector.shape_cast %195 : vector<1x64x32xbf16> to vector<64x32xbf16>
    %cst_122 = arith.constant dense<0.000000e+00> : vector<16x32xf32>
    %197 = tpu.matmul %194, %196, %cst_122 {dimension_numbers = #tpu.dot_dimension_numbers<[1], [0], [0], [1], [0, 0, 1, 1], [], []>} : vector<16x64xbf16>, vector<64x32xbf16>, vector<16x32xf32> -> vector<16x32xf32>
    %198 = arith.addf %192, %197 : vector<16x32xf32>
    %c0_123 = arith.constant 0 : index
    %c0_124 = arith.constant 0 : index
    %199 = vector.load %arg22[%c0_123, %c0_124] : memref<1x32xf32, #tpu.memory_space<vmem>>, vector<1x32xf32>
    %200 = vector.broadcast %199 : vector<1x32xf32> to vector<16x32xf32>
    %201 = arith.addf %198, %200 : vector<16x32xf32>
    %cst_125 = arith.constant 0.000000e+00 : f32
    %202 = vector.broadcast %cst_125 : f32 to vector<16x32xf32>
    %203 = arith.maximumf %201, %202 : vector<16x32xf32>
    %204 = arith.truncf %203 : vector<16x32xf32> to vector<16x32xbf16>
    %c0_126 = arith.constant 0 : index
    %c0_127 = arith.constant 0 : index
    %205 = vector.load %arg23[%c0_126, %c0_127] : memref<32x2xbf16, #tpu.memory_space<vmem>>, vector<32x2xbf16>
    %cst_128 = arith.constant dense<0.000000e+00> : vector<16x2xf32>
    %206 = tpu.matmul %204, %205, %cst_128 {dimension_numbers = #tpu.dot_dimension_numbers<[1], [0], [0], [1], [0, 0, 1, 1], [], []>} : vector<16x32xbf16>, vector<32x2xbf16>, vector<16x2xf32> -> vector<16x2xf32>
    %c0_129 = arith.constant 0 : index
    %c0_130 = arith.constant 0 : index
    %207 = vector.load %arg24[%c0_129, %c0_130] : memref<1x2xf32, #tpu.memory_space<vmem>>, vector<1x2xf32>
    %208 = vector.broadcast %207 : vector<1x2xf32> to vector<16x2xf32>
    %209 = arith.addf %206, %208 : vector<16x2xf32>
    %c0_131 = arith.constant 0 : index
    %c0_132 = arith.constant 0 : index
    %210 = vector.load %arg25[%c0_131, %c0_132] : memref<16x2xf32, #tpu.memory_space<vmem>>, vector<16x2xf32>
    tpu.vector_store %arg25[%c0_131, %c0_132], %209 {strides = array<i32>} : memref<16x2xf32, #tpu.memory_space<vmem>>, vector<16x2xf32>,
    return
  }
  func.func @transform_0(%arg0: i32) -> (i32, i32) {
    %c0_i32 = arith.constant 0 : i32
    %c0_i32_0 = arith.constant 0 : i32
    return %arg0, %c0_i32 : i32, i32
  }
  func.func @transform_1(%arg0: i32) -> (i32, i32, i32) {
    %c0_i32 = arith.constant 0 : i32
    %c0_i32_0 = arith.constant 0 : i32
    %c0_i32_1 = arith.constant 0 : i32
    %c0_i32_2 = arith.constant 0 : i32
    return %c0_i32, %c0_i32_0, %c0_i32_1 : i32, i32, i32
  }
  func.func @transform_2(%arg0: i32) -> (i32, i32, i32) {
    %c0_i32 = arith.constant 0 : i32
    %c0_i32_0 = arith.constant 0 : i32
    %c0_i32_1 = arith.constant 0 : i32
    %c0_i32_2 = arith.constant 0 : i32
    return %c0_i32, %c0_i32_0, %c0_i32_1 : i32, i32, i32
  }
  func.func @transform_3(%arg0: i32) -> (i32, i32, i32) {
    %c0_i32 = arith.constant 0 : i32
    %c0_i32_0 = arith.constant 0 : i32
    %c0_i32_1 = arith.constant 0 : i32
    %c0_i32_2 = arith.constant 0 : i32
    return %c0_i32, %c0_i32_0, %c0_i32_1 : i32, i32, i32
  }
  func.func @transform_4(%arg0: i32) -> (i32, i32) {
    %c0_i32 = arith.constant 0 : i32
    %c0_i32_0 = arith.constant 0 : i32
    %c0_i32_1 = arith.constant 0 : i32
    return %c0_i32, %c0_i32_0 : i32, i32
  }
  func.func @transform_5(%arg0: i32) -> (i32, i32) {
    %c0_i32 = arith.constant 0 : i32
    %c0_i32_0 = arith.constant 0 : i32
    %c0_i32_1 = arith.constant 0 : i32
    return %c0_i32, %c0_i32_0 : i32, i32
  }
  func.func @transform_6(%arg0: i32) -> (i32, i32) {
    %c0_i32 = arith.constant 0 : i32
    %c0_i32_0 = arith.constant 0 : i32
    %c0_i32_1 = arith.constant 0 : i32
    return %c0_i32, %c0_i32_0 : i32, i32
  }
  func.func @transform_7(%arg0: i32) -> (i32, i32) {
    %c0_i32 = arith.constant 0 : i32
    %c0_i32_0 = arith.constant 0 : i32
    %c0_i32_1 = arith.constant 0 : i32
    return %c0_i32, %c0_i32_0 : i32, i32
  }
  func.func @transform_8(%arg0: i32) -> (i32, i32) {
    %c0_i32 = arith.constant 0 : i32
    %c0_i32_0 = arith.constant 0 : i32
    %c0_i32_1 = arith.constant 0 : i32
    return %c0_i32, %c0_i32_0 : i32, i32
  }
  func.func @transform_9(%arg0: i32) -> (i32, i32) {
    %c0_i32 = arith.constant 0 : i32
    %c0_i32_0 = arith.constant 0 : i32
    %c0_i32_1 = arith.constant 0 : i32
    return %c0_i32, %c0_i32_0 : i32, i32
  }
  func.func @transform_10(%arg0: i32) -> (i32, i32) {
    %c0_i32 = arith.constant 0 : i32
    %c0_i32_0 = arith.constant 0 : i32
    %c0_i32_1 = arith.constant 0 : i32
    return %c0_i32, %c0_i32_0 : i32, i32
  }
  func.func @transform_11(%arg0: i32) -> (i32, i32) {
    %c0_i32 = arith.constant 0 : i32
    %c0_i32_0 = arith.constant 0 : i32
    %c0_i32_1 = arith.constant 0 : i32
    return %c0_i32, %c0_i32_0 : i32, i32
  }
  func.func @transform_12(%arg0: i32) -> (i32, i32) {
    %c0_i32 = arith.constant 0 : i32
    %c0_i32_0 = arith.constant 0 : i32
    %c0_i32_1 = arith.constant 0 : i32
    return %c0_i32, %c0_i32_0 : i32, i32
  }
  func.func @transform_13(%arg0: i32) -> (i32, i32) {
    %c0_i32 = arith.constant 0 : i32
    %c0_i32_0 = arith.constant 0 : i32
    %c0_i32_1 = arith.constant 0 : i32
    return %c0_i32, %c0_i32_0 : i32, i32
  }
  func.func @transform_14(%arg0: i32) -> (i32, i32) {
    %c0_i32 = arith.constant 0 : i32
    %c0_i32_0 = arith.constant 0 : i32
    %c0_i32_1 = arith.constant 0 : i32
    return %c0_i32, %c0_i32_0 : i32, i32
  }
  func.func @transform_15(%arg0: i32) -> (i32, i32) {
    %c0_i32 = arith.constant 0 : i32
    %c0_i32_0 = arith.constant 0 : i32
    %c0_i32_1 = arith.constant 0 : i32
    return %c0_i32, %c0_i32_0 : i32, i32
  }
  func.func @transform_16(%arg0: i32) -> (i32, i32) {
    %c0_i32 = arith.constant 0 : i32
    %c0_i32_0 = arith.constant 0 : i32
    %c0_i32_1 = arith.constant 0 : i32
    return %c0_i32, %c0_i32_0 : i32, i32
  }
  func.func @transform_17(%arg0: i32) -> (i32, i32) {
    %c0_i32 = arith.constant 0 : i32
    %c0_i32_0 = arith.constant 0 : i32
    %c0_i32_1 = arith.constant 0 : i32
    return %c0_i32, %c0_i32_0 : i32, i32
  }
  func.func @transform_18(%arg0: i32) -> (i32, i32) {
    %c0_i32 = arith.constant 0 : i32
    %c0_i32_0 = arith.constant 0 : i32
    %c0_i32_1 = arith.constant 0 : i32
    return %c0_i32, %c0_i32_0 : i32, i32
  }
  func.func @transform_19(%arg0: i32) -> (i32, i32) {
    %c0_i32 = arith.constant 0 : i32
    %c0_i32_0 = arith.constant 0 : i32
    %c0_i32_1 = arith.constant 0 : i32
    return %c0_i32, %c0_i32_0 : i32, i32
  }
  func.func @transform_20(%arg0: i32) -> (i32, i32, i32) {
    %c0_i32 = arith.constant 0 : i32
    %c0_i32_0 = arith.constant 0 : i32
    %c0_i32_1 = arith.constant 0 : i32
    %c0_i32_2 = arith.constant 0 : i32
    return %c0_i32, %c0_i32_0, %c0_i32_1 : i32, i32, i32
  }
  func.func @transform_21(%arg0: i32) -> (i32, i32) {
    %c0_i32 = arith.constant 0 : i32
    %c0_i32_0 = arith.constant 0 : i32
    %c0_i32_1 = arith.constant 0 : i32
    return %c0_i32, %c0_i32_0 : i32, i32
  }
  func.func @transform_22(%arg0: i32) -> (i32, i32) {
    %c0_i32 = arith.constant 0 : i32
    %c0_i32_0 = arith.constant 0 : i32
    %c0_i32_1 = arith.constant 0 : i32
    return %c0_i32, %c0_i32_0 : i32, i32
  }
  func.func @transform_23(%arg0: i32) -> (i32, i32) {
    %c0_i32 = arith.constant 0 : i32
    %c0_i32_0 = arith.constant 0 : i32
    %c0_i32_1 = arith.constant 0 : i32
    return %c0_i32, %c0_i32_0 : i32, i32
  }
  func.func @transform_24(%arg0: i32) -> (i32, i32) {
    %c0_i32 = arith.constant 0 : i32
    %c0_i32_0 = arith.constant 0 : i32
    return %arg0, %c0_i32 : i32, i32
  }
}

</mosaic_0001>

<llo_original>
// kernel: mnist_encoder_forward.1
$region0: #{mnist_encoder_forward.1}
  #allocation0 [shape = 'u32[]', space=smem, size = 0x4, offset = 0x4, fixed_abs, tag = 'smem constant byte address 0x4 - core index']
  #allocation1 [shape = 'u32[144,128]{1,0:T(1,128)}', space=vmem, size = 0x12000, scoped, tag = 'internal scratch']
  #allocation2 [shape = 'f32[448,128]{1,0:T(8,128)}', space=vmem, size = 0x38000, scoped, tag = 'scratch operand']
  %s0 = inlined_call_operand.vmem [shape: bf16[896,28], index: 0, kind: input, shape index: {}]
  %s1 = inlined_call_operand.vmem [shape: f32[2,448,1], index: 1, kind: input, shape index: {}]
  %s2 = inlined_call_operand.vmem [shape: f32[2,224,1], index: 2, kind: input, shape index: {}]
  %s3 = inlined_call_operand.vmem [shape: f32[2,112,1], index: 3, kind: input, shape index: {}]
  %s4 = inlined_call_operand.vmem [shape: bf16[28,384], index: 4, kind: input, shape index: {}]
  %s5 = inlined_call_operand.vmem [shape: f32[1,128], index: 5, kind: input, shape index: {}]
  %s6 = inlined_call_operand.vmem [shape: bf16[128,384], index: 6, kind: input, shape index: {}]
  %s7 = inlined_call_operand.vmem [shape: f32[1,128], index: 7, kind: input, shape index: {}]
  %s8 = inlined_call_operand.vmem [shape: bf16[128,384], index: 8, kind: input, shape index: {}]
  %s9 = inlined_call_operand.vmem [shape: f32[1,128], index: 9, kind: input, shape index: {}]
  %s10 = inlined_call_operand.vmem [shape: bf16[128,384], index: 10, kind: input, shape index: {}]
  %s11 = inlined_call_operand.vmem [shape: f32[1,128], index: 11, kind: input, shape index: {}]
  %s12 = inlined_call_operand.vmem [shape: bf16[128,384], index: 12, kind: input, shape index: {}]
  %s13 = inlined_call_operand.vmem [shape: f32[1,128], index: 13, kind: input, shape index: {}]
  %s14 = inlined_call_operand.vmem [shape: bf16[128,384], index: 14, kind: input, shape index: {}]
  %s15 = inlined_call_operand.vmem [shape: f32[1,128], index: 15, kind: input, shape index: {}]
  %s16 = inlined_call_operand.vmem [shape: bf16[128,128], index: 16, kind: input, shape index: {}]
  %s17 = inlined_call_operand.vmem [shape: bf16[128,128], index: 17, kind: input, shape index: {}]
  %s18 = inlined_call_operand.vmem [shape: bf16[64,112], index: 18, kind: input, shape index: {}]
  %s19 = inlined_call_operand.vmem [shape: bf16[128,64], index: 19, kind: input, shape index: {}]
  %s20 = inlined_call_operand.vmem [shape: bf16[4,64,32], index: 20, kind: input, shape index: {}]
  %s21 = inlined_call_operand.vmem [shape: f32[1,32], index: 21, kind: input, shape index: {}]
  %s22 = inlined_call_operand.vmem [shape: bf16[32,2], index: 22, kind: input, shape index: {}]
  %s23 = inlined_call_operand.vmem [shape: f32[1,2], index: 23, kind: input, shape index: {}]
  %s24 = inlined_call_operand.vmem [shape: f32[32,2], index: 24, kind: output, shape index: {}]
  %s25 = sld [smem:[#allocation0]]
  $region129: #{mnist_encoder_forward.1} parent=0
    _
  %s27 = ssub.s32 1, %s25
  %s28 = scalar_select 0, %s27, %s25
  loop: start=0, step=1, limit=4
  $region2: #{mnist_encoder_forward.1} parent=0 // loop_pre_header
    _
  $region3: #{mnist_encoder_forward.1} parent=0 // loop_header
    %s30 = sphi 0, %s34
    %p31 = scmp.ge.s32.totalorder %s30, 4
    %s40 = sphi 0, %s42
    %s43 = sphi 0, %s40
    %s44 = sphi 0, %s43
    %s60 = sphi 0, %s44
    %s64 = sphi 0, %s64
    %s66 = sphi 0, %s64
    %s67 = sphi 0, %s66
    %s81 = sphi 0, %s67
    %s85 = sphi 0, %s85
    %s87 = sphi 0, %s85
    %s88 = sphi 0, %s87
    %s102 = sphi 0, %s88
    %s106 = sphi 0, %s106
    %s108 = sphi 0, %s106
    %s109 = sphi 0, %s108
    %s123 = sphi 0, %s109
    %s127 = sphi 0, %s127
    %s129 = sphi 0, %s127
    %s130 = sphi 0, %s129
    %s144 = sphi 0, %s130
    %s148 = sphi 0, %s148
    %s150 = sphi 0, %s148
    %s151 = sphi 0, %s150
    %s165 = sphi 0, %s151
    %s169 = sphi 0, %s169
    %s171 = sphi 0, %s169
    %s172 = sphi 0, %s171
    %s186 = sphi 0, %s172
    %s190 = sphi 0, %s190
    %s192 = sphi 0, %s190
    %s193 = sphi 0, %s192
    %s207 = sphi 0, %s193
    %s211 = sphi 0, %s211
    %s213 = sphi 0, %s211
    %s214 = sphi 0, %s213
    %s228 = sphi 0, %s214
    %s232 = sphi 0, %s232
    %s234 = sphi 0, %s232
    %s235 = sphi 0, %s234
    %s249 = sphi 0, %s235
    %s253 = sphi 0, %s253
    %s255 = sphi 0, %s253
    %s256 = sphi 0, %s255
    %s270 = sphi 0, %s256
    %s274 = sphi 0, %s274
    %s276 = sphi 0, %s274
    %s277 = sphi 0, %s276
    %s291 = sphi 0, %s277
    %s295 = sphi 0, %s295
    %s297 = sphi 0, %s295
    %s298 = sphi 0, %s297
    %s312 = sphi 0, %s298
    %s316 = sphi 0, %s316
    %s318 = sphi 0, %s316
    %s319 = sphi 0, %s318
    %s333 = sphi 0, %s319
    %s337 = sphi 0, %s337
    %s339 = sphi 0, %s337
    %s340 = sphi 0, %s339
    %s354 = sphi 0, %s340
    %s358 = sphi 0, %s358
    %s360 = sphi 0, %s358
    %s361 = sphi 0, %s360
    %s375 = sphi 0, %s361
    %s379 = sphi 0, %s379
    %s381 = sphi 0, %s379
    %s382 = sphi 0, %s381
    %s396 = sphi 0, %s382
    %s400 = sphi 0, %s400
    %s402 = sphi 0, %s400
    %s403 = sphi 0, %s402
    %s417 = sphi 0, %s403
    %s421 = sphi 0, %s421
    %s423 = sphi 0, %s421
    %s424 = sphi 0, %s423
    %s438 = sphi 0, %s424
    %s442 = sphi 0, %s442
    %s444 = sphi 0, %s442
    %s445 = sphi 0, %s444
    %s459 = sphi 0, %s445
    %s463 = sphi 0, %s463
    %s465 = sphi 0, %s463
    %s466 = sphi 0, %s465
    %s480 = sphi 0, %s466
    %s484 = sphi 0, %s484
    %s486 = sphi 0, %s484
    %s487 = sphi 0, %s486
    %s501 = sphi 0, %s487
    %s505 = sphi 0, %s505
    %s507 = sphi 0, %s505
    %s508 = sphi 0, %s507
    %s522 = sphi 0, %s508
    %s526 = sphi 0, %s526
    %s528 = sphi 0, %s526
    %s529 = sphi 0, %s528
    %s543 = sphi 0, %s529
    %s549 = sphi 0, %s551
    %s552 = sphi 0, %s549
    %s553 = sphi 0, %s552
    %s569 = sphi 0, %s553
  $region4: #{mnist_encoder_forward.1} parent=0 // loop_header_branch
    %33 = sbr.rel (%p31) target = $region8
  $region5: #{mnist_encoder_forward.1} parent=0 // loop_body
    %s35 = ssub.s32 %s30, 1
    %s36 = ssub.s32 %s30, 2
    %s37 = sadd.s32 %s30, 1
    %s38 = ssub.s32 %s30, %s37
    %p39 = scmp.eq.s32.totalorder %s38, 0
    %s41 = sadd.s32 %s40, 1
    %s42 = scalar_select %p39, %s40, %s41
    %p45 = pneg %p39
    %p46 = scmp.eq.s32.totalorder %s30, 1
    %p47 = por %p45, %p46
    %p48 = scmp.ne.s32.totalorder %s40, %s43
    %p49 = scmp.eq.s32.totalorder %s30, 0
    %p50 = por %p48, %p49
    %p51 = scmp.ne.s32.totalorder %s40, %s43
    %p52 = scmp.eq.s32.totalorder %s35, 1
    %p53 = por %p51, %p52
    %p54 = scmp.ne.s32.totalorder %s43, %s44
    %p55 = scmp.eq.s32.totalorder %s35, 0
    %p56 = por %p54, %p55
    %p57 = scmp.ne.s32.totalorder %s43, %s44
    %p58 = scmp.eq.s32.totalorder %s36, 1
    %p59 = por %p57, %p58
    %p61 = scmp.ne.s32.totalorder %s44, %s60
    %p62 = scmp.eq.s32.totalorder %s36, 0
    %p63 = por %p61, %p62
    %s65 = sadd.s32 %s64, 1
    %p68 = scmp.eq.s32.totalorder %s30, 1
    %p69 = scmp.ne.s32.totalorder %s64, %s66
    %p70 = scmp.eq.s32.totalorder %s30, 0
    %p71 = por %p69, %p70
    %p72 = scmp.ne.s32.totalorder %s64, %s66
    %p73 = scmp.eq.s32.totalorder %s35, 1
    %p74 = por %p72, %p73
    %p75 = scmp.ne.s32.totalorder %s66, %s67
    %p76 = scmp.eq.s32.totalorder %s35, 0
    %p77 = por %p75, %p76
    %p78 = scmp.ne.s32.totalorder %s66, %s67
    %p79 = scmp.eq.s32.totalorder %s36, 1
    %p80 = por %p78, %p79
    %p82 = scmp.ne.s32.totalorder %s67, %s81
    %p83 = scmp.eq.s32.totalorder %s36, 0
    %p84 = por %p82, %p83
    %s86 = sadd.s32 %s85, 1
    %p89 = scmp.eq.s32.totalorder %s30, 1
    %p90 = scmp.ne.s32.totalorder %s85, %s87
    %p91 = scmp.eq.s32.totalorder %s30, 0
    %p92 = por %p90, %p91
    %p93 = scmp.ne.s32.totalorder %s85, %s87
    %p94 = scmp.eq.s32.totalorder %s35, 1
    %p95 = por %p93, %p94
    %p96 = scmp.ne.s32.totalorder %s87, %s88
    %p97 = scmp.eq.s32.totalorder %s35, 0
    %p98 = por %p96, %p97
    %p99 = scmp.ne.s32.totalorder %s87, %s88
    %p100 = scmp.eq.s32.totalorder %s36, 1
    %p101 = por %p99, %p100
    %p103 = scmp.ne.s32.totalorder %s88, %s102
    %p104 = scmp.eq.s32.totalorder %s36, 0
    %p105 = por %p103, %p104
    %s107 = sadd.s32 %s106, 1
    %p110 = scmp.eq.s32.totalorder %s30, 1
    %p111 = scmp.ne.s32.totalorder %s106, %s108
    %p112 = scmp.eq.s32.totalorder %s30, 0
    %p113 = por %p111, %p112
    %p114 = scmp.ne.s32.totalorder %s106, %s108
    %p115 = scmp.eq.s32.totalorder %s35, 1
    %p116 = por %p114, %p115
    %p117 = scmp.ne.s32.totalorder %s108, %s109
    %p118 = scmp.eq.s32.totalorder %s35, 0
    %p119 = por %p117, %p118
    %p120 = scmp.ne.s32.totalorder %s108, %s109
    %p121 = scmp.eq.s32.totalorder %s36, 1
    %p122 = por %p120, %p121
    %p124 = scmp.ne.s32.totalorder %s109, %s123
    %p125 = scmp.eq.s32.totalorder %s36, 0
    %p126 = por %p124, %p125
    %s128 = sadd.s32 %s127, 1
    %p131 = scmp.eq.s32.totalorder %s30, 1
    %p132 = scmp.ne.s32.totalorder %s127, %s129
    %p133 = scmp.eq.s32.totalorder %s30, 0
    %p134 = por %p132, %p133
    %p135 = scmp.ne.s32.totalorder %s127, %s129
    %p136 = scmp.eq.s32.totalorder %s35, 1
    %p137 = por %p135, %p136
    %p138 = scmp.ne.s32.totalorder %s129, %s130
    %p139 = scmp.eq.s32.totalorder %s35, 0
    %p140 = por %p138, %p139
    %p141 = scmp.ne.s32.totalorder %s129, %s130
    %p142 = scmp.eq.s32.totalorder %s36, 1
    %p143 = por %p141, %p142
    %p145 = scmp.ne.s32.totalorder %s130, %s144
    %p146 = scmp.eq.s32.totalorder %s36, 0
    %p147 = por %p145, %p146
    %s149 = sadd.s32 %s148, 1
    %p152 = scmp.eq.s32.totalorder %s30, 1
    %p153 = scmp.ne.s32.totalorder %s148, %s150
    %p154 = scmp.eq.s32.totalorder %s30, 0
    %p155 = por %p153, %p154
    %p156 = scmp.ne.s32.totalorder %s148, %s150
    %p157 = scmp.eq.s32.totalorder %s35, 1
    %p158 = por %p156, %p157
    %p159 = scmp.ne.s32.totalorder %s150, %s151
    %p160 = scmp.eq.s32.totalorder %s35, 0
    %p161 = por %p159, %p160
    %p162 = scmp.ne.s32.totalorder %s150, %s151
    %p163 = scmp.eq.s32.totalorder %s36, 1
    %p164 = por %p162, %p163
    %p166 = scmp.ne.s32.totalorder %s151, %s165
    %p167 = scmp.eq.s32.totalorder %s36, 0
    %p168 = por %p166, %p167
    %s170 = sadd.s32 %s169, 1
    %p173 = scmp.eq.s32.totalorder %s30, 1
    %p174 = scmp.ne.s32.totalorder %s169, %s171
    %p175 = scmp.eq.s32.totalorder %s30, 0
    %p176 = por %p174, %p175
    %p177 = scmp.ne.s32.totalorder %s169, %s171
    %p178 = scmp.eq.s32.totalorder %s35, 1
    %p179 = por %p177, %p178
    %p180 = scmp.ne.s32.totalorder %s171, %s172
    %p181 = scmp.eq.s32.totalorder %s35, 0
    %p182 = por %p180, %p181
    %p183 = scmp.ne.s32.totalorder %s171, %s172
    %p184 = scmp.eq.s32.totalorder %s36, 1
    %p185 = por %p183, %p184
    %p187 = scmp.ne.s32.totalorder %s172, %s186
    %p188 = scmp.eq.s32.totalorder %s36, 0
    %p189 = por %p187, %p188
    %s191 = sadd.s32 %s190, 1
    %p194 = scmp.eq.s32.totalorder %s30, 1
    %p195 = scmp.ne.s32.totalorder %s190, %s192
    %p196 = scmp.eq.s32.totalorder %s30, 0
    %p197 = por %p195, %p196
    %p198 = scmp.ne.s32.totalorder %s190, %s192
    %p199 = scmp.eq.s32.totalorder %s35, 1
    %p200 = por %p198, %p199
    %p201 = scmp.ne.s32.totalorder %s192, %s193
    %p202 = scmp.eq.s32.totalorder %s35, 0
    %p203 = por %p201, %p202
    %p204 = scmp.ne.s32.totalorder %s192, %s193
    %p205 = scmp.eq.s32.totalorder %s36, 1
    %p206 = por %p204, %p205
    %p208 = scmp.ne.s32.totalorder %s193, %s207
    %p209 = scmp.eq.s32.totalorder %s36, 0
    %p210 = por %p208, %p209
    %s212 = sadd.s32 %s211, 1
    %p215 = scmp.eq.s32.totalorder %s30, 1
    %p216 = scmp.ne.s32.totalorder %s211, %s213
    %p217 = scmp.eq.s32.totalorder %s30, 0
    %p218 = por %p216, %p217
    %p219 = scmp.ne.s32.totalorder %s211, %s213
    %p220 = scmp.eq.s32.totalorder %s35, 1
    %p221 = por %p219, %p220
    %p222 = scmp.ne.s32.totalorder %s213, %s214
    %p223 = scmp.eq.s32.totalorder %s35, 0
    %p224 = por %p222, %p223
    %p225 = scmp.ne.s32.totalorder %s213, %s214
    %p226 = scmp.eq.s32.totalorder %s36, 1
    %p227 = por %p225, %p226
    %p229 = scmp.ne.s32.totalorder %s214, %s228
    %p230 = scmp.eq.s32.totalorder %s36, 0
    %p231 = por %p229, %p230
    %s233 = sadd.s32 %s232, 1
    %p236 = scmp.eq.s32.totalorder %s30, 1
    %p237 = scmp.ne.s32.totalorder %s232, %s234
    %p238 = scmp.eq.s32.totalorder %s30, 0
    %p239 = por %p237, %p238
    %p240 = scmp.ne.s32.totalorder %s232, %s234
    %p241 = scmp.eq.s32.totalorder %s35, 1
    %p242 = por %p240, %p241
    %p243 = scmp.ne.s32.totalorder %s234, %s235
    %p244 = scmp.eq.s32.totalorder %s35, 0
    %p245 = por %p243, %p244
    %p246 = scmp.ne.s32.totalorder %s234, %s235
    %p247 = scmp.eq.s32.totalorder %s36, 1
    %p248 = por %p246, %p247
    %p250 = scmp.ne.s32.totalorder %s235, %s249
    %p251 = scmp.eq.s32.totalorder %s36, 0
    %p252 = por %p250, %p251
    %s254 = sadd.s32 %s253, 1
    %p257 = scmp.eq.s32.totalorder %s30, 1
    %p258 = scmp.ne.s32.totalorder %s253, %s255
    %p259 = scmp.eq.s32.totalorder %s30, 0
    %p260 = por %p258, %p259
    %p261 = scmp.ne.s32.totalorder %s253, %s255
    %p262 = scmp.eq.s32.totalorder %s35, 1
    %p263 = por %p261, %p262
    %p264 = scmp.ne.s32.totalorder %s255, %s256
    %p265 = scmp.eq.s32.totalorder %s35, 0
    %p266 = por %p264, %p265
    %p267 = scmp.ne.s32.totalorder %s255, %s256
    %p268 = scmp.eq.s32.totalorder %s36, 1
    %p269 = por %p267, %p268
    %p271 = scmp.ne.s32.totalorder %s256, %s270
    %p272 = scmp.eq.s32.totalorder %s36, 0
    %p273 = por %p271, %p272
    %s275 = sadd.s32 %s274, 1
    %p278 = scmp.eq.s32.totalorder %s30, 1
    %p279 = scmp.ne.s32.totalorder %s274, %s276
    %p280 = scmp.eq.s32.totalorder %s30, 0
    %p281 = por %p279, %p280
    %p282 = scmp.ne.s32.totalorder %s274, %s276
    %p283 = scmp.eq.s32.totalorder %s35, 1
    %p284 = por %p282, %p283
    %p285 = scmp.ne.s32.totalorder %s276, %s277
    %p286 = scmp.eq.s32.totalorder %s35, 0
    %p287 = por %p285, %p286
    %p288 = scmp.ne.s32.totalorder %s276, %s277
    %p289 = scmp.eq.s32.totalorder %s36, 1
    %p290 = por %p288, %p289
    %p292 = scmp.ne.s32.totalorder %s277, %s291
    %p293 = scmp.eq.s32.totalorder %s36, 0
    %p294 = por %p292, %p293
    %s296 = sadd.s32 %s295, 1
    %p299 = scmp.eq.s32.totalorder %s30, 1
    %p300 = scmp.ne.s32.totalorder %s295, %s297
    %p301 = scmp.eq.s32.totalorder %s30, 0
    %p302 = por %p300, %p301
    %p303 = scmp.ne.s32.totalorder %s295, %s297
    %p304 = scmp.eq.s32.totalorder %s35, 1
    %p305 = por %p303, %p304
    %p306 = scmp.ne.s32.totalorder %s297, %s298
    %p307 = scmp.eq.s32.totalorder %s35, 0
    %p308 = por %p306, %p307
    %p309 = scmp.ne.s32.totalorder %s297, %s298
    %p310 = scmp.eq.s32.totalorder %s36, 1
    %p311 = por %p309, %p310
    %p313 = scmp.ne.s32.totalorder %s298, %s312
    %p314 = scmp.eq.s32.totalorder %s36, 0
    %p315 = por %p313, %p314
    %s317 = sadd.s32 %s316, 1
    %p320 = scmp.eq.s32.totalorder %s30, 1
    %p321 = scmp.ne.s32.totalorder %s316, %s318
    %p322 = scmp.eq.s32.totalorder %s30, 0
    %p323 = por %p321, %p322
    %p324 = scmp.ne.s32.totalorder %s316, %s318
    %p325 = scmp.eq.s32.totalorder %s35, 1
    %p326 = por %p324, %p325
    %p327 = scmp.ne.s32.totalorder %s318, %s319
    %p328 = scmp.eq.s32.totalorder %s35, 0
    %p329 = por %p327, %p328
    %p330 = scmp.ne.s32.totalorder %s318, %s319
    %p331 = scmp.eq.s32.totalorder %s36, 1
    %p332 = por %p330, %p331
    %p334 = scmp.ne.s32.totalorder %s319, %s333
    %p335 = scmp.eq.s32.totalorder %s36, 0
    %p336 = por %p334, %p335
    %s338 = sadd.s32 %s337, 1
    %p341 = scmp.eq.s32.totalorder %s30, 1
    %p342 = scmp.ne.s32.totalorder %s337, %s339
    %p343 = scmp.eq.s32.totalorder %s30, 0
    %p344 = por %p342, %p343
    %p345 = scmp.ne.s32.totalorder %s337, %s339
    %p346 = scmp.eq.s32.totalorder %s35, 1
    %p347 = por %p345, %p346
    %p348 = scmp.ne.s32.totalorder %s339, %s340
    %p349 = scmp.eq.s32.totalorder %s35, 0
    %p350 = por %p348, %p349
    %p351 = scmp.ne.s32.totalorder %s339, %s340
    %p352 = scmp.eq.s32.totalorder %s36, 1
    %p353 = por %p351, %p352
    %p355 = scmp.ne.s32.totalorder %s340, %s354
    %p356 = scmp.eq.s32.totalorder %s36, 0
    %p357 = por %p355, %p356
    %s359 = sadd.s32 %s358, 1
    %p362 = scmp.eq.s32.totalorder %s30, 1
    %p363 = scmp.ne.s32.totalorder %s358, %s360
    %p364 = scmp.eq.s32.totalorder %s30, 0
    %p365 = por %p363, %p364
    %p366 = scmp.ne.s32.totalorder %s358, %s360
    %p367 = scmp.eq.s32.totalorder %s35, 1
    %p368 = por %p366, %p367
    %p369 = scmp.ne.s32.totalorder %s360, %s361
    %p370 = scmp.eq.s32.totalorder %s35, 0
    %p371 = por %p369, %p370
    %p372 = scmp.ne.s32.totalorder %s360, %s361
    %p373 = scmp.eq.s32.totalorder %s36, 1
    %p374 = por %p372, %p373
    %p376 = scmp.ne.s32.totalorder %s361, %s375
    %p377 = scmp.eq.s32.totalorder %s36, 0
    %p378 = por %p376, %p377
    %s380 = sadd.s32 %s379, 1
    %p383 = scmp.eq.s32.totalorder %s30, 1
    %p384 = scmp.ne.s32.totalorder %s379, %s381
    %p385 = scmp.eq.s32.totalorder %s30, 0
    %p386 = por %p384, %p385
    %p387 = scmp.ne.s32.totalorder %s379, %s381
    %p388 = scmp.eq.s32.totalorder %s35, 1
    %p389 = por %p387, %p388
    %p390 = scmp.ne.s32.totalorder %s381, %s382
    %p391 = scmp.eq.s32.totalorder %s35, 0
    %p392 = por %p390, %p391
    %p393 = scmp.ne.s32.totalorder %s381, %s382
    %p394 = scmp.eq.s32.totalorder %s36, 1
    %p395 = por %p393, %p394
    %p397 = scmp.ne.s32.totalorder %s382, %s396
    %p398 = scmp.eq.s32.totalorder %s36, 0
    %p399 = por %p397, %p398
    %s401 = sadd.s32 %s400, 1
    %p404 = scmp.eq.s32.totalorder %s30, 1
    %p405 = scmp.ne.s32.totalorder %s400, %s402
    %p406 = scmp.eq.s32.totalorder %s30, 0
    %p407 = por %p405, %p406
    %p408 = scmp.ne.s32.totalorder %s400, %s402
    %p409 = scmp.eq.s32.totalorder %s35, 1
    %p410 = por %p408, %p409
    %p411 = scmp.ne.s32.totalorder %s402, %s403
    %p412 = scmp.eq.s32.totalorder %s35, 0
    %p413 = por %p411, %p412
    %p414 = scmp.ne.s32.totalorder %s402, %s403
    %p415 = scmp.eq.s32.totalorder %s36, 1
    %p416 = por %p414, %p415
    %p418 = scmp.ne.s32.totalorder %s403, %s417
    %p419 = scmp.eq.s32.totalorder %s36, 0
    %p420 = por %p418, %p419
    %s422 = sadd.s32 %s421, 1
    %p425 = scmp.eq.s32.totalorder %s30, 1
    %p426 = scmp.ne.s32.totalorder %s421, %s423
    %p427 = scmp.eq.s32.totalorder %s30, 0
    %p428 = por %p426, %p427
    %p429 = scmp.ne.s32.totalorder %s421, %s423
    %p430 = scmp.eq.s32.totalorder %s35, 1
    %p431 = por %p429, %p430
    %p432 = scmp.ne.s32.totalorder %s423, %s424
    %p433 = scmp.eq.s32.totalorder %s35, 0
    %p434 = por %p432, %p433
    %p435 = scmp.ne.s32.totalorder %s423, %s424
    %p436 = scmp.eq.s32.totalorder %s36, 1
    %p437 = por %p435, %p436
    %p439 = scmp.ne.s32.totalorder %s424, %s438
    %p440 = scmp.eq.s32.totalorder %s36, 0
    %p441 = por %p439, %p440
    %s443 = sadd.s32 %s442, 1
    %p446 = scmp.eq.s32.totalorder %s30, 1
    %p447 = scmp.ne.s32.totalorder %s442, %s444
    %p448 = scmp.eq.s32.totalorder %s30, 0
    %p449 = por %p447, %p448
    %p450 = scmp.ne.s32.totalorder %s442, %s444
    %p451 = scmp.eq.s32.totalorder %s35, 1
    %p452 = por %p450, %p451
    %p453 = scmp.ne.s32.totalorder %s444, %s445
    %p454 = scmp.eq.s32.totalorder %s35, 0
    %p455 = por %p453, %p454
    %p456 = scmp.ne.s32.totalorder %s444, %s445
    %p457 = scmp.eq.s32.totalorder %s36, 1
    %p458 = por %p456, %p457
    %p460 = scmp.ne.s32.totalorder %s445, %s459
    %p461 = scmp.eq.s32.totalorder %s36, 0
    %p462 = por %p460, %p461
    %s464 = sadd.s32 %s463, 1
    %p467 = scmp.eq.s32.totalorder %s30, 1
    %p468 = scmp.ne.s32.totalorder %s463, %s465
    %p469 = scmp.eq.s32.totalorder %s30, 0
    %p470 = por %p468, %p469
    %p471 = scmp.ne.s32.totalorder %s463, %s465
    %p472 = scmp.eq.s32.totalorder %s35, 1
    %p473 = por %p471, %p472
    %p474 = scmp.ne.s32.totalorder %s465, %s466
    %p475 = scmp.eq.s32.totalorder %s35, 0
    %p476 = por %p474, %p475
    %p477 = scmp.ne.s32.totalorder %s465, %s466
    %p478 = scmp.eq.s32.totalorder %s36, 1
    %p479 = por %p477, %p478
    %p481 = scmp.ne.s32.totalorder %s466, %s480
    %p482 = scmp.eq.s32.totalorder %s36, 0
    %p483 = por %p481, %p482
    %s485 = sadd.s32 %s484, 1
    %p488 = scmp.eq.s32.totalorder %s30, 1
    %p489 = scmp.ne.s32.totalorder %s484, %s486
    %p490 = scmp.eq.s32.totalorder %s30, 0
    %p491 = por %p489, %p490
    %p492 = scmp.ne.s32.totalorder %s484, %s486
    %p493 = scmp.eq.s32.totalorder %s35, 1
    %p494 = por %p492, %p493
    %p495 = scmp.ne.s32.totalorder %s486, %s487
    %p496 = scmp.eq.s32.totalorder %s35, 0
    %p497 = por %p495, %p496
    %p498 = scmp.ne.s32.totalorder %s486, %s487
    %p499 = scmp.eq.s32.totalorder %s36, 1
    %p500 = por %p498, %p499
    %p502 = scmp.ne.s32.totalorder %s487, %s501
    %p503 = scmp.eq.s32.totalorder %s36, 0
    %p504 = por %p502, %p503
    %s506 = sadd.s32 %s505, 1
    %p509 = scmp.eq.s32.totalorder %s30, 1
    %p510 = scmp.ne.s32.totalorder %s505, %s507
    %p511 = scmp.eq.s32.totalorder %s30, 0
    %p512 = por %p510, %p511
    %p513 = scmp.ne.s32.totalorder %s505, %s507
    %p514 = scmp.eq.s32.totalorder %s35, 1
    %p515 = por %p513, %p514
    %p516 = scmp.ne.s32.totalorder %s507, %s508
    %p517 = scmp.eq.s32.totalorder %s35, 0
    %p518 = por %p516, %p517
    %p519 = scmp.ne.s32.totalorder %s507, %s508
    %p520 = scmp.eq.s32.totalorder %s36, 1
    %p521 = por %p519, %p520
    %p523 = scmp.ne.s32.totalorder %s508, %s522
    %p524 = scmp.eq.s32.totalorder %s36, 0
    %p525 = por %p523, %p524
    %s527 = sadd.s32 %s526, 1
    %p530 = scmp.eq.s32.totalorder %s30, 1
    %p531 = scmp.ne.s32.totalorder %s526, %s528
    %p532 = scmp.eq.s32.totalorder %s30, 0
    %p533 = por %p531, %p532
    %p534 = scmp.ne.s32.totalorder %s526, %s528
    %p535 = scmp.eq.s32.totalorder %s35, 1
    %p536 = por %p534, %p535
    %p537 = scmp.ne.s32.totalorder %s528, %s529
    %p538 = scmp.eq.s32.totalorder %s35, 0
    %p539 = por %p537, %p538
    %p540 = scmp.ne.s32.totalorder %s528, %s529
    %p541 = scmp.eq.s32.totalorder %s36, 1
    %p542 = por %p540, %p541
    %p544 = scmp.ne.s32.totalorder %s529, %s543
    %p545 = scmp.eq.s32.totalorder %s36, 0
    %p546 = por %p544, %p545
    %s547 = ssub.s32 %s30, %s37
    %p548 = scmp.eq.s32.totalorder %s547, 0
    %s550 = sadd.s32 %s549, 1
    %s551 = scalar_select %p548, %s549, %s550
    %p554 = pneg %p548
    %p555 = scmp.eq.s32.totalorder %s30, 1
    %p556 = por %p554, %p555
    %p557 = scmp.ne.s32.totalorder %s549, %s552
    %p558 = scmp.eq.s32.totalorder %s30, 0
    %p559 = por %p557, %p558
    %p560 = scmp.ne.s32.totalorder %s549, %s552
    %p561 = scmp.eq.s32.totalorder %s35, 1
    %p562 = por %p560, %p561
    %p563 = scmp.ne.s32.totalorder %s552, %s553
    %p564 = scmp.eq.s32.totalorder %s35, 0
    %p565 = por %p563, %p564
    %p566 = scmp.ne.s32.totalorder %s552, %s553
    %p567 = scmp.eq.s32.totalorder %s36, 1
    %p568 = por %p566, %p567
    %p570 = scmp.ne.s32.totalorder %s553, %s569
    %p571 = scmp.eq.s32.totalorder %s36, 0
    %p572 = por %p570, %p571
    %p573 = scmp.le.s32.totalorder 1, %s30
    %p574 = scmp.lt.s32.totalorder %s30, 3
    %p575 = pnand %p573, %p574
    %p576 = pneg %p575
    // Predicated region
    $region9: #{mnist_encoder_forward.1} parent=5 // pred_check
      _
    $region10: #{mnist_encoder_forward.1} parent=5 // pred_check_branch
      %578 = sbr.rel (%p575) target = $region12
    $region11: #{mnist_encoder_forward.1} parent=5 // pred_region
      %s579 = ssub.s32 %s30, 1
      // Predicated region
      $region13: #{mnist_encoder_forward.1} parent=11 // pred_check
        %p580 = pneg %p77
      $region14: #{mnist_encoder_forward.1} parent=11 // pred_check_branch
        %582 = sbr.rel (%p580) target = $region16
      $region15: #{mnist_encoder_forward.1} parent=11 // pred_region
        _
      $region16: #{mnist_encoder_forward.1} parent=11 // pred_fallthru
        _
      // Predicated region
      $region17: #{mnist_encoder_forward.1} parent=11 // pred_check
        %p583 = pneg %p98
      $region18: #{mnist_encoder_forward.1} parent=11 // pred_check_branch
        %585 = sbr.rel (%p583) target = $region20
      $region19: #{mnist_encoder_forward.1} parent=11 // pred_region
        _
      $region20: #{mnist_encoder_forward.1} parent=11 // pred_fallthru
        _
      // Predicated region
      $region21: #{mnist_encoder_forward.1} parent=11 // pred_check
        %p586 = pneg %p119
      $region22: #{mnist_encoder_forward.1} parent=11 // pred_check_branch
        %588 = sbr.rel (%p586) target = $region24
      $region23: #{mnist_encoder_forward.1} parent=11 // pred_region
        _
      $region24: #{mnist_encoder_forward.1} parent=11 // pred_fallthru
        _
      // Predicated region
      $region25: #{mnist_encoder_forward.1} parent=11 // pred_check
        %p589 = pneg %p140
      $region26: #{mnist_encoder_forward.1} parent=11 // pred_check_branch
        %591 = sbr.rel (%p589) target = $region28
      $region27: #{mnist_encoder_forward.1} parent=11 // pred_region
        _
      $region28: #{mnist_encoder_forward.1} parent=11 // pred_fallthru
        _
      // Predicated region
      $region29: #{mnist_encoder_forward.1} parent=11 // pred_check
        %p592 = pneg %p161
      $region30: #{mnist_encoder_forward.1} parent=11 // pred_check_branch
        %594 = sbr.rel (%p592) target = $region32
      $region31: #{mnist_encoder_forward.1} parent=11 // pred_region
        _
      $region32: #{mnist_encoder_forward.1} parent=11 // pred_fallthru
        _
      // Predicated region
      $region33: #{mnist_encoder_forward.1} parent=11 // pred_check
        %p595 = pneg %p182
      $region34: #{mnist_encoder_forward.1} parent=11 // pred_check_branch
        %597 = sbr.rel (%p595) target = $region36
      $region35: #{mnist_encoder_forward.1} parent=11 // pred_region
        _
      $region36: #{mnist_encoder_forward.1} parent=11 // pred_fallthru
        _
      // Predicated region
      $region37: #{mnist_encoder_forward.1} parent=11 // pred_check
        %p598 = pneg %p203
      $region38: #{mnist_encoder_forward.1} parent=11 // pred_check_branch
        %600 = sbr.rel (%p598) target = $region40
      $region39: #{mnist_encoder_forward.1} parent=11 // pred_region
        _
      $region40: #{mnist_encoder_forward.1} parent=11 // pred_fallthru
        _
      // Predicated region
      $region41: #{mnist_encoder_forward.1} parent=11 // pred_check
        %p601 = pneg %p224
      $region42: #{mnist_encoder_forward.1} parent=11 // pred_check_branch
        %603 = sbr.rel (%p601) target = $region44
      $region43: #{mnist_encoder_forward.1} parent=11 // pred_region
        _
      $region44: #{mnist_encoder_forward.1} parent=11 // pred_fallthru
        _
      // Predicated region
      $region45: #{mnist_encoder_forward.1} parent=11 // pred_check
        %p604 = pneg %p245
      $region46: #{mnist_encoder_forward.1} parent=11 // pred_check_branch
        %606 = sbr.rel (%p604) target = $region48
      $region47: #{mnist_encoder_forward.1} parent=11 // pred_region
        _
      $region48: #{mnist_encoder_forward.1} parent=11 // pred_fallthru
        _
      // Predicated region
      $region49: #{mnist_encoder_forward.1} parent=11 // pred_check
        %p607 = pneg %p266
      $region50: #{mnist_encoder_forward.1} parent=11 // pred_check_branch
        %609 = sbr.rel (%p607) target = $region52
      $region51: #{mnist_encoder_forward.1} parent=11 // pred_region
        _
      $region52: #{mnist_encoder_forward.1} parent=11 // pred_fallthru
        _
      // Predicated region
      $region53: #{mnist_encoder_forward.1} parent=11 // pred_check
        %p610 = pneg %p287
      $region54: #{mnist_encoder_forward.1} parent=11 // pred_check_branch
        %612 = sbr.rel (%p610) target = $region56
      $region55: #{mnist_encoder_forward.1} parent=11 // pred_region
        _
      $region56: #{mnist_encoder_forward.1} parent=11 // pred_fallthru
        _
      // Predicated region
      $region57: #{mnist_encoder_forward.1} parent=11 // pred_check
        %p613 = pneg %p308
      $region58: #{mnist_encoder_forward.1} parent=11 // pred_check_branch
        %615 = sbr.rel (%p613) target = $region60
      $region59: #{mnist_encoder_forward.1} parent=11 // pred_region
        _
      $region60: #{mnist_encoder_forward.1} parent=11 // pred_fallthru
        _
      // Predicated region
      $region61: #{mnist_encoder_forward.1} parent=11 // pred_check
        %p616 = pneg %p329
      $region62: #{mnist_encoder_forward.1} parent=11 // pred_check_branch
        %618 = sbr.rel (%p616) target = $region64
      $region63: #{mnist_encoder_forward.1} parent=11 // pred_region
        _
      $region64: #{mnist_encoder_forward.1} parent=11 // pred_fallthru
        _
      // Predicated region
      $region65: #{mnist_encoder_forward.1} parent=11 // pred_check
        %p619 = pneg %p350
      $region66: #{mnist_encoder_forward.1} parent=11 // pred_check_branch
        %621 = sbr.rel (%p619) target = $region68
      $region67: #{mnist_encoder_forward.1} parent=11 // pred_region
        _
      $region68: #{mnist_encoder_forward.1} parent=11 // pred_fallthru
        _
      // Predicated region
      $region69: #{mnist_encoder_forward.1} parent=11 // pred_check
        %p622 = pneg %p371
      $region70: #{mnist_encoder_forward.1} parent=11 // pred_check_branch
        %624 = sbr.rel (%p622) target = $region72
      $region71: #{mnist_encoder_forward.1} parent=11 // pred_region
        _
      $region72: #{mnist_encoder_forward.1} parent=11 // pred_fallthru
        _
      // Predicated region
      $region73: #{mnist_encoder_forward.1} parent=11 // pred_check
        %p625 = pneg %p392
      $region74: #{mnist_encoder_forward.1} parent=11 // pred_check_branch
        %627 = sbr.rel (%p625) target = $region76
      $region75: #{mnist_encoder_forward.1} parent=11 // pred_region
        _
      $region76: #{mnist_encoder_forward.1} parent=11 // pred_fallthru
        _
      // Predicated region
      $region77: #{mnist_encoder_forward.1} parent=11 // pred_check
        %p628 = pneg %p413
      $region78: #{mnist_encoder_forward.1} parent=11 // pred_check_branch
        %630 = sbr.rel (%p628) target = $region80
      $region79: #{mnist_encoder_forward.1} parent=11 // pred_region
        _
      $region80: #{mnist_encoder_forward.1} parent=11 // pred_fallthru
        _
      // Predicated region
      $region81: #{mnist_encoder_forward.1} parent=11 // pred_check
        %p631 = pneg %p434
      $region82: #{mnist_encoder_forward.1} parent=11 // pred_check_branch
        %633 = sbr.rel (%p631) target = $region84
      $region83: #{mnist_encoder_forward.1} parent=11 // pred_region
        _
      $region84: #{mnist_encoder_forward.1} parent=11 // pred_fallthru
        _
      // Predicated region
      $region85: #{mnist_encoder_forward.1} parent=11 // pred_check
        %p634 = pneg %p455
      $region86: #{mnist_encoder_forward.1} parent=11 // pred_check_branch
        %636 = sbr.rel (%p634) target = $region88
      $region87: #{mnist_encoder_forward.1} parent=11 // pred_region
        _
      $region88: #{mnist_encoder_forward.1} parent=11 // pred_fallthru
        _
      // Predicated region
      $region89: #{mnist_encoder_forward.1} parent=11 // pred_check
        %p637 = pneg %p476
      $region90: #{mnist_encoder_forward.1} parent=11 // pred_check_branch
        %639 = sbr.rel (%p637) target = $region92
      $region91: #{mnist_encoder_forward.1} parent=11 // pred_region
        _
      $region92: #{mnist_encoder_forward.1} parent=11 // pred_fallthru
        _
      // Predicated region
      $region93: #{mnist_encoder_forward.1} parent=11 // pred_check
        %p640 = pneg %p497
      $region94: #{mnist_encoder_forward.1} parent=11 // pred_check_branch
        %642 = sbr.rel (%p640) target = $region96
      $region95: #{mnist_encoder_forward.1} parent=11 // pred_region
        _
      $region96: #{mnist_encoder_forward.1} parent=11 // pred_fallthru
        _
      // Predicated region
      $region97: #{mnist_encoder_forward.1} parent=11 // pred_check
        %p643 = pneg %p518
      $region98: #{mnist_encoder_forward.1} parent=11 // pred_check_branch
        %645 = sbr.rel (%p643) target = $region100
      $region99: #{mnist_encoder_forward.1} parent=11 // pred_region
        _
      $region100: #{mnist_encoder_forward.1} parent=11 // pred_fallthru
        _
      // Predicated region
      $region101: #{mnist_encoder_forward.1} parent=11 // pred_check
        %p646 = pneg %p539
      $region102: #{mnist_encoder_forward.1} parent=11 // pred_check_branch
        %648 = sbr.rel (%p646) target = $region104
      $region103: #{mnist_encoder_forward.1} parent=11 // pred_region
        _
      $region104: #{mnist_encoder_forward.1} parent=11 // pred_fallthru
        _
    $region12: #{mnist_encoder_forward.1} parent=5 // pred_fallthru
      _
    %p649 = scmp.lt.s32.totalorder %s30, 2
    // Predicated region
    $region105: #{mnist_encoder_forward.1} parent=5 // pred_check
      %p650 = pneg %p649
    $region106: #{mnist_encoder_forward.1} parent=5 // pred_check_branch
      %652 = sbr.rel (%p650) target = $region108
    $region107: #{mnist_encoder_forward.1} parent=5 // pred_region
      // Predicated region
      $region109: #{mnist_encoder_forward.1} parent=107 // pred_check
        %p653 = pneg %p50
      $region110: #{mnist_encoder_forward.1} parent=107 // pred_check_branch
        %655 = sbr.rel (%p653) target = $region112
      $region111: #{mnist_encoder_forward.1} parent=107 // pred_region
        %s656 = smul.u32 56, %s30
        %p657 = scmp.lt.s32.totalorder %s656, 111
        %s658 = scalar_select %p657, %s656, 111
        %s659 = smul.addr %s658, 4
        %s660 = scalar_lea.vmem %s0, %s659
        %s661 = smul.u32 56, %s30
      $region112: #{mnist_encoder_forward.1} parent=107 // pred_fallthru
        _
    $region108: #{mnist_encoder_forward.1} parent=5 // pred_fallthru
      _
    %p662 = scmp.le.s32.totalorder 1, %s30
    %p663 = scmp.lt.s32.totalorder %s30, 3
    %p664 = pnand %p662, %p663
    %p665 = pneg %p664
    // Predicated region
    $region113: #{mnist_encoder_forward.1} parent=5 // pred_check
      _
    $region114: #{mnist_encoder_forward.1} parent=5 // pred_check_branch
      %667 = sbr.rel (%p664) target = $region116
    $region115: #{mnist_encoder_forward.1} parent=5 // pred_region
      %s668 = ssub.s32 %s30, 1
      %s669 = smul.u32 56, %s35
      %p670 = scmp.lt.s32.totalorder %s669, 111
      %s671 = scalar_select %p670, %s669, 111
      %s672 = smul.addr %s671, 4
      %s673 = scalar_lea.vmem %s0, %s672
      %p674 = pneg %p56
      %p675 = pneg %p53
      %p676 = pneg %p77
      %p677 = pneg %p74
      %p678 = pneg %p98
      %p679 = pneg %p95
      %p680 = pneg %p119
      %p681 = pneg %p116
      %p682 = pneg %p140
      %p683 = pneg %p137
      %p684 = pneg %p161
      %p685 = pneg %p158
      %p686 = pneg %p182
      %p687 = pneg %p179
      %p688 = pneg %p203
      %p689 = pneg %p200
      %p690 = pneg %p224
      %p691 = pneg %p221
      %p692 = pneg %p245
      %p693 = pneg %p242
      %p694 = pneg %p266
      %p695 = pneg %p263
      %p696 = pneg %p287
      %p697 = pneg %p284
      %p698 = pneg %p308
      %p699 = pneg %p305
      %p700 = pneg %p329
      %p701 = pneg %p326
      %p702 = pneg %p350
      %p703 = pneg %p347
      %p704 = pneg %p371
      %p705 = pneg %p368
      %p706 = pneg %p392
      %p707 = pneg %p389
      %p708 = pneg %p413
      %p709 = pneg %p410
      %p710 = pneg %p434
      %p711 = pneg %p431
      %p712 = pneg %p455
      %p713 = pneg %p452
      %p714 = pneg %p476
      %p715 = pneg %p473
      %p716 = pneg %p497
      %p717 = pneg %p494
      %p718 = pneg %p518
      %p719 = pneg %p515
      %p720 = pneg %p539
      %p721 = pneg %p536
      %p722 = pneg %p565
      %p723 = pneg %p562
      %s724 = smul.u32 2, %s35
      %p725 = scmp.lt.s32.totalorder %s724, 3
      %s726 = scalar_select %p725, %s724, 3
      %s727 = smul.addr %s726, 8
      %s728 = scalar_lea.vmem %s24, %s727
      %s729 = smul.u32 56, %s35
      %p730 = scmp.lt.s32.totalorder %s729, 111
      %s731 = scalar_select %p730, %s729, 111
      %s732 = smul.addr %s731, 4
      %s733 = scalar_lea.vmem %s0, %s732
      %s734 = smul.u32 56, %s35
      %s735 = smul.u32 2, %s35
      %p736 = scmp.lt.s32.totalorder %s735, 3
      %s737 = scalar_select %p736, %s735, 3
      %s738 = smul.addr %s737, 8
      %s739 = scalar_lea.vmem %s24, %s738
      %s740 = smul.u32 2, %s35
      %v742 = vld [vmem:[%s733] sm:$0xf]
      %v743 = vld [vmem:[%s733 + $0x4] sm:$0xf]
      %v744 = vld [vmem:[%s733 + $0x8] sm:$0xf]
      %v745 = vld [vmem:[%s733 + $0xc] sm:$0xf]
      %v746 = vld [vmem:[%s733 + $0x10] sm:$0xf]
      %v747 = vld [vmem:[%s733 + $0x14] sm:$0xf]
      %v748 = vld [vmem:[%s733 + $0x18] sm:$0xf]
      %v749 = vld [vmem:[%s733 + $0x1c] sm:$0xf]
      %v750 = vld [vmem:[%s733 + $0x20] sm:$0xf]
      %v751 = vld [vmem:[%s733 + $0x24] sm:$0xf]
      %v752 = vld [vmem:[%s733 + $0x28] sm:$0xf]
      %v753 = vld [vmem:[%s733 + $0x2c] sm:$0xf]
      %v754 = vld [vmem:[%s733 + $0x30] sm:$0xf]
      %v755 = vld [vmem:[%s733 + $0x34] sm:$0xf]
      %v756 = vld [vmem:[%s733 + $0x38] sm:$0xf]
      %v757 = vld [vmem:[%s733 + $0x3c] sm:$0xf]
      %v758 = vld [vmem:[%s733 + $0x40] sm:$0xf]
      %v759 = vld [vmem:[%s733 + $0x44] sm:$0xf]
      %v760 = vld [vmem:[%s733 + $0x48] sm:$0xf]
      %v761 = vld [vmem:[%s733 + $0x4c] sm:$0xf]
      %v762 = vld [vmem:[%s733 + $0x50] sm:$0xf]
      %v763 = vld [vmem:[%s733 + $0x54] sm:$0xf]
      %v764 = vld [vmem:[%s733 + $0x58] sm:$0xf]
      %v765 = vld [vmem:[%s733 + $0x5c] sm:$0xf]
      %v766 = vld [vmem:[%s733 + $0x60] sm:$0xf]
      %v767 = vld [vmem:[%s733 + $0x64] sm:$0xf]
      %v768 = vld [vmem:[%s733 + $0x68] sm:$0xf]
      %v769 = vld [vmem:[%s733 + $0x6c] sm:$0xf]
      %v770 = vld [vmem:[%s733 + $0x70] sm:$0xf]
      %v771 = vld [vmem:[%s733 + $0x74] sm:$0xf]
      %v772 = vld [vmem:[%s733 + $0x78] sm:$0xf]
      %v773 = vld [vmem:[%s733 + $0x7c] sm:$0xf]
      %v774 = vld [vmem:[%s733 + $0x80] sm:$0xf]
      %v775 = vld [vmem:[%s733 + $0x84] sm:$0xf]
      %v776 = vld [vmem:[%s733 + $0x88] sm:$0xf]
      %v777 = vld [vmem:[%s733 + $0x8c] sm:$0xf]
      %v778 = vld [vmem:[%s733 + $0x90] sm:$0xf]
      %v779 = vld [vmem:[%s733 + $0x94] sm:$0xf]
      %v780 = vld [vmem:[%s733 + $0x98] sm:$0xf]
      %v781 = vld [vmem:[%s733 + $0x9c] sm:$0xf]
      %v782 = vld [vmem:[%s733 + $0xa0] sm:$0xf]
      %v783 = vld [vmem:[%s733 + $0xa4] sm:$0xf]
      %v784 = vld [vmem:[%s733 + $0xa8] sm:$0xf]
      %v785 = vld [vmem:[%s733 + $0xac] sm:$0xf]
      %v786 = vld [vmem:[%s733 + $0xb0] sm:$0xf]
      %v787 = vld [vmem:[%s733 + $0xb4] sm:$0xf]
      %v788 = vld [vmem:[%s733 + $0xb8] sm:$0xf]
      %v789 = vld [vmem:[%s733 + $0xbc] sm:$0xf]
      %v790 = vld [vmem:[%s733 + $0xc0] sm:$0xf]
      %v791 = vld [vmem:[%s733 + $0xc4] sm:$0xf]
      %v792 = vld [vmem:[%s733 + $0xc8] sm:$0xf]
      %v793 = vld [vmem:[%s733 + $0xcc] sm:$0xf]
      %v794 = vld [vmem:[%s733 + $0xd0] sm:$0xf]
      %v795 = vld [vmem:[%s733 + $0xd4] sm:$0xf]
      %v796 = vld [vmem:[%s733 + $0xd8] sm:$0xf]
      %v797 = vld [vmem:[%s733 + $0xdc] sm:$0xf]
      %v798 = vld [vmem:[%s4] sm:$0xff]
      %v799 = vld [vmem:[%s4 + $0x8] sm:$0xf]
      %v800 = vld [vmem:[%s4 + $0xc] sm:$0xff]
      %v801 = vld [vmem:[%s4 + $0x14] sm:$0xf]
      %v802 = vld [vmem:[%s4 + $0x18] sm:$0xff]
      %v803 = vld [vmem:[%s4 + $0x20] sm:$0xf]
      %v804 = vld [vmem:[%s4 + $0x24] sm:$0x33]
      %v805 = vld [vmem:[%s4 + $0x2c] sm:$0x3]
      %v862 = vunpack.c.l.b16 %v742
      %v863 = vunpack.c.l.b16 %v743
      %v864 = vunpack.c.l.b16 %v744
      %v865 = vunpack.c.l.b16 %v745
      %v866 = vunpack.c.l.b16 %v746
      %v867 = vunpack.c.l.b16 %v747
      %v868 = vunpack.c.l.b16 %v748
      %v869 = vunpack.c.l.b16 %v749
      %v870 = vunpack.c.l.b16 %v750
      %v871 = vunpack.c.l.b16 %v751
      %v872 = vunpack.c.l.b16 %v752
      %v873 = vunpack.c.l.b16 %v753
      %v874 = vunpack.c.l.b16 %v754
      %v875 = vunpack.c.l.b16 %v755
      %v876 = vunpack.c.l.b16 %v756
      %v877 = vunpack.c.l.b16 %v757
      %v878 = vunpack.c.l.b16 %v758
      %v879 = vunpack.c.l.b16 %v759
      %v880 = vunpack.c.l.b16 %v760
      %v881 = vunpack.c.l.b16 %v761
      %v882 = vunpack.c.l.b16 %v762
      %v883 = vunpack.c.l.b16 %v763
      %v884 = vunpack.c.l.b16 %v764
      %v885 = vunpack.c.l.b16 %v765
      %v886 = vunpack.c.l.b16 %v766
      %v887 = vunpack.c.l.b16 %v767
      %v888 = vunpack.c.l.b16 %v768
      %v889 = vunpack.c.l.b16 %v769
      %v890 = vunpack.c.l.b16 %v770
      %v891 = vunpack.c.l.b16 %v771
      %v892 = vunpack.c.l.b16 %v772
      %v893 = vunpack.c.l.b16 %v773
      %v894 = vunpack.c.l.b16 %v774
      %v895 = vunpack.c.l.b16 %v775
      %v896 = vunpack.c.l.b16 %v776
      %v897 = vunpack.c.l.b16 %v777
      %v898 = vunpack.c.l.b16 %v778
      %v899 = vunpack.c.l.b16 %v779
      %v900 = vunpack.c.l.b16 %v780
      %v901 = vunpack.c.l.b16 %v781
      %v902 = vunpack.c.l.b16 %v782
      %v903 = vunpack.c.l.b16 %v783
      %v904 = vunpack.c.l.b16 %v784
      %v905 = vunpack.c.l.b16 %v785
      %v906 = vunpack.c.l.b16 %v786
      %v907 = vunpack.c.l.b16 %v787
      %v908 = vunpack.c.l.b16 %v788
      %v909 = vunpack.c.l.b16 %v789
      %v910 = vunpack.c.l.b16 %v790
      %v911 = vunpack.c.l.b16 %v791
      %v912 = vunpack.c.l.b16 %v792
      %v913 = vunpack.c.l.b16 %v793
      %v914 = vunpack.c.l.b16 %v794
      %v915 = vunpack.c.l.b16 %v795
      %v916 = vunpack.c.l.b16 %v796
      %v917 = vunpack.c.l.b16 %v797
      %v918 = vpack.c.b16 %v863, %v862
      %v919 = vpack.c.b16 %v865, %v864
      %v920 = vpack.c.b16 %v867, %v866
      %v921 = vpack.c.b16 %v869, %v868
      %v922 = vpack.c.b16 %v871, %v870
      %v923 = vpack.c.b16 %v873, %v872
      %v924 = vpack.c.b16 %v875, %v874
      %v925 = vpack.c.b16 %v877, %v876
      %v926 = vpack.c.b16 %v879, %v878
      %v927 = vpack.c.b16 %v881, %v880
      %v928 = vpack.c.b16 %v883, %v882
      %v929 = vpack.c.b16 %v885, %v884
      %v930 = vpack.c.b16 %v887, %v886
      %v931 = vpack.c.b16 %v889, %v888
      %v932 = vpack.c.b16 %v891, %v890
      %v933 = vpack.c.b16 %v893, %v892
      %v934 = vpack.c.b16 %v895, %v894
      %v935 = vpack.c.b16 %v897, %v896
      %v936 = vpack.c.b16 %v899, %v898
      %v937 = vpack.c.b16 %v901, %v900
      %v938 = vpack.c.b16 %v903, %v902
      %v939 = vpack.c.b16 %v905, %v904
      %v940 = vpack.c.b16 %v907, %v906
      %v941 = vpack.c.b16 %v909, %v908
      %v942 = vpack.c.b16 %v911, %v910
      %v943 = vpack.c.b16 %v913, %v912
      %v944 = vpack.c.b16 %v915, %v914
      %v945 = vpack.c.b16 %v917, %v916
      %v954 = vunpack.c.l.b16 %v798
      %v955 = vunpack.c.h.b16 %v798
      %v956 = vunpack.c.l.b16 %v799
      %v957 = vunpack.c.l.b16 %v800
      %v958 = vunpack.c.h.b16 %v800
      %v959 = vunpack.c.l.b16 %v801
      %v960 = vunpack.c.l.b16 %v802
      %v961 = vunpack.c.h.b16 %v802
      %v962 = vunpack.c.l.b16 %v803
      %v963 = vunpack.c.l.b16 %v804
      %v964 = vunpack.c.h.b16 %v804
      %v965 = vunpack.c.l.b16 %v805
      %v966 = vpack.c.b16 %v957, %v954
      %v967 = vpack.c.b16 %v958, %v955
      %v968 = vpack.c.b16 %v959, %v956
      %v969 = vpack.c.b16 %v963, %v960
      %v970 = vpack.c.b16 %v964, %v961
      %v971 = vpack.c.b16 %v965, %v962
      %vm975 = vcmask 228352
      %v977 = vsel %vm975, %v918, 0
      %v980 = vsel %vm975, %v919, 0
      %v983 = vsel %vm975, %v920, 0
      %v986 = vsel %vm975, %v921, 0
      %v989 = vsel %vm975, %v922, 0
      %v992 = vsel %vm975, %v923, 0
      %v995 = vsel %vm975, %v924, 0
      %v998 = vsel %vm975, %v925, 0
      %v1001 = vsel %vm975, %v926, 0
      %v1004 = vsel %vm975, %v927, 0
      %v1007 = vsel %vm975, %v928, 0
      %v1010 = vsel %vm975, %v929, 0
      %v1013 = vsel %vm975, %v930, 0
      %v1016 = vsel %vm975, %v931, 0
      %v1019 = vsel %vm975, %v932, 0
      %v1022 = vsel %vm975, %v933, 0
      %v1025 = vsel %vm975, %v934, 0
      %v1028 = vsel %vm975, %v935, 0
      %v1031 = vsel %vm975, %v936, 0
      %v1034 = vsel %vm975, %v937, 0
      %v1037 = vsel %vm975, %v938, 0
      %v1040 = vsel %vm975, %v939, 0
      %v1043 = vsel %vm975, %v940, 0
      %v1046 = vsel %vm975, %v941, 0
      %v1049 = vsel %vm975, %v942, 0
      %v1052 = vsel %vm975, %v943, 0
      %v1055 = vsel %vm975, %v944, 0
      %v1058 = vsel %vm975, %v945, 0
      %vm1060 = vcmask 1045504
      %v1062 = vsel %vm1060, %v969, 0
      %v1065 = vsel %vm1060, %v970, 0
      %v1068 = vsel %vm1060, %v971, 0
      %1070 = vmatprep.subr.bf16.mxu0 %v967
      %1071 = vmatpush1.bf16.msra.mxu0 %v966
      %1072 = vmatprep.subr.bf16.mxu0 %v1065
      %1073 = vmatpush1.bf16.msra.mxu0 %v1062
      %1074 = vmatprep.subr.bf16.mxu0 0
      %1075 = vmatpush1.bf16.msra.mxu0 0
      %1076 = vmatprep.subr.bf16.mxu0 0
      %1077 = vmatpush1.bf16.msra.mxu0 0
      %1078 = vmatprep.subr.bf16.mxu0 0
      %1079 = vmatpush1.bf16.msra.mxu0 0
      %1080 = vmatprep.subr.bf16.mxu0 0
      %1081 = vmatpush1.bf16.msra.mxu0 0
      %1082 = vmatprep.subr.bf16.mxu0 0
      %1083 = vmatpush1.bf16.msra.mxu0 0
      %1084 = vmatprep.subr.bf16.mxu0 0
      %1085 = vmatpush1.bf16.msra.mxu0 0
      %1086 = vmatprep.subr.bf16.mxu0 0
      %1087 = vmatpush1.bf16.msra.mxu0 0
      %1088 = vmatprep.subr.bf16.mxu0 0
      %1089 = vmatpush1.bf16.msra.mxu0 0
      %1090 = vmatprep.subr.bf16.mxu0 0
      %1091 = vmatpush1.bf16.msra.mxu0 0
      %1092 = vmatprep.subr.bf16.mxu0 0
      %1093 = vmatpush1.bf16.msra.mxu0 0
      %1094 = vmatprep.subr.bf16.mxu0 0
      %1095 = vmatpush1.bf16.msra.mxu0 0
      %1096 = vmatprep.subr.bf16.mxu0 0
      %1097 = vmatpush1.bf16.msra.mxu0 0
      %1098 = vmatprep.subr.bf16.mxu0 0
      %1099 = vmatpush1.bf16.msra.mxu0 0
      %1100 = vmatprep.subr.bf16.mxu0 0
      %1101 = vmatpush1.bf16.msra.mxu0 0
      %1102 = vmatprep.mubr.bf16.mxu0 0
      %1103 = vmatmul.mubr.bf16.gmra.mrb[0].mxu0 %v977
      %v1104 = vpop.f32.mrb[0].mxu0
      %v1105 = vadd.f32 0.0, %v1104
      %v1106 = vpop.f32.mrb[0].mxu0
      %v1107 = vadd.f32 0.0, %v1106
      %v1108 = vpop.f32.mrb[0].mxu0
      %v1109 = vadd.f32 0.0, %v1108
      %v1110 = vpop.f32.mrb[0].mxu0
      %v1111 = vadd.f32 0.0, %v1110
      %1112 = vmatprep.mubr.bf16.mxu0 0
      %1113 = vmatmul.mubr.bf16.gmra.mrb[0].mxu0 %v980
      %v1114 = vpop.f32.mrb[0].mxu0
      %v1115 = vadd.f32 0.0, %v1114
      %v1116 = vpop.f32.mrb[0].mxu0
      %v1117 = vadd.f32 0.0, %v1116
      %v1118 = vpop.f32.mrb[0].mxu0
      %v1119 = vadd.f32 0.0, %v1118
      %v1120 = vpop.f32.mrb[0].mxu0
      %v1121 = vadd.f32 0.0, %v1120
      %1122 = vmatprep.mubr.bf16.mxu0 0
      %1123 = vmatmul.mubr.bf16.gmra.mrb[0].mxu0 %v983
      %v1124 = vpop.f32.mrb[0].mxu0
      %v1125 = vadd.f32 0.0, %v1124
      %v1126 = vpop.f32.mrb[0].mxu0
      %v1127 = vadd.f32 0.0, %v1126
      %v1128 = vpop.f32.mrb[0].mxu0
      %v1129 = vadd.f32 0.0, %v1128
      %v1130 = vpop.f32.mrb[0].mxu0
      %v1131 = vadd.f32 0.0, %v1130
      %1132 = vmatprep.mubr.bf16.mxu0 0
      %1133 = vmatmul.mubr.bf16.gmra.mrb[0].mxu0 %v986
      %v1134 = vpop.f32.mrb[0].mxu0
      %v1135 = vadd.f32 0.0, %v1134
      %v1136 = vpop.f32.mrb[0].mxu0
      %v1137 = vadd.f32 0.0, %v1136
      %v1138 = vpop.f32.mrb[0].mxu0
      %v1139 = vadd.f32 0.0, %v1138
      %v1140 = vpop.f32.mrb[0].mxu0
      %v1141 = vadd.f32 0.0, %v1140
      %1142 = vmatprep.mubr.bf16.mxu0 0
      %1143 = vmatmul.mubr.bf16.gmra.mrb[0].mxu0 %v989
      %v1144 = vpop.f32.mrb[0].mxu0
      %v1145 = vadd.f32 0.0, %v1144
      %v1146 = vpop.f32.mrb[0].mxu0
      %v1147 = vadd.f32 0.0, %v1146
      %v1148 = vpop.f32.mrb[0].mxu0
      %v1149 = vadd.f32 0.0, %v1148
      %v1150 = vpop.f32.mrb[0].mxu0
      %v1151 = vadd.f32 0.0, %v1150
      %1152 = vmatprep.mubr.bf16.mxu0 0
      %1153 = vmatmul.mubr.bf16.gmra.mrb[0].mxu0 %v992
      %v1154 = vpop.f32.mrb[0].mxu0
      %v1155 = vadd.f32 0.0, %v1154
      %v1156 = vpop.f32.mrb[0].mxu0
      %v1157 = vadd.f32 0.0, %v1156
      %v1158 = vpop.f32.mrb[0].mxu0
      %v1159 = vadd.f32 0.0, %v1158
      %v1160 = vpop.f32.mrb[0].mxu0
      %v1161 = vadd.f32 0.0, %v1160
      %1162 = vmatprep.mubr.bf16.mxu0 0
      %1163 = vmatmul.mubr.bf16.gmra.mrb[0].mxu0 %v995
      %v1164 = vpop.f32.mrb[0].mxu0
      %v1165 = vadd.f32 0.0, %v1164
      %v1166 = vpop.f32.mrb[0].mxu0
      %v1167 = vadd.f32 0.0, %v1166
      %v1168 = vpop.f32.mrb[0].mxu0
      %v1169 = vadd.f32 0.0, %v1168
      %v1170 = vpop.f32.mrb[0].mxu0
      %v1171 = vadd.f32 0.0, %v1170
      %1172 = vmatprep.mubr.bf16.mxu0 0
      %1173 = vmatmul.mubr.bf16.gmra.mrb[0].mxu0 %v998
      %v1174 = vpop.f32.mrb[0].mxu0
      %v1175 = vadd.f32 0.0, %v1174
      %v1176 = vpop.f32.mrb[0].mxu0
      %v1177 = vadd.f32 0.0, %v1176
      %v1178 = vpop.f32.mrb[0].mxu0
      %v1179 = vadd.f32 0.0, %v1178
      %v1180 = vpop.f32.mrb[0].mxu0
      %v1181 = vadd.f32 0.0, %v1180
      %1182 = vmatprep.mubr.bf16.mxu0 0
      %1183 = vmatmul.mubr.bf16.gmra.mrb[0].mxu0 %v1001
      %v1184 = vpop.f32.mrb[0].mxu0
      %v1185 = vadd.f32 0.0, %v1184
      %v1186 = vpop.f32.mrb[0].mxu0
      %v1187 = vadd.f32 0.0, %v1186
      %v1188 = vpop.f32.mrb[0].mxu0
      %v1189 = vadd.f32 0.0, %v1188
      %v1190 = vpop.f32.mrb[0].mxu0
      %v1191 = vadd.f32 0.0, %v1190
      %1192 = vmatprep.mubr.bf16.mxu0 0
      %1193 = vmatmul.mubr.bf16.gmra.mrb[0].mxu0 %v1004
      %v1194 = vpop.f32.mrb[0].mxu0
      %v1195 = vadd.f32 0.0, %v1194
      %v1196 = vpop.f32.mrb[0].mxu0
      %v1197 = vadd.f32 0.0, %v1196
      %v1198 = vpop.f32.mrb[0].mxu0
      %v1199 = vadd.f32 0.0, %v1198
      %v1200 = vpop.f32.mrb[0].mxu0
      %v1201 = vadd.f32 0.0, %v1200
      %1202 = vmatprep.mubr.bf16.mxu0 0
      %1203 = vmatmul.mubr.bf16.gmra.mrb[0].mxu0 %v1007
      %v1204 = vpop.f32.mrb[0].mxu0
      %v1205 = vadd.f32 0.0, %v1204
      %v1206 = vpop.f32.mrb[0].mxu0
      %v1207 = vadd.f32 0.0, %v1206
      %v1208 = vpop.f32.mrb[0].mxu0
      %v1209 = vadd.f32 0.0, %v1208
      %v1210 = vpop.f32.mrb[0].mxu0
      %v1211 = vadd.f32 0.0, %v1210
      %1212 = vmatprep.mubr.bf16.mxu0 0
      %1213 = vmatmul.mubr.bf16.gmra.mrb[0].mxu0 %v1010
      %v1214 = vpop.f32.mrb[0].mxu0
      %v1215 = vadd.f32 0.0, %v1214
      %v1216 = vpop.f32.mrb[0].mxu0
      %v1217 = vadd.f32 0.0, %v1216
      %v1218 = vpop.f32.mrb[0].mxu0
      %v1219 = vadd.f32 0.0, %v1218
      %v1220 = vpop.f32.mrb[0].mxu0
      %v1221 = vadd.f32 0.0, %v1220
      %1222 = vmatprep.mubr.bf16.mxu0 0
      %1223 = vmatmul.mubr.bf16.gmra.mrb[0].mxu0 %v1013
      %v1224 = vpop.f32.mrb[0].mxu0
      %v1225 = vadd.f32 0.0, %v1224
      %v1226 = vpop.f32.mrb[0].mxu0
      %v1227 = vadd.f32 0.0, %v1226
      %v1228 = vpop.f32.mrb[0].mxu0
      %v1229 = vadd.f32 0.0, %v1228
      %v1230 = vpop.f32.mrb[0].mxu0
      %v1231 = vadd.f32 0.0, %v1230
      %1232 = vmatprep.mubr.bf16.mxu0 0
      %1233 = vmatmul.mubr.bf16.gmra.mrb[0].mxu0 %v1016
      %v1234 = vpop.f32.mrb[0].mxu0
      %v1235 = vadd.f32 0.0, %v1234
      %v1236 = vpop.f32.mrb[0].mxu0
      %v1237 = vadd.f32 0.0, %v1236
      %v1238 = vpop.f32.mrb[0].mxu0
      %v1239 = vadd.f32 0.0, %v1238
      %v1240 = vpop.f32.mrb[0].mxu0
      %v1241 = vadd.f32 0.0, %v1240
      %1242 = vmatprep.mubr.bf16.mxu0 0
      %1243 = vmatmul.mubr.bf16.gmra.mrb[0].mxu0 %v1019
      %v1244 = vpop.f32.mrb[0].mxu0
      %v1245 = vadd.f32 0.0, %v1244
      %v1246 = vpop.f32.mrb[0].mxu0
      %v1247 = vadd.f32 0.0, %v1246
      %v1248 = vpop.f32.mrb[0].mxu0
      %v1249 = vadd.f32 0.0, %v1248
      %v1250 = vpop.f32.mrb[0].mxu0
      %v1251 = vadd.f32 0.0, %v1250
      %1252 = vmatprep.mubr.bf16.mxu0 0
      %1253 = vmatmul.mubr.bf16.gmra.mrb[0].mxu0 %v1022
      %v1254 = vpop.f32.mrb[0].mxu0
      %v1255 = vadd.f32 0.0, %v1254
      %v1256 = vpop.f32.mrb[0].mxu0
      %v1257 = vadd.f32 0.0, %v1256
      %v1258 = vpop.f32.mrb[0].mxu0
      %v1259 = vadd.f32 0.0, %v1258
      %v1260 = vpop.f32.mrb[0].mxu0
      %v1261 = vadd.f32 0.0, %v1260
      %1262 = vmatprep.mubr.bf16.mxu0 0
      %1263 = vmatmul.mubr.bf16.gmra.mrb[0].mxu0 %v1025
      %v1264 = vpop.f32.mrb[0].mxu0
      %v1265 = vadd.f32 0.0, %v1264
      %v1266 = vpop.f32.mrb[0].mxu0
      %v1267 = vadd.f32 0.0, %v1266
      %v1268 = vpop.f32.mrb[0].mxu0
      %v1269 = vadd.f32 0.0, %v1268
      %v1270 = vpop.f32.mrb[0].mxu0
      %v1271 = vadd.f32 0.0, %v1270
      %1272 = vmatprep.mubr.bf16.mxu0 0
      %1273 = vmatmul.mubr.bf16.gmra.mrb[0].mxu0 %v1028
      %v1274 = vpop.f32.mrb[0].mxu0
      %v1275 = vadd.f32 0.0, %v1274
      %v1276 = vpop.f32.mrb[0].mxu0
      %v1277 = vadd.f32 0.0, %v1276
      %v1278 = vpop.f32.mrb[0].mxu0
      %v1279 = vadd.f32 0.0, %v1278
      %v1280 = vpop.f32.mrb[0].mxu0
      %v1281 = vadd.f32 0.0, %v1280
      %1282 = vmatprep.mubr.bf16.mxu0 0
      %1283 = vmatmul.mubr.bf16.gmra.mrb[0].mxu0 %v1031
      %v1284 = vpop.f32.mrb[0].mxu0
      %v1285 = vadd.f32 0.0, %v1284
      %v1286 = vpop.f32.mrb[0].mxu0
      %v1287 = vadd.f32 0.0, %v1286
      %v1288 = vpop.f32.mrb[0].mxu0
      %v1289 = vadd.f32 0.0, %v1288
      %v1290 = vpop.f32.mrb[0].mxu0
      %v1291 = vadd.f32 0.0, %v1290
      %1292 = vmatprep.mubr.bf16.mxu0 0
      %1293 = vmatmul.mubr.bf16.gmra.mrb[0].mxu0 %v1034
      %v1294 = vpop.f32.mrb[0].mxu0
      %v1295 = vadd.f32 0.0, %v1294
      %v1296 = vpop.f32.mrb[0].mxu0
      %v1297 = vadd.f32 0.0, %v1296
      %v1298 = vpop.f32.mrb[0].mxu0
      %v1299 = vadd.f32 0.0, %v1298
      %v1300 = vpop.f32.mrb[0].mxu0
      %v1301 = vadd.f32 0.0, %v1300
      %1302 = vmatprep.mubr.bf16.mxu0 0
      %1303 = vmatmul.mubr.bf16.gmra.mrb[0].mxu0 %v1037
      %v1304 = vpop.f32.mrb[0].mxu0
      %v1305 = vadd.f32 0.0, %v1304
      %v1306 = vpop.f32.mrb[0].mxu0
      %v1307 = vadd.f32 0.0, %v1306
      %v1308 = vpop.f32.mrb[0].mxu0
      %v1309 = vadd.f32 0.0, %v1308
      %v1310 = vpop.f32.mrb[0].mxu0
      %v1311 = vadd.f32 0.0, %v1310
      %1312 = vmatprep.mubr.bf16.mxu0 0
      %1313 = vmatmul.mubr.bf16.gmra.mrb[0].mxu0 %v1040
      %v1314 = vpop.f32.mrb[0].mxu0
      %v1315 = vadd.f32 0.0, %v1314
      %v1316 = vpop.f32.mrb[0].mxu0
      %v1317 = vadd.f32 0.0, %v1316
      %v1318 = vpop.f32.mrb[0].mxu0
      %v1319 = vadd.f32 0.0, %v1318
      %v1320 = vpop.f32.mrb[0].mxu0
      %v1321 = vadd.f32 0.0, %v1320
      %1322 = vmatprep.mubr.bf16.mxu0 0
      %1323 = vmatmul.mubr.bf16.gmra.mrb[0].mxu0 %v1043
      %v1324 = vpop.f32.mrb[0].mxu0
      %v1325 = vadd.f32 0.0, %v1324
      %v1326 = vpop.f32.mrb[0].mxu0
      %v1327 = vadd.f32 0.0, %v1326
      %v1328 = vpop.f32.mrb[0].mxu0
      %v1329 = vadd.f32 0.0, %v1328
      %v1330 = vpop.f32.mrb[0].mxu0
      %v1331 = vadd.f32 0.0, %v1330
      %1332 = vmatprep.mubr.bf16.mxu0 0
      %1333 = vmatmul.mubr.bf16.gmra.mrb[0].mxu0 %v1046
      %v1334 = vpop.f32.mrb[0].mxu0
      %v1335 = vadd.f32 0.0, %v1334
      %v1336 = vpop.f32.mrb[0].mxu0
      %v1337 = vadd.f32 0.0, %v1336
      %v1338 = vpop.f32.mrb[0].mxu0
      %v1339 = vadd.f32 0.0, %v1338
      %v1340 = vpop.f32.mrb[0].mxu0
      %v1341 = vadd.f32 0.0, %v1340
      %1342 = vmatprep.mubr.bf16.mxu0 0
      %1343 = vmatmul.mubr.bf16.gmra.mrb[0].mxu0 %v1049
      %v1344 = vpop.f32.mrb[0].mxu0
      %v1345 = vadd.f32 0.0, %v1344
      %v1346 = vpop.f32.mrb[0].mxu0
      %v1347 = vadd.f32 0.0, %v1346
      %v1348 = vpop.f32.mrb[0].mxu0
      %v1349 = vadd.f32 0.0, %v1348
      %v1350 = vpop.f32.mrb[0].mxu0
      %v1351 = vadd.f32 0.0, %v1350
      %1352 = vmatprep.mubr.bf16.mxu0 0
      %1353 = vmatmul.mubr.bf16.gmra.mrb[0].mxu0 %v1052
      %v1354 = vpop.f32.mrb[0].mxu0
      %v1355 = vadd.f32 0.0, %v1354
      %v1356 = vpop.f32.mrb[0].mxu0
      %v1357 = vadd.f32 0.0, %v1356
      %v1358 = vpop.f32.mrb[0].mxu0
      %v1359 = vadd.f32 0.0, %v1358
      %v1360 = vpop.f32.mrb[0].mxu0
      %v1361 = vadd.f32 0.0, %v1360
      %1362 = vmatprep.mubr.bf16.mxu0 0
      %1363 = vmatmul.mubr.bf16.gmra.mrb[0].mxu0 %v1055
      %v1364 = vpop.f32.mrb[0].mxu0
      %v1365 = vadd.f32 0.0, %v1364
      %v1366 = vpop.f32.mrb[0].mxu0
      %v1367 = vadd.f32 0.0, %v1366
      %v1368 = vpop.f32.mrb[0].mxu0
      %v1369 = vadd.f32 0.0, %v1368
      %v1370 = vpop.f32.mrb[0].mxu0
      %v1371 = vadd.f32 0.0, %v1370
      %1372 = vmatprep.mubr.bf16.mxu0 0
      %1373 = vmatmul.mubr.bf16.gmra.mrb[0].mxu0 %v1058
      %v1374 = vpop.f32.mrb[0].mxu0
      %v1375 = vadd.f32 0.0, %v1374
      %v1376 = vpop.f32.mrb[0].mxu0
      %v1377 = vadd.f32 0.0, %v1376
      %v1378 = vpop.f32.mrb[0].mxu0
      %v1379 = vadd.f32 0.0, %v1378
      %v1380 = vpop.f32.mrb[0].mxu0
      %v1381 = vadd.f32 0.0, %v1380
      %1382 = vdwg.mxu0
      %1383 = vmatprep.subr.bf16.mxu0 0
      %1384 = vmatpush1.bf16.msra.mxu0 %v968
      %1385 = vmatprep.subr.bf16.mxu0 0
      %1386 = vmatpush1.bf16.msra.mxu0 %v1068
      %1387 = vmatprep.subr.bf16.mxu0 0
      %1388 = vmatpush1.bf16.msra.mxu0 0
      %1389 = vmatprep.subr.bf16.mxu0 0
      %1390 = vmatpush1.bf16.msra.mxu0 0
      %1391 = vmatprep.subr.bf16.mxu0 0
      %1392 = vmatpush1.bf16.msra.mxu0 0
      %1393 = vmatprep.subr.bf16.mxu0 0
      %1394 = vmatpush1.bf16.msra.mxu0 0
      %1395 = vmatprep.subr.bf16.mxu0 0
      %1396 = vmatpush1.bf16.msra.mxu0 0
      %1397 = vmatprep.subr.bf16.mxu0 0
      %1398 = vmatpush1.bf16.msra.mxu0 0
      %1399 = vmatprep.subr.bf16.mxu0 0
      %1400 = vmatpush1.bf16.msra.mxu0 0
      %1401 = vmatprep.subr.bf16.mxu0 0
      %1402 = vmatpush1.bf16.msra.mxu0 0
      %1403 = vmatprep.subr.bf16.mxu0 0
      %1404 = vmatpush1.bf16.msra.mxu0 0
      %1405 = vmatprep.subr.bf16.mxu0 0
      %1406 = vmatpush1.bf16.msra.mxu0 0
      %1407 = vmatprep.subr.bf16.mxu0 0
      %1408 = vmatpush1.bf16.msra.mxu0 0
      %1409 = vmatprep.subr.bf16.mxu0 0
      %1410 = vmatpush1.bf16.msra.mxu0 0
      %1411 = vmatprep.subr.bf16.mxu0 0
      %1412 = vmatpush1.bf16.msra.mxu0 0
      %1413 = vmatprep.subr.bf16.mxu0 0
      %1414 = vmatpush1.bf16.msra.mxu0 0
      %1415 = vmatprep.mubr.bf16.mxu0 0
      %1416 = vmatmul.mubr.bf16.gmra.mrb[0].mxu0 %v977
      %v1417 = vpop.f32.mrb[0].mxu0
      %v1418 = vadd.f32 0.0, %v1417
      %v1419 = vpop.f32.mrb[0].mxu0
      %v1420 = vpop.f32.mrb[0].mxu0
      %v1421 = vadd.f32 0.0, %v1420
      %v1422 = vpop.f32.mrb[0].mxu0
      %1423 = vmatprep.mubr.bf16.mxu0 0
      %1424 = vmatmul.mubr.bf16.gmra.mrb[0].mxu0 %v980
      %v1425 = vpop.f32.mrb[0].mxu0
      %v1426 = vadd.f32 0.0, %v1425
      %v1427 = vpop.f32.mrb[0].mxu0
      %v1428 = vpop.f32.mrb[0].mxu0
      %v1429 = vadd.f32 0.0, %v1428
      %v1430 = vpop.f32.mrb[0].mxu0
      %1431 = vmatprep.mubr.bf16.mxu0 0
      %1432 = vmatmul.mubr.bf16.gmra.mrb[0].mxu0 %v983
      %v1433 = vpop.f32.mrb[0].mxu0
      %v1434 = vadd.f32 0.0, %v1433
      %v1435 = vpop.f32.mrb[0].mxu0
      %v1436 = vpop.f32.mrb[0].mxu0
      %v1437 = vadd.f32 0.0, %v1436
      %v1438 = vpop.f32.mrb[0].mxu0
      %1439 = vmatprep.mubr.bf16.mxu0 0
      %1440 = vmatmul.mubr.bf16.gmra.mrb[0].mxu0 %v986
      %v1441 = vpop.f32.mrb[0].mxu0
      %v1442 = vadd.f32 0.0, %v1441
      %v1443 = vpop.f32.mrb[0].mxu0
      %v1444 = vpop.f32.mrb[0].mxu0
      %v1445 = vadd.f32 0.0, %v1444
      %v1446 = vpop.f32.mrb[0].mxu0
      %1447 = vmatprep.mubr.bf16.mxu0 0
      %1448 = vmatmul.mubr.bf16.gmra.mrb[0].mxu0 %v989
      %v1449 = vpop.f32.mrb[0].mxu0
      %v1450 = vadd.f32 0.0, %v1449
      %v1451 = vpop.f32.mrb[0].mxu0
      %v1452 = vpop.f32.mrb[0].mxu0
      %v1453 = vadd.f32 0.0, %v1452
      %v1454 = vpop.f32.mrb[0].mxu0
      %1455 = vmatprep.mubr.bf16.mxu0 0
      %1456 = vmatmul.mubr.bf16.gmra.mrb[0].mxu0 %v992
      %v1457 = vpop.f32.mrb[0].mxu0
      %v1458 = vadd.f32 0.0, %v1457
      %v1459 = vpop.f32.mrb[0].mxu0
      %v1460 = vpop.f32.mrb[0].mxu0
      %v1461 = vadd.f32 0.0, %v1460
      %v1462 = vpop.f32.mrb[0].mxu0
      %1463 = vmatprep.mubr.bf16.mxu0 0
      %1464 = vmatmul.mubr.bf16.gmra.mrb[0].mxu0 %v995
      %v1465 = vpop.f32.mrb[0].mxu0
      %v1466 = vadd.f32 0.0, %v1465
      %v1467 = vpop.f32.mrb[0].mxu0
      %v1468 = vpop.f32.mrb[0].mxu0
      %v1469 = vadd.f32 0.0, %v1468
      %v1470 = vpop.f32.mrb[0].mxu0
      %1471 = vmatprep.mubr.bf16.mxu0 0
      %1472 = vmatmul.mubr.bf16.gmra.mrb[0].mxu0 %v998
      %v1473 = vpop.f32.mrb[0].mxu0
      %v1474 = vadd.f32 0.0, %v1473
      %v1475 = vpop.f32.mrb[0].mxu0
      %v1476 = vpop.f32.mrb[0].mxu0
      %v1477 = vadd.f32 0.0, %v1476
      %v1478 = vpop.f32.mrb[0].mxu0
      %1479 = vmatprep.mubr.bf16.mxu0 0
      %1480 = vmatmul.mubr.bf16.gmra.mrb[0].mxu0 %v1001
      %v1481 = vpop.f32.mrb[0].mxu0
      %v1482 = vadd.f32 0.0, %v1481
      %v1483 = vpop.f32.mrb[0].mxu0
      %v1484 = vpop.f32.mrb[0].mxu0
      %v1485 = vadd.f32 0.0, %v1484
      %v1486 = vpop.f32.mrb[0].mxu0
      %1487 = vmatprep.mubr.bf16.mxu0 0
      %1488 = vmatmul.mubr.bf16.gmra.mrb[0].mxu0 %v1004
      %v1489 = vpop.f32.mrb[0].mxu0
      %v1490 = vadd.f32 0.0, %v1489
      %v1491 = vpop.f32.mrb[0].mxu0
      %v1492 = vpop.f32.mrb[0].mxu0
      %v1493 = vadd.f32 0.0, %v1492
      %v1494 = vpop.f32.mrb[0].mxu0
      %1495 = vmatprep.mubr.bf16.mxu0 0
      %1496 = vmatmul.mubr.bf16.gmra.mrb[0].mxu0 %v1007
      %v1497 = vpop.f32.mrb[0].mxu0
      %v1498 = vadd.f32 0.0, %v1497
      %v1499 = vpop.f32.mrb[0].mxu0
      %v1500 = vpop.f32.mrb[0].mxu0
      %v1501 = vadd.f32 0.0, %v1500
      %v1502 = vpop.f32.mrb[0].mxu0
      %1503 = vmatprep.mubr.bf16.mxu0 0
      %1504 = vmatmul.mubr.bf16.gmra.mrb[0].mxu0 %v1010
      %v1505 = vpop.f32.mrb[0].mxu0
      %v1506 = vadd.f32 0.0, %v1505
      %v1507 = vpop.f32.mrb[0].mxu0
      %v1508 = vpop.f32.mrb[0].mxu0
      %v1509 = vadd.f32 0.0, %v1508
      %v1510 = vpop.f32.mrb[0].mxu0
      %1511 = vmatprep.mubr.bf16.mxu0 0
      %1512 = vmatmul.mubr.bf16.gmra.mrb[0].mxu0 %v1013
      %v1513 = vpop.f32.mrb[0].mxu0
      %v1514 = vadd.f32 0.0, %v1513
      %v1515 = vpop.f32.mrb[0].mxu0
      %v1516 = vpop.f32.mrb[0].mxu0
      %v1517 = vadd.f32 0.0, %v1516
      %v1518 = vpop.f32.mrb[0].mxu0
      %1519 = vmatprep.mubr.bf16.mxu0 0
      %1520 = vmatmul.mubr.bf16.gmra.mrb[0].mxu0 %v1016
      %v1521 = vpop.f32.mrb[0].mxu0
      %v1522 = vadd.f32 0.0, %v1521
      %v1523 = vpop.f32.mrb[0].mxu0
      %v1524 = vpop.f32.mrb[0].mxu0
      %v1525 = vadd.f32 0.0, %v1524
      %v1526 = vpop.f32.mrb[0].mxu0
      %1527 = vmatprep.mubr.bf16.mxu0 0
      %1528 = vmatmul.mubr.bf16.gmra.mrb[0].mxu0 %v1019
      %v1529 = vpop.f32.mrb[0].mxu0
      %v1530 = vadd.f32 0.0, %v1529
      %v1531 = vpop.f32.mrb[0].mxu0
      %v1532 = vpop.f32.mrb[0].mxu0
      %v1533 = vadd.f32 0.0, %v1532
      %v1534 = vpop.f32.mrb[0].mxu0
      %1535 = vmatprep.mubr.bf16.mxu0 0
      %1536 = vmatmul.mubr.bf16.gmra.mrb[0].mxu0 %v1022
      %v1537 = vpop.f32.mrb[0].mxu0
      %v1538 = vadd.f32 0.0, %v1537
      %v1539 = vpop.f32.mrb[0].mxu0
      %v1540 = vpop.f32.mrb[0].mxu0
      %v1541 = vadd.f32 0.0, %v1540
      %v1542 = vpop.f32.mrb[0].mxu0
      %1543 = vmatprep.mubr.bf16.mxu0 0
      %1544 = vmatmul.mubr.bf16.gmra.mrb[0].mxu0 %v1025
      %v1545 = vpop.f32.mrb[0].mxu0
      %v1546 = vadd.f32 0.0, %v1545
      %v1547 = vpop.f32.mrb[0].mxu0
      %v1548 = vpop.f32.mrb[0].mxu0
      %v1549 = vadd.f32 0.0, %v1548
      %v1550 = vpop.f32.mrb[0].mxu0
      %1551 = vmatprep.mubr.bf16.mxu0 0
      %1552 = vmatmul.mubr.bf16.gmra.mrb[0].mxu0 %v1028
      %v1553 = vpop.f32.mrb[0].mxu0
      %v1554 = vadd.f32 0.0, %v1553
      %v1555 = vpop.f32.mrb[0].mxu0
      %v1556 = vpop.f32.mrb[0].mxu0
      %v1557 = vadd.f32 0.0, %v1556
      %v1558 = vpop.f32.mrb[0].mxu0
      %1559 = vmatprep.mubr.bf16.mxu0 0
      %1560 = vmatmul.mubr.bf16.gmra.mrb[0].mxu0 %v1031
      %v1561 = vpop.f32.mrb[0].mxu0
      %v1562 = vadd.f32 0.0, %v1561
      %v1563 = vpop.f32.mrb[0].mxu0
      %v1564 = vpop.f32.mrb[0].mxu0
      %v1565 = vadd.f32 0.0, %v1564
      %v1566 = vpop.f32.mrb[0].mxu0
      %1567 = vmatprep.mubr.bf16.mxu0 0
      %1568 = vmatmul.mubr.bf16.gmra.mrb[0].mxu0 %v1034
      %v1569 = vpop.f32.mrb[0].mxu0
      %v1570 = vadd.f32 0.0, %v1569
      %v1571 = vpop.f32.mrb[0].mxu0
      %v1572 = vpop.f32.mrb[0].mxu0
      %v1573 = vadd.f32 0.0, %v1572
      %v1574 = vpop.f32.mrb[0].mxu0
      %1575 = vmatprep.mubr.bf16.mxu0 0
      %1576 = vmatmul.mubr.bf16.gmra.mrb[0].mxu0 %v1037
      %v1577 = vpop.f32.mrb[0].mxu0
      %v1578 = vadd.f32 0.0, %v1577
      %v1579 = vpop.f32.mrb[0].mxu0
      %v1580 = vpop.f32.mrb[0].mxu0
      %v1581 = vadd.f32 0.0, %v1580
      %v1582 = vpop.f32.mrb[0].mxu0
      %1583 = vmatprep.mubr.bf16.mxu0 0
      %1584 = vmatmul.mubr.bf16.gmra.mrb[0].mxu0 %v1040
      %v1585 = vpop.f32.mrb[0].mxu0
      %v1586 = vadd.f32 0.0, %v1585
      %v1587 = vpop.f32.mrb[0].mxu0
      %v1588 = vpop.f32.mrb[0].mxu0
      %v1589 = vadd.f32 0.0, %v1588
      %v1590 = vpop.f32.mrb[0].mxu0
      %1591 = vmatprep.mubr.bf16.mxu0 0
      %1592 = vmatmul.mubr.bf16.gmra.mrb[0].mxu0 %v1043
      %v1593 = vpop.f32.mrb[0].mxu0
      %v1594 = vadd.f32 0.0, %v1593
      %v1595 = vpop.f32.mrb[0].mxu0
      %v1596 = vpop.f32.mrb[0].mxu0
      %v1597 = vadd.f32 0.0, %v1596
      %v1598 = vpop.f32.mrb[0].mxu0
      %1599 = vmatprep.mubr.bf16.mxu0 0
      %1600 = vmatmul.mubr.bf16.gmra.mrb[0].mxu0 %v1046
      %v1601 = vpop.f32.mrb[0].mxu0
      %v1602 = vadd.f32 0.0, %v1601
      %v1603 = vpop.f32.mrb[0].mxu0
      %v1604 = vpop.f32.mrb[0].mxu0
      %v1605 = vadd.f32 0.0, %v1604
      %v1606 = vpop.f32.mrb[0].mxu0
      %1607 = vmatprep.mubr.bf16.mxu0 0
      %1608 = vmatmul.mubr.bf16.gmra.mrb[0].mxu0 %v1049
      %v1609 = vpop.f32.mrb[0].mxu0
      %v1610 = vadd.f32 0.0, %v1609
      %v1611 = vpop.f32.mrb[0].mxu0
      %v1612 = vpop.f32.mrb[0].mxu0
      %v1613 = vadd.f32 0.0, %v1612
      %v1614 = vpop.f32.mrb[0].mxu0
      %1615 = vmatprep.mubr.bf16.mxu0 0
      %1616 = vmatmul.mubr.bf16.gmra.mrb[0].mxu0 %v1052
      %v1617 = vpop.f32.mrb[0].mxu0
      %v1618 = vadd.f32 0.0, %v1617
      %v1619 = vpop.f32.mrb[0].mxu0
      %v1620 = vpop.f32.mrb[0].mxu0
      %v1621 = vadd.f32 0.0, %v1620
      %v1622 = vpop.f32.mrb[0].mxu0
      %1623 = vmatprep.mubr.bf16.mxu0 0
      %1624 = vmatmul.mubr.bf16.gmra.mrb[0].mxu0 %v1055
      %v1625 = vpop.f32.mrb[0].mxu0
      %v1626 = vadd.f32 0.0, %v1625
      %v1627 = vpop.f32.mrb[0].mxu0
      %v1628 = vpop.f32.mrb[0].mxu0
      %v1629 = vadd.f32 0.0, %v1628
      %v1630 = vpop.f32.mrb[0].mxu0
      %1631 = vmatprep.mubr.bf16.mxu0 0
      %1632 = vmatmul.mubr.bf16.gmra.mrb[0].mxu0 %v1058
      %v1633 = vpop.f32.mrb[0].mxu0
      %v1634 = vadd.f32 0.0, %v1633
      %v1635 = vpop.f32.mrb[0].mxu0
      %v1636 = vpop.f32.mrb[0].mxu0
      %v1637 = vadd.f32 0.0, %v1636
      %v1638 = vpop.f32.mrb[0].mxu0
      %1639 = vdwg.mxu0
      %v1640 = vrot.slane %v1105, 7
      %v1641 = vrot.slane %v1109, 7
      %v1642 = vrot.slane %v1115, 7
      %v1643 = vrot.slane %v1119, 7
      %v1644 = vrot.slane %v1125, 7
      %v1645 = vrot.slane %v1129, 7
      %v1646 = vrot.slane %v1135, 7
      %v1647 = vrot.slane %v1139, 7
      %v1648 = vrot.slane %v1145, 7
      %v1649 = vrot.slane %v1149, 7
      %v1650 = vrot.slane %v1155, 7
      %v1651 = vrot.slane %v1159, 7
      %v1652 = vrot.slane %v1165, 7
      %v1653 = vrot.slane %v1169, 7
      %v1654 = vrot.slane %v1175, 7
      %v1655 = vrot.slane %v1179, 7
      %v1656 = vrot.slane %v1185, 7
      %v1657 = vrot.slane %v1189, 7
      %v1658 = vrot.slane %v1195, 7
      %v1659 = vrot.slane %v1199, 7
      %v1660 = vrot.slane %v1205, 7
      %v1661 = vrot.slane %v1209, 7
      %v1662 = vrot.slane %v1215, 7
      %v1663 = vrot.slane %v1219, 7
      %v1664 = vrot.slane %v1225, 7
      %v1665 = vrot.slane %v1229, 7
      %v1666 = vrot.slane %v1235, 7
      %v1667 = vrot.slane %v1239, 7
      %v1668 = vrot.slane %v1245, 7
      %v1669 = vrot.slane %v1249, 7
      %v1670 = vrot.slane %v1255, 7
      %v1671 = vrot.slane %v1259, 7
      %v1672 = vrot.slane %v1265, 7
      %v1673 = vrot.slane %v1269, 7
      %v1674 = vrot.slane %v1275, 7
      %v1675 = vrot.slane %v1279, 7
      %v1676 = vrot.slane %v1285, 7
      %v1677 = vrot.slane %v1289, 7
      %v1678 = vrot.slane %v1295, 7
      %v1679 = vrot.slane %v1299, 7
      %v1680 = vrot.slane %v1305, 7
      %v1681 = vrot.slane %v1309, 7
      %v1682 = vrot.slane %v1315, 7
      %v1683 = vrot.slane %v1319, 7
      %v1684 = vrot.slane %v1325, 7
      %v1685 = vrot.slane %v1329, 7
      %v1686 = vrot.slane %v1335, 7
      %v1687 = vrot.slane %v1339, 7
      %v1688 = vrot.slane %v1345, 7
      %v1689 = vrot.slane %v1349, 7
      %v1690 = vrot.slane %v1355, 7
      %v1691 = vrot.slane %v1359, 7
      %v1692 = vrot.slane %v1365, 7
      %v1693 = vrot.slane %v1369, 7
      %v1694 = vrot.slane %v1375, 7
      %v1695 = vrot.slane %v1379, 7
      %v1696 = vlaneseq
      %v1697 = vshrl.u32 %v1696, 7
      %vm1698 = vcmp.lt.s32.totalorder %v1697, 1
      %v1699 = vsel %vm1698, %v1694, %v1695
      %v1700 = vsel %vm1698, %v1693, %v1694
      %v1701 = vsel %vm1698, %v1692, %v1693
      %v1702 = vsel %vm1698, %v1691, %v1692
      %v1703 = vsel %vm1698, %v1690, %v1691
      %v1704 = vsel %vm1698, %v1689, %v1690
      %v1705 = vsel %vm1698, %v1688, %v1689
      %v1706 = vsel %vm1698, %v1687, %v1688
      %v1707 = vsel %vm1698, %v1686, %v1687
      %v1708 = vsel %vm1698, %v1685, %v1686
      %v1709 = vsel %vm1698, %v1684, %v1685
      %v1710 = vsel %vm1698, %v1683, %v1684
      %v1711 = vsel %vm1698, %v1682, %v1683
      %v1712 = vsel %vm1698, %v1681, %v1682
      %v1713 = vsel %vm1698, %v1680, %v1681
      %v1714 = vsel %vm1698, %v1679, %v1680
      %v1715 = vsel %vm1698, %v1678, %v1679
      %v1716 = vsel %vm1698, %v1677, %v1678
      %v1717 = vsel %vm1698, %v1676, %v1677
      %v1718 = vsel %vm1698, %v1675, %v1676
      %v1719 = vsel %vm1698, %v1674, %v1675
      %v1720 = vsel %vm1698, %v1673, %v1674
      %v1721 = vsel %vm1698, %v1672, %v1673
      %v1722 = vsel %vm1698, %v1671, %v1672
      %v1723 = vsel %vm1698, %v1670, %v1671
      %v1724 = vsel %vm1698, %v1669, %v1670
      %v1725 = vsel %vm1698, %v1668, %v1669
      %v1726 = vsel %vm1698, %v1667, %v1668
      %v1727 = vsel %vm1698, %v1666, %v1667
      %v1728 = vsel %vm1698, %v1665, %v1666
      %v1729 = vsel %vm1698, %v1664, %v1665
      %v1730 = vsel %vm1698, %v1663, %v1664
      %v1731 = vsel %vm1698, %v1662, %v1663
      %v1732 = vsel %vm1698, %v1661, %v1662
      %v1733 = vsel %vm1698, %v1660, %v1661
      %v1734 = vsel %vm1698, %v1659, %v1660
      %v1735 = vsel %vm1698, %v1658, %v1659
      %v1736 = vsel %vm1698, %v1657, %v1658
      %v1737 = vsel %vm1698, %v1656, %v1657
      %v1738 = vsel %vm1698, %v1655, %v1656
      %v1739 = vsel %vm1698, %v1654, %v1655
      %v1740 = vsel %vm1698, %v1653, %v1654
      %v1741 = vsel %vm1698, %v1652, %v1653
      %v1742 = vsel %vm1698, %v1651, %v1652
      %v1743 = vsel %vm1698, %v1650, %v1651
      %v1744 = vsel %vm1698, %v1649, %v1650
      %v1745 = vsel %vm1698, %v1648, %v1649
      %v1746 = vsel %vm1698, %v1647, %v1648
      %v1747 = vsel %vm1698, %v1646, %v1647
      %v1748 = vsel %vm1698, %v1645, %v1646
      %v1749 = vsel %vm1698, %v1644, %v1645
      %v1750 = vsel %vm1698, %v1643, %v1644
      %v1751 = vsel %vm1698, %v1642, %v1643
      %v1752 = vsel %vm1698, %v1641, %v1642
      %v1753 = vsel %vm1698, %v1640, %v1641
      %v1754 = vsel %vm1698, %v1695, %v1640
      %v1755 = vld [vmem:[%s1] sm:$0xff]
      %v1756 = vld [vmem:[%s1 + $0x8] sm:$0xff]
      %v1757 = vld [vmem:[%s1 + $0x10] sm:$0xff]
      %v1758 = vld [vmem:[%s1 + $0x18] sm:$0xff]
      %v1759 = vld [vmem:[%s1 + $0x20] sm:$0xff]
      %v1760 = vld [vmem:[%s1 + $0x28] sm:$0xff]
      %v1761 = vld [vmem:[%s1 + $0x30] sm:$0xff]
      %v1762 = vld [vmem:[%s1 + $0x38] sm:$0xff]
      %v1763 = vld [vmem:[%s1 + $0x40] sm:$0xff]
      %v1764 = vld [vmem:[%s1 + $0x48] sm:$0xff]
      %v1765 = vld [vmem:[%s1 + $0x50] sm:$0xff]
      %v1766 = vld [vmem:[%s1 + $0x58] sm:$0xff]
      %v1767 = vld [vmem:[%s1 + $0x60] sm:$0xff]
      %v1768 = vld [vmem:[%s1 + $0x68] sm:$0xff]
      %v1769 = vld [vmem:[%s1 + $0x70] sm:$0xff]
      %v1770 = vld [vmem:[%s1 + $0x78] sm:$0xff]
      %v1771 = vld [vmem:[%s1 + $0x80] sm:$0xff]
      %v1772 = vld [vmem:[%s1 + $0x88] sm:$0xff]
      %v1773 = vld [vmem:[%s1 + $0x90] sm:$0xff]
      %v1774 = vld [vmem:[%s1 + $0x98] sm:$0xff]
      %v1775 = vld [vmem:[%s1 + $0xa0] sm:$0xff]
      %v1776 = vld [vmem:[%s1 + $0xa8] sm:$0xff]
      %v1777 = vld [vmem:[%s1 + $0xb0] sm:$0xff]
      %v1778 = vld [vmem:[%s1 + $0xb8] sm:$0xff]
      %v1779 = vld [vmem:[%s1 + $0xc0] sm:$0xff]
      %v1780 = vld [vmem:[%s1 + $0xc8] sm:$0xff]
      %v1781 = vld [vmem:[%s1 + $0xd0] sm:$0xff]
      %v1782 = vld [vmem:[%s1 + $0xd8] sm:$0xff]
      %v1783 = vld [vmem:[%s1 + $0xe0] sm:$0xff]
      %v1784 = vld [vmem:[%s1 + $0xe8] sm:$0xff]
      %v1785 = vld [vmem:[%s1 + $0xf0] sm:$0xff]
      %v1786 = vld [vmem:[%s1 + $0xf8] sm:$0xff]
      %v1787 = vld [vmem:[%s1 + $0x100] sm:$0xff]
      %v1788 = vld [vmem:[%s1 + $0x108] sm:$0xff]
      %v1789 = vld [vmem:[%s1 + $0x110] sm:$0xff]
      %v1790 = vld [vmem:[%s1 + $0x118] sm:$0xff]
      %v1791 = vld [vmem:[%s1 + $0x120] sm:$0xff]
      %v1792 = vld [vmem:[%s1 + $0x128] sm:$0xff]
      %v1793 = vld [vmem:[%s1 + $0x130] sm:$0xff]
      %v1794 = vld [vmem:[%s1 + $0x138] sm:$0xff]
      %v1795 = vld [vmem:[%s1 + $0x140] sm:$0xff]
      %v1796 = vld [vmem:[%s1 + $0x148] sm:$0xff]
      %v1797 = vld [vmem:[%s1 + $0x150] sm:$0xff]
      %v1798 = vld [vmem:[%s1 + $0x158] sm:$0xff]
      %v1799 = vld [vmem:[%s1 + $0x160] sm:$0xff]
      %v1800 = vld [vmem:[%s1 + $0x168] sm:$0xff]
      %v1801 = vld [vmem:[%s1 + $0x170] sm:$0xff]
      %v1802 = vld [vmem:[%s1 + $0x178] sm:$0xff]
      %v1803 = vld [vmem:[%s1 + $0x180] sm:$0xff]
      %v1804 = vld [vmem:[%s1 + $0x188] sm:$0xff]
      %v1805 = vld [vmem:[%s1 + $0x190] sm:$0xff]
      %v1806 = vld [vmem:[%s1 + $0x198] sm:$0xff]
      %v1807 = vld [vmem:[%s1 + $0x1a0] sm:$0xff]
      %v1808 = vld [vmem:[%s1 + $0x1a8] sm:$0xff]
      %v1809 = vld [vmem:[%s1 + $0x1b0] sm:$0xff]
      %v1810 = vld [vmem:[%s1 + $0x1b8] sm:$0xff]
      %1812 = vset.pattern.permute.xlu0 0
      %1813 = vperm.xlu0 %1812, %v1755
      %v1814 = vpop.permute.xlu0 %1813
      %1817 = vset.pattern.permute.xlu0 0
      %1818 = vperm.xlu0 %1817, %v1756
      %v1819 = vpop.permute.xlu0 %1818
      %1822 = vset.pattern.permute.xlu0 0
      %1823 = vperm.xlu0 %1822, %v1757
      %v1824 = vpop.permute.xlu0 %1823
      %1827 = vset.pattern.permute.xlu0 0
      %1828 = vperm.xlu0 %1827, %v1758
      %v1829 = vpop.permute.xlu0 %1828
      %1832 = vset.pattern.permute.xlu0 0
      %1833 = vperm.xlu0 %1832, %v1759
      %v1834 = vpop.permute.xlu0 %1833
      %1837 = vset.pattern.permute.xlu0 0
      %1838 = vperm.xlu0 %1837, %v1760
      %v1839 = vpop.permute.xlu0 %1838
      %1842 = vset.pattern.permute.xlu0 0
      %1843 = vperm.xlu0 %1842, %v1761
      %v1844 = vpop.permute.xlu0 %1843
      %1847 = vset.pattern.permute.xlu0 0
      %1848 = vperm.xlu0 %1847, %v1762
      %v1849 = vpop.permute.xlu0 %1848
      %1852 = vset.pattern.permute.xlu0 0
      %1853 = vperm.xlu0 %1852, %v1763
      %v1854 = vpop.permute.xlu0 %1853
      %1857 = vset.pattern.permute.xlu0 0
      %1858 = vperm.xlu0 %1857, %v1764
      %v1859 = vpop.permute.xlu0 %1858
      %1862 = vset.pattern.permute.xlu0 0
      %1863 = vperm.xlu0 %1862, %v1765
      %v1864 = vpop.permute.xlu0 %1863
      %1867 = vset.pattern.permute.xlu0 0
      %1868 = vperm.xlu0 %1867, %v1766
      %v1869 = vpop.permute.xlu0 %1868
      %1872 = vset.pattern.permute.xlu0 0
      %1873 = vperm.xlu0 %1872, %v1767
      %v1874 = vpop.permute.xlu0 %1873
      %1877 = vset.pattern.permute.xlu0 0
      %1878 = vperm.xlu0 %1877, %v1768
      %v1879 = vpop.permute.xlu0 %1878
      %1882 = vset.pattern.permute.xlu0 0
      %1883 = vperm.xlu0 %1882, %v1769
      %v1884 = vpop.permute.xlu0 %1883
      %1887 = vset.pattern.permute.xlu0 0
      %1888 = vperm.xlu0 %1887, %v1770
      %v1889 = vpop.permute.xlu0 %1888
      %1892 = vset.pattern.permute.xlu0 0
      %1893 = vperm.xlu0 %1892, %v1771
      %v1894 = vpop.permute.xlu0 %1893
      %1897 = vset.pattern.permute.xlu0 0
      %1898 = vperm.xlu0 %1897, %v1772
      %v1899 = vpop.permute.xlu0 %1898
      %1902 = vset.pattern.permute.xlu0 0
      %1903 = vperm.xlu0 %1902, %v1773
      %v1904 = vpop.permute.xlu0 %1903
      %1907 = vset.pattern.permute.xlu0 0
      %1908 = vperm.xlu0 %1907, %v1774
      %v1909 = vpop.permute.xlu0 %1908
      %1912 = vset.pattern.permute.xlu0 0
      %1913 = vperm.xlu0 %1912, %v1775
      %v1914 = vpop.permute.xlu0 %1913
      %1917 = vset.pattern.permute.xlu0 0
      %1918 = vperm.xlu0 %1917, %v1776
      %v1919 = vpop.permute.xlu0 %1918
      %1922 = vset.pattern.permute.xlu0 0
      %1923 = vperm.xlu0 %1922, %v1777
      %v1924 = vpop.permute.xlu0 %1923
      %1927 = vset.pattern.permute.xlu0 0
      %1928 = vperm.xlu0 %1927, %v1778
      %v1929 = vpop.permute.xlu0 %1928
      %1932 = vset.pattern.permute.xlu0 0
      %1933 = vperm.xlu0 %1932, %v1779
      %v1934 = vpop.permute.xlu0 %1933
      %1937 = vset.pattern.permute.xlu0 0
      %1938 = vperm.xlu0 %1937, %v1780
      %v1939 = vpop.permute.xlu0 %1938
      %1942 = vset.pattern.permute.xlu0 0
      %1943 = vperm.xlu0 %1942, %v1781
      %v1944 = vpop.permute.xlu0 %1943
      %1947 = vset.pattern.permute.xlu0 0
      %1948 = vperm.xlu0 %1947, %v1782
      %v1949 = vpop.permute.xlu0 %1948
      %1952 = vset.pattern.permute.xlu0 0
      %1953 = vperm.xlu0 %1952, %v1783
      %v1954 = vpop.permute.xlu0 %1953
      %1957 = vset.pattern.permute.xlu0 0
      %1958 = vperm.xlu0 %1957, %v1784
      %v1959 = vpop.permute.xlu0 %1958
      %1962 = vset.pattern.permute.xlu0 0
      %1963 = vperm.xlu0 %1962, %v1785
      %v1964 = vpop.permute.xlu0 %1963
      %1967 = vset.pattern.permute.xlu0 0
      %1968 = vperm.xlu0 %1967, %v1786
      %v1969 = vpop.permute.xlu0 %1968
      %1972 = vset.pattern.permute.xlu0 0
      %1973 = vperm.xlu0 %1972, %v1787
      %v1974 = vpop.permute.xlu0 %1973
      %1977 = vset.pattern.permute.xlu0 0
      %1978 = vperm.xlu0 %1977, %v1788
      %v1979 = vpop.permute.xlu0 %1978
      %1982 = vset.pattern.permute.xlu0 0
      %1983 = vperm.xlu0 %1982, %v1789
      %v1984 = vpop.permute.xlu0 %1983
      %1987 = vset.pattern.permute.xlu0 0
      %1988 = vperm.xlu0 %1987, %v1790
      %v1989 = vpop.permute.xlu0 %1988
      %1992 = vset.pattern.permute.xlu0 0
      %1993 = vperm.xlu0 %1992, %v1791
      %v1994 = vpop.permute.xlu0 %1993
      %1997 = vset.pattern.permute.xlu0 0
      %1998 = vperm.xlu0 %1997, %v1792
      %v1999 = vpop.permute.xlu0 %1998
      %2002 = vset.pattern.permute.xlu0 0
      %2003 = vperm.xlu0 %2002, %v1793
      %v2004 = vpop.permute.xlu0 %2003
      %2007 = vset.pattern.permute.xlu0 0
      %2008 = vperm.xlu0 %2007, %v1794
      %v2009 = vpop.permute.xlu0 %2008
      %2012 = vset.pattern.permute.xlu0 0
      %2013 = vperm.xlu0 %2012, %v1795
      %v2014 = vpop.permute.xlu0 %2013
      %2017 = vset.pattern.permute.xlu0 0
      %2018 = vperm.xlu0 %2017, %v1796
      %v2019 = vpop.permute.xlu0 %2018
      %2022 = vset.pattern.permute.xlu0 0
      %2023 = vperm.xlu0 %2022, %v1797
      %v2024 = vpop.permute.xlu0 %2023
      %2027 = vset.pattern.permute.xlu0 0
      %2028 = vperm.xlu0 %2027, %v1798
      %v2029 = vpop.permute.xlu0 %2028
      %2032 = vset.pattern.permute.xlu0 0
      %2033 = vperm.xlu0 %2032, %v1799
      %v2034 = vpop.permute.xlu0 %2033
      %2037 = vset.pattern.permute.xlu0 0
      %2038 = vperm.xlu0 %2037, %v1800
      %v2039 = vpop.permute.xlu0 %2038
      %2042 = vset.pattern.permute.xlu0 0
      %2043 = vperm.xlu0 %2042, %v1801
      %v2044 = vpop.permute.xlu0 %2043
      %2047 = vset.pattern.permute.xlu0 0
      %2048 = vperm.xlu0 %2047, %v1802
      %v2049 = vpop.permute.xlu0 %2048
      %2052 = vset.pattern.permute.xlu0 0
      %2053 = vperm.xlu0 %2052, %v1803
      %v2054 = vpop.permute.xlu0 %2053
      %2057 = vset.pattern.permute.xlu0 0
      %2058 = vperm.xlu0 %2057, %v1804
      %v2059 = vpop.permute.xlu0 %2058
      %2062 = vset.pattern.permute.xlu0 0
      %2063 = vperm.xlu0 %2062, %v1805
      %v2064 = vpop.permute.xlu0 %2063
      %2067 = vset.pattern.permute.xlu0 0
      %2068 = vperm.xlu0 %2067, %v1806
      %v2069 = vpop.permute.xlu0 %2068
      %2072 = vset.pattern.permute.xlu0 0
      %2073 = vperm.xlu0 %2072, %v1807
      %v2074 = vpop.permute.xlu0 %2073
      %2077 = vset.pattern.permute.xlu0 0
      %2078 = vperm.xlu0 %2077, %v1808
      %v2079 = vpop.permute.xlu0 %2078
      %2082 = vset.pattern.permute.xlu0 0
      %2083 = vperm.xlu0 %2082, %v1809
      %v2084 = vpop.permute.xlu0 %2083
      %2087 = vset.pattern.permute.xlu0 0
      %2088 = vperm.xlu0 %2087, %v1810
      %v2089 = vpop.permute.xlu0 %2088
      %v2091 = vmul.f32 %v1754, %v1814
      %v2092 = vmul.f32 %v1753, %v1819
      %v2093 = vmul.f32 %v1752, %v1824
      %v2094 = vmul.f32 %v1751, %v1829
      %v2095 = vmul.f32 %v1750, %v1834
      %v2096 = vmul.f32 %v1749, %v1839
      %v2097 = vmul.f32 %v1748, %v1844
      %v2098 = vmul.f32 %v1747, %v1849
      %v2099 = vmul.f32 %v1746, %v1854
      %v2100 = vmul.f32 %v1745, %v1859
      %v2101 = vmul.f32 %v1744, %v1864
      %v2102 = vmul.f32 %v1743, %v1869
      %v2103 = vmul.f32 %v1742, %v1874
      %v2104 = vmul.f32 %v1741, %v1879
      %v2105 = vmul.f32 %v1740, %v1884
      %v2106 = vmul.f32 %v1739, %v1889
      %v2107 = vmul.f32 %v1738, %v1894
      %v2108 = vmul.f32 %v1737, %v1899
      %v2109 = vmul.f32 %v1736, %v1904
      %v2110 = vmul.f32 %v1735, %v1909
      %v2111 = vmul.f32 %v1734, %v1914
      %v2112 = vmul.f32 %v1733, %v1919
      %v2113 = vmul.f32 %v1732, %v1924
      %v2114 = vmul.f32 %v1731, %v1929
      %v2115 = vmul.f32 %v1730, %v1934
      %v2116 = vmul.f32 %v1729, %v1939
      %v2117 = vmul.f32 %v1728, %v1944
      %v2118 = vmul.f32 %v1727, %v1949
      %v2119 = vmul.f32 %v1726, %v1954
      %v2120 = vmul.f32 %v1725, %v1959
      %v2121 = vmul.f32 %v1724, %v1964
      %v2122 = vmul.f32 %v1723, %v1969
      %v2123 = vmul.f32 %v1722, %v1974
      %v2124 = vmul.f32 %v1721, %v1979
      %v2125 = vmul.f32 %v1720, %v1984
      %v2126 = vmul.f32 %v1719, %v1989
      %v2127 = vmul.f32 %v1718, %v1994
      %v2128 = vmul.f32 %v1717, %v1999
      %v2129 = vmul.f32 %v1716, %v2004
      %v2130 = vmul.f32 %v1715, %v2009
      %v2131 = vmul.f32 %v1714, %v2014
      %v2132 = vmul.f32 %v1713, %v2019
      %v2133 = vmul.f32 %v1712, %v2024
      %v2134 = vmul.f32 %v1711, %v2029
      %v2135 = vmul.f32 %v1710, %v2034
      %v2136 = vmul.f32 %v1709, %v2039
      %v2137 = vmul.f32 %v1708, %v2044
      %v2138 = vmul.f32 %v1707, %v2049
      %v2139 = vmul.f32 %v1706, %v2054
      %v2140 = vmul.f32 %v1705, %v2059
      %v2141 = vmul.f32 %v1704, %v2064
      %v2142 = vmul.f32 %v1703, %v2069
      %v2143 = vmul.f32 %v1702, %v2074
      %v2144 = vmul.f32 %v1701, %v2079
      %v2145 = vmul.f32 %v1700, %v2084
      %v2146 = vmul.f32 %v1699, %v2089
      %v2147 = vrot.slane %v1418, 1
      %v2148 = vrot.slane %v1421, 1
      %v2149 = vrot.slane %v1426, 1
      %v2150 = vrot.slane %v1429, 1
      %v2151 = vrot.slane %v1434, 1
      %v2152 = vrot.slane %v1437, 1
      %v2153 = vrot.slane %v1442, 1
      %v2154 = vrot.slane %v1445, 1
      %v2155 = vrot.slane %v1450, 1
      %v2156 = vrot.slane %v1453, 1
      %v2157 = vrot.slane %v1458, 1
      %v2158 = vrot.slane %v1461, 1
      %v2159 = vrot.slane %v1466, 1
      %v2160 = vrot.slane %v1469, 1
      %v2161 = vrot.slane %v1474, 1
      %v2162 = vrot.slane %v1477, 1
      %v2163 = vrot.slane %v1482, 1
      %v2164 = vrot.slane %v1485, 1
      %v2165 = vrot.slane %v1490, 1
      %v2166 = vrot.slane %v1493, 1
      %v2167 = vrot.slane %v1498, 1
      %v2168 = vrot.slane %v1501, 1
      %v2169 = vrot.slane %v1506, 1
      %v2170 = vrot.slane %v1509, 1
      %v2171 = vrot.slane %v1514, 1
      %v2172 = vrot.slane %v1517, 1
      %v2173 = vrot.slane %v1522, 1
      %v2174 = vrot.slane %v1525, 1
      %v2175 = vrot.slane %v1530, 1
      %v2176 = vrot.slane %v1533, 1
      %v2177 = vrot.slane %v1538, 1
      %v2178 = vrot.slane %v1541, 1
      %v2179 = vrot.slane %v1546, 1
      %v2180 = vrot.slane %v1549, 1
      %v2181 = vrot.slane %v1554, 1
      %v2182 = vrot.slane %v1557, 1
      %v2183 = vrot.slane %v1562, 1
      %v2184 = vrot.slane %v1565, 1
      %v2185 = vrot.slane %v1570, 1
      %v2186 = vrot.slane %v1573, 1
      %v2187 = vrot.slane %v1578, 1
      %v2188 = vrot.slane %v1581, 1
      %v2189 = vrot.slane %v1586, 1
      %v2190 = vrot.slane %v1589, 1
      %v2191 = vrot.slane %v1594, 1
      %v2192 = vrot.slane %v1597, 1
      %v2193 = vrot.slane %v1602, 1
      %v2194 = vrot.slane %v1605, 1
      %v2195 = vrot.slane %v1610, 1
      %v2196 = vrot.slane %v1613, 1
      %v2197 = vrot.slane %v1618, 1
      %v2198 = vrot.slane %v1621, 1
      %v2199 = vrot.slane %v1626, 1
      %v2200 = vrot.slane %v1629, 1
      %v2201 = vrot.slane %v1634, 1
      %v2202 = vrot.slane %v1637, 1
      %vm2203 = vcmp.lt.s32.totalorder %v1697, 7
      %v2204 = vsel %vm2203, %v2201, %v2202
      %v2205 = vsel %vm2203, %v2200, %v2201
      %v2206 = vsel %vm2203, %v2199, %v2200
      %v2207 = vsel %vm2203, %v2198, %v2199
      %v2208 = vsel %vm2203, %v2197, %v2198
      %v2209 = vsel %vm2203, %v2196, %v2197
      %v2210 = vsel %vm2203, %v2195, %v2196
      %v2211 = vsel %vm2203, %v2194, %v2195
      %v2212 = vsel %vm2203, %v2193, %v2194
      %v2213 = vsel %vm2203, %v2192, %v2193
      %v2214 = vsel %vm2203, %v2191, %v2192
      %v2215 = vsel %vm2203, %v2190, %v2191
      %v2216 = vsel %vm2203, %v2189, %v2190
      %v2217 = vsel %vm2203, %v2188, %v2189
      %v2218 = vsel %vm2203, %v2187, %v2188
      %v2219 = vsel %vm2203, %v2186, %v2187
      %v2220 = vsel %vm2203, %v2185, %v2186
      %v2221 = vsel %vm2203, %v2184, %v2185
      %v2222 = vsel %vm2203, %v2183, %v2184
      %v2223 = vsel %vm2203, %v2182, %v2183
      %v2224 = vsel %vm2203, %v2181, %v2182
      %v2225 = vsel %vm2203, %v2180, %v2181
      %v2226 = vsel %vm2203, %v2179, %v2180
      %v2227 = vsel %vm2203, %v2178, %v2179
      %v2228 = vsel %vm2203, %v2177, %v2178
      %v2229 = vsel %vm2203, %v2176, %v2177
      %v2230 = vsel %vm2203, %v2175, %v2176
      %v2231 = vsel %vm2203, %v2174, %v2175
      %v2232 = vsel %vm2203, %v2173, %v2174
      %v2233 = vsel %vm2203, %v2172, %v2173
      %v2234 = vsel %vm2203, %v2171, %v2172
      %v2235 = vsel %vm2203, %v2170, %v2171
      %v2236 = vsel %vm2203, %v2169, %v2170
      %v2237 = vsel %vm2203, %v2168, %v2169
      %v2238 = vsel %vm2203, %v2167, %v2168
      %v2239 = vsel %vm2203, %v2166, %v2167
      %v2240 = vsel %vm2203, %v2165, %v2166
      %v2241 = vsel %vm2203, %v2164, %v2165
      %v2242 = vsel %vm2203, %v2163, %v2164
      %v2243 = vsel %vm2203, %v2162, %v2163
      %v2244 = vsel %vm2203, %v2161, %v2162
      %v2245 = vsel %vm2203, %v2160, %v2161
      %v2246 = vsel %vm2203, %v2159, %v2160
      %v2247 = vsel %vm2203, %v2158, %v2159
      %v2248 = vsel %vm2203, %v2157, %v2158
      %v2249 = vsel %vm2203, %v2156, %v2157
      %v2250 = vsel %vm2203, %v2155, %v2156
      %v2251 = vsel %vm2203, %v2154, %v2155
      %v2252 = vsel %vm2203, %v2153, %v2154
      %v2253 = vsel %vm2203, %v2152, %v2153
      %v2254 = vsel %vm2203, %v2151, %v2152
      %v2255 = vsel %vm2203, %v2150, %v2151
      %v2256 = vsel %vm2203, %v2149, %v2150
      %v2257 = vsel %vm2203, %v2148, %v2149
      %v2258 = vsel %vm2203, %v2147, %v2148
      %v2259 = vsel %vm2203, %v2202, %v2147
      %s2260 = scalar_lea.vmem %s1, 448
      %v2261 = vld [vmem:[%s2260] sm:$0xff]
      %v2262 = vld [vmem:[%s2260 + $0x8] sm:$0xff]
      %v2263 = vld [vmem:[%s2260 + $0x10] sm:$0xff]
      %v2264 = vld [vmem:[%s2260 + $0x18] sm:$0xff]
      %v2265 = vld [vmem:[%s2260 + $0x20] sm:$0xff]
      %v2266 = vld [vmem:[%s2260 + $0x28] sm:$0xff]
      %v2267 = vld [vmem:[%s2260 + $0x30] sm:$0xff]
      %v2268 = vld [vmem:[%s2260 + $0x38] sm:$0xff]
      %v2269 = vld [vmem:[%s2260 + $0x40] sm:$0xff]
      %v2270 = vld [vmem:[%s2260 + $0x48] sm:$0xff]
      %v2271 = vld [vmem:[%s2260 + $0x50] sm:$0xff]
      %v2272 = vld [vmem:[%s2260 + $0x58] sm:$0xff]
      %v2273 = vld [vmem:[%s2260 + $0x60] sm:$0xff]
      %v2274 = vld [vmem:[%s2260 + $0x68] sm:$0xff]
      %v2275 = vld [vmem:[%s2260 + $0x70] sm:$0xff]
      %v2276 = vld [vmem:[%s2260 + $0x78] sm:$0xff]
      %v2277 = vld [vmem:[%s2260 + $0x80] sm:$0xff]
      %v2278 = vld [vmem:[%s2260 + $0x88] sm:$0xff]
      %v2279 = vld [vmem:[%s2260 + $0x90] sm:$0xff]
      %v2280 = vld [vmem:[%s2260 + $0x98] sm:$0xff]
      %v2281 = vld [vmem:[%s2260 + $0xa0] sm:$0xff]
      %v2282 = vld [vmem:[%s2260 + $0xa8] sm:$0xff]
      %v2283 = vld [vmem:[%s2260 + $0xb0] sm:$0xff]
      %v2284 = vld [vmem:[%s2260 + $0xb8] sm:$0xff]
      %v2285 = vld [vmem:[%s2260 + $0xc0] sm:$0xff]
      %v2286 = vld [vmem:[%s2260 + $0xc8] sm:$0xff]
      %v2287 = vld [vmem:[%s2260 + $0xd0] sm:$0xff]
      %v2288 = vld [vmem:[%s2260 + $0xd8] sm:$0xff]
      %v2289 = vld [vmem:[%s2260 + $0xe0] sm:$0xff]
      %v2290 = vld [vmem:[%s2260 + $0xe8] sm:$0xff]
      %v2291 = vld [vmem:[%s2260 + $0xf0] sm:$0xff]
      %v2292 = vld [vmem:[%s2260 + $0xf8] sm:$0xff]
      %v2293 = vld [vmem:[%s2260 + $0x100] sm:$0xff]
      %v2294 = vld [vmem:[%s2260 + $0x108] sm:$0xff]
      %v2295 = vld [vmem:[%s2260 + $0x110] sm:$0xff]
      %v2296 = vld [vmem:[%s2260 + $0x118] sm:$0xff]
      %v2297 = vld [vmem:[%s2260 + $0x120] sm:$0xff]
      %v2298 = vld [vmem:[%s2260 + $0x128] sm:$0xff]
      %v2299 = vld [vmem:[%s2260 + $0x130] sm:$0xff]
      %v2300 = vld [vmem:[%s2260 + $0x138] sm:$0xff]
      %v2301 = vld [vmem:[%s2260 + $0x140] sm:$0xff]
      %v2302 = vld [vmem:[%s2260 + $0x148] sm:$0xff]
      %v2303 = vld [vmem:[%s2260 + $0x150] sm:$0xff]
      %v2304 = vld [vmem:[%s2260 + $0x158] sm:$0xff]
      %v2305 = vld [vmem:[%s2260 + $0x160] sm:$0xff]
      %v2306 = vld [vmem:[%s2260 + $0x168] sm:$0xff]
      %v2307 = vld [vmem:[%s2260 + $0x170] sm:$0xff]
      %v2308 = vld [vmem:[%s2260 + $0x178] sm:$0xff]
      %v2309 = vld [vmem:[%s2260 + $0x180] sm:$0xff]
      %v2310 = vld [vmem:[%s2260 + $0x188] sm:$0xff]
      %v2311 = vld [vmem:[%s2260 + $0x190] sm:$0xff]
      %v2312 = vld [vmem:[%s2260 + $0x198] sm:$0xff]
      %v2313 = vld [vmem:[%s2260 + $0x1a0] sm:$0xff]
      %v2314 = vld [vmem:[%s2260 + $0x1a8] sm:$0xff]
      %v2315 = vld [vmem:[%s2260 + $0x1b0] sm:$0xff]
      %v2316 = vld [vmem:[%s2260 + $0x1b8] sm:$0xff]
      %2318 = vset.pattern.permute.xlu0 0
      %2319 = vperm.xlu0 %2318, %v2261
      %v2320 = vpop.permute.xlu0 %2319
      %2323 = vset.pattern.permute.xlu0 0
      %2324 = vperm.xlu0 %2323, %v2262
      %v2325 = vpop.permute.xlu0 %2324
      %2328 = vset.pattern.permute.xlu0 0
      %2329 = vperm.xlu0 %2328, %v2263
      %v2330 = vpop.permute.xlu0 %2329
      %2333 = vset.pattern.permute.xlu0 0
      %2334 = vperm.xlu0 %2333, %v2264
      %v2335 = vpop.permute.xlu0 %2334
      %2338 = vset.pattern.permute.xlu0 0
      %2339 = vperm.xlu0 %2338, %v2265
      %v2340 = vpop.permute.xlu0 %2339
      %2343 = vset.pattern.permute.xlu0 0
      %2344 = vperm.xlu0 %2343, %v2266
      %v2345 = vpop.permute.xlu0 %2344
      %2348 = vset.pattern.permute.xlu0 0
      %2349 = vperm.xlu0 %2348, %v2267
      %v2350 = vpop.permute.xlu0 %2349
      %2353 = vset.pattern.permute.xlu0 0
      %2354 = vperm.xlu0 %2353, %v2268
      %v2355 = vpop.permute.xlu0 %2354
      %2358 = vset.pattern.permute.xlu0 0
      %2359 = vperm.xlu0 %2358, %v2269
      %v2360 = vpop.permute.xlu0 %2359
      %2363 = vset.pattern.permute.xlu0 0
      %2364 = vperm.xlu0 %2363, %v2270
      %v2365 = vpop.permute.xlu0 %2364
      %2368 = vset.pattern.permute.xlu0 0
      %2369 = vperm.xlu0 %2368, %v2271
      %v2370 = vpop.permute.xlu0 %2369
      %2373 = vset.pattern.permute.xlu0 0
      %2374 = vperm.xlu0 %2373, %v2272
      %v2375 = vpop.permute.xlu0 %2374
      %2378 = vset.pattern.permute.xlu0 0
      %2379 = vperm.xlu0 %2378, %v2273
      %v2380 = vpop.permute.xlu0 %2379
      %2383 = vset.pattern.permute.xlu0 0
      %2384 = vperm.xlu0 %2383, %v2274
      %v2385 = vpop.permute.xlu0 %2384
      %2388 = vset.pattern.permute.xlu0 0
      %2389 = vperm.xlu0 %2388, %v2275
      %v2390 = vpop.permute.xlu0 %2389
      %2393 = vset.pattern.permute.xlu0 0
      %2394 = vperm.xlu0 %2393, %v2276
      %v2395 = vpop.permute.xlu0 %2394
      %2398 = vset.pattern.permute.xlu0 0
      %2399 = vperm.xlu0 %2398, %v2277
      %v2400 = vpop.permute.xlu0 %2399
      %2403 = vset.pattern.permute.xlu0 0
      %2404 = vperm.xlu0 %2403, %v2278
      %v2405 = vpop.permute.xlu0 %2404
      %2408 = vset.pattern.permute.xlu0 0
      %2409 = vperm.xlu0 %2408, %v2279
      %v2410 = vpop.permute.xlu0 %2409
      %2413 = vset.pattern.permute.xlu0 0
      %2414 = vperm.xlu0 %2413, %v2280
      %v2415 = vpop.permute.xlu0 %2414
      %2418 = vset.pattern.permute.xlu0 0
      %2419 = vperm.xlu0 %2418, %v2281
      %v2420 = vpop.permute.xlu0 %2419
      %2423 = vset.pattern.permute.xlu0 0
      %2424 = vperm.xlu0 %2423, %v2282
      %v2425 = vpop.permute.xlu0 %2424
      %2428 = vset.pattern.permute.xlu0 0
      %2429 = vperm.xlu0 %2428, %v2283
      %v2430 = vpop.permute.xlu0 %2429
      %2433 = vset.pattern.permute.xlu0 0
      %2434 = vperm.xlu0 %2433, %v2284
      %v2435 = vpop.permute.xlu0 %2434
      %2438 = vset.pattern.permute.xlu0 0
      %2439 = vperm.xlu0 %2438, %v2285
      %v2440 = vpop.permute.xlu0 %2439
      %2443 = vset.pattern.permute.xlu0 0
      %2444 = vperm.xlu0 %2443, %v2286
      %v2445 = vpop.permute.xlu0 %2444
      %2448 = vset.pattern.permute.xlu0 0
      %2449 = vperm.xlu0 %2448, %v2287
      %v2450 = vpop.permute.xlu0 %2449
      %2453 = vset.pattern.permute.xlu0 0
      %2454 = vperm.xlu0 %2453, %v2288
      %v2455 = vpop.permute.xlu0 %2454
      %2458 = vset.pattern.permute.xlu0 0
      %2459 = vperm.xlu0 %2458, %v2289
      %v2460 = vpop.permute.xlu0 %2459
      %2463 = vset.pattern.permute.xlu0 0
      %2464 = vperm.xlu0 %2463, %v2290
      %v2465 = vpop.permute.xlu0 %2464
      %2468 = vset.pattern.permute.xlu0 0
      %2469 = vperm.xlu0 %2468, %v2291
      %v2470 = vpop.permute.xlu0 %2469
      %2473 = vset.pattern.permute.xlu0 0
      %2474 = vperm.xlu0 %2473, %v2292
      %v2475 = vpop.permute.xlu0 %2474
      %2478 = vset.pattern.permute.xlu0 0
      %2479 = vperm.xlu0 %2478, %v2293
      %v2480 = vpop.permute.xlu0 %2479
      %2483 = vset.pattern.permute.xlu0 0
      %2484 = vperm.xlu0 %2483, %v2294
      %v2485 = vpop.permute.xlu0 %2484
      %2488 = vset.pattern.permute.xlu0 0
      %2489 = vperm.xlu0 %2488, %v2295
      %v2490 = vpop.permute.xlu0 %2489
      %2493 = vset.pattern.permute.xlu0 0
      %2494 = vperm.xlu0 %2493, %v2296
      %v2495 = vpop.permute.xlu0 %2494
      %2498 = vset.pattern.permute.xlu0 0
      %2499 = vperm.xlu0 %2498, %v2297
      %v2500 = vpop.permute.xlu0 %2499
      %2503 = vset.pattern.permute.xlu0 0
      %2504 = vperm.xlu0 %2503, %v2298
      %v2505 = vpop.permute.xlu0 %2504
      %2508 = vset.pattern.permute.xlu0 0
      %2509 = vperm.xlu0 %2508, %v2299
      %v2510 = vpop.permute.xlu0 %2509
      %2513 = vset.pattern.permute.xlu0 0
      %2514 = vperm.xlu0 %2513, %v2300
      %v2515 = vpop.permute.xlu0 %2514
      %2518 = vset.pattern.permute.xlu0 0
      %2519 = vperm.xlu0 %2518, %v2301
      %v2520 = vpop.permute.xlu0 %2519
      %2523 = vset.pattern.permute.xlu0 0
      %2524 = vperm.xlu0 %2523, %v2302
      %v2525 = vpop.permute.xlu0 %2524
      %2528 = vset.pattern.permute.xlu0 0
      %2529 = vperm.xlu0 %2528, %v2303
      %v2530 = vpop.permute.xlu0 %2529
      %2533 = vset.pattern.permute.xlu0 0
      %2534 = vperm.xlu0 %2533, %v2304
      %v2535 = vpop.permute.xlu0 %2534
      %2538 = vset.pattern.permute.xlu0 0
      %2539 = vperm.xlu0 %2538, %v2305
      %v2540 = vpop.permute.xlu0 %2539
      %2543 = vset.pattern.permute.xlu0 0
      %2544 = vperm.xlu0 %2543, %v2306
      %v2545 = vpop.permute.xlu0 %2544
      %2548 = vset.pattern.permute.xlu0 0
      %2549 = vperm.xlu0 %2548, %v2307
      %v2550 = vpop.permute.xlu0 %2549
      %2553 = vset.pattern.permute.xlu0 0
      %2554 = vperm.xlu0 %2553, %v2308
      %v2555 = vpop.permute.xlu0 %2554
      %2558 = vset.pattern.permute.xlu0 0
      %2559 = vperm.xlu0 %2558, %v2309
      %v2560 = vpop.permute.xlu0 %2559
      %2563 = vset.pattern.permute.xlu0 0
      %2564 = vperm.xlu0 %2563, %v2310
      %v2565 = vpop.permute.xlu0 %2564
      %2568 = vset.pattern.permute.xlu0 0
      %2569 = vperm.xlu0 %2568, %v2311
      %v2570 = vpop.permute.xlu0 %2569
      %2573 = vset.pattern.permute.xlu0 0
      %2574 = vperm.xlu0 %2573, %v2312
      %v2575 = vpop.permute.xlu0 %2574
      %2578 = vset.pattern.permute.xlu0 0
      %2579 = vperm.xlu0 %2578, %v2313
      %v2580 = vpop.permute.xlu0 %2579
      %2583 = vset.pattern.permute.xlu0 0
      %2584 = vperm.xlu0 %2583, %v2314
      %v2585 = vpop.permute.xlu0 %2584
      %2588 = vset.pattern.permute.xlu0 0
      %2589 = vperm.xlu0 %2588, %v2315
      %v2590 = vpop.permute.xlu0 %2589
      %2593 = vset.pattern.permute.xlu0 0
      %2594 = vperm.xlu0 %2593, %v2316
      %v2595 = vpop.permute.xlu0 %2594
      %v2597 = vmul.f32 %v2258, %v2320
      %v2598 = vmul.f32 %v2257, %v2325
      %v2599 = vmul.f32 %v2256, %v2330
      %v2600 = vmul.f32 %v2255, %v2335
      %v2601 = vmul.f32 %v2254, %v2340
      %v2602 = vmul.f32 %v2253, %v2345
      %v2603 = vmul.f32 %v2252, %v2350
      %v2604 = vmul.f32 %v2251, %v2355
      %v2605 = vmul.f32 %v2250, %v2360
      %v2606 = vmul.f32 %v2249, %v2365
      %v2607 = vmul.f32 %v2248, %v2370
      %v2608 = vmul.f32 %v2247, %v2375
      %v2609 = vmul.f32 %v2246, %v2380
      %v2610 = vmul.f32 %v2245, %v2385
      %v2611 = vmul.f32 %v2244, %v2390
      %v2612 = vmul.f32 %v2243, %v2395
      %v2613 = vmul.f32 %v2242, %v2400
      %v2614 = vmul.f32 %v2241, %v2405
      %v2615 = vmul.f32 %v2240, %v2410
      %v2616 = vmul.f32 %v2239, %v2415
      %v2617 = vmul.f32 %v2238, %v2420
      %v2618 = vmul.f32 %v2237, %v2425
      %v2619 = vmul.f32 %v2236, %v2430
      %v2620 = vmul.f32 %v2235, %v2435
      %v2621 = vmul.f32 %v2234, %v2440
      %v2622 = vmul.f32 %v2233, %v2445
      %v2623 = vmul.f32 %v2232, %v2450
      %v2624 = vmul.f32 %v2231, %v2455
      %v2625 = vmul.f32 %v2230, %v2460
      %v2626 = vmul.f32 %v2229, %v2465
      %v2627 = vmul.f32 %v2228, %v2470
      %v2628 = vmul.f32 %v2227, %v2475
      %v2629 = vmul.f32 %v2226, %v2480
      %v2630 = vmul.f32 %v2225, %v2485
      %v2631 = vmul.f32 %v2224, %v2490
      %v2632 = vmul.f32 %v2223, %v2495
      %v2633 = vmul.f32 %v2222, %v2500
      %v2634 = vmul.f32 %v2221, %v2505
      %v2635 = vmul.f32 %v2220, %v2510
      %v2636 = vmul.f32 %v2219, %v2515
      %v2637 = vmul.f32 %v2218, %v2520
      %v2638 = vmul.f32 %v2217, %v2525
      %v2639 = vmul.f32 %v2216, %v2530
      %v2640 = vmul.f32 %v2215, %v2535
      %v2641 = vmul.f32 %v2214, %v2540
      %v2642 = vmul.f32 %v2213, %v2545
      %v2643 = vmul.f32 %v2212, %v2550
      %v2644 = vmul.f32 %v2211, %v2555
      %v2645 = vmul.f32 %v2210, %v2560
      %v2646 = vmul.f32 %v2209, %v2565
      %v2647 = vmul.f32 %v2208, %v2570
      %v2648 = vmul.f32 %v2207, %v2575
      %v2649 = vmul.f32 %v2206, %v2580
      %v2650 = vmul.f32 %v2205, %v2585
      %v2651 = vmul.f32 %v2204, %v2590
      %v2652 = vmul.f32 %v2259, %v2595
      %v2653 = vadd.f32 %v1107, %v2091
      %v2654 = vadd.f32 %v1111, %v2092
      %v2655 = vadd.f32 %v1117, %v2093
      %v2656 = vadd.f32 %v1121, %v2094
      %v2657 = vadd.f32 %v1127, %v2095
      %v2658 = vadd.f32 %v1131, %v2096
      %v2659 = vadd.f32 %v1137, %v2097
      %v2660 = vadd.f32 %v1141, %v2098
      %v2661 = vadd.f32 %v1147, %v2099
      %v2662 = vadd.f32 %v1151, %v2100
      %v2663 = vadd.f32 %v1157, %v2101
      %v2664 = vadd.f32 %v1161, %v2102
      %v2665 = vadd.f32 %v1167, %v2103
      %v2666 = vadd.f32 %v1171, %v2104
      %v2667 = vadd.f32 %v1177, %v2105
      %v2668 = vadd.f32 %v1181, %v2106
      %v2669 = vadd.f32 %v1187, %v2107
      %v2670 = vadd.f32 %v1191, %v2108
      %v2671 = vadd.f32 %v1197, %v2109
      %v2672 = vadd.f32 %v1201, %v2110
      %v2673 = vadd.f32 %v1207, %v2111
      %v2674 = vadd.f32 %v1211, %v2112
      %v2675 = vadd.f32 %v1217, %v2113
      %v2676 = vadd.f32 %v1221, %v2114
      %v2677 = vadd.f32 %v1227, %v2115
      %v2678 = vadd.f32 %v1231, %v2116
      %v2679 = vadd.f32 %v1237, %v2117
      %v2680 = vadd.f32 %v1241, %v2118
      %v2681 = vadd.f32 %v1247, %v2119
      %v2682 = vadd.f32 %v1251, %v2120
      %v2683 = vadd.f32 %v1257, %v2121
      %v2684 = vadd.f32 %v1261, %v2122
      %v2685 = vadd.f32 %v1267, %v2123
      %v2686 = vadd.f32 %v1271, %v2124
      %v2687 = vadd.f32 %v1277, %v2125
      %v2688 = vadd.f32 %v1281, %v2126
      %v2689 = vadd.f32 %v1287, %v2127
      %v2690 = vadd.f32 %v1291, %v2128
      %v2691 = vadd.f32 %v1297, %v2129
      %v2692 = vadd.f32 %v1301, %v2130
      %v2693 = vadd.f32 %v1307, %v2131
      %v2694 = vadd.f32 %v1311, %v2132
      %v2695 = vadd.f32 %v1317, %v2133
      %v2696 = vadd.f32 %v1321, %v2134
      %v2697 = vadd.f32 %v1327, %v2135
      %v2698 = vadd.f32 %v1331, %v2136
      %v2699 = vadd.f32 %v1337, %v2137
      %v2700 = vadd.f32 %v1341, %v2138
      %v2701 = vadd.f32 %v1347, %v2139
      %v2702 = vadd.f32 %v1351, %v2140
      %v2703 = vadd.f32 %v1357, %v2141
      %v2704 = vadd.f32 %v1361, %v2142
      %v2705 = vadd.f32 %v1367, %v2143
      %v2706 = vadd.f32 %v1371, %v2144
      %v2707 = vadd.f32 %v1377, %v2145
      %v2708 = vadd.f32 %v1381, %v2146
      %v2709 = vadd.f32 %v2653, %v2597
      %v2710 = vadd.f32 %v2654, %v2598
      %v2711 = vadd.f32 %v2655, %v2599
      %v2712 = vadd.f32 %v2656, %v2600
      %v2713 = vadd.f32 %v2657, %v2601
      %v2714 = vadd.f32 %v2658, %v2602
      %v2715 = vadd.f32 %v2659, %v2603
      %v2716 = vadd.f32 %v2660, %v2604
      %v2717 = vadd.f32 %v2661, %v2605
      %v2718 = vadd.f32 %v2662, %v2606
      %v2719 = vadd.f32 %v2663, %v2607
      %v2720 = vadd.f32 %v2664, %v2608
      %v2721 = vadd.f32 %v2665, %v2609
      %v2722 = vadd.f32 %v2666, %v2610
      %v2723 = vadd.f32 %v2667, %v2611
      %v2724 = vadd.f32 %v2668, %v2612
      %v2725 = vadd.f32 %v2669, %v2613
      %v2726 = vadd.f32 %v2670, %v2614
      %v2727 = vadd.f32 %v2671, %v2615
      %v2728 = vadd.f32 %v2672, %v2616
      %v2729 = vadd.f32 %v2673, %v2617
      %v2730 = vadd.f32 %v2674, %v2618
      %v2731 = vadd.f32 %v2675, %v2619
      %v2732 = vadd.f32 %v2676, %v2620
      %v2733 = vadd.f32 %v2677, %v2621
      %v2734 = vadd.f32 %v2678, %v2622
      %v2735 = vadd.f32 %v2679, %v2623
      %v2736 = vadd.f32 %v2680, %v2624
      %v2737 = vadd.f32 %v2681, %v2625
      %v2738 = vadd.f32 %v2682, %v2626
      %v2739 = vadd.f32 %v2683, %v2627
      %v2740 = vadd.f32 %v2684, %v2628
      %v2741 = vadd.f32 %v2685, %v2629
      %v2742 = vadd.f32 %v2686, %v2630
      %v2743 = vadd.f32 %v2687, %v2631
      %v2744 = vadd.f32 %v2688, %v2632
      %v2745 = vadd.f32 %v2689, %v2633
      %v2746 = vadd.f32 %v2690, %v2634
      %v2747 = vadd.f32 %v2691, %v2635
      %v2748 = vadd.f32 %v2692, %v2636
      %v2749 = vadd.f32 %v2693, %v2637
      %v2750 = vadd.f32 %v2694, %v2638
      %v2751 = vadd.f32 %v2695, %v2639
      %v2752 = vadd.f32 %v2696, %v2640
      %v2753 = vadd.f32 %v2697, %v2641
      %v2754 = vadd.f32 %v2698, %v2642
      %v2755 = vadd.f32 %v2699, %v2643
      %v2756 = vadd.f32 %v2700, %v2644
      %v2757 = vadd.f32 %v2701, %v2645
      %v2758 = vadd.f32 %v2702, %v2646
      %v2759 = vadd.f32 %v2703, %v2647
      %v2760 = vadd.f32 %v2704, %v2648
      %v2761 = vadd.f32 %v2705, %v2649
      %v2762 = vadd.f32 %v2706, %v2650
      %v2763 = vadd.f32 %v2707, %v2651
      %v2764 = vadd.f32 %v2708, %v2652
      %v2765 = vld [vmem:[%s5] sm:$0x1]
      %v2767 = vlaneseq
      %v2768 = vshrl.u32 %v2767, 7
      %v2769 = vsub.s32 0, %v2768
      %v2770 = vrot.slane %v2765, %v2769
      %v2772 = vadd.f32 %v2709, %v2770
      %v2773 = vadd.f32 %v2710, %v2770
      %v2774 = vadd.f32 %v2711, %v2770
      %v2775 = vadd.f32 %v2712, %v2770
      %v2776 = vadd.f32 %v2713, %v2770
      %v2777 = vadd.f32 %v2714, %v2770
      %v2778 = vadd.f32 %v2715, %v2770
      %v2779 = vadd.f32 %v2716, %v2770
      %v2780 = vadd.f32 %v2717, %v2770
      %v2781 = vadd.f32 %v2718, %v2770
      %v2782 = vadd.f32 %v2719, %v2770
      %v2783 = vadd.f32 %v2720, %v2770
      %v2784 = vadd.f32 %v2721, %v2770
      %v2785 = vadd.f32 %v2722, %v2770
      %v2786 = vadd.f32 %v2723, %v2770
      %v2787 = vadd.f32 %v2724, %v2770
      %v2788 = vadd.f32 %v2725, %v2770
      %v2789 = vadd.f32 %v2726, %v2770
      %v2790 = vadd.f32 %v2727, %v2770
      %v2791 = vadd.f32 %v2728, %v2770
      %v2792 = vadd.f32 %v2729, %v2770
      %v2793 = vadd.f32 %v2730, %v2770
      %v2794 = vadd.f32 %v2731, %v2770
      %v2795 = vadd.f32 %v2732, %v2770
      %v2796 = vadd.f32 %v2733, %v2770
      %v2797 = vadd.f32 %v2734, %v2770
      %v2798 = vadd.f32 %v2735, %v2770
      %v2799 = vadd.f32 %v2736, %v2770
      %v2800 = vadd.f32 %v2737, %v2770
      %v2801 = vadd.f32 %v2738, %v2770
      %v2802 = vadd.f32 %v2739, %v2770
      %v2803 = vadd.f32 %v2740, %v2770
      %v2804 = vadd.f32 %v2741, %v2770
      %v2805 = vadd.f32 %v2742, %v2770
      %v2806 = vadd.f32 %v2743, %v2770
      %v2807 = vadd.f32 %v2744, %v2770
      %v2808 = vadd.f32 %v2745, %v2770
      %v2809 = vadd.f32 %v2746, %v2770
      %v2810 = vadd.f32 %v2747, %v2770
      %v2811 = vadd.f32 %v2748, %v2770
      %v2812 = vadd.f32 %v2749, %v2770
      %v2813 = vadd.f32 %v2750, %v2770
      %v2814 = vadd.f32 %v2751, %v2770
      %v2815 = vadd.f32 %v2752, %v2770
      %v2816 = vadd.f32 %v2753, %v2770
      %v2817 = vadd.f32 %v2754, %v2770
      %v2818 = vadd.f32 %v2755, %v2770
      %v2819 = vadd.f32 %v2756, %v2770
      %v2820 = vadd.f32 %v2757, %v2770
      %v2821 = vadd.f32 %v2758, %v2770
      %v2822 = vadd.f32 %v2759, %v2770
      %v2823 = vadd.f32 %v2760, %v2770
      %v2824 = vadd.f32 %v2761, %v2770
      %v2825 = vadd.f32 %v2762, %v2770
      %v2826 = vadd.f32 %v2763, %v2770
      %v2827 = vadd.f32 %v2764, %v2770
      %vm2828 = vcmp.ge.f32.partialorder %v2772, 0.0
      %vm2829 = vcmp.ge.f32.partialorder %v2773, 0.0
      %vm2830 = vcmp.ge.f32.partialorder %v2774, 0.0
      %vm2831 = vcmp.ge.f32.partialorder %v2775, 0.0
      %vm2832 = vcmp.ge.f32.partialorder %v2776, 0.0
      %vm2833 = vcmp.ge.f32.partialorder %v2777, 0.0
      %vm2834 = vcmp.ge.f32.partialorder %v2778, 0.0
      %vm2835 = vcmp.ge.f32.partialorder %v2779, 0.0
      %vm2836 = vcmp.ge.f32.partialorder %v2780, 0.0
      %vm2837 = vcmp.ge.f32.partialorder %v2781, 0.0
      %vm2838 = vcmp.ge.f32.partialorder %v2782, 0.0
      %vm2839 = vcmp.ge.f32.partialorder %v2783, 0.0
      %vm2840 = vcmp.ge.f32.partialorder %v2784, 0.0
      %vm2841 = vcmp.ge.f32.partialorder %v2785, 0.0
      %vm2842 = vcmp.ge.f32.partialorder %v2786, 0.0
      %vm2843 = vcmp.ge.f32.partialorder %v2787, 0.0
      %vm2844 = vcmp.ge.f32.partialorder %v2788, 0.0
      %vm2845 = vcmp.ge.f32.partialorder %v2789, 0.0
      %vm2846 = vcmp.ge.f32.partialorder %v2790, 0.0
      %vm2847 = vcmp.ge.f32.partialorder %v2791, 0.0
      %vm2848 = vcmp.ge.f32.partialorder %v2792, 0.0
      %vm2849 = vcmp.ge.f32.partialorder %v2793, 0.0
      %vm2850 = vcmp.ge.f32.partialorder %v2794, 0.0
      %vm2851 = vcmp.ge.f32.partialorder %v2795, 0.0
      %vm2852 = vcmp.ge.f32.partialorder %v2796, 0.0
      %vm2853 = vcmp.ge.f32.partialorder %v2797, 0.0
      %vm2854 = vcmp.ge.f32.partialorder %v2798, 0.0
      %vm2855 = vcmp.ge.f32.partialorder %v2799, 0.0
      %vm2856 = vcmp.ge.f32.partialorder %v2800, 0.0
      %vm2857 = vcmp.ge.f32.partialorder %v2801, 0.0
      %vm2858 = vcmp.ge.f32.partialorder %v2802, 0.0
      %vm2859 = vcmp.ge.f32.partialorder %v2803, 0.0
      %vm2860 = vcmp.ge.f32.partialorder %v2804, 0.0
      %vm2861 = vcmp.ge.f32.partialorder %v2805, 0.0
      %vm2862 = vcmp.ge.f32.partialorder %v2806, 0.0
      %vm2863 = vcmp.ge.f32.partialorder %v2807, 0.0
      %vm2864 = vcmp.ge.f32.partialorder %v2808, 0.0
      %vm2865 = vcmp.ge.f32.partialorder %v2809, 0.0
      %vm2866 = vcmp.ge.f32.partialorder %v2810, 0.0
      %vm2867 = vcmp.ge.f32.partialorder %v2811, 0.0
      %vm2868 = vcmp.ge.f32.partialorder %v2812, 0.0
      %vm2869 = vcmp.ge.f32.partialorder %v2813, 0.0
      %vm2870 = vcmp.ge.f32.partialorder %v2814, 0.0
      %vm2871 = vcmp.ge.f32.partialorder %v2815, 0.0
      %vm2872 = vcmp.ge.f32.partialorder %v2816, 0.0
      %vm2873 = vcmp.ge.f32.partialorder %v2817, 0.0
      %vm2874 = vcmp.ge.f32.partialorder %v2818, 0.0
      %vm2875 = vcmp.ge.f32.partialorder %v2819, 0.0
      %vm2876 = vcmp.ge.f32.partialorder %v2820, 0.0
      %vm2877 = vcmp.ge.f32.partialorder %v2821, 0.0
      %vm2878 = vcmp.ge.f32.partialorder %v2822, 0.0
      %vm2879 = vcmp.ge.f32.partialorder %v2823, 0.0
      %vm2880 = vcmp.ge.f32.partialorder %v2824, 0.0
      %vm2881 = vcmp.ge.f32.partialorder %v2825, 0.0
      %vm2882 = vcmp.ge.f32.partialorder %v2826, 0.0
      %vm2883 = vcmp.ge.f32.partialorder %v2827, 0.0
      %v2884 = vmul.f32 %v2772, 0.2
      %v2885 = vmul.f32 %v2773, 0.2
      %v2886 = vmul.f32 %v2774, 0.2
      %v2887 = vmul.f32 %v2775, 0.2
      %v2888 = vmul.f32 %v2776, 0.2
      %v2889 = vmul.f32 %v2777, 0.2
      %v2890 = vmul.f32 %v2778, 0.2
      %v2891 = vmul.f32 %v2779, 0.2
      %v2892 = vmul.f32 %v2780, 0.2
      %v2893 = vmul.f32 %v2781, 0.2
      %v2894 = vmul.f32 %v2782, 0.2
      %v2895 = vmul.f32 %v2783, 0.2
      %v2896 = vmul.f32 %v2784, 0.2
      %v2897 = vmul.f32 %v2785, 0.2
      %v2898 = vmul.f32 %v2786, 0.2
      %v2899 = vmul.f32 %v2787, 0.2
      %v2900 = vmul.f32 %v2788, 0.2
      %v2901 = vmul.f32 %v2789, 0.2
      %v2902 = vmul.f32 %v2790, 0.2
      %v2903 = vmul.f32 %v2791, 0.2
      %v2904 = vmul.f32 %v2792, 0.2
      %v2905 = vmul.f32 %v2793, 0.2
      %v2906 = vmul.f32 %v2794, 0.2
      %v2907 = vmul.f32 %v2795, 0.2
      %v2908 = vmul.f32 %v2796, 0.2
      %v2909 = vmul.f32 %v2797, 0.2
      %v2910 = vmul.f32 %v2798, 0.2
      %v2911 = vmul.f32 %v2799, 0.2
      %v2912 = vmul.f32 %v2800, 0.2
      %v2913 = vmul.f32 %v2801, 0.2
      %v2914 = vmul.f32 %v2802, 0.2
      %v2915 = vmul.f32 %v2803, 0.2
      %v2916 = vmul.f32 %v2804, 0.2
      %v2917 = vmul.f32 %v2805, 0.2
      %v2918 = vmul.f32 %v2806, 0.2
      %v2919 = vmul.f32 %v2807, 0.2
      %v2920 = vmul.f32 %v2808, 0.2
      %v2921 = vmul.f32 %v2809, 0.2
      %v2922 = vmul.f32 %v2810, 0.2
      %v2923 = vmul.f32 %v2811, 0.2
      %v2924 = vmul.f32 %v2812, 0.2
      %v2925 = vmul.f32 %v2813, 0.2
      %v2926 = vmul.f32 %v2814, 0.2
      %v2927 = vmul.f32 %v2815, 0.2
      %v2928 = vmul.f32 %v2816, 0.2
      %v2929 = vmul.f32 %v2817, 0.2
      %v2930 = vmul.f32 %v2818, 0.2
      %v2931 = vmul.f32 %v2819, 0.2
      %v2932 = vmul.f32 %v2820, 0.2
      %v2933 = vmul.f32 %v2821, 0.2
      %v2934 = vmul.f32 %v2822, 0.2
      %v2935 = vmul.f32 %v2823, 0.2
      %v2936 = vmul.f32 %v2824, 0.2
      %v2937 = vmul.f32 %v2825, 0.2
      %v2938 = vmul.f32 %v2826, 0.2
      %v2939 = vmul.f32 %v2827, 0.2
      %v2940 = vsel %vm2828, %v2772, %v2884
      %v2941 = vsel %vm2829, %v2773, %v2885
      %v2942 = vsel %vm2830, %v2774, %v2886
      %v2943 = vsel %vm2831, %v2775, %v2887
      %v2944 = vsel %vm2832, %v2776, %v2888
      %v2945 = vsel %vm2833, %v2777, %v2889
      %v2946 = vsel %vm2834, %v2778, %v2890
      %v2947 = vsel %vm2835, %v2779, %v2891
      %v2948 = vsel %vm2836, %v2780, %v2892
      %v2949 = vsel %vm2837, %v2781, %v2893
      %v2950 = vsel %vm2838, %v2782, %v2894
      %v2951 = vsel %vm2839, %v2783, %v2895
      %v2952 = vsel %vm2840, %v2784, %v2896
      %v2953 = vsel %vm2841, %v2785, %v2897
      %v2954 = vsel %vm2842, %v2786, %v2898
      %v2955 = vsel %vm2843, %v2787, %v2899
      %v2956 = vsel %vm2844, %v2788, %v2900
      %v2957 = vsel %vm2845, %v2789, %v2901
      %v2958 = vsel %vm2846, %v2790, %v2902
      %v2959 = vsel %vm2847, %v2791, %v2903
      %v2960 = vsel %vm2848, %v2792, %v2904
      %v2961 = vsel %vm2849, %v2793, %v2905
      %v2962 = vsel %vm2850, %v2794, %v2906
      %v2963 = vsel %vm2851, %v2795, %v2907
      %v2964 = vsel %vm2852, %v2796, %v2908
      %v2965 = vsel %vm2853, %v2797, %v2909
      %v2966 = vsel %vm2854, %v2798, %v2910
      %v2967 = vsel %vm2855, %v2799, %v2911
      %v2968 = vsel %vm2856, %v2800, %v2912
      %v2969 = vsel %vm2857, %v2801, %v2913
      %v2970 = vsel %vm2858, %v2802, %v2914
      %v2971 = vsel %vm2859, %v2803, %v2915
      %v2972 = vsel %vm2860, %v2804, %v2916
      %v2973 = vsel %vm2861, %v2805, %v2917
      %v2974 = vsel %vm2862, %v2806, %v2918
      %v2975 = vsel %vm2863, %v2807, %v2919
      %v2976 = vsel %vm2864, %v2808, %v2920
      %v2977 = vsel %vm2865, %v2809, %v2921
      %v2978 = vsel %vm2866, %v2810, %v2922
      %v2979 = vsel %vm2867, %v2811, %v2923
      %v2980 = vsel %vm2868, %v2812, %v2924
      %v2981 = vsel %vm2869, %v2813, %v2925
      %v2982 = vsel %vm2870, %v2814, %v2926
      %v2983 = vsel %vm2871, %v2815, %v2927
      %v2984 = vsel %vm2872, %v2816, %v2928
      %v2985 = vsel %vm2873, %v2817, %v2929
      %v2986 = vsel %vm2874, %v2818, %v2930
      %v2987 = vsel %vm2875, %v2819, %v2931
      %v2988 = vsel %vm2876, %v2820, %v2932
      %v2989 = vsel %vm2877, %v2821, %v2933
      %v2990 = vsel %vm2878, %v2822, %v2934
      %v2991 = vsel %vm2879, %v2823, %v2935
      %v2992 = vsel %vm2880, %v2824, %v2936
      %v2993 = vsel %vm2881, %v2825, %v2937
      %v2994 = vsel %vm2882, %v2826, %v2938
      %v2995 = vsel %vm2883, %v2827, %v2939
      %v2996 = vpack.c.bf16 %v2941, %v2940
      %v2997 = vpack.c.bf16 %v2943, %v2942
      %v2998 = vpack.c.bf16 %v2945, %v2944
      %v2999 = vpack.c.bf16 %v2947, %v2946
      %v3000 = vpack.c.bf16 %v2949, %v2948
      %v3001 = vpack.c.bf16 %v2951, %v2950
      %v3002 = vpack.c.bf16 %v2953, %v2952
      %v3003 = vpack.c.bf16 %v2955, %v2954
      %v3004 = vpack.c.bf16 %v2957, %v2956
      %v3005 = vpack.c.bf16 %v2959, %v2958
      %v3006 = vpack.c.bf16 %v2961, %v2960
      %v3007 = vpack.c.bf16 %v2963, %v2962
      %v3008 = vpack.c.bf16 %v2965, %v2964
      %v3009 = vpack.c.bf16 %v2967, %v2966
      %v3010 = vpack.c.bf16 %v2969, %v2968
      %v3011 = vpack.c.bf16 %v2971, %v2970
      %v3012 = vpack.c.bf16 %v2973, %v2972
      %v3013 = vpack.c.bf16 %v2975, %v2974
      %v3014 = vpack.c.bf16 %v2977, %v2976
      %v3015 = vpack.c.bf16 %v2979, %v2978
      %v3016 = vpack.c.bf16 %v2981, %v2980
      %v3017 = vpack.c.bf16 %v2983, %v2982
      %v3018 = vpack.c.bf16 %v2985, %v2984
      %v3019 = vpack.c.bf16 %v2987, %v2986
      %v3020 = vpack.c.bf16 %v2989, %v2988
      %v3021 = vpack.c.bf16 %v2991, %v2990
      %v3022 = vpack.c.bf16 %v2993, %v2992
      %v3023 = vpack.c.bf16 %v2995, %v2994
      %v3024 = vld [vmem:[%s6] sm:$0xff]
      %v3025 = vld [vmem:[%s6 + $0x8] sm:$0xf]
      %v3026 = vld [vmem:[%s6 + $0xc] sm:$0xff]
      %v3027 = vld [vmem:[%s6 + $0x14] sm:$0xf]
      %v3028 = vld [vmem:[%s6 + $0x18] sm:$0xff]
      %v3029 = vld [vmem:[%s6 + $0x20] sm:$0xf]
      %v3030 = vld [vmem:[%s6 + $0x24] sm:$0xff]
      %v3031 = vld [vmem:[%s6 + $0x2c] sm:$0xf]
      %v3032 = vld [vmem:[%s6 + $0x30] sm:$0xff]
      %v3033 = vld [vmem:[%s6 + $0x38] sm:$0xf]
      %v3034 = vld [vmem:[%s6 + $0x3c] sm:$0xff]
      %v3035 = vld [vmem:[%s6 + $0x44] sm:$0xf]
      %v3036 = vld [vmem:[%s6 + $0x48] sm:$0xff]
      %v3037 = vld [vmem:[%s6 + $0x50] sm:$0xf]
      %v3038 = vld [vmem:[%s6 + $0x54] sm:$0xff]
      %v3039 = vld [vmem:[%s6 + $0x5c] sm:$0xf]
      %v3040 = vld [vmem:[%s6 + $0x60] sm:$0xff]
      %v3041 = vld [vmem:[%s6 + $0x68] sm:$0xf]
      %v3042 = vld [vmem:[%s6 + $0x6c] sm:$0xff]
      %v3043 = vld [vmem:[%s6 + $0x74] sm:$0xf]
      %v3044 = vld [vmem:[%s6 + $0x78] sm:$0xff]
      %v3045 = vld [vmem:[%s6 + $0x80] sm:$0xf]
      %v3046 = vld [vmem:[%s6 + $0x84] sm:$0xff]
      %v3047 = vld [vmem:[%s6 + $0x8c] sm:$0xf]
      %v3048 = vld [vmem:[%s6 + $0x90] sm:$0xff]
      %v3049 = vld [vmem:[%s6 + $0x98] sm:$0xf]
      %v3050 = vld [vmem:[%s6 + $0x9c] sm:$0xff]
      %v3051 = vld [vmem:[%s6 + $0xa4] sm:$0xf]
      %v3052 = vld [vmem:[%s6 + $0xa8] sm:$0xff]
      %v3053 = vld [vmem:[%s6 + $0xb0] sm:$0xf]
      %v3054 = vld [vmem:[%s6 + $0xb4] sm:$0xff]
      %v3055 = vld [vmem:[%s6 + $0xbc] sm:$0xf]
      %v3088 = vunpack.c.l.b16 %v3024
      %v3089 = vunpack.c.h.b16 %v3024
      %v3090 = vunpack.c.l.b16 %v3025
      %v3091 = vunpack.c.l.b16 %v3026
      %v3092 = vunpack.c.h.b16 %v3026
      %v3093 = vunpack.c.l.b16 %v3027
      %v3094 = vunpack.c.l.b16 %v3028
      %v3095 = vunpack.c.h.b16 %v3028
      %v3096 = vunpack.c.l.b16 %v3029
      %v3097 = vunpack.c.l.b16 %v3030
      %v3098 = vunpack.c.h.b16 %v3030
      %v3099 = vunpack.c.l.b16 %v3031
      %v3100 = vunpack.c.l.b16 %v3032
      %v3101 = vunpack.c.h.b16 %v3032
      %v3102 = vunpack.c.l.b16 %v3033
      %v3103 = vunpack.c.l.b16 %v3034
      %v3104 = vunpack.c.h.b16 %v3034
      %v3105 = vunpack.c.l.b16 %v3035
      %v3106 = vunpack.c.l.b16 %v3036
      %v3107 = vunpack.c.h.b16 %v3036
      %v3108 = vunpack.c.l.b16 %v3037
      %v3109 = vunpack.c.l.b16 %v3038
      %v3110 = vunpack.c.h.b16 %v3038
      %v3111 = vunpack.c.l.b16 %v3039
      %v3112 = vunpack.c.l.b16 %v3040
      %v3113 = vunpack.c.h.b16 %v3040
      %v3114 = vunpack.c.l.b16 %v3041
      %v3115 = vunpack.c.l.b16 %v3042
      %v3116 = vunpack.c.h.b16 %v3042
      %v3117 = vunpack.c.l.b16 %v3043
      %v3118 = vunpack.c.l.b16 %v3044
      %v3119 = vunpack.c.h.b16 %v3044
      %v3120 = vunpack.c.l.b16 %v3045
      %v3121 = vunpack.c.l.b16 %v3046
      %v3122 = vunpack.c.h.b16 %v3046
      %v3123 = vunpack.c.l.b16 %v3047
      %v3124 = vunpack.c.l.b16 %v3048
      %v3125 = vunpack.c.h.b16 %v3048
      %v3126 = vunpack.c.l.b16 %v3049
      %v3127 = vunpack.c.l.b16 %v3050
      %v3128 = vunpack.c.h.b16 %v3050
      %v3129 = vunpack.c.l.b16 %v3051
      %v3130 = vunpack.c.l.b16 %v3052
      %v3131 = vunpack.c.h.b16 %v3052
      %v3132 = vunpack.c.l.b16 %v3053
      %v3133 = vunpack.c.l.b16 %v3054
      %v3134 = vunpack.c.h.b16 %v3054
      %v3135 = vunpack.c.l.b16 %v3055
      %v3136 = vpack.c.b16 %v3091, %v3088
      %v3137 = vpack.c.b16 %v3092, %v3089
      %v3138 = vpack.c.b16 %v3093, %v3090
      %v3139 = vpack.c.b16 %v3097, %v3094
      %v3140 = vpack.c.b16 %v3098, %v3095
      %v3141 = vpack.c.b16 %v3099, %v3096
      %v3142 = vpack.c.b16 %v3103, %v3100
      %v3143 = vpack.c.b16 %v3104, %v3101
      %v3144 = vpack.c.b16 %v3105, %v3102
      %v3145 = vpack.c.b16 %v3109, %v3106
      %v3146 = vpack.c.b16 %v3110, %v3107
      %v3147 = vpack.c.b16 %v3111, %v3108
      %v3148 = vpack.c.b16 %v3115, %v3112
      %v3149 = vpack.c.b16 %v3116, %v3113
      %v3150 = vpack.c.b16 %v3117, %v3114
      %v3151 = vpack.c.b16 %v3121, %v3118
      %v3152 = vpack.c.b16 %v3122, %v3119
      %v3153 = vpack.c.b16 %v3123, %v3120
      %v3154 = vpack.c.b16 %v3127, %v3124
      %v3155 = vpack.c.b16 %v3128, %v3125
      %v3156 = vpack.c.b16 %v3129, %v3126
      %v3157 = vpack.c.b16 %v3133, %v3130
      %v3158 = vpack.c.b16 %v3134, %v3131
      %v3159 = vpack.c.b16 %v3135, %v3132
      %3184 = vmatprep.subr.bf16.mxu0 %v3137
      %3185 = vmatpush1.bf16.msra.mxu0 %v3136
      %3186 = vmatprep.subr.bf16.mxu0 %v3140
      %3187 = vmatpush1.bf16.msra.mxu0 %v3139
      %3188 = vmatprep.subr.bf16.mxu0 %v3143
      %3189 = vmatpush1.bf16.msra.mxu0 %v3142
      %3190 = vmatprep.subr.bf16.mxu0 %v3146
      %3191 = vmatpush1.bf16.msra.mxu0 %v3145
      %3192 = vmatprep.subr.bf16.mxu0 %v3149
      %3193 = vmatpush1.bf16.msra.mxu0 %v3148
      %3194 = vmatprep.subr.bf16.mxu0 %v3152
      %3195 = vmatpush1.bf16.msra.mxu0 %v3151
      %3196 = vmatprep.subr.bf16.mxu0 %v3155
      %3197 = vmatpush1.bf16.msra.mxu0 %v3154
      %3198 = vmatprep.subr.bf16.mxu0 %v3158
      %3199 = vmatpush1.bf16.msra.mxu0 %v3157
      %3200 = vmatprep.subr.bf16.mxu0 0
      %3201 = vmatpush1.bf16.msra.mxu0 0
      %3202 = vmatprep.subr.bf16.mxu0 0
      %3203 = vmatpush1.bf16.msra.mxu0 0
      %3204 = vmatprep.subr.bf16.mxu0 0
      %3205 = vmatpush1.bf16.msra.mxu0 0
      %3206 = vmatprep.subr.bf16.mxu0 0
      %3207 = vmatpush1.bf16.msra.mxu0 0
      %3208 = vmatprep.subr.bf16.mxu0 0
      %3209 = vmatpush1.bf16.msra.mxu0 0
      %3210 = vmatprep.subr.bf16.mxu0 0
      %3211 = vmatpush1.bf16.msra.mxu0 0
      %3212 = vmatprep.subr.bf16.mxu0 0
      %3213 = vmatpush1.bf16.msra.mxu0 0
      %3214 = vmatprep.subr.bf16.mxu0 0
      %3215 = vmatpush1.bf16.msra.mxu0 0
      %3216 = vmatprep.mubr.bf16.mxu0 0
      %3217 = vmatmul.mubr.bf16.gmra.mrb[0].mxu0 %v2996
      %v3218 = vpop.f32.mrb[0].mxu0
      %v3219 = vadd.f32 0.0, %v3218
      %v3220 = vpop.f32.mrb[0].mxu0
      %v3221 = vadd.f32 0.0, %v3220
      %v3222 = vpop.f32.mrb[0].mxu0
      %v3223 = vadd.f32 0.0, %v3222
      %v3224 = vpop.f32.mrb[0].mxu0
      %v3225 = vadd.f32 0.0, %v3224
      %3226 = vmatprep.mubr.bf16.mxu0 0
      %3227 = vmatmul.mubr.bf16.gmra.mrb[0].mxu0 %v2997
      %v3228 = vpop.f32.mrb[0].mxu0
      %v3229 = vadd.f32 0.0, %v3228
      %v3230 = vpop.f32.mrb[0].mxu0
      %v3231 = vadd.f32 0.0, %v3230
      %v3232 = vpop.f32.mrb[0].mxu0
      %v3233 = vadd.f32 0.0, %v3232
      %v3234 = vpop.f32.mrb[0].mxu0
      %v3235 = vadd.f32 0.0, %v3234
      %3236 = vmatprep.mubr.bf16.mxu0 0
      %3237 = vmatmul.mubr.bf16.gmra.mrb[0].mxu0 %v2998
      %v3238 = vpop.f32.mrb[0].mxu0
      %v3239 = vadd.f32 0.0, %v3238
      %v3240 = vpop.f32.mrb[0].mxu0
      %v3241 = vadd.f32 0.0, %v3240
      %v3242 = vpop.f32.mrb[0].mxu0
      %v3243 = vadd.f32 0.0, %v3242
      %v3244 = vpop.f32.mrb[0].mxu0
      %v3245 = vadd.f32 0.0, %v3244
      %3246 = vmatprep.mubr.bf16.mxu0 0
      %3247 = vmatmul.mubr.bf16.gmra.mrb[0].mxu0 %v2999
      %v3248 = vpop.f32.mrb[0].mxu0
      %v3249 = vadd.f32 0.0, %v3248
      %v3250 = vpop.f32.mrb[0].mxu0
      %v3251 = vadd.f32 0.0, %v3250
      %v3252 = vpop.f32.mrb[0].mxu0
      %v3253 = vadd.f32 0.0, %v3252
      %v3254 = vpop.f32.mrb[0].mxu0
      %v3255 = vadd.f32 0.0, %v3254
      %3256 = vmatprep.mubr.bf16.mxu0 0
      %3257 = vmatmul.mubr.bf16.gmra.mrb[0].mxu0 %v3000
      %v3258 = vpop.f32.mrb[0].mxu0
      %v3259 = vadd.f32 0.0, %v3258
      %v3260 = vpop.f32.mrb[0].mxu0
      %v3261 = vadd.f32 0.0, %v3260
      %v3262 = vpop.f32.mrb[0].mxu0
      %v3263 = vadd.f32 0.0, %v3262
      %v3264 = vpop.f32.mrb[0].mxu0
      %v3265 = vadd.f32 0.0, %v3264
      %3266 = vmatprep.mubr.bf16.mxu0 0
      %3267 = vmatmul.mubr.bf16.gmra.mrb[0].mxu0 %v3001
      %v3268 = vpop.f32.mrb[0].mxu0
      %v3269 = vadd.f32 0.0, %v3268
      %v3270 = vpop.f32.mrb[0].mxu0
      %v3271 = vadd.f32 0.0, %v3270
      %v3272 = vpop.f32.mrb[0].mxu0
      %v3273 = vadd.f32 0.0, %v3272
      %v3274 = vpop.f32.mrb[0].mxu0
      %v3275 = vadd.f32 0.0, %v3274
      %3276 = vmatprep.mubr.bf16.mxu0 0
      %3277 = vmatmul.mubr.bf16.gmra.mrb[0].mxu0 %v3002
      %v3278 = vpop.f32.mrb[0].mxu0
      %v3279 = vadd.f32 0.0, %v3278
      %v3280 = vpop.f32.mrb[0].mxu0
      %v3281 = vadd.f32 0.0, %v3280
      %v3282 = vpop.f32.mrb[0].mxu0
      %v3283 = vadd.f32 0.0, %v3282
      %v3284 = vpop.f32.mrb[0].mxu0
      %v3285 = vadd.f32 0.0, %v3284
      %3286 = vmatprep.mubr.bf16.mxu0 0
      %3287 = vmatmul.mubr.bf16.gmra.mrb[0].mxu0 %v3003
      %v3288 = vpop.f32.mrb[0].mxu0
      %v3289 = vadd.f32 0.0, %v3288
      %v3290 = vpop.f32.mrb[0].mxu0
      %v3291 = vadd.f32 0.0, %v3290
      %v3292 = vpop.f32.mrb[0].mxu0
      %v3293 = vadd.f32 0.0, %v3292
      %v3294 = vpop.f32.mrb[0].mxu0
      %v3295 = vadd.f32 0.0, %v3294
      %3296 = vmatprep.mubr.bf16.mxu0 0
      %3297 = vmatmul.mubr.bf16.gmra.mrb[0].mxu0 %v3004
      %v3298 = vpop.f32.mrb[0].mxu0
      %v3299 = vadd.f32 0.0, %v3298
      %v3300 = vpop.f32.mrb[0].mxu0
      %v3301 = vadd.f32 0.0, %v3300
      %v3302 = vpop.f32.mrb[0].mxu0
      %v3303 = vadd.f32 0.0, %v3302
      %v3304 = vpop.f32.mrb[0].mxu0
      %v3305 = vadd.f32 0.0, %v3304
      %3306 = vmatprep.mubr.bf16.mxu0 0
      %3307 = vmatmul.mubr.bf16.gmra.mrb[0].mxu0 %v3005
      %v3308 = vpop.f32.mrb[0].mxu0
      %v3309 = vadd.f32 0.0, %v3308
      %v3310 = vpop.f32.mrb[0].mxu0
      %v3311 = vadd.f32 0.0, %v3310
      %v3312 = vpop.f32.mrb[0].mxu0
      %v3313 = vadd.f32 0.0, %v3312
      %v3314 = vpop.f32.mrb[0].mxu0
      %v3315 = vadd.f32 0.0, %v3314
      %3316 = vmatprep.mubr.bf16.mxu0 0
      %3317 = vmatmul.mubr.bf16.gmra.mrb[0].mxu0 %v3006
      %v3318 = vpop.f32.mrb[0].mxu0
      %v3319 = vadd.f32 0.0, %v3318
      %v3320 = vpop.f32.mrb[0].mxu0
      %v3321 = vadd.f32 0.0, %v3320
      %v3322 = vpop.f32.mrb[0].mxu0
      %v3323 = vadd.f32 0.0, %v3322
      %v3324 = vpop.f32.mrb[0].mxu0
      %v3325 = vadd.f32 0.0, %v3324
      %3326 = vmatprep.mubr.bf16.mxu0 0
      %3327 = vmatmul.mubr.bf16.gmra.mrb[0].mxu0 %v3007
      %v3328 = vpop.f32.mrb[0].mxu0
      %v3329 = vadd.f32 0.0, %v3328
      %v3330 = vpop.f32.mrb[0].mxu0
      %v3331 = vadd.f32 0.0, %v3330
      %v3332 = vpop.f32.mrb[0].mxu0
      %v3333 = vadd.f32 0.0, %v3332
      %v3334 = vpop.f32.mrb[0].mxu0
      %v3335 = vadd.f32 0.0, %v3334
      %3336 = vmatprep.mubr.bf16.mxu0 0
      %3337 = vmatmul.mubr.bf16.gmra.mrb[0].mxu0 %v3008
      %v3338 = vpop.f32.mrb[0].mxu0
      %v3339 = vadd.f32 0.0, %v3338
      %v3340 = vpop.f32.mrb[0].mxu0
      %v3341 = vadd.f32 0.0, %v3340
      %v3342 = vpop.f32.mrb[0].mxu0
      %v3343 = vadd.f32 0.0, %v3342
      %v3344 = vpop.f32.mrb[0].mxu0
      %v3345 = vadd.f32 0.0, %v3344
      %3346 = vmatprep.mubr.bf16.mxu0 0
      %3347 = vmatmul.mubr.bf16.gmra.mrb[0].mxu0 %v3009
      %v3348 = vpop.f32.mrb[0].mxu0
      %v3349 = vadd.f32 0.0, %v3348
      %v3350 = vpop.f32.mrb[0].mxu0
      %v3351 = vadd.f32 0.0, %v3350
      %v3352 = vpop.f32.mrb[0].mxu0
      %v3353 = vadd.f32 0.0, %v3352
      %v3354 = vpop.f32.mrb[0].mxu0
      %v3355 = vadd.f32 0.0, %v3354
      %3356 = vmatprep.mubr.bf16.mxu0 0
      %3357 = vmatmul.mubr.bf16.gmra.mrb[0].mxu0 %v3010
      %v3358 = vpop.f32.mrb[0].mxu0
      %v3359 = vadd.f32 0.0, %v3358
      %v3360 = vpop.f32.mrb[0].mxu0
      %v3361 = vadd.f32 0.0, %v3360
      %v3362 = vpop.f32.mrb[0].mxu0
      %v3363 = vadd.f32 0.0, %v3362
      %v3364 = vpop.f32.mrb[0].mxu0
      %v3365 = vadd.f32 0.0, %v3364
      %3366 = vmatprep.mubr.bf16.mxu0 0
      %3367 = vmatmul.mubr.bf16.gmra.mrb[0].mxu0 %v3011
      %v3368 = vpop.f32.mrb[0].mxu0
      %v3369 = vadd.f32 0.0, %v3368
      %v3370 = vpop.f32.mrb[0].mxu0
      %v3371 = vadd.f32 0.0, %v3370
      %v3372 = vpop.f32.mrb[0].mxu0
      %v3373 = vadd.f32 0.0, %v3372
      %v3374 = vpop.f32.mrb[0].mxu0
      %v3375 = vadd.f32 0.0, %v3374
      %3376 = vmatprep.mubr.bf16.mxu0 0
      %3377 = vmatmul.mubr.bf16.gmra.mrb[0].mxu0 %v3012
      %v3378 = vpop.f32.mrb[0].mxu0
      %v3379 = vadd.f32 0.0, %v3378
      %v3380 = vpop.f32.mrb[0].mxu0
      %v3381 = vadd.f32 0.0, %v3380
      %v3382 = vpop.f32.mrb[0].mxu0
      %v3383 = vadd.f32 0.0, %v3382
      %v3384 = vpop.f32.mrb[0].mxu0
      %v3385 = vadd.f32 0.0, %v3384
      %3386 = vmatprep.mubr.bf16.mxu0 0
      %3387 = vmatmul.mubr.bf16.gmra.mrb[0].mxu0 %v3013
      %v3388 = vpop.f32.mrb[0].mxu0
      %v3389 = vadd.f32 0.0, %v3388
      %v3390 = vpop.f32.mrb[0].mxu0
      %v3391 = vadd.f32 0.0, %v3390
      %v3392 = vpop.f32.mrb[0].mxu0
      %v3393 = vadd.f32 0.0, %v3392
      %v3394 = vpop.f32.mrb[0].mxu0
      %v3395 = vadd.f32 0.0, %v3394
      %3396 = vmatprep.mubr.bf16.mxu0 0
      %3397 = vmatmul.mubr.bf16.gmra.mrb[0].mxu0 %v3014
      %v3398 = vpop.f32.mrb[0].mxu0
      %v3399 = vadd.f32 0.0, %v3398
      %v3400 = vpop.f32.mrb[0].mxu0
      %v3401 = vadd.f32 0.0, %v3400
      %v3402 = vpop.f32.mrb[0].mxu0
      %v3403 = vadd.f32 0.0, %v3402
      %v3404 = vpop.f32.mrb[0].mxu0
      %v3405 = vadd.f32 0.0, %v3404
      %3406 = vmatprep.mubr.bf16.mxu0 0
      %3407 = vmatmul.mubr.bf16.gmra.mrb[0].mxu0 %v3015
      %v3408 = vpop.f32.mrb[0].mxu0
      %v3409 = vadd.f32 0.0, %v3408
      %v3410 = vpop.f32.mrb[0].mxu0
      %v3411 = vadd.f32 0.0, %v3410
      %v3412 = vpop.f32.mrb[0].mxu0
      %v3413 = vadd.f32 0.0, %v3412
      %v3414 = vpop.f32.mrb[0].mxu0
      %v3415 = vadd.f32 0.0, %v3414
      %3416 = vmatprep.mubr.bf16.mxu0 0
      %3417 = vmatmul.mubr.bf16.gmra.mrb[0].mxu0 %v3016
      %v3418 = vpop.f32.mrb[0].mxu0
      %v3419 = vadd.f32 0.0, %v3418
      %v3420 = vpop.f32.mrb[0].mxu0
      %v3421 = vadd.f32 0.0, %v3420
      %v3422 = vpop.f32.mrb[0].mxu0
      %v3423 = vadd.f32 0.0, %v3422
      %v3424 = vpop.f32.mrb[0].mxu0
      %v3425 = vadd.f32 0.0, %v3424
      %3426 = vmatprep.mubr.bf16.mxu0 0
      %3427 = vmatmul.mubr.bf16.gmra.mrb[0].mxu0 %v3017
      %v3428 = vpop.f32.mrb[0].mxu0
      %v3429 = vadd.f32 0.0, %v3428
      %v3430 = vpop.f32.mrb[0].mxu0
      %v3431 = vadd.f32 0.0, %v3430
      %v3432 = vpop.f32.mrb[0].mxu0
      %v3433 = vadd.f32 0.0, %v3432
      %v3434 = vpop.f32.mrb[0].mxu0
      %v3435 = vadd.f32 0.0, %v3434
      %3436 = vmatprep.mubr.bf16.mxu0 0
      %3437 = vmatmul.mubr.bf16.gmra.mrb[0].mxu0 %v3018
      %v3438 = vpop.f32.mrb[0].mxu0
      %v3439 = vadd.f32 0.0, %v3438
      %v3440 = vpop.f32.mrb[0].mxu0
      %v3441 = vadd.f32 0.0, %v3440
      %v3442 = vpop.f32.mrb[0].mxu0
      %v3443 = vadd.f32 0.0, %v3442
      %v3444 = vpop.f32.mrb[0].mxu0
      %v3445 = vadd.f32 0.0, %v3444
      %3446 = vmatprep.mubr.bf16.mxu0 0
      %3447 = vmatmul.mubr.bf16.gmra.mrb[0].mxu0 %v3019
      %v3448 = vpop.f32.mrb[0].mxu0
      %v3449 = vadd.f32 0.0, %v3448
      %v3450 = vpop.f32.mrb[0].mxu0
      %v3451 = vadd.f32 0.0, %v3450
      %v3452 = vpop.f32.mrb[0].mxu0
      %v3453 = vadd.f32 0.0, %v3452
      %v3454 = vpop.f32.mrb[0].mxu0
      %v3455 = vadd.f32 0.0, %v3454
      %3456 = vmatprep.mubr.bf16.mxu0 0
      %3457 = vmatmul.mubr.bf16.gmra.mrb[0].mxu0 %v3020
      %v3458 = vpop.f32.mrb[0].mxu0
      %v3459 = vadd.f32 0.0, %v3458
      %v3460 = vpop.f32.mrb[0].mxu0
      %v3461 = vadd.f32 0.0, %v3460
      %v3462 = vpop.f32.mrb[0].mxu0
      %v3463 = vadd.f32 0.0, %v3462
      %v3464 = vpop.f32.mrb[0].mxu0
      %v3465 = vadd.f32 0.0, %v3464
      %3466 = vmatprep.mubr.bf16.mxu0 0
      %3467 = vmatmul.mubr.bf16.gmra.mrb[0].mxu0 %v3021
      %v3468 = vpop.f32.mrb[0].mxu0
      %v3469 = vadd.f32 0.0, %v3468
      %v3470 = vpop.f32.mrb[0].mxu0
      %v3471 = vadd.f32 0.0, %v3470
      %v3472 = vpop.f32.mrb[0].mxu0
      %v3473 = vadd.f32 0.0, %v3472
      %v3474 = vpop.f32.mrb[0].mxu0
      %v3475 = vadd.f32 0.0, %v3474
      %3476 = vmatprep.mubr.bf16.mxu0 0
      %3477 = vmatmul.mubr.bf16.gmra.mrb[0].mxu0 %v3022
      %v3478 = vpop.f32.mrb[0].mxu0
      %v3479 = vadd.f32 0.0, %v3478
      %v3480 = vpop.f32.mrb[0].mxu0
      %v3481 = vadd.f32 0.0, %v3480
      %v3482 = vpop.f32.mrb[0].mxu0
      %v3483 = vadd.f32 0.0, %v3482
      %v3484 = vpop.f32.mrb[0].mxu0
      %v3485 = vadd.f32 0.0, %v3484
      %3486 = vmatprep.mubr.bf16.mxu0 0
      %3487 = vmatmul.mubr.bf16.gmra.mrb[0].mxu0 %v3023
      %v3488 = vpop.f32.mrb[0].mxu0
      %v3489 = vadd.f32 0.0, %v3488
      %v3490 = vpop.f32.mrb[0].mxu0
      %v3491 = vadd.f32 0.0, %v3490
      %v3492 = vpop.f32.mrb[0].mxu0
      %v3493 = vadd.f32 0.0, %v3492
      %v3494 = vpop.f32.mrb[0].mxu0
      %v3495 = vadd.f32 0.0, %v3494
      %3496 = vdwg.mxu0
      %3497 = vmatprep.subr.bf16.mxu0 0
      %3498 = vmatpush1.bf16.msra.mxu0 %v3138
      %3499 = vmatprep.subr.bf16.mxu0 0
      %3500 = vmatpush1.bf16.msra.mxu0 %v3141
      %3501 = vmatprep.subr.bf16.mxu0 0
      %3502 = vmatpush1.bf16.msra.mxu0 %v3144
      %3503 = vmatprep.subr.bf16.mxu0 0
      %3504 = vmatpush1.bf16.msra.mxu0 %v3147
      %3505 = vmatprep.subr.bf16.mxu0 0
      %3506 = vmatpush1.bf16.msra.mxu0 %v3150
      %3507 = vmatprep.subr.bf16.mxu0 0
      %3508 = vmatpush1.bf16.msra.mxu0 %v3153
      %3509 = vmatprep.subr.bf16.mxu0 0
      %3510 = vmatpush1.bf16.msra.mxu0 %v3156
      %3511 = vmatprep.subr.bf16.mxu0 0
      %3512 = vmatpush1.bf16.msra.mxu0 %v3159
      %3513 = vmatprep.subr.bf16.mxu0 0
      %3514 = vmatpush1.bf16.msra.mxu0 0
      %3515 = vmatprep.subr.bf16.mxu0 0
      %3516 = vmatpush1.bf16.msra.mxu0 0
      %3517 = vmatprep.subr.bf16.mxu0 0
      %3518 = vmatpush1.bf16.msra.mxu0 0
      %3519 = vmatprep.subr.bf16.mxu0 0
      %3520 = vmatpush1.bf16.msra.mxu0 0
      %3521 = vmatprep.subr.bf16.mxu0 0
      %3522 = vmatpush1.bf16.msra.mxu0 0
      %3523 = vmatprep.subr.bf16.mxu0 0
      %3524 = vmatpush1.bf16.msra.mxu0 0
      %3525 = vmatprep.subr.bf16.mxu0 0
      %3526 = vmatpush1.bf16.msra.mxu0 0
      %3527 = vmatprep.subr.bf16.mxu0 0
      %3528 = vmatpush1.bf16.msra.mxu0 0
      %3529 = vmatprep.mubr.bf16.mxu0 0
      %3530 = vmatmul.mubr.bf16.gmra.mrb[0].mxu0 %v2996
      %v3531 = vpop.f32.mrb[0].mxu0
      %v3532 = vadd.f32 0.0, %v3531
      %v3533 = vpop.f32.mrb[0].mxu0
      %v3534 = vpop.f32.mrb[0].mxu0
      %v3535 = vadd.f32 0.0, %v3534
      %v3536 = vpop.f32.mrb[0].mxu0
      %3537 = vmatprep.mubr.bf16.mxu0 0
      %3538 = vmatmul.mubr.bf16.gmra.mrb[0].mxu0 %v2997
      %v3539 = vpop.f32.mrb[0].mxu0
      %v3540 = vadd.f32 0.0, %v3539
      %v3541 = vpop.f32.mrb[0].mxu0
      %v3542 = vpop.f32.mrb[0].mxu0
      %v3543 = vadd.f32 0.0, %v3542
      %v3544 = vpop.f32.mrb[0].mxu0
      %3545 = vmatprep.mubr.bf16.mxu0 0
      %3546 = vmatmul.mubr.bf16.gmra.mrb[0].mxu0 %v2998
      %v3547 = vpop.f32.mrb[0].mxu0
      %v3548 = vadd.f32 0.0, %v3547
      %v3549 = vpop.f32.mrb[0].mxu0
      %v3550 = vpop.f32.mrb[0].mxu0
      %v3551 = vadd.f32 0.0, %v3550
      %v3552 = vpop.f32.mrb[0].mxu0
      %3553 = vmatprep.mubr.bf16.mxu0 0
      %3554 = vmatmul.mubr.bf16.gmra.mrb[0].mxu0 %v2999
      %v3555 = vpop.f32.mrb[0].mxu0
      %v3556 = vadd.f32 0.0, %v3555
      %v3557 = vpop.f32.mrb[0].mxu0
      %v3558 = vpop.f32.mrb[0].mxu0
      %v3559 = vadd.f32 0.0, %v3558
      %v3560 = vpop.f32.mrb[0].mxu0
      %3561 = vmatprep.mubr.bf16.mxu0 0
      %3562 = vmatmul.mubr.bf16.gmra.mrb[0].mxu0 %v3000
      %v3563 = vpop.f32.mrb[0].mxu0
      %v3564 = vadd.f32 0.0, %v3563
      %v3565 = vpop.f32.mrb[0].mxu0
      %v3566 = vpop.f32.mrb[0].mxu0
      %v3567 = vadd.f32 0.0, %v3566
      %v3568 = vpop.f32.mrb[0].mxu0
      %3569 = vmatprep.mubr.bf16.mxu0 0
      %3570 = vmatmul.mubr.bf16.gmra.mrb[0].mxu0 %v3001
      %v3571 = vpop.f32.mrb[0].mxu0
      %v3572 = vadd.f32 0.0, %v3571
      %v3573 = vpop.f32.mrb[0].mxu0
      %v3574 = vpop.f32.mrb[0].mxu0
      %v3575 = vadd.f32 0.0, %v3574
      %v3576 = vpop.f32.mrb[0].mxu0
      %3577 = vmatprep.mubr.bf16.mxu0 0
      %3578 = vmatmul.mubr.bf16.gmra.mrb[0].mxu0 %v3002
      %v3579 = vpop.f32.mrb[0].mxu0
      %v3580 = vadd.f32 0.0, %v3579
      %v3581 = vpop.f32.mrb[0].mxu0
      %v3582 = vpop.f32.mrb[0].mxu0
      %v3583 = vadd.f32 0.0, %v3582
      %v3584 = vpop.f32.mrb[0].mxu0
      %3585 = vmatprep.mubr.bf16.mxu0 0
      %3586 = vmatmul.mubr.bf16.gmra.mrb[0].mxu0 %v3003
      %v3587 = vpop.f32.mrb[0].mxu0
      %v3588 = vadd.f32 0.0, %v3587
      %v3589 = vpop.f32.mrb[0].mxu0
      %v3590 = vpop.f32.mrb[0].mxu0
      %v3591 = vadd.f32 0.0, %v3590
      %v3592 = vpop.f32.mrb[0].mxu0
      %3593 = vmatprep.mubr.bf16.mxu0 0
      %3594 = vmatmul.mubr.bf16.gmra.mrb[0].mxu0 %v3004
      %v3595 = vpop.f32.mrb[0].mxu0
      %v3596 = vadd.f32 0.0, %v3595
      %v3597 = vpop.f32.mrb[0].mxu0
      %v3598 = vpop.f32.mrb[0].mxu0
      %v3599 = vadd.f32 0.0, %v3598
      %v3600 = vpop.f32.mrb[0].mxu0
      %3601 = vmatprep.mubr.bf16.mxu0 0
      %3602 = vmatmul.mubr.bf16.gmra.mrb[0].mxu0 %v3005
      %v3603 = vpop.f32.mrb[0].mxu0
      %v3604 = vadd.f32 0.0, %v3603
      %v3605 = vpop.f32.mrb[0].mxu0
      %v3606 = vpop.f32.mrb[0].mxu0
      %v3607 = vadd.f32 0.0, %v3606
      %v3608 = vpop.f32.mrb[0].mxu0
      %3609 = vmatprep.mubr.bf16.mxu0 0
      %3610 = vmatmul.mubr.bf16.gmra.mrb[0].mxu0 %v3006
      %v3611 = vpop.f32.mrb[0].mxu0
      %v3612 = vadd.f32 0.0, %v3611
      %v3613 = vpop.f32.mrb[0].mxu0
      %v3614 = vpop.f32.mrb[0].mxu0
      %v3615 = vadd.f32 0.0, %v3614
      %v3616 = vpop.f32.mrb[0].mxu0
      %3617 = vmatprep.mubr.bf16.mxu0 0
      %3618 = vmatmul.mubr.bf16.gmra.mrb[0].mxu0 %v3007
      %v3619 = vpop.f32.mrb[0].mxu0
      %v3620 = vadd.f32 0.0, %v3619
      %v3621 = vpop.f32.mrb[0].mxu0
      %v3622 = vpop.f32.mrb[0].mxu0
      %v3623 = vadd.f32 0.0, %v3622
      %v3624 = vpop.f32.mrb[0].mxu0
      %3625 = vmatprep.mubr.bf16.mxu0 0
      %3626 = vmatmul.mubr.bf16.gmra.mrb[0].mxu0 %v3008
      %v3627 = vpop.f32.mrb[0].mxu0
      %v3628 = vadd.f32 0.0, %v3627
      %v3629 = vpop.f32.mrb[0].mxu0
      %v3630 = vpop.f32.mrb[0].mxu0
      %v3631 = vadd.f32 0.0, %v3630
      %v3632 = vpop.f32.mrb[0].mxu0
      %3633 = vmatprep.mubr.bf16.mxu0 0
      %3634 = vmatmul.mubr.bf16.gmra.mrb[0].mxu0 %v3009
      %v3635 = vpop.f32.mrb[0].mxu0
      %v3636 = vadd.f32 0.0, %v3635
      %v3637 = vpop.f32.mrb[0].mxu0
      %v3638 = vpop.f32.mrb[0].mxu0
      %v3639 = vadd.f32 0.0, %v3638
      %v3640 = vpop.f32.mrb[0].mxu0
      %3641 = vmatprep.mubr.bf16.mxu0 0
      %3642 = vmatmul.mubr.bf16.gmra.mrb[0].mxu0 %v3010
      %v3643 = vpop.f32.mrb[0].mxu0
      %v3644 = vadd.f32 0.0, %v3643
      %v3645 = vpop.f32.mrb[0].mxu0
      %v3646 = vpop.f32.mrb[0].mxu0
      %v3647 = vadd.f32 0.0, %v3646
      %v3648 = vpop.f32.mrb[0].mxu0
      %3649 = vmatprep.mubr.bf16.mxu0 0
      %3650 = vmatmul.mubr.bf16.gmra.mrb[0].mxu0 %v3011
      %v3651 = vpop.f32.mrb[0].mxu0
      %v3652 = vadd.f32 0.0, %v3651
      %v3653 = vpop.f32.mrb[0].mxu0
      %v3654 = vpop.f32.mrb[0].mxu0
      %v3655 = vadd.f32 0.0, %v3654
      %v3656 = vpop.f32.mrb[0].mxu0
      %3657 = vmatprep.mubr.bf16.mxu0 0
      %3658 = vmatmul.mubr.bf16.gmra.mrb[0].mxu0 %v3012
      %v3659 = vpop.f32.mrb[0].mxu0
      %v3660 = vadd.f32 0.0, %v3659
      %v3661 = vpop.f32.mrb[0].mxu0
      %v3662 = vpop.f32.mrb[0].mxu0
      %v3663 = vadd.f32 0.0, %v3662
      %v3664 = vpop.f32.mrb[0].mxu0
      %3665 = vmatprep.mubr.bf16.mxu0 0
      %3666 = vmatmul.mubr.bf16.gmra.mrb[0].mxu0 %v3013
      %v3667 = vpop.f32.mrb[0].mxu0
      %v3668 = vadd.f32 0.0, %v3667
      %v3669 = vpop.f32.mrb[0].mxu0
      %v3670 = vpop.f32.mrb[0].mxu0
      %v3671 = vadd.f32 0.0, %v3670
      %v3672 = vpop.f32.mrb[0].mxu0
      %3673 = vmatprep.mubr.bf16.mxu0 0
      %3674 = vmatmul.mubr.bf16.gmra.mrb[0].mxu0 %v3014
      %v3675 = vpop.f32.mrb[0].mxu0
      %v3676 = vadd.f32 0.0, %v3675
      %v3677 = vpop.f32.mrb[0].mxu0
      %v3678 = vpop.f32.mrb[0].mxu0
      %v3679 = vadd.f32 0.0, %v3678
      %v3680 = vpop.f32.mrb[0].mxu0
      %3681 = vmatprep.mubr.bf16.mxu0 0
      %3682 = vmatmul.mubr.bf16.gmra.mrb[0].mxu0 %v3015
      %v3683 = vpop.f32.mrb[0].mxu0
      %v3684 = vadd.f32 0.0, %v3683
      %v3685 = vpop.f32.mrb[0].mxu0
      %v3686 = vpop.f32.mrb[0].mxu0
      %v3687 = vadd.f32 0.0, %v3686
      %v3688 = vpop.f32.mrb[0].mxu0
      %3689 = vmatprep.mubr.bf16.mxu0 0
      %3690 = vmatmul.mubr.bf16.gmra.mrb[0].mxu0 %v3016
      %v3691 = vpop.f32.mrb[0].mxu0
      %v3692 = vadd.f32 0.0, %v3691
      %v3693 = vpop.f32.mrb[0].mxu0
      %v3694 = vpop.f32.mrb[0].mxu0
      %v3695 = vadd.f32 0.0, %v3694
      %v3696 = vpop.f32.mrb[0].mxu0
      %3697 = vmatprep.mubr.bf16.mxu0 0
      %3698 = vmatmul.mubr.bf16.gmra.mrb[0].mxu0 %v3017
      %v3699 = vpop.f32.mrb[0].mxu0
      %v3700 = vadd.f32 0.0, %v3699
      %v3701 = vpop.f32.mrb[0].mxu0
      %v3702 = vpop.f32.mrb[0].mxu0
      %v3703 = vadd.f32 0.0, %v3702
      %v3704 = vpop.f32.mrb[0].mxu0
      %3705 = vmatprep.mubr.bf16.mxu0 0
      %3706 = vmatmul.mubr.bf16.gmra.mrb[0].mxu0 %v3018
      %v3707 = vpop.f32.mrb[0].mxu0
      %v3708 = vadd.f32 0.0, %v3707
      %v3709 = vpop.f32.mrb[0].mxu0
      %v3710 = vpop.f32.mrb[0].mxu0
      %v3711 = vadd.f32 0.0, %v3710
      %v3712 = vpop.f32.mrb[0].mxu0
      %3713 = vmatprep.mubr.bf16.mxu0 0
      %3714 = vmatmul.mubr.bf16.gmra.mrb[0].mxu0 %v3019
      %v3715 = vpop.f32.mrb[0].mxu0
      %v3716 = vadd.f32 0.0, %v3715
      %v3717 = vpop.f32.mrb[0].mxu0
      %v3718 = vpop.f32.mrb[0].mxu0
      %v3719 = vadd.f32 0.0, %v3718
      %v3720 = vpop.f32.mrb[0].mxu0
      %3721 = vmatprep.mubr.bf16.mxu0 0
      %3722 = vmatmul.mubr.bf16.gmra.mrb[0].mxu0 %v3020
      %v3723 = vpop.f32.mrb[0].mxu0
      %v3724 = vadd.f32 0.0, %v3723
      %v3725 = vpop.f32.mrb[0].mxu0
      %v3726 = vpop.f32.mrb[0].mxu0
      %v3727 = vadd.f32 0.0, %v3726
      %v3728 = vpop.f32.mrb[0].mxu0
      %3729 = vmatprep.mubr.bf16.mxu0 0
      %3730 = vmatmul.mubr.bf16.gmra.mrb[0].mxu0 %v3021
      %v3731 = vpop.f32.mrb[0].mxu0
      %v3732 = vadd.f32 0.0, %v3731
      %v3733 = vpop.f32.mrb[0].mxu0
      %v3734 = vpop.f32.mrb[0].mxu0
      %v3735 = vadd.f32 0.0, %v3734
      %v3736 = vpop.f32.mrb[0].mxu0
      %3737 = vmatprep.mubr.bf16.mxu0 0
      %3738 = vmatmul.mubr.bf16.gmra.mrb[0].mxu0 %v3022
      %v3739 = vpop.f32.mrb[0].mxu0
      %v3740 = vadd.f32 0.0, %v3739
      %v3741 = vpop.f32.mrb[0].mxu0
      %v3742 = vpop.f32.mrb[0].mxu0
      %v3743 = vadd.f32 0.0, %v3742
      %v3744 = vpop.f32.mrb[0].mxu0
      %3745 = vmatprep.mubr.bf16.mxu0 0
      %3746 = vmatmul.mubr.bf16.gmra.mrb[0].mxu0 %v3023
      %v3747 = vpop.f32.mrb[0].mxu0
      %v3748 = vadd.f32 0.0, %v3747
      %v3749 = vpop.f32.mrb[0].mxu0
      %v3750 = vpop.f32.mrb[0].mxu0
      %v3751 = vadd.f32 0.0, %v3750
      %v3752 = vpop.f32.mrb[0].mxu0
      %3753 = vdwg.mxu0
      %v3754 = vrot.slane %v3219, 7
      %v3755 = vrot.slane %v3223, 7
      %v3756 = vrot.slane %v3229, 7
      %v3757 = vrot.slane %v3233, 7
      %v3758 = vrot.slane %v3239, 7
      %v3759 = vrot.slane %v3243, 7
      %v3760 = vrot.slane %v3249, 7
      %v3761 = vrot.slane %v3253, 7
      %v3762 = vrot.slane %v3259, 7
      %v3763 = vrot.slane %v3263, 7
      %v3764 = vrot.slane %v3269, 7
      %v3765 = vrot.slane %v3273, 7
      %v3766 = vrot.slane %v3279, 7
      %v3767 = vrot.slane %v3283, 7
      %v3768 = vrot.slane %v3289, 7
      %v3769 = vrot.slane %v3293, 7
      %v3770 = vrot.slane %v3299, 7
      %v3771 = vrot.slane %v3303, 7
      %v3772 = vrot.slane %v3309, 7
      %v3773 = vrot.slane %v3313, 7
      %v3774 = vrot.slane %v3319, 7
      %v3775 = vrot.slane %v3323, 7
      %v3776 = vrot.slane %v3329, 7
      %v3777 = vrot.slane %v3333, 7
      %v3778 = vrot.slane %v3339, 7
      %v3779 = vrot.slane %v3343, 7
      %v3780 = vrot.slane %v3349, 7
      %v3781 = vrot.slane %v3353, 7
      %v3782 = vrot.slane %v3359, 7
      %v3783 = vrot.slane %v3363, 7
      %v3784 = vrot.slane %v3369, 7
      %v3785 = vrot.slane %v3373, 7
      %v3786 = vrot.slane %v3379, 7
      %v3787 = vrot.slane %v3383, 7
      %v3788 = vrot.slane %v3389, 7
      %v3789 = vrot.slane %v3393, 7
      %v3790 = vrot.slane %v3399, 7
      %v3791 = vrot.slane %v3403, 7
      %v3792 = vrot.slane %v3409, 7
      %v3793 = vrot.slane %v3413, 7
      %v3794 = vrot.slane %v3419, 7
      %v3795 = vrot.slane %v3423, 7
      %v3796 = vrot.slane %v3429, 7
      %v3797 = vrot.slane %v3433, 7
      %v3798 = vrot.slane %v3439, 7
      %v3799 = vrot.slane %v3443, 7
      %v3800 = vrot.slane %v3449, 7
      %v3801 = vrot.slane %v3453, 7
      %v3802 = vrot.slane %v3459, 7
      %v3803 = vrot.slane %v3463, 7
      %v3804 = vrot.slane %v3469, 7
      %v3805 = vrot.slane %v3473, 7
      %v3806 = vrot.slane %v3479, 7
      %v3807 = vrot.slane %v3483, 7
      %v3808 = vrot.slane %v3489, 7
      %v3809 = vrot.slane %v3493, 7
      %v3810 = vsel %vm1698, %v3808, %v3809
      %v3811 = vsel %vm1698, %v3807, %v3808
      %v3812 = vsel %vm1698, %v3806, %v3807
      %v3813 = vsel %vm1698, %v3805, %v3806
      %v3814 = vsel %vm1698, %v3804, %v3805
      %v3815 = vsel %vm1698, %v3803, %v3804
      %v3816 = vsel %vm1698, %v3802, %v3803
      %v3817 = vsel %vm1698, %v3801, %v3802
      %v3818 = vsel %vm1698, %v3800, %v3801
      %v3819 = vsel %vm1698, %v3799, %v3800
      %v3820 = vsel %vm1698, %v3798, %v3799
      %v3821 = vsel %vm1698, %v3797, %v3798
      %v3822 = vsel %vm1698, %v3796, %v3797
      %v3823 = vsel %vm1698, %v3795, %v3796
      %v3824 = vsel %vm1698, %v3794, %v3795
      %v3825 = vsel %vm1698, %v3793, %v3794
      %v3826 = vsel %vm1698, %v3792, %v3793
      %v3827 = vsel %vm1698, %v3791, %v3792
      %v3828 = vsel %vm1698, %v3790, %v3791
      %v3829 = vsel %vm1698, %v3789, %v3790
      %v3830 = vsel %vm1698, %v3788, %v3789
      %v3831 = vsel %vm1698, %v3787, %v3788
      %v3832 = vsel %vm1698, %v3786, %v3787
      %v3833 = vsel %vm1698, %v3785, %v3786
      %v3834 = vsel %vm1698, %v3784, %v3785
      %v3835 = vsel %vm1698, %v3783, %v3784
      %v3836 = vsel %vm1698, %v3782, %v3783
      %v3837 = vsel %vm1698, %v3781, %v3782
      %v3838 = vsel %vm1698, %v3780, %v3781
      %v3839 = vsel %vm1698, %v3779, %v3780
      %v3840 = vsel %vm1698, %v3778, %v3779
      %v3841 = vsel %vm1698, %v3777, %v3778
      %v3842 = vsel %vm1698, %v3776, %v3777
      %v3843 = vsel %vm1698, %v3775, %v3776
      %v3844 = vsel %vm1698, %v3774, %v3775
      %v3845 = vsel %vm1698, %v3773, %v3774
      %v3846 = vsel %vm1698, %v3772, %v3773
      %v3847 = vsel %vm1698, %v3771, %v3772
      %v3848 = vsel %vm1698, %v3770, %v3771
      %v3849 = vsel %vm1698, %v3769, %v3770
      %v3850 = vsel %vm1698, %v3768, %v3769
      %v3851 = vsel %vm1698, %v3767, %v3768
      %v3852 = vsel %vm1698, %v3766, %v3767
      %v3853 = vsel %vm1698, %v3765, %v3766
      %v3854 = vsel %vm1698, %v3764, %v3765
      %v3855 = vsel %vm1698, %v3763, %v3764
      %v3856 = vsel %vm1698, %v3762, %v3763
      %v3857 = vsel %vm1698, %v3761, %v3762
      %v3858 = vsel %vm1698, %v3760, %v3761
      %v3859 = vsel %vm1698, %v3759, %v3760
      %v3860 = vsel %vm1698, %v3758, %v3759
      %v3861 = vsel %vm1698, %v3757, %v3758
      %v3862 = vsel %vm1698, %v3756, %v3757
      %v3863 = vsel %vm1698, %v3755, %v3756
      %v3864 = vsel %vm1698, %v3754, %v3755
      %v3865 = vsel %vm1698, %v3809, %v3754
      %v3866 = vmul.f32 %v3865, %v1814
      %v3867 = vmul.f32 %v3864, %v1819
      %v3868 = vmul.f32 %v3863, %v1824
      %v3869 = vmul.f32 %v3862, %v1829
      %v3870 = vmul.f32 %v3861, %v1834
      %v3871 = vmul.f32 %v3860, %v1839
      %v3872 = vmul.f32 %v3859, %v1844
      %v3873 = vmul.f32 %v3858, %v1849
      %v3874 = vmul.f32 %v3857, %v1854
      %v3875 = vmul.f32 %v3856, %v1859
      %v3876 = vmul.f32 %v3855, %v1864
      %v3877 = vmul.f32 %v3854, %v1869
      %v3878 = vmul.f32 %v3853, %v1874
      %v3879 = vmul.f32 %v3852, %v1879
      %v3880 = vmul.f32 %v3851, %v1884
      %v3881 = vmul.f32 %v3850, %v1889
      %v3882 = vmul.f32 %v3849, %v1894
      %v3883 = vmul.f32 %v3848, %v1899
      %v3884 = vmul.f32 %v3847, %v1904
      %v3885 = vmul.f32 %v3846, %v1909
      %v3886 = vmul.f32 %v3845, %v1914
      %v3887 = vmul.f32 %v3844, %v1919
      %v3888 = vmul.f32 %v3843, %v1924
      %v3889 = vmul.f32 %v3842, %v1929
      %v3890 = vmul.f32 %v3841, %v1934
      %v3891 = vmul.f32 %v3840, %v1939
      %v3892 = vmul.f32 %v3839, %v1944
      %v3893 = vmul.f32 %v3838, %v1949
      %v3894 = vmul.f32 %v3837, %v1954
      %v3895 = vmul.f32 %v3836, %v1959
      %v3896 = vmul.f32 %v3835, %v1964
      %v3897 = vmul.f32 %v3834, %v1969
      %v3898 = vmul.f32 %v3833, %v1974
      %v3899 = vmul.f32 %v3832, %v1979
      %v3900 = vmul.f32 %v3831, %v1984
      %v3901 = vmul.f32 %v3830, %v1989
      %v3902 = vmul.f32 %v3829, %v1994
      %v3903 = vmul.f32 %v3828, %v1999
      %v3904 = vmul.f32 %v3827, %v2004
      %v3905 = vmul.f32 %v3826, %v2009
      %v3906 = vmul.f32 %v3825, %v2014
      %v3907 = vmul.f32 %v3824, %v2019
      %v3908 = vmul.f32 %v3823, %v2024
      %v3909 = vmul.f32 %v3822, %v2029
      %v3910 = vmul.f32 %v3821, %v2034
      %v3911 = vmul.f32 %v3820, %v2039
      %v3912 = vmul.f32 %v3819, %v2044
      %v3913 = vmul.f32 %v3818, %v2049
      %v3914 = vmul.f32 %v3817, %v2054
      %v3915 = vmul.f32 %v3816, %v2059
      %v3916 = vmul.f32 %v3815, %v2064
      %v3917 = vmul.f32 %v3814, %v2069
      %v3918 = vmul.f32 %v3813, %v2074
      %v3919 = vmul.f32 %v3812, %v2079
      %v3920 = vmul.f32 %v3811, %v2084
      %v3921 = vmul.f32 %v3810, %v2089
      %v3922 = vrot.slane %v3532, 1
      %v3923 = vrot.slane %v3535, 1
      %v3924 = vrot.slane %v3540, 1
      %v3925 = vrot.slane %v3543, 1
      %v3926 = vrot.slane %v3548, 1
      %v3927 = vrot.slane %v3551, 1
      %v3928 = vrot.slane %v3556, 1
      %v3929 = vrot.slane %v3559, 1
      %v3930 = vrot.slane %v3564, 1
      %v3931 = vrot.slane %v3567, 1
      %v3932 = vrot.slane %v3572, 1
      %v3933 = vrot.slane %v3575, 1
      %v3934 = vrot.slane %v3580, 1
      %v3935 = vrot.slane %v3583, 1
      %v3936 = vrot.slane %v3588, 1
      %v3937 = vrot.slane %v3591, 1
      %v3938 = vrot.slane %v3596, 1
      %v3939 = vrot.slane %v3599, 1
      %v3940 = vrot.slane %v3604, 1
      %v3941 = vrot.slane %v3607, 1
      %v3942 = vrot.slane %v3612, 1
      %v3943 = vrot.slane %v3615, 1
      %v3944 = vrot.slane %v3620, 1
      %v3945 = vrot.slane %v3623, 1
      %v3946 = vrot.slane %v3628, 1
      %v3947 = vrot.slane %v3631, 1
      %v3948 = vrot.slane %v3636, 1
      %v3949 = vrot.slane %v3639, 1
      %v3950 = vrot.slane %v3644, 1
      %v3951 = vrot.slane %v3647, 1
      %v3952 = vrot.slane %v3652, 1
      %v3953 = vrot.slane %v3655, 1
      %v3954 = vrot.slane %v3660, 1
      %v3955 = vrot.slane %v3663, 1
      %v3956 = vrot.slane %v3668, 1
      %v3957 = vrot.slane %v3671, 1
      %v3958 = vrot.slane %v3676, 1
      %v3959 = vrot.slane %v3679, 1
      %v3960 = vrot.slane %v3684, 1
      %v3961 = vrot.slane %v3687, 1
      %v3962 = vrot.slane %v3692, 1
      %v3963 = vrot.slane %v3695, 1
      %v3964 = vrot.slane %v3700, 1
      %v3965 = vrot.slane %v3703, 1
      %v3966 = vrot.slane %v3708, 1
      %v3967 = vrot.slane %v3711, 1
      %v3968 = vrot.slane %v3716, 1
      %v3969 = vrot.slane %v3719, 1
      %v3970 = vrot.slane %v3724, 1
      %v3971 = vrot.slane %v3727, 1
      %v3972 = vrot.slane %v3732, 1
      %v3973 = vrot.slane %v3735, 1
      %v3974 = vrot.slane %v3740, 1
      %v3975 = vrot.slane %v3743, 1
      %v3976 = vrot.slane %v3748, 1
      %v3977 = vrot.slane %v3751, 1
      %v3978 = vsel %vm2203, %v3976, %v3977
      %v3979 = vsel %vm2203, %v3975, %v3976
      %v3980 = vsel %vm2203, %v3974, %v3975
      %v3981 = vsel %vm2203, %v3973, %v3974
      %v3982 = vsel %vm2203, %v3972, %v3973
      %v3983 = vsel %vm2203, %v3971, %v3972
      %v3984 = vsel %vm2203, %v3970, %v3971
      %v3985 = vsel %vm2203, %v3969, %v3970
      %v3986 = vsel %vm2203, %v3968, %v3969
      %v3987 = vsel %vm2203, %v3967, %v3968
      %v3988 = vsel %vm2203, %v3966, %v3967
      %v3989 = vsel %vm2203, %v3965, %v3966
      %v3990 = vsel %vm2203, %v3964, %v3965
      %v3991 = vsel %vm2203, %v3963, %v3964
      %v3992 = vsel %vm2203, %v3962, %v3963
      %v3993 = vsel %vm2203, %v3961, %v3962
      %v3994 = vsel %vm2203, %v3960, %v3961
      %v3995 = vsel %vm2203, %v3959, %v3960
      %v3996 = vsel %vm2203, %v3958, %v3959
      %v3997 = vsel %vm2203, %v3957, %v3958
      %v3998 = vsel %vm2203, %v3956, %v3957
      %v3999 = vsel %vm2203, %v3955, %v3956
      %v4000 = vsel %vm2203, %v3954, %v3955
      %v4001 = vsel %vm2203, %v3953, %v3954
      %v4002 = vsel %vm2203, %v3952, %v3953
      %v4003 = vsel %vm2203, %v3951, %v3952
      %v4004 = vsel %vm2203, %v3950, %v3951
      %v4005 = vsel %vm2203, %v3949, %v3950
      %v4006 = vsel %vm2203, %v3948, %v3949
      %v4007 = vsel %vm2203, %v3947, %v3948
      %v4008 = vsel %vm2203, %v3946, %v3947
      %v4009 = vsel %vm2203, %v3945, %v3946
      %v4010 = vsel %vm2203, %v3944, %v3945
      %v4011 = vsel %vm2203, %v3943, %v3944
      %v4012 = vsel %vm2203, %v3942, %v3943
      %v4013 = vsel %vm2203, %v3941, %v3942
      %v4014 = vsel %vm2203, %v3940, %v3941
      %v4015 = vsel %vm2203, %v3939, %v3940
      %v4016 = vsel %vm2203, %v3938, %v3939
      %v4017 = vsel %vm2203, %v3937, %v3938
      %v4018 = vsel %vm2203, %v3936, %v3937
      %v4019 = vsel %vm2203, %v3935, %v3936
      %v4020 = vsel %vm2203, %v3934, %v3935
      %v4021 = vsel %vm2203, %v3933, %v3934
      %v4022 = vsel %vm2203, %v3932, %v3933
      %v4023 = vsel %vm2203, %v3931, %v3932
      %v4024 = vsel %vm2203, %v3930, %v3931
      %v4025 = vsel %vm2203, %v3929, %v3930
      %v4026 = vsel %vm2203, %v3928, %v3929
      %v4027 = vsel %vm2203, %v3927, %v3928
      %v4028 = vsel %vm2203, %v3926, %v3927
      %v4029 = vsel %vm2203, %v3925, %v3926
      %v4030 = vsel %vm2203, %v3924, %v3925
      %v4031 = vsel %vm2203, %v3923, %v3924
      %v4032 = vsel %vm2203, %v3922, %v3923
      %v4033 = vsel %vm2203, %v3977, %v3922
      %v4034 = vmul.f32 %v4032, %v2320
      %v4035 = vmul.f32 %v4031, %v2325
      %v4036 = vmul.f32 %v4030, %v2330
      %v4037 = vmul.f32 %v4029, %v2335
      %v4038 = vmul.f32 %v4028, %v2340
      %v4039 = vmul.f32 %v4027, %v2345
      %v4040 = vmul.f32 %v4026, %v2350
      %v4041 = vmul.f32 %v4025, %v2355
      %v4042 = vmul.f32 %v4024, %v2360
      %v4043 = vmul.f32 %v4023, %v2365
      %v4044 = vmul.f32 %v4022, %v2370
      %v4045 = vmul.f32 %v4021, %v2375
      %v4046 = vmul.f32 %v4020, %v2380
      %v4047 = vmul.f32 %v4019, %v2385
      %v4048 = vmul.f32 %v4018, %v2390
      %v4049 = vmul.f32 %v4017, %v2395
      %v4050 = vmul.f32 %v4016, %v2400
      %v4051 = vmul.f32 %v4015, %v2405
      %v4052 = vmul.f32 %v4014, %v2410
      %v4053 = vmul.f32 %v4013, %v2415
      %v4054 = vmul.f32 %v4012, %v2420
      %v4055 = vmul.f32 %v4011, %v2425
      %v4056 = vmul.f32 %v4010, %v2430
      %v4057 = vmul.f32 %v4009, %v2435
      %v4058 = vmul.f32 %v4008, %v2440
      %v4059 = vmul.f32 %v4007, %v2445
      %v4060 = vmul.f32 %v4006, %v2450
      %v4061 = vmul.f32 %v4005, %v2455
      %v4062 = vmul.f32 %v4004, %v2460
      %v4063 = vmul.f32 %v4003, %v2465
      %v4064 = vmul.f32 %v4002, %v2470
      %v4065 = vmul.f32 %v4001, %v2475
      %v4066 = vmul.f32 %v4000, %v2480
      %v4067 = vmul.f32 %v3999, %v2485
      %v4068 = vmul.f32 %v3998, %v2490
      %v4069 = vmul.f32 %v3997, %v2495
      %v4070 = vmul.f32 %v3996, %v2500
      %v4071 = vmul.f32 %v3995, %v2505
      %v4072 = vmul.f32 %v3994, %v2510
      %v4073 = vmul.f32 %v3993, %v2515
      %v4074 = vmul.f32 %v3992, %v2520
      %v4075 = vmul.f32 %v3991, %v2525
      %v4076 = vmul.f32 %v3990, %v2530
      %v4077 = vmul.f32 %v3989, %v2535
      %v4078 = vmul.f32 %v3988, %v2540
      %v4079 = vmul.f32 %v3987, %v2545
      %v4080 = vmul.f32 %v3986, %v2550
      %v4081 = vmul.f32 %v3985, %v2555
      %v4082 = vmul.f32 %v3984, %v2560
      %v4083 = vmul.f32 %v3983, %v2565
      %v4084 = vmul.f32 %v3982, %v2570
      %v4085 = vmul.f32 %v3981, %v2575
      %v4086 = vmul.f32 %v3980, %v2580
      %v4087 = vmul.f32 %v3979, %v2585
      %v4088 = vmul.f32 %v3978, %v2590
      %v4089 = vmul.f32 %v4033, %v2595
      %v4090 = vadd.f32 %v3221, %v3866
      %v4091 = vadd.f32 %v3225, %v3867
      %v4092 = vadd.f32 %v3231, %v3868
      %v4093 = vadd.f32 %v3235, %v3869
      %v4094 = vadd.f32 %v3241, %v3870
      %v4095 = vadd.f32 %v3245, %v3871
      %v4096 = vadd.f32 %v3251, %v3872
      %v4097 = vadd.f32 %v3255, %v3873
      %v4098 = vadd.f32 %v3261, %v3874
      %v4099 = vadd.f32 %v3265, %v3875
      %v4100 = vadd.f32 %v3271, %v3876
      %v4101 = vadd.f32 %v3275, %v3877
      %v4102 = vadd.f32 %v3281, %v3878
      %v4103 = vadd.f32 %v3285, %v3879
      %v4104 = vadd.f32 %v3291, %v3880
      %v4105 = vadd.f32 %v3295, %v3881
      %v4106 = vadd.f32 %v3301, %v3882
      %v4107 = vadd.f32 %v3305, %v3883
      %v4108 = vadd.f32 %v3311, %v3884
      %v4109 = vadd.f32 %v3315, %v3885
      %v4110 = vadd.f32 %v3321, %v3886
      %v4111 = vadd.f32 %v3325, %v3887
      %v4112 = vadd.f32 %v3331, %v3888
      %v4113 = vadd.f32 %v3335, %v3889
      %v4114 = vadd.f32 %v3341, %v3890
      %v4115 = vadd.f32 %v3345, %v3891
      %v4116 = vadd.f32 %v3351, %v3892
      %v4117 = vadd.f32 %v3355, %v3893
      %v4118 = vadd.f32 %v3361, %v3894
      %v4119 = vadd.f32 %v3365, %v3895
      %v4120 = vadd.f32 %v3371, %v3896
      %v4121 = vadd.f32 %v3375, %v3897
      %v4122 = vadd.f32 %v3381, %v3898
      %v4123 = vadd.f32 %v3385, %v3899
      %v4124 = vadd.f32 %v3391, %v3900
      %v4125 = vadd.f32 %v3395, %v3901
      %v4126 = vadd.f32 %v3401, %v3902
      %v4127 = vadd.f32 %v3405, %v3903
      %v4128 = vadd.f32 %v3411, %v3904
      %v4129 = vadd.f32 %v3415, %v3905
      %v4130 = vadd.f32 %v3421, %v3906
      %v4131 = vadd.f32 %v3425, %v3907
      %v4132 = vadd.f32 %v3431, %v3908
      %v4133 = vadd.f32 %v3435, %v3909
      %v4134 = vadd.f32 %v3441, %v3910
      %v4135 = vadd.f32 %v3445, %v3911
      %v4136 = vadd.f32 %v3451, %v3912
      %v4137 = vadd.f32 %v3455, %v3913
      %v4138 = vadd.f32 %v3461, %v3914
      %v4139 = vadd.f32 %v3465, %v3915
      %v4140 = vadd.f32 %v3471, %v3916
      %v4141 = vadd.f32 %v3475, %v3917
      %v4142 = vadd.f32 %v3481, %v3918
      %v4143 = vadd.f32 %v3485, %v3919
      %v4144 = vadd.f32 %v3491, %v3920
      %v4145 = vadd.f32 %v3495, %v3921
      %v4146 = vadd.f32 %v4090, %v4034
      %v4147 = vadd.f32 %v4091, %v4035
      %v4148 = vadd.f32 %v4092, %v4036
      %v4149 = vadd.f32 %v4093, %v4037
      %v4150 = vadd.f32 %v4094, %v4038
      %v4151 = vadd.f32 %v4095, %v4039
      %v4152 = vadd.f32 %v4096, %v4040
      %v4153 = vadd.f32 %v4097, %v4041
      %v4154 = vadd.f32 %v4098, %v4042
      %v4155 = vadd.f32 %v4099, %v4043
      %v4156 = vadd.f32 %v4100, %v4044
      %v4157 = vadd.f32 %v4101, %v4045
      %v4158 = vadd.f32 %v4102, %v4046
      %v4159 = vadd.f32 %v4103, %v4047
      %v4160 = vadd.f32 %v4104, %v4048
      %v4161 = vadd.f32 %v4105, %v4049
      %v4162 = vadd.f32 %v4106, %v4050
      %v4163 = vadd.f32 %v4107, %v4051
      %v4164 = vadd.f32 %v4108, %v4052
      %v4165 = vadd.f32 %v4109, %v4053
      %v4166 = vadd.f32 %v4110, %v4054
      %v4167 = vadd.f32 %v4111, %v4055
      %v4168 = vadd.f32 %v4112, %v4056
      %v4169 = vadd.f32 %v4113, %v4057
      %v4170 = vadd.f32 %v4114, %v4058
      %v4171 = vadd.f32 %v4115, %v4059
      %v4172 = vadd.f32 %v4116, %v4060
      %v4173 = vadd.f32 %v4117, %v4061
      %v4174 = vadd.f32 %v4118, %v4062
      %v4175 = vadd.f32 %v4119, %v4063
      %v4176 = vadd.f32 %v4120, %v4064
      %v4177 = vadd.f32 %v4121, %v4065
      %v4178 = vadd.f32 %v4122, %v4066
      %v4179 = vadd.f32 %v4123, %v4067
      %v4180 = vadd.f32 %v4124, %v4068
      %v4181 = vadd.f32 %v4125, %v4069
      %v4182 = vadd.f32 %v4126, %v4070
      %v4183 = vadd.f32 %v4127, %v4071
      %v4184 = vadd.f32 %v4128, %v4072
      %v4185 = vadd.f32 %v4129, %v4073
      %v4186 = vadd.f32 %v4130, %v4074
      %v4187 = vadd.f32 %v4131, %v4075
      %v4188 = vadd.f32 %v4132, %v4076
      %v4189 = vadd.f32 %v4133, %v4077
      %v4190 = vadd.f32 %v4134, %v4078
      %v4191 = vadd.f32 %v4135, %v4079
      %v4192 = vadd.f32 %v4136, %v4080
      %v4193 = vadd.f32 %v4137, %v4081
      %v4194 = vadd.f32 %v4138, %v4082
      %v4195 = vadd.f32 %v4139, %v4083
      %v4196 = vadd.f32 %v4140, %v4084
      %v4197 = vadd.f32 %v4141, %v4085
      %v4198 = vadd.f32 %v4142, %v4086
      %v4199 = vadd.f32 %v4143, %v4087
      %v4200 = vadd.f32 %v4144, %v4088
      %v4201 = vadd.f32 %v4145, %v4089
      %v4202 = vld [vmem:[%s7] sm:$0x1]
      %v4204 = vlaneseq
      %v4205 = vshrl.u32 %v4204, 7
      %v4206 = vsub.s32 0, %v4205
      %v4207 = vrot.slane %v4202, %v4206
      %v4209 = vadd.f32 %v4146, %v4207
      %v4210 = vadd.f32 %v4147, %v4207
      %v4211 = vadd.f32 %v4148, %v4207
      %v4212 = vadd.f32 %v4149, %v4207
      %v4213 = vadd.f32 %v4150, %v4207
      %v4214 = vadd.f32 %v4151, %v4207
      %v4215 = vadd.f32 %v4152, %v4207
      %v4216 = vadd.f32 %v4153, %v4207
      %v4217 = vadd.f32 %v4154, %v4207
      %v4218 = vadd.f32 %v4155, %v4207
      %v4219 = vadd.f32 %v4156, %v4207
      %v4220 = vadd.f32 %v4157, %v4207
      %v4221 = vadd.f32 %v4158, %v4207
      %v4222 = vadd.f32 %v4159, %v4207
      %v4223 = vadd.f32 %v4160, %v4207
      %v4224 = vadd.f32 %v4161, %v4207
      %v4225 = vadd.f32 %v4162, %v4207
      %v4226 = vadd.f32 %v4163, %v4207
      %v4227 = vadd.f32 %v4164, %v4207
      %v4228 = vadd.f32 %v4165, %v4207
      %v4229 = vadd.f32 %v4166, %v4207
      %v4230 = vadd.f32 %v4167, %v4207
      %v4231 = vadd.f32 %v4168, %v4207
      %v4232 = vadd.f32 %v4169, %v4207
      %v4233 = vadd.f32 %v4170, %v4207
      %v4234 = vadd.f32 %v4171, %v4207
      %v4235 = vadd.f32 %v4172, %v4207
      %v4236 = vadd.f32 %v4173, %v4207
      %v4237 = vadd.f32 %v4174, %v4207
      %v4238 = vadd.f32 %v4175, %v4207
      %v4239 = vadd.f32 %v4176, %v4207
      %v4240 = vadd.f32 %v4177, %v4207
      %v4241 = vadd.f32 %v4178, %v4207
      %v4242 = vadd.f32 %v4179, %v4207
      %v4243 = vadd.f32 %v4180, %v4207
      %v4244 = vadd.f32 %v4181, %v4207
      %v4245 = vadd.f32 %v4182, %v4207
      %v4246 = vadd.f32 %v4183, %v4207
      %v4247 = vadd.f32 %v4184, %v4207
      %v4248 = vadd.f32 %v4185, %v4207
      %v4249 = vadd.f32 %v4186, %v4207
      %v4250 = vadd.f32 %v4187, %v4207
      %v4251 = vadd.f32 %v4188, %v4207
      %v4252 = vadd.f32 %v4189, %v4207
      %v4253 = vadd.f32 %v4190, %v4207
      %v4254 = vadd.f32 %v4191, %v4207
      %v4255 = vadd.f32 %v4192, %v4207
      %v4256 = vadd.f32 %v4193, %v4207
      %v4257 = vadd.f32 %v4194, %v4207
      %v4258 = vadd.f32 %v4195, %v4207
      %v4259 = vadd.f32 %v4196, %v4207
      %v4260 = vadd.f32 %v4197, %v4207
      %v4261 = vadd.f32 %v4198, %v4207
      %v4262 = vadd.f32 %v4199, %v4207
      %v4263 = vadd.f32 %v4200, %v4207
      %v4264 = vadd.f32 %v4201, %v4207
      %vm4265 = vcmp.ge.f32.partialorder %v4209, 0.0
      %vm4266 = vcmp.ge.f32.partialorder %v4210, 0.0
      %vm4267 = vcmp.ge.f32.partialorder %v4211, 0.0
      %vm4268 = vcmp.ge.f32.partialorder %v4212, 0.0
      %vm4269 = vcmp.ge.f32.partialorder %v4213, 0.0
      %vm4270 = vcmp.ge.f32.partialorder %v4214, 0.0
      %vm4271 = vcmp.ge.f32.partialorder %v4215, 0.0
      %vm4272 = vcmp.ge.f32.partialorder %v4216, 0.0
      %vm4273 = vcmp.ge.f32.partialorder %v4217, 0.0
      %vm4274 = vcmp.ge.f32.partialorder %v4218, 0.0
      %vm4275 = vcmp.ge.f32.partialorder %v4219, 0.0
      %vm4276 = vcmp.ge.f32.partialorder %v4220, 0.0
      %vm4277 = vcmp.ge.f32.partialorder %v4221, 0.0
      %vm4278 = vcmp.ge.f32.partialorder %v4222, 0.0
      %vm4279 = vcmp.ge.f32.partialorder %v4223, 0.0
      %vm4280 = vcmp.ge.f32.partialorder %v4224, 0.0
      %vm4281 = vcmp.ge.f32.partialorder %v4225, 0.0
      %vm4282 = vcmp.ge.f32.partialorder %v4226, 0.0
      %vm4283 = vcmp.ge.f32.partialorder %v4227, 0.0
      %vm4284 = vcmp.ge.f32.partialorder %v4228, 0.0
      %vm4285 = vcmp.ge.f32.partialorder %v4229, 0.0
      %vm4286 = vcmp.ge.f32.partialorder %v4230, 0.0
      %vm4287 = vcmp.ge.f32.partialorder %v4231, 0.0
      %vm4288 = vcmp.ge.f32.partialorder %v4232, 0.0
      %vm4289 = vcmp.ge.f32.partialorder %v4233, 0.0
      %vm4290 = vcmp.ge.f32.partialorder %v4234, 0.0
      %vm4291 = vcmp.ge.f32.partialorder %v4235, 0.0
      %vm4292 = vcmp.ge.f32.partialorder %v4236, 0.0
      %vm4293 = vcmp.ge.f32.partialorder %v4237, 0.0
      %vm4294 = vcmp.ge.f32.partialorder %v4238, 0.0
      %vm4295 = vcmp.ge.f32.partialorder %v4239, 0.0
      %vm4296 = vcmp.ge.f32.partialorder %v4240, 0.0
      %vm4297 = vcmp.ge.f32.partialorder %v4241, 0.0
      %vm4298 = vcmp.ge.f32.partialorder %v4242, 0.0
      %vm4299 = vcmp.ge.f32.partialorder %v4243, 0.0
      %vm4300 = vcmp.ge.f32.partialorder %v4244, 0.0
      %vm4301 = vcmp.ge.f32.partialorder %v4245, 0.0
      %vm4302 = vcmp.ge.f32.partialorder %v4246, 0.0
      %vm4303 = vcmp.ge.f32.partialorder %v4247, 0.0
      %vm4304 = vcmp.ge.f32.partialorder %v4248, 0.0
      %vm4305 = vcmp.ge.f32.partialorder %v4249, 0.0
      %vm4306 = vcmp.ge.f32.partialorder %v4250, 0.0
      %vm4307 = vcmp.ge.f32.partialorder %v4251, 0.0
      %vm4308 = vcmp.ge.f32.partialorder %v4252, 0.0
      %vm4309 = vcmp.ge.f32.partialorder %v4253, 0.0
      %vm4310 = vcmp.ge.f32.partialorder %v4254, 0.0
      %vm4311 = vcmp.ge.f32.partialorder %v4255, 0.0
      %vm4312 = vcmp.ge.f32.partialorder %v4256, 0.0
      %vm4313 = vcmp.ge.f32.partialorder %v4257, 0.0
      %vm4314 = vcmp.ge.f32.partialorder %v4258, 0.0
      %vm4315 = vcmp.ge.f32.partialorder %v4259, 0.0
      %vm4316 = vcmp.ge.f32.partialorder %v4260, 0.0
      %vm4317 = vcmp.ge.f32.partialorder %v4261, 0.0
      %vm4318 = vcmp.ge.f32.partialorder %v4262, 0.0
      %vm4319 = vcmp.ge.f32.partialorder %v4263, 0.0
      %vm4320 = vcmp.ge.f32.partialorder %v4264, 0.0
      %v4321 = vmul.f32 %v4209, 0.2
      %v4322 = vmul.f32 %v4210, 0.2
      %v4323 = vmul.f32 %v4211, 0.2
      %v4324 = vmul.f32 %v4212, 0.2
      %v4325 = vmul.f32 %v4213, 0.2
      %v4326 = vmul.f32 %v4214, 0.2
      %v4327 = vmul.f32 %v4215, 0.2
      %v4328 = vmul.f32 %v4216, 0.2
      %v4329 = vmul.f32 %v4217, 0.2
      %v4330 = vmul.f32 %v4218, 0.2
      %v4331 = vmul.f32 %v4219, 0.2
      %v4332 = vmul.f32 %v4220, 0.2
      %v4333 = vmul.f32 %v4221, 0.2
      %v4334 = vmul.f32 %v4222, 0.2
      %v4335 = vmul.f32 %v4223, 0.2
      %v4336 = vmul.f32 %v4224, 0.2
      %v4337 = vmul.f32 %v4225, 0.2
      %v4338 = vmul.f32 %v4226, 0.2
      %v4339 = vmul.f32 %v4227, 0.2
      %v4340 = vmul.f32 %v4228, 0.2
      %v4341 = vmul.f32 %v4229, 0.2
      %v4342 = vmul.f32 %v4230, 0.2
      %v4343 = vmul.f32 %v4231, 0.2
      %v4344 = vmul.f32 %v4232, 0.2
      %v4345 = vmul.f32 %v4233, 0.2
      %v4346 = vmul.f32 %v4234, 0.2
      %v4347 = vmul.f32 %v4235, 0.2
      %v4348 = vmul.f32 %v4236, 0.2
      %v4349 = vmul.f32 %v4237, 0.2
      %v4350 = vmul.f32 %v4238, 0.2
      %v4351 = vmul.f32 %v4239, 0.2
      %v4352 = vmul.f32 %v4240, 0.2
      %v4353 = vmul.f32 %v4241, 0.2
      %v4354 = vmul.f32 %v4242, 0.2
      %v4355 = vmul.f32 %v4243, 0.2
      %v4356 = vmul.f32 %v4244, 0.2
      %v4357 = vmul.f32 %v4245, 0.2
      %v4358 = vmul.f32 %v4246, 0.2
      %v4359 = vmul.f32 %v4247, 0.2
      %v4360 = vmul.f32 %v4248, 0.2
      %v4361 = vmul.f32 %v4249, 0.2
      %v4362 = vmul.f32 %v4250, 0.2
      %v4363 = vmul.f32 %v4251, 0.2
      %v4364 = vmul.f32 %v4252, 0.2
      %v4365 = vmul.f32 %v4253, 0.2
      %v4366 = vmul.f32 %v4254, 0.2
      %v4367 = vmul.f32 %v4255, 0.2
      %v4368 = vmul.f32 %v4256, 0.2
      %v4369 = vmul.f32 %v4257, 0.2
      %v4370 = vmul.f32 %v4258, 0.2
      %v4371 = vmul.f32 %v4259, 0.2
      %v4372 = vmul.f32 %v4260, 0.2
      %v4373 = vmul.f32 %v4261, 0.2
      %v4374 = vmul.f32 %v4262, 0.2
      %v4375 = vmul.f32 %v4263, 0.2
      %v4376 = vmul.f32 %v4264, 0.2
      %v4377 = vsel %vm4265, %v4209, %v4321
      %v4378 = vsel %vm4266, %v4210, %v4322
      %v4379 = vsel %vm4267, %v4211, %v4323
      %v4380 = vsel %vm4268, %v4212, %v4324
      %v4381 = vsel %vm4269, %v4213, %v4325
      %v4382 = vsel %vm4270, %v4214, %v4326
      %v4383 = vsel %vm4271, %v4215, %v4327
      %v4384 = vsel %vm4272, %v4216, %v4328
      %v4385 = vsel %vm4273, %v4217, %v4329
      %v4386 = vsel %vm4274, %v4218, %v4330
      %v4387 = vsel %vm4275, %v4219, %v4331
      %v4388 = vsel %vm4276, %v4220, %v4332
      %v4389 = vsel %vm4277, %v4221, %v4333
      %v4390 = vsel %vm4278, %v4222, %v4334
      %v4391 = vsel %vm4279, %v4223, %v4335
      %v4392 = vsel %vm4280, %v4224, %v4336
      %v4393 = vsel %vm4281, %v4225, %v4337
      %v4394 = vsel %vm4282, %v4226, %v4338
      %v4395 = vsel %vm4283, %v4227, %v4339
      %v4396 = vsel %vm4284, %v4228, %v4340
      %v4397 = vsel %vm4285, %v4229, %v4341
      %v4398 = vsel %vm4286, %v4230, %v4342
      %v4399 = vsel %vm4287, %v4231, %v4343
      %v4400 = vsel %vm4288, %v4232, %v4344
      %v4401 = vsel %vm4289, %v4233, %v4345
      %v4402 = vsel %vm4290, %v4234, %v4346
      %v4403 = vsel %vm4291, %v4235, %v4347
      %v4404 = vsel %vm4292, %v4236, %v4348
      %v4405 = vsel %vm4293, %v4237, %v4349
      %v4406 = vsel %vm4294, %v4238, %v4350
      %v4407 = vsel %vm4295, %v4239, %v4351
      %v4408 = vsel %vm4296, %v4240, %v4352
      %v4409 = vsel %vm4297, %v4241, %v4353
      %v4410 = vsel %vm4298, %v4242, %v4354
      %v4411 = vsel %vm4299, %v4243, %v4355
      %v4412 = vsel %vm4300, %v4244, %v4356
      %v4413 = vsel %vm4301, %v4245, %v4357
      %v4414 = vsel %vm4302, %v4246, %v4358
      %v4415 = vsel %vm4303, %v4247, %v4359
      %v4416 = vsel %vm4304, %v4248, %v4360
      %v4417 = vsel %vm4305, %v4249, %v4361
      %v4418 = vsel %vm4306, %v4250, %v4362
      %v4419 = vsel %vm4307, %v4251, %v4363
      %v4420 = vsel %vm4308, %v4252, %v4364
      %v4421 = vsel %vm4309, %v4253, %v4365
      %v4422 = vsel %vm4310, %v4254, %v4366
      %v4423 = vsel %vm4311, %v4255, %v4367
      %v4424 = vsel %vm4312, %v4256, %v4368
      %v4425 = vsel %vm4313, %v4257, %v4369
      %v4426 = vsel %vm4314, %v4258, %v4370
      %v4427 = vsel %vm4315, %v4259, %v4371
      %v4428 = vsel %vm4316, %v4260, %v4372
      %v4429 = vsel %vm4317, %v4261, %v4373
      %v4430 = vsel %vm4318, %v4262, %v4374
      %v4431 = vsel %vm4319, %v4263, %v4375
      %v4432 = vsel %vm4320, %v4264, %v4376
      %4433 = vst [vmem:[#allocation2] sm:$0xff] %v4377
      %4434 = vst [vmem:[#allocation2 + $0x8] sm:$0xff] %v4378
      %4435 = vst [vmem:[#allocation2 + $0x10] sm:$0xff] %v4379
      %4436 = vst [vmem:[#allocation2 + $0x18] sm:$0xff] %v4380
      %4437 = vst [vmem:[#allocation2 + $0x20] sm:$0xff] %v4381
      %4438 = vst [vmem:[#allocation2 + $0x28] sm:$0xff] %v4382
      %4439 = vst [vmem:[#allocation2 + $0x30] sm:$0xff] %v4383
      %4440 = vst [vmem:[#allocation2 + $0x38] sm:$0xff] %v4384
      %4441 = vst [vmem:[#allocation2 + $0x40] sm:$0xff] %v4385
      %4442 = vst [vmem:[#allocation2 + $0x48] sm:$0xff] %v4386
      %4443 = vst [vmem:[#allocation2 + $0x50] sm:$0xff] %v4387
      %4444 = vst [vmem:[#allocation2 + $0x58] sm:$0xff] %v4388
      %4445 = vst [vmem:[#allocation2 + $0x60] sm:$0xff] %v4389
      %4446 = vst [vmem:[#allocation2 + $0x68] sm:$0xff] %v4390
      %4447 = vst [vmem:[#allocation2 + $0x70] sm:$0xff] %v4391
      %4448 = vst [vmem:[#allocation2 + $0x78] sm:$0xff] %v4392
      %4449 = vst [vmem:[#allocation2 + $0x80] sm:$0xff] %v4393
      %4450 = vst [vmem:[#allocation2 + $0x88] sm:$0xff] %v4394
      %4451 = vst [vmem:[#allocation2 + $0x90] sm:$0xff] %v4395
      %4452 = vst [vmem:[#allocation2 + $0x98] sm:$0xff] %v4396
      %4453 = vst [vmem:[#allocation2 + $0xa0] sm:$0xff] %v4397
      %4454 = vst [vmem:[#allocation2 + $0xa8] sm:$0xff] %v4398
      %4455 = vst [vmem:[#allocation2 + $0xb0] sm:$0xff] %v4399
      %4456 = vst [vmem:[#allocation2 + $0xb8] sm:$0xff] %v4400
      %4457 = vst [vmem:[#allocation2 + $0xc0] sm:$0xff] %v4401
      %4458 = vst [vmem:[#allocation2 + $0xc8] sm:$0xff] %v4402
      %4459 = vst [vmem:[#allocation2 + $0xd0] sm:$0xff] %v4403
      %4460 = vst [vmem:[#allocation2 + $0xd8] sm:$0xff] %v4404
      %4461 = vst [vmem:[#allocation2 + $0xe0] sm:$0xff] %v4405
      %4462 = vst [vmem:[#allocation2 + $0xe8] sm:$0xff] %v4406
      %4463 = vst [vmem:[#allocation2 + $0xf0] sm:$0xff] %v4407
      %4464 = vst [vmem:[#allocation2 + $0xf8] sm:$0xff] %v4408
      %4465 = vst [vmem:[#allocation2 + $0x100] sm:$0xff] %v4409
      %4466 = vst [vmem:[#allocation2 + $0x108] sm:$0xff] %v4410
      %4467 = vst [vmem:[#allocation2 + $0x110] sm:$0xff] %v4411
      %4468 = vst [vmem:[#allocation2 + $0x118] sm:$0xff] %v4412
      %4469 = vst [vmem:[#allocation2 + $0x120] sm:$0xff] %v4413
      %4470 = vst [vmem:[#allocation2 + $0x128] sm:$0xff] %v4414
      %4471 = vst [vmem:[#allocation2 + $0x130] sm:$0xff] %v4415
      %4472 = vst [vmem:[#allocation2 + $0x138] sm:$0xff] %v4416
      %4473 = vst [vmem:[#allocation2 + $0x140] sm:$0xff] %v4417
      %4474 = vst [vmem:[#allocation2 + $0x148] sm:$0xff] %v4418
      %4475 = vst [vmem:[#allocation2 + $0x150] sm:$0xff] %v4419
      %4476 = vst [vmem:[#allocation2 + $0x158] sm:$0xff] %v4420
      %4477 = vst [vmem:[#allocation2 + $0x160] sm:$0xff] %v4421
      %4478 = vst [vmem:[#allocation2 + $0x168] sm:$0xff] %v4422
      %4479 = vst [vmem:[#allocation2 + $0x170] sm:$0xff] %v4423
      %4480 = vst [vmem:[#allocation2 + $0x178] sm:$0xff] %v4424
      %4481 = vst [vmem:[#allocation2 + $0x180] sm:$0xff] %v4425
      %4482 = vst [vmem:[#allocation2 + $0x188] sm:$0xff] %v4426
      %4483 = vst [vmem:[#allocation2 + $0x190] sm:$0xff] %v4427
      %4484 = vst [vmem:[#allocation2 + $0x198] sm:$0xff] %v4428
      %4485 = vst [vmem:[#allocation2 + $0x1a0] sm:$0xff] %v4429
      %4486 = vst [vmem:[#allocation2 + $0x1a8] sm:$0xff] %v4430
      %4487 = vst [vmem:[#allocation2 + $0x1b0] sm:$0xff] %v4431
      %4488 = vst [vmem:[#allocation2 + $0x1b8] sm:$0xff] %v4432
      %v4489 = vld [vmem:[#allocation2] ss:$2 sm:$0xff]
      %s4490 = scalar_lea.vmem [#allocation2], 16
      %v4491 = vld [vmem:[%s4490] ss:$2 sm:$0xff]
      %s4492 = scalar_lea.vmem [#allocation2], 32
      %v4493 = vld [vmem:[%s4492] ss:$2 sm:$0xff]
      %s4494 = scalar_lea.vmem [#allocation2], 48
      %v4495 = vld [vmem:[%s4494] ss:$2 sm:$0xff]
      %s4496 = scalar_lea.vmem [#allocation2], 64
      %v4497 = vld [vmem:[%s4496] ss:$2 sm:$0xff]
      %s4498 = scalar_lea.vmem [#allocation2], 80
      %v4499 = vld [vmem:[%s4498] ss:$2 sm:$0xff]
      %s4500 = scalar_lea.vmem [#allocation2], 96
      %v4501 = vld [vmem:[%s4500] ss:$2 sm:$0xff]
      %s4502 = scalar_lea.vmem [#allocation2], 112
      %v4503 = vld [vmem:[%s4502] ss:$2 sm:$0xff]
      %s4504 = scalar_lea.vmem [#allocation2], 128
      %v4505 = vld [vmem:[%s4504] ss:$2 sm:$0xff]
      %s4506 = scalar_lea.vmem [#allocation2], 144
      %v4507 = vld [vmem:[%s4506] ss:$2 sm:$0xff]
      %s4508 = scalar_lea.vmem [#allocation2], 160
      %v4509 = vld [vmem:[%s4508] ss:$2 sm:$0xff]
      %s4510 = scalar_lea.vmem [#allocation2], 176
      %v4511 = vld [vmem:[%s4510] ss:$2 sm:$0xff]
      %s4512 = scalar_lea.vmem [#allocation2], 192
      %v4513 = vld [vmem:[%s4512] ss:$2 sm:$0xff]
      %s4514 = scalar_lea.vmem [#allocation2], 208
      %v4515 = vld [vmem:[%s4514] ss:$2 sm:$0xff]
      %s4516 = scalar_lea.vmem [#allocation2], 224
      %v4517 = vld [vmem:[%s4516] ss:$2 sm:$0xff]
      %s4518 = scalar_lea.vmem [#allocation2], 240
      %v4519 = vld [vmem:[%s4518] ss:$2 sm:$0xff]
      %s4520 = scalar_lea.vmem [#allocation2], 256
      %v4521 = vld [vmem:[%s4520] ss:$2 sm:$0xff]
      %s4522 = scalar_lea.vmem [#allocation2], 272
      %v4523 = vld [vmem:[%s4522] ss:$2 sm:$0xff]
      %s4524 = scalar_lea.vmem [#allocation2], 288
      %v4525 = vld [vmem:[%s4524] ss:$2 sm:$0xff]
      %s4526 = scalar_lea.vmem [#allocation2], 304
      %v4527 = vld [vmem:[%s4526] ss:$2 sm:$0xff]
      %s4528 = scalar_lea.vmem [#allocation2], 320
      %v4529 = vld [vmem:[%s4528] ss:$2 sm:$0xff]
      %s4530 = scalar_lea.vmem [#allocation2], 336
      %v4531 = vld [vmem:[%s4530] ss:$2 sm:$0xff]
      %s4532 = scalar_lea.vmem [#allocation2], 352
      %v4533 = vld [vmem:[%s4532] ss:$2 sm:$0xff]
      %s4534 = scalar_lea.vmem [#allocation2], 368
      %v4535 = vld [vmem:[%s4534] ss:$2 sm:$0xff]
      %s4536 = scalar_lea.vmem [#allocation2], 384
      %v4537 = vld [vmem:[%s4536] ss:$2 sm:$0xff]
      %s4538 = scalar_lea.vmem [#allocation2], 400
      %v4539 = vld [vmem:[%s4538] ss:$2 sm:$0xff]
      %s4540 = scalar_lea.vmem [#allocation2], 416
      %v4541 = vld [vmem:[%s4540] ss:$2 sm:$0xff]
      %s4542 = scalar_lea.vmem [#allocation2], 432
      %v4543 = vld [vmem:[%s4542] ss:$2 sm:$0xff]
      %s4544 = scalar_lea.vmem [#allocation2], 1
      %v4545 = vld [vmem:[%s4544] ss:$2 sm:$0xff]
      %s4546 = scalar_lea.vmem [#allocation2], 17
      %v4547 = vld [vmem:[%s4546] ss:$2 sm:$0xff]
      %s4548 = scalar_lea.vmem [#allocation2], 33
      %v4549 = vld [vmem:[%s4548] ss:$2 sm:$0xff]
      %s4550 = scalar_lea.vmem [#allocation2], 49
      %v4551 = vld [vmem:[%s4550] ss:$2 sm:$0xff]
      %s4552 = scalar_lea.vmem [#allocation2], 65
      %v4553 = vld [vmem:[%s4552] ss:$2 sm:$0xff]
      %s4554 = scalar_lea.vmem [#allocation2], 81
      %v4555 = vld [vmem:[%s4554] ss:$2 sm:$0xff]
      %s4556 = scalar_lea.vmem [#allocation2], 97
      %v4557 = vld [vmem:[%s4556] ss:$2 sm:$0xff]
      %s4558 = scalar_lea.vmem [#allocation2], 113
      %v4559 = vld [vmem:[%s4558] ss:$2 sm:$0xff]
      %s4560 = scalar_lea.vmem [#allocation2], 129
      %v4561 = vld [vmem:[%s4560] ss:$2 sm:$0xff]
      %s4562 = scalar_lea.vmem [#allocation2], 145
      %v4563 = vld [vmem:[%s4562] ss:$2 sm:$0xff]
      %s4564 = scalar_lea.vmem [#allocation2], 161
      %v4565 = vld [vmem:[%s4564] ss:$2 sm:$0xff]
      %s4566 = scalar_lea.vmem [#allocation2], 177
      %v4567 = vld [vmem:[%s4566] ss:$2 sm:$0xff]
      %s4568 = scalar_lea.vmem [#allocation2], 193
      %v4569 = vld [vmem:[%s4568] ss:$2 sm:$0xff]
      %s4570 = scalar_lea.vmem [#allocation2], 209
      %v4571 = vld [vmem:[%s4570] ss:$2 sm:$0xff]
      %s4572 = scalar_lea.vmem [#allocation2], 225
      %v4573 = vld [vmem:[%s4572] ss:$2 sm:$0xff]
      %s4574 = scalar_lea.vmem [#allocation2], 241
      %v4575 = vld [vmem:[%s4574] ss:$2 sm:$0xff]
      %s4576 = scalar_lea.vmem [#allocation2], 257
      %v4577 = vld [vmem:[%s4576] ss:$2 sm:$0xff]
      %s4578 = scalar_lea.vmem [#allocation2], 273
      %v4579 = vld [vmem:[%s4578] ss:$2 sm:$0xff]
      %s4580 = scalar_lea.vmem [#allocation2], 289
      %v4581 = vld [vmem:[%s4580] ss:$2 sm:$0xff]
      %s4582 = scalar_lea.vmem [#allocation2], 305
      %v4583 = vld [vmem:[%s4582] ss:$2 sm:$0xff]
      %s4584 = scalar_lea.vmem [#allocation2], 321
      %v4585 = vld [vmem:[%s4584] ss:$2 sm:$0xff]
      %s4586 = scalar_lea.vmem [#allocation2], 337
      %v4587 = vld [vmem:[%s4586] ss:$2 sm:$0xff]
      %s4588 = scalar_lea.vmem [#allocation2], 353
      %v4589 = vld [vmem:[%s4588] ss:$2 sm:$0xff]
      %s4590 = scalar_lea.vmem [#allocation2], 369
      %v4591 = vld [vmem:[%s4590] ss:$2 sm:$0xff]
      %s4592 = scalar_lea.vmem [#allocation2], 385
      %v4593 = vld [vmem:[%s4592] ss:$2 sm:$0xff]
      %s4594 = scalar_lea.vmem [#allocation2], 401
      %v4595 = vld [vmem:[%s4594] ss:$2 sm:$0xff]
      %s4596 = scalar_lea.vmem [#allocation2], 417
      %v4597 = vld [vmem:[%s4596] ss:$2 sm:$0xff]
      %s4598 = scalar_lea.vmem [#allocation2], 433
      %v4599 = vld [vmem:[%s4598] ss:$2 sm:$0xff]
      %v4600 = vadd.f32 %v4489, %v4545
      %v4601 = vadd.f32 %v4491, %v4547
      %v4602 = vadd.f32 %v4493, %v4549
      %v4603 = vadd.f32 %v4495, %v4551
      %v4604 = vadd.f32 %v4497, %v4553
      %v4605 = vadd.f32 %v4499, %v4555
      %v4606 = vadd.f32 %v4501, %v4557
      %v4607 = vadd.f32 %v4503, %v4559
      %v4608 = vadd.f32 %v4505, %v4561
      %v4609 = vadd.f32 %v4507, %v4563
      %v4610 = vadd.f32 %v4509, %v4565
      %v4611 = vadd.f32 %v4511, %v4567
      %v4612 = vadd.f32 %v4513, %v4569
      %v4613 = vadd.f32 %v4515, %v4571
      %v4614 = vadd.f32 %v4517, %v4573
      %v4615 = vadd.f32 %v4519, %v4575
      %v4616 = vadd.f32 %v4521, %v4577
      %v4617 = vadd.f32 %v4523, %v4579
      %v4618 = vadd.f32 %v4525, %v4581
      %v4619 = vadd.f32 %v4527, %v4583
      %v4620 = vadd.f32 %v4529, %v4585
      %v4621 = vadd.f32 %v4531, %v4587
      %v4622 = vadd.f32 %v4533, %v4589
      %v4623 = vadd.f32 %v4535, %v4591
      %v4624 = vadd.f32 %v4537, %v4593
      %v4625 = vadd.f32 %v4539, %v4595
      %v4626 = vadd.f32 %v4541, %v4597
      %v4627 = vadd.f32 %v4543, %v4599
      %v4628 = vpack.c.bf16 %v4601, %v4600
      %v4629 = vpack.c.bf16 %v4603, %v4602
      %v4630 = vpack.c.bf16 %v4605, %v4604
      %v4631 = vpack.c.bf16 %v4607, %v4606
      %v4632 = vpack.c.bf16 %v4609, %v4608
      %v4633 = vpack.c.bf16 %v4611, %v4610
      %v4634 = vpack.c.bf16 %v4613, %v4612
      %v4635 = vpack.c.bf16 %v4615, %v4614
      %v4636 = vpack.c.bf16 %v4617, %v4616
      %v4637 = vpack.c.bf16 %v4619, %v4618
      %v4638 = vpack.c.bf16 %v4621, %v4620
      %v4639 = vpack.c.bf16 %v4623, %v4622
      %v4640 = vpack.c.bf16 %v4625, %v4624
      %v4641 = vpack.c.bf16 %v4627, %v4626
      %v4642 = vld [vmem:[%s16] sm:$0xf]
      %v4643 = vld [vmem:[%s16 + $0x4] sm:$0xf]
      %v4644 = vld [vmem:[%s16 + $0x8] sm:$0xf]
      %v4645 = vld [vmem:[%s16 + $0xc] sm:$0xf]
      %v4646 = vld [vmem:[%s16 + $0x10] sm:$0xf]
      %v4647 = vld [vmem:[%s16 + $0x14] sm:$0xf]
      %v4648 = vld [vmem:[%s16 + $0x18] sm:$0xf]
      %v4649 = vld [vmem:[%s16 + $0x1c] sm:$0xf]
      %v4650 = vld [vmem:[%s16 + $0x20] sm:$0xf]
      %v4651 = vld [vmem:[%s16 + $0x24] sm:$0xf]
      %v4652 = vld [vmem:[%s16 + $0x28] sm:$0xf]
      %v4653 = vld [vmem:[%s16 + $0x2c] sm:$0xf]
      %v4654 = vld [vmem:[%s16 + $0x30] sm:$0xf]
      %v4655 = vld [vmem:[%s16 + $0x34] sm:$0xf]
      %v4656 = vld [vmem:[%s16 + $0x38] sm:$0xf]
      %v4657 = vld [vmem:[%s16 + $0x3c] sm:$0xf]
      %v4674 = vunpack.c.l.b16 %v4642
      %v4675 = vunpack.c.l.b16 %v4643
      %v4676 = vunpack.c.l.b16 %v4644
      %v4677 = vunpack.c.l.b16 %v4645
      %v4678 = vunpack.c.l.b16 %v4646
      %v4679 = vunpack.c.l.b16 %v4647
      %v4680 = vunpack.c.l.b16 %v4648
      %v4681 = vunpack.c.l.b16 %v4649
      %v4682 = vunpack.c.l.b16 %v4650
      %v4683 = vunpack.c.l.b16 %v4651
      %v4684 = vunpack.c.l.b16 %v4652
      %v4685 = vunpack.c.l.b16 %v4653
      %v4686 = vunpack.c.l.b16 %v4654
      %v4687 = vunpack.c.l.b16 %v4655
      %v4688 = vunpack.c.l.b16 %v4656
      %v4689 = vunpack.c.l.b16 %v4657
      %v4690 = vpack.c.b16 %v4675, %v4674
      %v4691 = vpack.c.b16 %v4677, %v4676
      %v4692 = vpack.c.b16 %v4679, %v4678
      %v4693 = vpack.c.b16 %v4681, %v4680
      %v4694 = vpack.c.b16 %v4683, %v4682
      %v4695 = vpack.c.b16 %v4685, %v4684
      %v4696 = vpack.c.b16 %v4687, %v4686
      %v4697 = vpack.c.b16 %v4689, %v4688
      %4706 = vmatprep.subr.bf16.mxu0 0
      %4707 = vmatpush1.bf16.msra.mxu0 %v4690
      %4708 = vmatprep.subr.bf16.mxu0 0
      %4709 = vmatpush1.bf16.msra.mxu0 %v4691
      %4710 = vmatprep.subr.bf16.mxu0 0
      %4711 = vmatpush1.bf16.msra.mxu0 %v4692
      %4712 = vmatprep.subr.bf16.mxu0 0
      %4713 = vmatpush1.bf16.msra.mxu0 %v4693
      %4714 = vmatprep.subr.bf16.mxu0 0
      %4715 = vmatpush1.bf16.msra.mxu0 %v4694
      %4716 = vmatprep.subr.bf16.mxu0 0
      %4717 = vmatpush1.bf16.msra.mxu0 %v4695
      %4718 = vmatprep.subr.bf16.mxu0 0
      %4719 = vmatpush1.bf16.msra.mxu0 %v4696
      %4720 = vmatprep.subr.bf16.mxu0 0
      %4721 = vmatpush1.bf16.msra.mxu0 %v4697
      %4722 = vmatprep.subr.bf16.mxu0 0
      %4723 = vmatpush1.bf16.msra.mxu0 0
      %4724 = vmatprep.subr.bf16.mxu0 0
      %4725 = vmatpush1.bf16.msra.mxu0 0
      %4726 = vmatprep.subr.bf16.mxu0 0
      %4727 = vmatpush1.bf16.msra.mxu0 0
      %4728 = vmatprep.subr.bf16.mxu0 0
      %4729 = vmatpush1.bf16.msra.mxu0 0
      %4730 = vmatprep.subr.bf16.mxu0 0
      %4731 = vmatpush1.bf16.msra.mxu0 0
      %4732 = vmatprep.subr.bf16.mxu0 0
      %4733 = vmatpush1.bf16.msra.mxu0 0
      %4734 = vmatprep.subr.bf16.mxu0 0
      %4735 = vmatpush1.bf16.msra.mxu0 0
      %4736 = vmatprep.subr.bf16.mxu0 0
      %4737 = vmatpush1.bf16.msra.mxu0 0
      %4738 = vmatprep.mubr.bf16.mxu0 0
      %4739 = vmatmul.mubr.bf16.gmra.mrb[0].mxu0 %v4628
      %v4740 = vpop.f32.mrb[0].mxu0
      %v4741 = vadd.f32 0.0, %v4740
      %v4742 = vpop.f32.mrb[0].mxu0
      %v4743 = vpop.f32.mrb[0].mxu0
      %v4744 = vadd.f32 0.0, %v4743
      %v4745 = vpop.f32.mrb[0].mxu0
      %4746 = vmatprep.mubr.bf16.mxu0 0
      %4747 = vmatmul.mubr.bf16.gmra.mrb[0].mxu0 %v4629
      %v4748 = vpop.f32.mrb[0].mxu0
      %v4749 = vadd.f32 0.0, %v4748
      %v4750 = vpop.f32.mrb[0].mxu0
      %v4751 = vpop.f32.mrb[0].mxu0
      %v4752 = vadd.f32 0.0, %v4751
      %v4753 = vpop.f32.mrb[0].mxu0
      %4754 = vmatprep.mubr.bf16.mxu0 0
      %4755 = vmatmul.mubr.bf16.gmra.mrb[0].mxu0 %v4630
      %v4756 = vpop.f32.mrb[0].mxu0
      %v4757 = vadd.f32 0.0, %v4756
      %v4758 = vpop.f32.mrb[0].mxu0
      %v4759 = vpop.f32.mrb[0].mxu0
      %v4760 = vadd.f32 0.0, %v4759
      %v4761 = vpop.f32.mrb[0].mxu0
      %4762 = vmatprep.mubr.bf16.mxu0 0
      %4763 = vmatmul.mubr.bf16.gmra.mrb[0].mxu0 %v4631
      %v4764 = vpop.f32.mrb[0].mxu0
      %v4765 = vadd.f32 0.0, %v4764
      %v4766 = vpop.f32.mrb[0].mxu0
      %v4767 = vpop.f32.mrb[0].mxu0
      %v4768 = vadd.f32 0.0, %v4767
      %v4769 = vpop.f32.mrb[0].mxu0
      %4770 = vmatprep.mubr.bf16.mxu0 0
      %4771 = vmatmul.mubr.bf16.gmra.mrb[0].mxu0 %v4632
      %v4772 = vpop.f32.mrb[0].mxu0
      %v4773 = vadd.f32 0.0, %v4772
      %v4774 = vpop.f32.mrb[0].mxu0
      %v4775 = vpop.f32.mrb[0].mxu0
      %v4776 = vadd.f32 0.0, %v4775
      %v4777 = vpop.f32.mrb[0].mxu0
      %4778 = vmatprep.mubr.bf16.mxu0 0
      %4779 = vmatmul.mubr.bf16.gmra.mrb[0].mxu0 %v4633
      %v4780 = vpop.f32.mrb[0].mxu0
      %v4781 = vadd.f32 0.0, %v4780
      %v4782 = vpop.f32.mrb[0].mxu0
      %v4783 = vpop.f32.mrb[0].mxu0
      %v4784 = vadd.f32 0.0, %v4783
      %v4785 = vpop.f32.mrb[0].mxu0
      %4786 = vmatprep.mubr.bf16.mxu0 0
      %4787 = vmatmul.mubr.bf16.gmra.mrb[0].mxu0 %v4634
      %v4788 = vpop.f32.mrb[0].mxu0
      %v4789 = vadd.f32 0.0, %v4788
      %v4790 = vpop.f32.mrb[0].mxu0
      %v4791 = vpop.f32.mrb[0].mxu0
      %v4792 = vadd.f32 0.0, %v4791
      %v4793 = vpop.f32.mrb[0].mxu0
      %4794 = vmatprep.mubr.bf16.mxu0 0
      %4795 = vmatmul.mubr.bf16.gmra.mrb[0].mxu0 %v4635
      %v4796 = vpop.f32.mrb[0].mxu0
      %v4797 = vadd.f32 0.0, %v4796
      %v4798 = vpop.f32.mrb[0].mxu0
      %v4799 = vpop.f32.mrb[0].mxu0
      %v4800 = vadd.f32 0.0, %v4799
      %v4801 = vpop.f32.mrb[0].mxu0
      %4802 = vmatprep.mubr.bf16.mxu0 0
      %4803 = vmatmul.mubr.bf16.gmra.mrb[0].mxu0 %v4636
      %v4804 = vpop.f32.mrb[0].mxu0
      %v4805 = vadd.f32 0.0, %v4804
      %v4806 = vpop.f32.mrb[0].mxu0
      %v4807 = vpop.f32.mrb[0].mxu0
      %v4808 = vadd.f32 0.0, %v4807
      %v4809 = vpop.f32.mrb[0].mxu0
      %4810 = vmatprep.mubr.bf16.mxu0 0
      %4811 = vmatmul.mubr.bf16.gmra.mrb[0].mxu0 %v4637
      %v4812 = vpop.f32.mrb[0].mxu0
      %v4813 = vadd.f32 0.0, %v4812
      %v4814 = vpop.f32.mrb[0].mxu0
      %v4815 = vpop.f32.mrb[0].mxu0
      %v4816 = vadd.f32 0.0, %v4815
      %v4817 = vpop.f32.mrb[0].mxu0
      %4818 = vmatprep.mubr.bf16.mxu0 0
      %4819 = vmatmul.mubr.bf16.gmra.mrb[0].mxu0 %v4638
      %v4820 = vpop.f32.mrb[0].mxu0
      %v4821 = vadd.f32 0.0, %v4820
      %v4822 = vpop.f32.mrb[0].mxu0
      %v4823 = vpop.f32.mrb[0].mxu0
      %v4824 = vadd.f32 0.0, %v4823
      %v4825 = vpop.f32.mrb[0].mxu0
      %4826 = vmatprep.mubr.bf16.mxu0 0
      %4827 = vmatmul.mubr.bf16.gmra.mrb[0].mxu0 %v4639
      %v4828 = vpop.f32.mrb[0].mxu0
      %v4829 = vadd.f32 0.0, %v4828
      %v4830 = vpop.f32.mrb[0].mxu0
      %v4831 = vpop.f32.mrb[0].mxu0
      %v4832 = vadd.f32 0.0, %v4831
      %v4833 = vpop.f32.mrb[0].mxu0
      %4834 = vmatprep.mubr.bf16.mxu0 0
      %4835 = vmatmul.mubr.bf16.gmra.mrb[0].mxu0 %v4640
      %v4836 = vpop.f32.mrb[0].mxu0
      %v4837 = vadd.f32 0.0, %v4836
      %v4838 = vpop.f32.mrb[0].mxu0
      %v4839 = vpop.f32.mrb[0].mxu0
      %v4840 = vadd.f32 0.0, %v4839
      %v4841 = vpop.f32.mrb[0].mxu0
      %4842 = vmatprep.mubr.bf16.mxu0 0
      %4843 = vmatmul.mubr.bf16.gmra.mrb[0].mxu0 %v4641
      %v4844 = vpop.f32.mrb[0].mxu0
      %v4845 = vadd.f32 0.0, %v4844
      %v4846 = vpop.f32.mrb[0].mxu0
      %v4847 = vpop.f32.mrb[0].mxu0
      %v4848 = vadd.f32 0.0, %v4847
      %v4849 = vpop.f32.mrb[0].mxu0
      %4850 = vdwg.mxu0
      %v4851 = vpack.c.bf16 %v4744, %v4741
      %v4852 = vpack.c.bf16 %v4752, %v4749
      %v4853 = vpack.c.bf16 %v4760, %v4757
      %v4854 = vpack.c.bf16 %v4768, %v4765
      %v4855 = vpack.c.bf16 %v4776, %v4773
      %v4856 = vpack.c.bf16 %v4784, %v4781
      %v4857 = vpack.c.bf16 %v4792, %v4789
      %v4858 = vpack.c.bf16 %v4800, %v4797
      %v4859 = vpack.c.bf16 %v4808, %v4805
      %v4860 = vpack.c.bf16 %v4816, %v4813
      %v4861 = vpack.c.bf16 %v4824, %v4821
      %v4862 = vpack.c.bf16 %v4832, %v4829
      %v4863 = vpack.c.bf16 %v4840, %v4837
      %v4864 = vpack.c.bf16 %v4848, %v4845
      %v4865 = vld [vmem:[%s8] sm:$0xff]
      %v4866 = vld [vmem:[%s8 + $0x8] sm:$0xf]
      %v4867 = vld [vmem:[%s8 + $0xc] sm:$0xff]
      %v4868 = vld [vmem:[%s8 + $0x14] sm:$0xf]
      %v4869 = vld [vmem:[%s8 + $0x18] sm:$0xff]
      %v4870 = vld [vmem:[%s8 + $0x20] sm:$0xf]
      %v4871 = vld [vmem:[%s8 + $0x24] sm:$0xff]
      %v4872 = vld [vmem:[%s8 + $0x2c] sm:$0xf]
      %v4873 = vld [vmem:[%s8 + $0x30] sm:$0xff]
      %v4874 = vld [vmem:[%s8 + $0x38] sm:$0xf]
      %v4875 = vld [vmem:[%s8 + $0x3c] sm:$0xff]
      %v4876 = vld [vmem:[%s8 + $0x44] sm:$0xf]
      %v4877 = vld [vmem:[%s8 + $0x48] sm:$0xff]
      %v4878 = vld [vmem:[%s8 + $0x50] sm:$0xf]
      %v4879 = vld [vmem:[%s8 + $0x54] sm:$0xff]
      %v4880 = vld [vmem:[%s8 + $0x5c] sm:$0xf]
      %v4881 = vld [vmem:[%s8 + $0x60] sm:$0xff]
      %v4882 = vld [vmem:[%s8 + $0x68] sm:$0xf]
      %v4883 = vld [vmem:[%s8 + $0x6c] sm:$0xff]
      %v4884 = vld [vmem:[%s8 + $0x74] sm:$0xf]
      %v4885 = vld [vmem:[%s8 + $0x78] sm:$0xff]
      %v4886 = vld [vmem:[%s8 + $0x80] sm:$0xf]
      %v4887 = vld [vmem:[%s8 + $0x84] sm:$0xff]
      %v4888 = vld [vmem:[%s8 + $0x8c] sm:$0xf]
      %v4889 = vld [vmem:[%s8 + $0x90] sm:$0xff]
      %v4890 = vld [vmem:[%s8 + $0x98] sm:$0xf]
      %v4891 = vld [vmem:[%s8 + $0x9c] sm:$0xff]
      %v4892 = vld [vmem:[%s8 + $0xa4] sm:$0xf]
      %v4893 = vld [vmem:[%s8 + $0xa8] sm:$0xff]
      %v4894 = vld [vmem:[%s8 + $0xb0] sm:$0xf]
      %v4895 = vld [vmem:[%s8 + $0xb4] sm:$0xff]
      %v4896 = vld [vmem:[%s8 + $0xbc] sm:$0xf]
      %v4929 = vunpack.c.l.b16 %v4865
      %v4930 = vunpack.c.h.b16 %v4865
      %v4931 = vunpack.c.l.b16 %v4866
      %v4932 = vunpack.c.l.b16 %v4867
      %v4933 = vunpack.c.h.b16 %v4867
      %v4934 = vunpack.c.l.b16 %v4868
      %v4935 = vunpack.c.l.b16 %v4869
      %v4936 = vunpack.c.h.b16 %v4869
      %v4937 = vunpack.c.l.b16 %v4870
      %v4938 = vunpack.c.l.b16 %v4871
      %v4939 = vunpack.c.h.b16 %v4871
      %v4940 = vunpack.c.l.b16 %v4872
      %v4941 = vunpack.c.l.b16 %v4873
      %v4942 = vunpack.c.h.b16 %v4873
      %v4943 = vunpack.c.l.b16 %v4874
      %v4944 = vunpack.c.l.b16 %v4875
      %v4945 = vunpack.c.h.b16 %v4875
      %v4946 = vunpack.c.l.b16 %v4876
      %v4947 = vunpack.c.l.b16 %v4877
      %v4948 = vunpack.c.h.b16 %v4877
      %v4949 = vunpack.c.l.b16 %v4878
      %v4950 = vunpack.c.l.b16 %v4879
      %v4951 = vunpack.c.h.b16 %v4879
      %v4952 = vunpack.c.l.b16 %v4880
      %v4953 = vunpack.c.l.b16 %v4881
      %v4954 = vunpack.c.h.b16 %v4881
      %v4955 = vunpack.c.l.b16 %v4882
      %v4956 = vunpack.c.l.b16 %v4883
      %v4957 = vunpack.c.h.b16 %v4883
      %v4958 = vunpack.c.l.b16 %v4884
      %v4959 = vunpack.c.l.b16 %v4885
      %v4960 = vunpack.c.h.b16 %v4885
      %v4961 = vunpack.c.l.b16 %v4886
      %v4962 = vunpack.c.l.b16 %v4887
      %v4963 = vunpack.c.h.b16 %v4887
      %v4964 = vunpack.c.l.b16 %v4888
      %v4965 = vunpack.c.l.b16 %v4889
      %v4966 = vunpack.c.h.b16 %v4889
      %v4967 = vunpack.c.l.b16 %v4890
      %v4968 = vunpack.c.l.b16 %v4891
      %v4969 = vunpack.c.h.b16 %v4891
      %v4970 = vunpack.c.l.b16 %v4892
      %v4971 = vunpack.c.l.b16 %v4893
      %v4972 = vunpack.c.h.b16 %v4893
      %v4973 = vunpack.c.l.b16 %v4894
      %v4974 = vunpack.c.l.b16 %v4895
      %v4975 = vunpack.c.h.b16 %v4895
      %v4976 = vunpack.c.l.b16 %v4896
      %v4977 = vpack.c.b16 %v4932, %v4929
      %v4978 = vpack.c.b16 %v4933, %v4930
      %v4979 = vpack.c.b16 %v4934, %v4931
      %v4980 = vpack.c.b16 %v4938, %v4935
      %v4981 = vpack.c.b16 %v4939, %v4936
      %v4982 = vpack.c.b16 %v4940, %v4937
      %v4983 = vpack.c.b16 %v4944, %v4941
      %v4984 = vpack.c.b16 %v4945, %v4942
      %v4985 = vpack.c.b16 %v4946, %v4943
      %v4986 = vpack.c.b16 %v4950, %v4947
      %v4987 = vpack.c.b16 %v4951, %v4948
      %v4988 = vpack.c.b16 %v4952, %v4949
      %v4989 = vpack.c.b16 %v4956, %v4953
      %v4990 = vpack.c.b16 %v4957, %v4954
      %v4991 = vpack.c.b16 %v4958, %v4955
      %v4992 = vpack.c.b16 %v4962, %v4959
      %v4993 = vpack.c.b16 %v4963, %v4960
      %v4994 = vpack.c.b16 %v4964, %v4961
      %v4995 = vpack.c.b16 %v4968, %v4965
      %v4996 = vpack.c.b16 %v4969, %v4966
      %v4997 = vpack.c.b16 %v4970, %v4967
      %v4998 = vpack.c.b16 %v4974, %v4971
      %v4999 = vpack.c.b16 %v4975, %v4972
      %v5000 = vpack.c.b16 %v4976, %v4973
      %5025 = vmatprep.subr.bf16.mxu0 %v4978
      %5026 = vmatpush1.bf16.msra.mxu0 %v4977
      %5027 = vmatprep.subr.bf16.mxu0 %v4981
      %5028 = vmatpush1.bf16.msra.mxu0 %v4980
      %5029 = vmatprep.subr.bf16.mxu0 %v4984
      %5030 = vmatpush1.bf16.msra.mxu0 %v4983
      %5031 = vmatprep.subr.bf16.mxu0 %v4987
      %5032 = vmatpush1.bf16.msra.mxu0 %v4986
      %5033 = vmatprep.subr.bf16.mxu0 %v4990
      %5034 = vmatpush1.bf16.msra.mxu0 %v4989
      %5035 = vmatprep.subr.bf16.mxu0 %v4993
      %5036 = vmatpush1.bf16.msra.mxu0 %v4992
      %5037 = vmatprep.subr.bf16.mxu0 %v4996
      %5038 = vmatpush1.bf16.msra.mxu0 %v4995
      %5039 = vmatprep.subr.bf16.mxu0 %v4999
      %5040 = vmatpush1.bf16.msra.mxu0 %v4998
      %5041 = vmatprep.subr.bf16.mxu0 0
      %5042 = vmatpush1.bf16.msra.mxu0 0
      %5043 = vmatprep.subr.bf16.mxu0 0
      %5044 = vmatpush1.bf16.msra.mxu0 0
      %5045 = vmatprep.subr.bf16.mxu0 0
      %5046 = vmatpush1.bf16.msra.mxu0 0
      %5047 = vmatprep.subr.bf16.mxu0 0
      %5048 = vmatpush1.bf16.msra.mxu0 0
      %5049 = vmatprep.subr.bf16.mxu0 0
      %5050 = vmatpush1.bf16.msra.mxu0 0
      %5051 = vmatprep.subr.bf16.mxu0 0
      %5052 = vmatpush1.bf16.msra.mxu0 0
      %5053 = vmatprep.subr.bf16.mxu0 0
      %5054 = vmatpush1.bf16.msra.mxu0 0
      %5055 = vmatprep.subr.bf16.mxu0 0
      %5056 = vmatpush1.bf16.msra.mxu0 0
      %5057 = vmatprep.mubr.bf16.mxu0 0
      %5058 = vmatmul.mubr.bf16.gmra.mrb[0].mxu0 %v4851
      %v5059 = vpop.f32.mrb[0].mxu0
      %v5060 = vadd.f32 0.0, %v5059
      %v5061 = vpop.f32.mrb[0].mxu0
      %v5062 = vadd.f32 0.0, %v5061
      %v5063 = vpop.f32.mrb[0].mxu0
      %v5064 = vadd.f32 0.0, %v5063
      %v5065 = vpop.f32.mrb[0].mxu0
      %v5066 = vadd.f32 0.0, %v5065
      %5067 = vmatprep.mubr.bf16.mxu0 0
      %5068 = vmatmul.mubr.bf16.gmra.mrb[0].mxu0 %v4852
      %v5069 = vpop.f32.mrb[0].mxu0
      %v5070 = vadd.f32 0.0, %v5069
      %v5071 = vpop.f32.mrb[0].mxu0
      %v5072 = vadd.f32 0.0, %v5071
      %v5073 = vpop.f32.mrb[0].mxu0
      %v5074 = vadd.f32 0.0, %v5073
      %v5075 = vpop.f32.mrb[0].mxu0
      %v5076 = vadd.f32 0.0, %v5075
      %5077 = vmatprep.mubr.bf16.mxu0 0
      %5078 = vmatmul.mubr.bf16.gmra.mrb[0].mxu0 %v4853
      %v5079 = vpop.f32.mrb[0].mxu0
      %v5080 = vadd.f32 0.0, %v5079
      %v5081 = vpop.f32.mrb[0].mxu0
      %v5082 = vadd.f32 0.0, %v5081
      %v5083 = vpop.f32.mrb[0].mxu0
      %v5084 = vadd.f32 0.0, %v5083
      %v5085 = vpop.f32.mrb[0].mxu0
      %v5086 = vadd.f32 0.0, %v5085
      %5087 = vmatprep.mubr.bf16.mxu0 0
      %5088 = vmatmul.mubr.bf16.gmra.mrb[0].mxu0 %v4854
      %v5089 = vpop.f32.mrb[0].mxu0
      %v5090 = vadd.f32 0.0, %v5089
      %v5091 = vpop.f32.mrb[0].mxu0
      %v5092 = vadd.f32 0.0, %v5091
      %v5093 = vpop.f32.mrb[0].mxu0
      %v5094 = vadd.f32 0.0, %v5093
      %v5095 = vpop.f32.mrb[0].mxu0
      %v5096 = vadd.f32 0.0, %v5095
      %5097 = vmatprep.mubr.bf16.mxu0 0
      %5098 = vmatmul.mubr.bf16.gmra.mrb[0].mxu0 %v4855
      %v5099 = vpop.f32.mrb[0].mxu0
      %v5100 = vadd.f32 0.0, %v5099
      %v5101 = vpop.f32.mrb[0].mxu0
      %v5102 = vadd.f32 0.0, %v5101
      %v5103 = vpop.f32.mrb[0].mxu0
      %v5104 = vadd.f32 0.0, %v5103
      %v5105 = vpop.f32.mrb[0].mxu0
      %v5106 = vadd.f32 0.0, %v5105
      %5107 = vmatprep.mubr.bf16.mxu0 0
      %5108 = vmatmul.mubr.bf16.gmra.mrb[0].mxu0 %v4856
      %v5109 = vpop.f32.mrb[0].mxu0
      %v5110 = vadd.f32 0.0, %v5109
      %v5111 = vpop.f32.mrb[0].mxu0
      %v5112 = vadd.f32 0.0, %v5111
      %v5113 = vpop.f32.mrb[0].mxu0
      %v5114 = vadd.f32 0.0, %v5113
      %v5115 = vpop.f32.mrb[0].mxu0
      %v5116 = vadd.f32 0.0, %v5115
      %5117 = vmatprep.mubr.bf16.mxu0 0
      %5118 = vmatmul.mubr.bf16.gmra.mrb[0].mxu0 %v4857
      %v5119 = vpop.f32.mrb[0].mxu0
      %v5120 = vadd.f32 0.0, %v5119
      %v5121 = vpop.f32.mrb[0].mxu0
      %v5122 = vadd.f32 0.0, %v5121
      %v5123 = vpop.f32.mrb[0].mxu0
      %v5124 = vadd.f32 0.0, %v5123
      %v5125 = vpop.f32.mrb[0].mxu0
      %v5126 = vadd.f32 0.0, %v5125
      %5127 = vmatprep.mubr.bf16.mxu0 0
      %5128 = vmatmul.mubr.bf16.gmra.mrb[0].mxu0 %v4858
      %v5129 = vpop.f32.mrb[0].mxu0
      %v5130 = vadd.f32 0.0, %v5129
      %v5131 = vpop.f32.mrb[0].mxu0
      %v5132 = vadd.f32 0.0, %v5131
      %v5133 = vpop.f32.mrb[0].mxu0
      %v5134 = vadd.f32 0.0, %v5133
      %v5135 = vpop.f32.mrb[0].mxu0
      %v5136 = vadd.f32 0.0, %v5135
      %5137 = vmatprep.mubr.bf16.mxu0 0
      %5138 = vmatmul.mubr.bf16.gmra.mrb[0].mxu0 %v4859
      %v5139 = vpop.f32.mrb[0].mxu0
      %v5140 = vadd.f32 0.0, %v5139
      %v5141 = vpop.f32.mrb[0].mxu0
      %v5142 = vadd.f32 0.0, %v5141
      %v5143 = vpop.f32.mrb[0].mxu0
      %v5144 = vadd.f32 0.0, %v5143
      %v5145 = vpop.f32.mrb[0].mxu0
      %v5146 = vadd.f32 0.0, %v5145
      %5147 = vmatprep.mubr.bf16.mxu0 0
      %5148 = vmatmul.mubr.bf16.gmra.mrb[0].mxu0 %v4860
      %v5149 = vpop.f32.mrb[0].mxu0
      %v5150 = vadd.f32 0.0, %v5149
      %v5151 = vpop.f32.mrb[0].mxu0
      %v5152 = vadd.f32 0.0, %v5151
      %v5153 = vpop.f32.mrb[0].mxu0
      %v5154 = vadd.f32 0.0, %v5153
      %v5155 = vpop.f32.mrb[0].mxu0
      %v5156 = vadd.f32 0.0, %v5155
      %5157 = vmatprep.mubr.bf16.mxu0 0
      %5158 = vmatmul.mubr.bf16.gmra.mrb[0].mxu0 %v4861
      %v5159 = vpop.f32.mrb[0].mxu0
      %v5160 = vadd.f32 0.0, %v5159
      %v5161 = vpop.f32.mrb[0].mxu0
      %v5162 = vadd.f32 0.0, %v5161
      %v5163 = vpop.f32.mrb[0].mxu0
      %v5164 = vadd.f32 0.0, %v5163
      %v5165 = vpop.f32.mrb[0].mxu0
      %v5166 = vadd.f32 0.0, %v5165
      %5167 = vmatprep.mubr.bf16.mxu0 0
      %5168 = vmatmul.mubr.bf16.gmra.mrb[0].mxu0 %v4862
      %v5169 = vpop.f32.mrb[0].mxu0
      %v5170 = vadd.f32 0.0, %v5169
      %v5171 = vpop.f32.mrb[0].mxu0
      %v5172 = vadd.f32 0.0, %v5171
      %v5173 = vpop.f32.mrb[0].mxu0
      %v5174 = vadd.f32 0.0, %v5173
      %v5175 = vpop.f32.mrb[0].mxu0
      %v5176 = vadd.f32 0.0, %v5175
      %5177 = vmatprep.mubr.bf16.mxu0 0
      %5178 = vmatmul.mubr.bf16.gmra.mrb[0].mxu0 %v4863
      %v5179 = vpop.f32.mrb[0].mxu0
      %v5180 = vadd.f32 0.0, %v5179
      %v5181 = vpop.f32.mrb[0].mxu0
      %v5182 = vadd.f32 0.0, %v5181
      %v5183 = vpop.f32.mrb[0].mxu0
      %v5184 = vadd.f32 0.0, %v5183
      %v5185 = vpop.f32.mrb[0].mxu0
      %v5186 = vadd.f32 0.0, %v5185
      %5187 = vmatprep.mubr.bf16.mxu0 0
      %5188 = vmatmul.mubr.bf16.gmra.mrb[0].mxu0 %v4864
      %v5189 = vpop.f32.mrb[0].mxu0
      %v5190 = vadd.f32 0.0, %v5189
      %v5191 = vpop.f32.mrb[0].mxu0
      %v5192 = vadd.f32 0.0, %v5191
      %v5193 = vpop.f32.mrb[0].mxu0
      %v5194 = vadd.f32 0.0, %v5193
      %v5195 = vpop.f32.mrb[0].mxu0
      %v5196 = vadd.f32 0.0, %v5195
      %5197 = vdwg.mxu0
      %5198 = vmatprep.subr.bf16.mxu0 0
      %5199 = vmatpush1.bf16.msra.mxu0 %v4979
      %5200 = vmatprep.subr.bf16.mxu0 0
      %5201 = vmatpush1.bf16.msra.mxu0 %v4982
      %5202 = vmatprep.subr.bf16.mxu0 0
      %5203 = vmatpush1.bf16.msra.mxu0 %v4985
      %5204 = vmatprep.subr.bf16.mxu0 0
      %5205 = vmatpush1.bf16.msra.mxu0 %v4988
      %5206 = vmatprep.subr.bf16.mxu0 0
      %5207 = vmatpush1.bf16.msra.mxu0 %v4991
      %5208 = vmatprep.subr.bf16.mxu0 0
      %5209 = vmatpush1.bf16.msra.mxu0 %v4994
      %5210 = vmatprep.subr.bf16.mxu0 0
      %5211 = vmatpush1.bf16.msra.mxu0 %v4997
      %5212 = vmatprep.subr.bf16.mxu0 0
      %5213 = vmatpush1.bf16.msra.mxu0 %v5000
      %5214 = vmatprep.subr.bf16.mxu0 0
      %5215 = vmatpush1.bf16.msra.mxu0 0
      %5216 = vmatprep.subr.bf16.mxu0 0
      %5217 = vmatpush1.bf16.msra.mxu0 0
      %5218 = vmatprep.subr.bf16.mxu0 0
      %5219 = vmatpush1.bf16.msra.mxu0 0
      %5220 = vmatprep.subr.bf16.mxu0 0
      %5221 = vmatpush1.bf16.msra.mxu0 0
      %5222 = vmatprep.subr.bf16.mxu0 0
      %5223 = vmatpush1.bf16.msra.mxu0 0
      %5224 = vmatprep.subr.bf16.mxu0 0
      %5225 = vmatpush1.bf16.msra.mxu0 0
      %5226 = vmatprep.subr.bf16.mxu0 0
      %5227 = vmatpush1.bf16.msra.mxu0 0
      %5228 = vmatprep.subr.bf16.mxu0 0
      %5229 = vmatpush1.bf16.msra.mxu0 0
      %5230 = vmatprep.mubr.bf16.mxu0 0
      %5231 = vmatmul.mubr.bf16.gmra.mrb[0].mxu0 %v4851
      %v5232 = vpop.f32.mrb[0].mxu0
      %v5233 = vadd.f32 0.0, %v5232
      %v5234 = vpop.f32.mrb[0].mxu0
      %v5235 = vpop.f32.mrb[0].mxu0
      %v5236 = vadd.f32 0.0, %v5235
      %v5237 = vpop.f32.mrb[0].mxu0
      %5238 = vmatprep.mubr.bf16.mxu0 0
      %5239 = vmatmul.mubr.bf16.gmra.mrb[0].mxu0 %v4852
      %v5240 = vpop.f32.mrb[0].mxu0
      %v5241 = vadd.f32 0.0, %v5240
      %v5242 = vpop.f32.mrb[0].mxu0
      %v5243 = vpop.f32.mrb[0].mxu0
      %v5244 = vadd.f32 0.0, %v5243
      %v5245 = vpop.f32.mrb[0].mxu0
      %5246 = vmatprep.mubr.bf16.mxu0 0
      %5247 = vmatmul.mubr.bf16.gmra.mrb[0].mxu0 %v4853
      %v5248 = vpop.f32.mrb[0].mxu0
      %v5249 = vadd.f32 0.0, %v5248
      %v5250 = vpop.f32.mrb[0].mxu0
      %v5251 = vpop.f32.mrb[0].mxu0
      %v5252 = vadd.f32 0.0, %v5251
      %v5253 = vpop.f32.mrb[0].mxu0
      %5254 = vmatprep.mubr.bf16.mxu0 0
      %5255 = vmatmul.mubr.bf16.gmra.mrb[0].mxu0 %v4854
      %v5256 = vpop.f32.mrb[0].mxu0
      %v5257 = vadd.f32 0.0, %v5256
      %v5258 = vpop.f32.mrb[0].mxu0
      %v5259 = vpop.f32.mrb[0].mxu0
      %v5260 = vadd.f32 0.0, %v5259
      %v5261 = vpop.f32.mrb[0].mxu0
      %5262 = vmatprep.mubr.bf16.mxu0 0
      %5263 = vmatmul.mubr.bf16.gmra.mrb[0].mxu0 %v4855
      %v5264 = vpop.f32.mrb[0].mxu0
      %v5265 = vadd.f32 0.0, %v5264
      %v5266 = vpop.f32.mrb[0].mxu0
      %v5267 = vpop.f32.mrb[0].mxu0
      %v5268 = vadd.f32 0.0, %v5267
      %v5269 = vpop.f32.mrb[0].mxu0
      %5270 = vmatprep.mubr.bf16.mxu0 0
      %5271 = vmatmul.mubr.bf16.gmra.mrb[0].mxu0 %v4856
      %v5272 = vpop.f32.mrb[0].mxu0
      %v5273 = vadd.f32 0.0, %v5272
      %v5274 = vpop.f32.mrb[0].mxu0
      %v5275 = vpop.f32.mrb[0].mxu0
      %v5276 = vadd.f32 0.0, %v5275
      %v5277 = vpop.f32.mrb[0].mxu0
      %5278 = vmatprep.mubr.bf16.mxu0 0
      %5279 = vmatmul.mubr.bf16.gmra.mrb[0].mxu0 %v4857
      %v5280 = vpop.f32.mrb[0].mxu0
      %v5281 = vadd.f32 0.0, %v5280
      %v5282 = vpop.f32.mrb[0].mxu0
      %v5283 = vpop.f32.mrb[0].mxu0
      %v5284 = vadd.f32 0.0, %v5283
      %v5285 = vpop.f32.mrb[0].mxu0
      %5286 = vmatprep.mubr.bf16.mxu0 0
      %5287 = vmatmul.mubr.bf16.gmra.mrb[0].mxu0 %v4858
      %v5288 = vpop.f32.mrb[0].mxu0
      %v5289 = vadd.f32 0.0, %v5288
      %v5290 = vpop.f32.mrb[0].mxu0
      %v5291 = vpop.f32.mrb[0].mxu0
      %v5292 = vadd.f32 0.0, %v5291
      %v5293 = vpop.f32.mrb[0].mxu0
      %5294 = vmatprep.mubr.bf16.mxu0 0
      %5295 = vmatmul.mubr.bf16.gmra.mrb[0].mxu0 %v4859
      %v5296 = vpop.f32.mrb[0].mxu0
      %v5297 = vadd.f32 0.0, %v5296
      %v5298 = vpop.f32.mrb[0].mxu0
      %v5299 = vpop.f32.mrb[0].mxu0
      %v5300 = vadd.f32 0.0, %v5299
      %v5301 = vpop.f32.mrb[0].mxu0
      %5302 = vmatprep.mubr.bf16.mxu0 0
      %5303 = vmatmul.mubr.bf16.gmra.mrb[0].mxu0 %v4860
      %v5304 = vpop.f32.mrb[0].mxu0
      %v5305 = vadd.f32 0.0, %v5304
      %v5306 = vpop.f32.mrb[0].mxu0
      %v5307 = vpop.f32.mrb[0].mxu0
      %v5308 = vadd.f32 0.0, %v5307
      %v5309 = vpop.f32.mrb[0].mxu0
      %5310 = vmatprep.mubr.bf16.mxu0 0
      %5311 = vmatmul.mubr.bf16.gmra.mrb[0].mxu0 %v4861
      %v5312 = vpop.f32.mrb[0].mxu0
      %v5313 = vadd.f32 0.0, %v5312
      %v5314 = vpop.f32.mrb[0].mxu0
      %v5315 = vpop.f32.mrb[0].mxu0
      %v5316 = vadd.f32 0.0, %v5315
      %v5317 = vpop.f32.mrb[0].mxu0
      %5318 = vmatprep.mubr.bf16.mxu0 0
      %5319 = vmatmul.mubr.bf16.gmra.mrb[0].mxu0 %v4862
      %v5320 = vpop.f32.mrb[0].mxu0
      %v5321 = vadd.f32 0.0, %v5320
      %v5322 = vpop.f32.mrb[0].mxu0
      %v5323 = vpop.f32.mrb[0].mxu0
      %v5324 = vadd.f32 0.0, %v5323
      %v5325 = vpop.f32.mrb[0].mxu0
      %5326 = vmatprep.mubr.bf16.mxu0 0
      %5327 = vmatmul.mubr.bf16.gmra.mrb[0].mxu0 %v4863
      %v5328 = vpop.f32.mrb[0].mxu0
      %v5329 = vadd.f32 0.0, %v5328
      %v5330 = vpop.f32.mrb[0].mxu0
      %v5331 = vpop.f32.mrb[0].mxu0
      %v5332 = vadd.f32 0.0, %v5331
      %v5333 = vpop.f32.mrb[0].mxu0
      %5334 = vmatprep.mubr.bf16.mxu0 0
      %5335 = vmatmul.mubr.bf16.gmra.mrb[0].mxu0 %v4864
      %v5336 = vpop.f32.mrb[0].mxu0
      %v5337 = vadd.f32 0.0, %v5336
      %v5338 = vpop.f32.mrb[0].mxu0
      %v5339 = vpop.f32.mrb[0].mxu0
      %v5340 = vadd.f32 0.0, %v5339
      %v5341 = vpop.f32.mrb[0].mxu0
      %5342 = vdwg.mxu0
      %v5343 = vrot.slane %v5060, 7
      %v5344 = vrot.slane %v5064, 7
      %v5345 = vrot.slane %v5070, 7
      %v5346 = vrot.slane %v5074, 7
      %v5347 = vrot.slane %v5080, 7
      %v5348 = vrot.slane %v5084, 7
      %v5349 = vrot.slane %v5090, 7
      %v5350 = vrot.slane %v5094, 7
      %v5351 = vrot.slane %v5100, 7
      %v5352 = vrot.slane %v5104, 7
      %v5353 = vrot.slane %v5110, 7
      %v5354 = vrot.slane %v5114, 7
      %v5355 = vrot.slane %v5120, 7
      %v5356 = vrot.slane %v5124, 7
      %v5357 = vrot.slane %v5130, 7
      %v5358 = vrot.slane %v5134, 7
      %v5359 = vrot.slane %v5140, 7
      %v5360 = vrot.slane %v5144, 7
      %v5361 = vrot.slane %v5150, 7
      %v5362 = vrot.slane %v5154, 7
      %v5363 = vrot.slane %v5160, 7
      %v5364 = vrot.slane %v5164, 7
      %v5365 = vrot.slane %v5170, 7
      %v5366 = vrot.slane %v5174, 7
      %v5367 = vrot.slane %v5180, 7
      %v5368 = vrot.slane %v5184, 7
      %v5369 = vrot.slane %v5190, 7
      %v5370 = vrot.slane %v5194, 7
      %v5371 = vsel %vm1698, %v5369, %v5370
      %v5372 = vsel %vm1698, %v5368, %v5369
      %v5373 = vsel %vm1698, %v5367, %v5368
      %v5374 = vsel %vm1698, %v5366, %v5367
      %v5375 = vsel %vm1698, %v5365, %v5366
      %v5376 = vsel %vm1698, %v5364, %v5365
      %v5377 = vsel %vm1698, %v5363, %v5364
      %v5378 = vsel %vm1698, %v5362, %v5363
      %v5379 = vsel %vm1698, %v5361, %v5362
      %v5380 = vsel %vm1698, %v5360, %v5361
      %v5381 = vsel %vm1698, %v5359, %v5360
      %v5382 = vsel %vm1698, %v5358, %v5359
      %v5383 = vsel %vm1698, %v5357, %v5358
      %v5384 = vsel %vm1698, %v5356, %v5357
      %v5385 = vsel %vm1698, %v5355, %v5356
      %v5386 = vsel %vm1698, %v5354, %v5355
      %v5387 = vsel %vm1698, %v5353, %v5354
      %v5388 = vsel %vm1698, %v5352, %v5353
      %v5389 = vsel %vm1698, %v5351, %v5352
      %v5390 = vsel %vm1698, %v5350, %v5351
      %v5391 = vsel %vm1698, %v5349, %v5350
      %v5392 = vsel %vm1698, %v5348, %v5349
      %v5393 = vsel %vm1698, %v5347, %v5348
      %v5394 = vsel %vm1698, %v5346, %v5347
      %v5395 = vsel %vm1698, %v5345, %v5346
      %v5396 = vsel %vm1698, %v5344, %v5345
      %v5397 = vsel %vm1698, %v5343, %v5344
      %v5398 = vsel %vm1698, %v5370, %v5343
      %v5399 = vld [vmem:[%s2] sm:$0xff]
      %v5400 = vld [vmem:[%s2 + $0x8] sm:$0xff]
      %v5401 = vld [vmem:[%s2 + $0x10] sm:$0xff]
      %v5402 = vld [vmem:[%s2 + $0x18] sm:$0xff]
      %v5403 = vld [vmem:[%s2 + $0x20] sm:$0xff]
      %v5404 = vld [vmem:[%s2 + $0x28] sm:$0xff]
      %v5405 = vld [vmem:[%s2 + $0x30] sm:$0xff]
      %v5406 = vld [vmem:[%s2 + $0x38] sm:$0xff]
      %v5407 = vld [vmem:[%s2 + $0x40] sm:$0xff]
      %v5408 = vld [vmem:[%s2 + $0x48] sm:$0xff]
      %v5409 = vld [vmem:[%s2 + $0x50] sm:$0xff]
      %v5410 = vld [vmem:[%s2 + $0x58] sm:$0xff]
      %v5411 = vld [vmem:[%s2 + $0x60] sm:$0xff]
      %v5412 = vld [vmem:[%s2 + $0x68] sm:$0xff]
      %v5413 = vld [vmem:[%s2 + $0x70] sm:$0xff]
      %v5414 = vld [vmem:[%s2 + $0x78] sm:$0xff]
      %v5415 = vld [vmem:[%s2 + $0x80] sm:$0xff]
      %v5416 = vld [vmem:[%s2 + $0x88] sm:$0xff]
      %v5417 = vld [vmem:[%s2 + $0x90] sm:$0xff]
      %v5418 = vld [vmem:[%s2 + $0x98] sm:$0xff]
      %v5419 = vld [vmem:[%s2 + $0xa0] sm:$0xff]
      %v5420 = vld [vmem:[%s2 + $0xa8] sm:$0xff]
      %v5421 = vld [vmem:[%s2 + $0xb0] sm:$0xff]
      %v5422 = vld [vmem:[%s2 + $0xb8] sm:$0xff]
      %v5423 = vld [vmem:[%s2 + $0xc0] sm:$0xff]
      %v5424 = vld [vmem:[%s2 + $0xc8] sm:$0xff]
      %v5425 = vld [vmem:[%s2 + $0xd0] sm:$0xff]
      %v5426 = vld [vmem:[%s2 + $0xd8] sm:$0xff]
      %5428 = vset.pattern.permute.xlu0 0
      %5429 = vperm.xlu0 %5428, %v5399
      %v5430 = vpop.permute.xlu0 %5429
      %5433 = vset.pattern.permute.xlu0 0
      %5434 = vperm.xlu0 %5433, %v5400
      %v5435 = vpop.permute.xlu0 %5434
      %5438 = vset.pattern.permute.xlu0 0
      %5439 = vperm.xlu0 %5438, %v5401
      %v5440 = vpop.permute.xlu0 %5439
      %5443 = vset.pattern.permute.xlu0 0
      %5444 = vperm.xlu0 %5443, %v5402
      %v5445 = vpop.permute.xlu0 %5444
      %5448 = vset.pattern.permute.xlu0 0
      %5449 = vperm.xlu0 %5448, %v5403
      %v5450 = vpop.permute.xlu0 %5449
      %5453 = vset.pattern.permute.xlu0 0
      %5454 = vperm.xlu0 %5453, %v5404
      %v5455 = vpop.permute.xlu0 %5454
      %5458 = vset.pattern.permute.xlu0 0
      %5459 = vperm.xlu0 %5458, %v5405
      %v5460 = vpop.permute.xlu0 %5459
      %5463 = vset.pattern.permute.xlu0 0
      %5464 = vperm.xlu0 %5463, %v5406
      %v5465 = vpop.permute.xlu0 %5464
      %5468 = vset.pattern.permute.xlu0 0
      %5469 = vperm.xlu0 %5468, %v5407
      %v5470 = vpop.permute.xlu0 %5469
      %5473 = vset.pattern.permute.xlu0 0
      %5474 = vperm.xlu0 %5473, %v5408
      %v5475 = vpop.permute.xlu0 %5474
      %5478 = vset.pattern.permute.xlu0 0
      %5479 = vperm.xlu0 %5478, %v5409
      %v5480 = vpop.permute.xlu0 %5479
      %5483 = vset.pattern.permute.xlu0 0
      %5484 = vperm.xlu0 %5483, %v5410
      %v5485 = vpop.permute.xlu0 %5484
      %5488 = vset.pattern.permute.xlu0 0
      %5489 = vperm.xlu0 %5488, %v5411
      %v5490 = vpop.permute.xlu0 %5489
      %5493 = vset.pattern.permute.xlu0 0
      %5494 = vperm.xlu0 %5493, %v5412
      %v5495 = vpop.permute.xlu0 %5494
      %5498 = vset.pattern.permute.xlu0 0
      %5499 = vperm.xlu0 %5498, %v5413
      %v5500 = vpop.permute.xlu0 %5499
      %5503 = vset.pattern.permute.xlu0 0
      %5504 = vperm.xlu0 %5503, %v5414
      %v5505 = vpop.permute.xlu0 %5504
      %5508 = vset.pattern.permute.xlu0 0
      %5509 = vperm.xlu0 %5508, %v5415
      %v5510 = vpop.permute.xlu0 %5509
      %5513 = vset.pattern.permute.xlu0 0
      %5514 = vperm.xlu0 %5513, %v5416
      %v5515 = vpop.permute.xlu0 %5514
      %5518 = vset.pattern.permute.xlu0 0
      %5519 = vperm.xlu0 %5518, %v5417
      %v5520 = vpop.permute.xlu0 %5519
      %5523 = vset.pattern.permute.xlu0 0
      %5524 = vperm.xlu0 %5523, %v5418
      %v5525 = vpop.permute.xlu0 %5524
      %5528 = vset.pattern.permute.xlu0 0
      %5529 = vperm.xlu0 %5528, %v5419
      %v5530 = vpop.permute.xlu0 %5529
      %5533 = vset.pattern.permute.xlu0 0
      %5534 = vperm.xlu0 %5533, %v5420
      %v5535 = vpop.permute.xlu0 %5534
      %5538 = vset.pattern.permute.xlu0 0
      %5539 = vperm.xlu0 %5538, %v5421
      %v5540 = vpop.permute.xlu0 %5539
      %5543 = vset.pattern.permute.xlu0 0
      %5544 = vperm.xlu0 %5543, %v5422
      %v5545 = vpop.permute.xlu0 %5544
      %5548 = vset.pattern.permute.xlu0 0
      %5549 = vperm.xlu0 %5548, %v5423
      %v5550 = vpop.permute.xlu0 %5549
      %5553 = vset.pattern.permute.xlu0 0
      %5554 = vperm.xlu0 %5553, %v5424
      %v5555 = vpop.permute.xlu0 %5554
      %5558 = vset.pattern.permute.xlu0 0
      %5559 = vperm.xlu0 %5558, %v5425
      %v5560 = vpop.permute.xlu0 %5559
      %5563 = vset.pattern.permute.xlu0 0
      %5564 = vperm.xlu0 %5563, %v5426
      %v5565 = vpop.permute.xlu0 %5564
      %v5567 = vmul.f32 %v5398, %v5430
      %v5568 = vmul.f32 %v5397, %v5435
      %v5569 = vmul.f32 %v5396, %v5440
      %v5570 = vmul.f32 %v5395, %v5445
      %v5571 = vmul.f32 %v5394, %v5450
      %v5572 = vmul.f32 %v5393, %v5455
      %v5573 = vmul.f32 %v5392, %v5460
      %v5574 = vmul.f32 %v5391, %v5465
      %v5575 = vmul.f32 %v5390, %v5470
      %v5576 = vmul.f32 %v5389, %v5475
      %v5577 = vmul.f32 %v5388, %v5480
      %v5578 = vmul.f32 %v5387, %v5485
      %v5579 = vmul.f32 %v5386, %v5490
      %v5580 = vmul.f32 %v5385, %v5495
      %v5581 = vmul.f32 %v5384, %v5500
      %v5582 = vmul.f32 %v5383, %v5505
      %v5583 = vmul.f32 %v5382, %v5510
      %v5584 = vmul.f32 %v5381, %v5515
      %v5585 = vmul.f32 %v5380, %v5520
      %v5586 = vmul.f32 %v5379, %v5525
      %v5587 = vmul.f32 %v5378, %v5530
      %v5588 = vmul.f32 %v5377, %v5535
      %v5589 = vmul.f32 %v5376, %v5540
      %v5590 = vmul.f32 %v5375, %v5545
      %v5591 = vmul.f32 %v5374, %v5550
      %v5592 = vmul.f32 %v5373, %v5555
      %v5593 = vmul.f32 %v5372, %v5560
      %v5594 = vmul.f32 %v5371, %v5565
      %v5595 = vrot.slane %v5233, 1
      %v5596 = vrot.slane %v5236, 1
      %v5597 = vrot.slane %v5241, 1
      %v5598 = vrot.slane %v5244, 1
      %v5599 = vrot.slane %v5249, 1
      %v5600 = vrot.slane %v5252, 1
      %v5601 = vrot.slane %v5257, 1
      %v5602 = vrot.slane %v5260, 1
      %v5603 = vrot.slane %v5265, 1
      %v5604 = vrot.slane %v5268, 1
      %v5605 = vrot.slane %v5273, 1
      %v5606 = vrot.slane %v5276, 1
      %v5607 = vrot.slane %v5281, 1
      %v5608 = vrot.slane %v5284, 1
      %v5609 = vrot.slane %v5289, 1
      %v5610 = vrot.slane %v5292, 1
      %v5611 = vrot.slane %v5297, 1
      %v5612 = vrot.slane %v5300, 1
      %v5613 = vrot.slane %v5305, 1
      %v5614 = vrot.slane %v5308, 1
      %v5615 = vrot.slane %v5313, 1
      %v5616 = vrot.slane %v5316, 1
      %v5617 = vrot.slane %v5321, 1
      %v5618 = vrot.slane %v5324, 1
      %v5619 = vrot.slane %v5329, 1
      %v5620 = vrot.slane %v5332, 1
      %v5621 = vrot.slane %v5337, 1
      %v5622 = vrot.slane %v5340, 1
      %v5623 = vsel %vm2203, %v5621, %v5622
      %v5624 = vsel %vm2203, %v5620, %v5621
      %v5625 = vsel %vm2203, %v5619, %v5620
      %v5626 = vsel %vm2203, %v5618, %v5619
      %v5627 = vsel %vm2203, %v5617, %v5618
      %v5628 = vsel %vm2203, %v5616, %v5617
      %v5629 = vsel %vm2203, %v5615, %v5616
      %v5630 = vsel %vm2203, %v5614, %v5615
      %v5631 = vsel %vm2203, %v5613, %v5614
      %v5632 = vsel %vm2203, %v5612, %v5613
      %v5633 = vsel %vm2203, %v5611, %v5612
      %v5634 = vsel %vm2203, %v5610, %v5611
      %v5635 = vsel %vm2203, %v5609, %v5610
      %v5636 = vsel %vm2203, %v5608, %v5609
      %v5637 = vsel %vm2203, %v5607, %v5608
      %v5638 = vsel %vm2203, %v5606, %v5607
      %v5639 = vsel %vm2203, %v5605, %v5606
      %v5640 = vsel %vm2203, %v5604, %v5605
      %v5641 = vsel %vm2203, %v5603, %v5604
      %v5642 = vsel %vm2203, %v5602, %v5603
      %v5643 = vsel %vm2203, %v5601, %v5602
      %v5644 = vsel %vm2203, %v5600, %v5601
      %v5645 = vsel %vm2203, %v5599, %v5600
      %v5646 = vsel %vm2203, %v5598, %v5599
      %v5647 = vsel %vm2203, %v5597, %v5598
      %v5648 = vsel %vm2203, %v5596, %v5597
      %v5649 = vsel %vm2203, %v5595, %v5596
      %v5650 = vsel %vm2203, %v5622, %v5595
      %s5651 = scalar_lea.vmem %s2, 224
      %v5652 = vld [vmem:[%s5651] sm:$0xff]
      %v5653 = vld [vmem:[%s5651 + $0x8] sm:$0xff]
      %v5654 = vld [vmem:[%s5651 + $0x10] sm:$0xff]
      %v5655 = vld [vmem:[%s5651 + $0x18] sm:$0xff]
      %v5656 = vld [vmem:[%s5651 + $0x20] sm:$0xff]
      %v5657 = vld [vmem:[%s5651 + $0x28] sm:$0xff]
      %v5658 = vld [vmem:[%s5651 + $0x30] sm:$0xff]
      %v5659 = vld [vmem:[%s5651 + $0x38] sm:$0xff]
      %v5660 = vld [vmem:[%s5651 + $0x40] sm:$0xff]
      %v5661 = vld [vmem:[%s5651 + $0x48] sm:$0xff]
      %v5662 = vld [vmem:[%s5651 + $0x50] sm:$0xff]
      %v5663 = vld [vmem:[%s5651 + $0x58] sm:$0xff]
      %v5664 = vld [vmem:[%s5651 + $0x60] sm:$0xff]
      %v5665 = vld [vmem:[%s5651 + $0x68] sm:$0xff]
      %v5666 = vld [vmem:[%s5651 + $0x70] sm:$0xff]
      %v5667 = vld [vmem:[%s5651 + $0x78] sm:$0xff]
      %v5668 = vld [vmem:[%s5651 + $0x80] sm:$0xff]
      %v5669 = vld [vmem:[%s5651 + $0x88] sm:$0xff]
      %v5670 = vld [vmem:[%s5651 + $0x90] sm:$0xff]
      %v5671 = vld [vmem:[%s5651 + $0x98] sm:$0xff]
      %v5672 = vld [vmem:[%s5651 + $0xa0] sm:$0xff]
      %v5673 = vld [vmem:[%s5651 + $0xa8] sm:$0xff]
      %v5674 = vld [vmem:[%s5651 + $0xb0] sm:$0xff]
      %v5675 = vld [vmem:[%s5651 + $0xb8] sm:$0xff]
      %v5676 = vld [vmem:[%s5651 + $0xc0] sm:$0xff]
      %v5677 = vld [vmem:[%s5651 + $0xc8] sm:$0xff]
      %v5678 = vld [vmem:[%s5651 + $0xd0] sm:$0xff]
      %v5679 = vld [vmem:[%s5651 + $0xd8] sm:$0xff]
      %5681 = vset.pattern.permute.xlu0 0
      %5682 = vperm.xlu0 %5681, %v5652
      %v5683 = vpop.permute.xlu0 %5682
      %5686 = vset.pattern.permute.xlu0 0
      %5687 = vperm.xlu0 %5686, %v5653
      %v5688 = vpop.permute.xlu0 %5687
      %5691 = vset.pattern.permute.xlu0 0
      %5692 = vperm.xlu0 %5691, %v5654
      %v5693 = vpop.permute.xlu0 %5692
      %5696 = vset.pattern.permute.xlu0 0
      %5697 = vperm.xlu0 %5696, %v5655
      %v5698 = vpop.permute.xlu0 %5697
      %5701 = vset.pattern.permute.xlu0 0
      %5702 = vperm.xlu0 %5701, %v5656
      %v5703 = vpop.permute.xlu0 %5702
      %5706 = vset.pattern.permute.xlu0 0
      %5707 = vperm.xlu0 %5706, %v5657
      %v5708 = vpop.permute.xlu0 %5707
      %5711 = vset.pattern.permute.xlu0 0
      %5712 = vperm.xlu0 %5711, %v5658
      %v5713 = vpop.permute.xlu0 %5712
      %5716 = vset.pattern.permute.xlu0 0
      %5717 = vperm.xlu0 %5716, %v5659
      %v5718 = vpop.permute.xlu0 %5717
      %5721 = vset.pattern.permute.xlu0 0
      %5722 = vperm.xlu0 %5721, %v5660
      %v5723 = vpop.permute.xlu0 %5722
      %5726 = vset.pattern.permute.xlu0 0
      %5727 = vperm.xlu0 %5726, %v5661
      %v5728 = vpop.permute.xlu0 %5727
      %5731 = vset.pattern.permute.xlu0 0
      %5732 = vperm.xlu0 %5731, %v5662
      %v5733 = vpop.permute.xlu0 %5732
      %5736 = vset.pattern.permute.xlu0 0
      %5737 = vperm.xlu0 %5736, %v5663
      %v5738 = vpop.permute.xlu0 %5737
      %5741 = vset.pattern.permute.xlu0 0
      %5742 = vperm.xlu0 %5741, %v5664
      %v5743 = vpop.permute.xlu0 %5742
      %5746 = vset.pattern.permute.xlu0 0
      %5747 = vperm.xlu0 %5746, %v5665
      %v5748 = vpop.permute.xlu0 %5747
      %5751 = vset.pattern.permute.xlu0 0
      %5752 = vperm.xlu0 %5751, %v5666
      %v5753 = vpop.permute.xlu0 %5752
      %5756 = vset.pattern.permute.xlu0 0
      %5757 = vperm.xlu0 %5756, %v5667
      %v5758 = vpop.permute.xlu0 %5757
      %5761 = vset.pattern.permute.xlu0 0
      %5762 = vperm.xlu0 %5761, %v5668
      %v5763 = vpop.permute.xlu0 %5762
      %5766 = vset.pattern.permute.xlu0 0
      %5767 = vperm.xlu0 %5766, %v5669
      %v5768 = vpop.permute.xlu0 %5767
      %5771 = vset.pattern.permute.xlu0 0
      %5772 = vperm.xlu0 %5771, %v5670
      %v5773 = vpop.permute.xlu0 %5772
      %5776 = vset.pattern.permute.xlu0 0
      %5777 = vperm.xlu0 %5776, %v5671
      %v5778 = vpop.permute.xlu0 %5777
      %5781 = vset.pattern.permute.xlu0 0
      %5782 = vperm.xlu0 %5781, %v5672
      %v5783 = vpop.permute.xlu0 %5782
      %5786 = vset.pattern.permute.xlu0 0
      %5787 = vperm.xlu0 %5786, %v5673
      %v5788 = vpop.permute.xlu0 %5787
      %5791 = vset.pattern.permute.xlu0 0
      %5792 = vperm.xlu0 %5791, %v5674
      %v5793 = vpop.permute.xlu0 %5792
      %5796 = vset.pattern.permute.xlu0 0
      %5797 = vperm.xlu0 %5796, %v5675
      %v5798 = vpop.permute.xlu0 %5797
      %5801 = vset.pattern.permute.xlu0 0
      %5802 = vperm.xlu0 %5801, %v5676
      %v5803 = vpop.permute.xlu0 %5802
      %5806 = vset.pattern.permute.xlu0 0
      %5807 = vperm.xlu0 %5806, %v5677
      %v5808 = vpop.permute.xlu0 %5807
      %5811 = vset.pattern.permute.xlu0 0
      %5812 = vperm.xlu0 %5811, %v5678
      %v5813 = vpop.permute.xlu0 %5812
      %5816 = vset.pattern.permute.xlu0 0
      %5817 = vperm.xlu0 %5816, %v5679
      %v5818 = vpop.permute.xlu0 %5817
      %v5820 = vmul.f32 %v5649, %v5683
      %v5821 = vmul.f32 %v5648, %v5688
      %v5822 = vmul.f32 %v5647, %v5693
      %v5823 = vmul.f32 %v5646, %v5698
      %v5824 = vmul.f32 %v5645, %v5703
      %v5825 = vmul.f32 %v5644, %v5708
      %v5826 = vmul.f32 %v5643, %v5713
      %v5827 = vmul.f32 %v5642, %v5718
      %v5828 = vmul.f32 %v5641, %v5723
      %v5829 = vmul.f32 %v5640, %v5728
      %v5830 = vmul.f32 %v5639, %v5733
      %v5831 = vmul.f32 %v5638, %v5738
      %v5832 = vmul.f32 %v5637, %v5743
      %v5833 = vmul.f32 %v5636, %v5748
      %v5834 = vmul.f32 %v5635, %v5753
      %v5835 = vmul.f32 %v5634, %v5758
      %v5836 = vmul.f32 %v5633, %v5763
      %v5837 = vmul.f32 %v5632, %v5768
      %v5838 = vmul.f32 %v5631, %v5773
      %v5839 = vmul.f32 %v5630, %v5778
      %v5840 = vmul.f32 %v5629, %v5783
      %v5841 = vmul.f32 %v5628, %v5788
      %v5842 = vmul.f32 %v5627, %v5793
      %v5843 = vmul.f32 %v5626, %v5798
      %v5844 = vmul.f32 %v5625, %v5803
      %v5845 = vmul.f32 %v5624, %v5808
      %v5846 = vmul.f32 %v5623, %v5813
      %v5847 = vmul.f32 %v5650, %v5818
      %v5848 = vadd.f32 %v5062, %v5567
      %v5849 = vadd.f32 %v5066, %v5568
      %v5850 = vadd.f32 %v5072, %v5569
      %v5851 = vadd.f32 %v5076, %v5570
      %v5852 = vadd.f32 %v5082, %v5571
      %v5853 = vadd.f32 %v5086, %v5572
      %v5854 = vadd.f32 %v5092, %v5573
      %v5855 = vadd.f32 %v5096, %v5574
      %v5856 = vadd.f32 %v5102, %v5575
      %v5857 = vadd.f32 %v5106, %v5576
      %v5858 = vadd.f32 %v5112, %v5577
      %v5859 = vadd.f32 %v5116, %v5578
      %v5860 = vadd.f32 %v5122, %v5579
      %v5861 = vadd.f32 %v5126, %v5580
      %v5862 = vadd.f32 %v5132, %v5581
      %v5863 = vadd.f32 %v5136, %v5582
      %v5864 = vadd.f32 %v5142, %v5583
      %v5865 = vadd.f32 %v5146, %v5584
      %v5866 = vadd.f32 %v5152, %v5585
      %v5867 = vadd.f32 %v5156, %v5586
      %v5868 = vadd.f32 %v5162, %v5587
      %v5869 = vadd.f32 %v5166, %v5588
      %v5870 = vadd.f32 %v5172, %v5589
      %v5871 = vadd.f32 %v5176, %v5590
      %v5872 = vadd.f32 %v5182, %v5591
      %v5873 = vadd.f32 %v5186, %v5592
      %v5874 = vadd.f32 %v5192, %v5593
      %v5875 = vadd.f32 %v5196, %v5594
      %v5876 = vadd.f32 %v5848, %v5820
      %v5877 = vadd.f32 %v5849, %v5821
      %v5878 = vadd.f32 %v5850, %v5822
      %v5879 = vadd.f32 %v5851, %v5823
      %v5880 = vadd.f32 %v5852, %v5824
      %v5881 = vadd.f32 %v5853, %v5825
      %v5882 = vadd.f32 %v5854, %v5826
      %v5883 = vadd.f32 %v5855, %v5827
      %v5884 = vadd.f32 %v5856, %v5828
      %v5885 = vadd.f32 %v5857, %v5829
      %v5886 = vadd.f32 %v5858, %v5830
      %v5887 = vadd.f32 %v5859, %v5831
      %v5888 = vadd.f32 %v5860, %v5832
      %v5889 = vadd.f32 %v5861, %v5833
      %v5890 = vadd.f32 %v5862, %v5834
      %v5891 = vadd.f32 %v5863, %v5835
      %v5892 = vadd.f32 %v5864, %v5836
      %v5893 = vadd.f32 %v5865, %v5837
      %v5894 = vadd.f32 %v5866, %v5838
      %v5895 = vadd.f32 %v5867, %v5839
      %v5896 = vadd.f32 %v5868, %v5840
      %v5897 = vadd.f32 %v5869, %v5841
      %v5898 = vadd.f32 %v5870, %v5842
      %v5899 = vadd.f32 %v5871, %v5843
      %v5900 = vadd.f32 %v5872, %v5844
      %v5901 = vadd.f32 %v5873, %v5845
      %v5902 = vadd.f32 %v5874, %v5846
      %v5903 = vadd.f32 %v5875, %v5847
      %v5904 = vld [vmem:[%s9] sm:$0x1]
      %v5906 = vlaneseq
      %v5907 = vshrl.u32 %v5906, 7
      %v5908 = vsub.s32 0, %v5907
      %v5909 = vrot.slane %v5904, %v5908
      %v5911 = vadd.f32 %v5876, %v5909
      %v5912 = vadd.f32 %v5877, %v5909
      %v5913 = vadd.f32 %v5878, %v5909
      %v5914 = vadd.f32 %v5879, %v5909
      %v5915 = vadd.f32 %v5880, %v5909
      %v5916 = vadd.f32 %v5881, %v5909
      %v5917 = vadd.f32 %v5882, %v5909
      %v5918 = vadd.f32 %v5883, %v5909
      %v5919 = vadd.f32 %v5884, %v5909
      %v5920 = vadd.f32 %v5885, %v5909
      %v5921 = vadd.f32 %v5886, %v5909
      %v5922 = vadd.f32 %v5887, %v5909
      %v5923 = vadd.f32 %v5888, %v5909
      %v5924 = vadd.f32 %v5889, %v5909
      %v5925 = vadd.f32 %v5890, %v5909
      %v5926 = vadd.f32 %v5891, %v5909
      %v5927 = vadd.f32 %v5892, %v5909
      %v5928 = vadd.f32 %v5893, %v5909
      %v5929 = vadd.f32 %v5894, %v5909
      %v5930 = vadd.f32 %v5895, %v5909
      %v5931 = vadd.f32 %v5896, %v5909
      %v5932 = vadd.f32 %v5897, %v5909
      %v5933 = vadd.f32 %v5898, %v5909
      %v5934 = vadd.f32 %v5899, %v5909
      %v5935 = vadd.f32 %v5900, %v5909
      %v5936 = vadd.f32 %v5901, %v5909
      %v5937 = vadd.f32 %v5902, %v5909
      %v5938 = vadd.f32 %v5903, %v5909
      %vm5939 = vcmp.ge.f32.partialorder %v5911, 0.0
      %vm5940 = vcmp.ge.f32.partialorder %v5912, 0.0
      %vm5941 = vcmp.ge.f32.partialorder %v5913, 0.0
      %vm5942 = vcmp.ge.f32.partialorder %v5914, 0.0
      %vm5943 = vcmp.ge.f32.partialorder %v5915, 0.0
      %vm5944 = vcmp.ge.f32.partialorder %v5916, 0.0
      %vm5945 = vcmp.ge.f32.partialorder %v5917, 0.0
      %vm5946 = vcmp.ge.f32.partialorder %v5918, 0.0
      %vm5947 = vcmp.ge.f32.partialorder %v5919, 0.0
      %vm5948 = vcmp.ge.f32.partialorder %v5920, 0.0
      %vm5949 = vcmp.ge.f32.partialorder %v5921, 0.0
      %vm5950 = vcmp.ge.f32.partialorder %v5922, 0.0
      %vm5951 = vcmp.ge.f32.partialorder %v5923, 0.0
      %vm5952 = vcmp.ge.f32.partialorder %v5924, 0.0
      %vm5953 = vcmp.ge.f32.partialorder %v5925, 0.0
      %vm5954 = vcmp.ge.f32.partialorder %v5926, 0.0
      %vm5955 = vcmp.ge.f32.partialorder %v5927, 0.0
      %vm5956 = vcmp.ge.f32.partialorder %v5928, 0.0
      %vm5957 = vcmp.ge.f32.partialorder %v5929, 0.0
      %vm5958 = vcmp.ge.f32.partialorder %v5930, 0.0
      %vm5959 = vcmp.ge.f32.partialorder %v5931, 0.0
      %vm5960 = vcmp.ge.f32.partialorder %v5932, 0.0
      %vm5961 = vcmp.ge.f32.partialorder %v5933, 0.0
      %vm5962 = vcmp.ge.f32.partialorder %v5934, 0.0
      %vm5963 = vcmp.ge.f32.partialorder %v5935, 0.0
      %vm5964 = vcmp.ge.f32.partialorder %v5936, 0.0
      %vm5965 = vcmp.ge.f32.partialorder %v5937, 0.0
      %vm5966 = vcmp.ge.f32.partialorder %v5938, 0.0
      %v5967 = vmul.f32 %v5911, 0.2
      %v5968 = vmul.f32 %v5912, 0.2
      %v5969 = vmul.f32 %v5913, 0.2
      %v5970 = vmul.f32 %v5914, 0.2
      %v5971 = vmul.f32 %v5915, 0.2
      %v5972 = vmul.f32 %v5916, 0.2
      %v5973 = vmul.f32 %v5917, 0.2
      %v5974 = vmul.f32 %v5918, 0.2
      %v5975 = vmul.f32 %v5919, 0.2
      %v5976 = vmul.f32 %v5920, 0.2
      %v5977 = vmul.f32 %v5921, 0.2
      %v5978 = vmul.f32 %v5922, 0.2
      %v5979 = vmul.f32 %v5923, 0.2
      %v5980 = vmul.f32 %v5924, 0.2
      %v5981 = vmul.f32 %v5925, 0.2
      %v5982 = vmul.f32 %v5926, 0.2
      %v5983 = vmul.f32 %v5927, 0.2
      %v5984 = vmul.f32 %v5928, 0.2
      %v5985 = vmul.f32 %v5929, 0.2
      %v5986 = vmul.f32 %v5930, 0.2
      %v5987 = vmul.f32 %v5931, 0.2
      %v5988 = vmul.f32 %v5932, 0.2
      %v5989 = vmul.f32 %v5933, 0.2
      %v5990 = vmul.f32 %v5934, 0.2
      %v5991 = vmul.f32 %v5935, 0.2
      %v5992 = vmul.f32 %v5936, 0.2
      %v5993 = vmul.f32 %v5937, 0.2
      %v5994 = vmul.f32 %v5938, 0.2
      %v5995 = vsel %vm5939, %v5911, %v5967
      %v5996 = vsel %vm5940, %v5912, %v5968
      %v5997 = vsel %vm5941, %v5913, %v5969
      %v5998 = vsel %vm5942, %v5914, %v5970
      %v5999 = vsel %vm5943, %v5915, %v5971
      %v6000 = vsel %vm5944, %v5916, %v5972
      %v6001 = vsel %vm5945, %v5917, %v5973
      %v6002 = vsel %vm5946, %v5918, %v5974
      %v6003 = vsel %vm5947, %v5919, %v5975
      %v6004 = vsel %vm5948, %v5920, %v5976
      %v6005 = vsel %vm5949, %v5921, %v5977
      %v6006 = vsel %vm5950, %v5922, %v5978
      %v6007 = vsel %vm5951, %v5923, %v5979
      %v6008 = vsel %vm5952, %v5924, %v5980
      %v6009 = vsel %vm5953, %v5925, %v5981
      %v6010 = vsel %vm5954, %v5926, %v5982
      %v6011 = vsel %vm5955, %v5927, %v5983
      %v6012 = vsel %vm5956, %v5928, %v5984
      %v6013 = vsel %vm5957, %v5929, %v5985
      %v6014 = vsel %vm5958, %v5930, %v5986
      %v6015 = vsel %vm5959, %v5931, %v5987
      %v6016 = vsel %vm5960, %v5932, %v5988
      %v6017 = vsel %vm5961, %v5933, %v5989
      %v6018 = vsel %vm5962, %v5934, %v5990
      %v6019 = vsel %vm5963, %v5935, %v5991
      %v6020 = vsel %vm5964, %v5936, %v5992
      %v6021 = vsel %vm5965, %v5937, %v5993
      %v6022 = vsel %vm5966, %v5938, %v5994
      %v6023 = vpack.c.bf16 %v5996, %v5995
      %v6024 = vpack.c.bf16 %v5998, %v5997
      %v6025 = vpack.c.bf16 %v6000, %v5999
      %v6026 = vpack.c.bf16 %v6002, %v6001
      %v6027 = vpack.c.bf16 %v6004, %v6003
      %v6028 = vpack.c.bf16 %v6006, %v6005
      %v6029 = vpack.c.bf16 %v6008, %v6007
      %v6030 = vpack.c.bf16 %v6010, %v6009
      %v6031 = vpack.c.bf16 %v6012, %v6011
      %v6032 = vpack.c.bf16 %v6014, %v6013
      %v6033 = vpack.c.bf16 %v6016, %v6015
      %v6034 = vpack.c.bf16 %v6018, %v6017
      %v6035 = vpack.c.bf16 %v6020, %v6019
      %v6036 = vpack.c.bf16 %v6022, %v6021
      %v6037 = vld [vmem:[%s10] sm:$0xff]
      %v6038 = vld [vmem:[%s10 + $0x8] sm:$0xf]
      %v6039 = vld [vmem:[%s10 + $0xc] sm:$0xff]
      %v6040 = vld [vmem:[%s10 + $0x14] sm:$0xf]
      %v6041 = vld [vmem:[%s10 + $0x18] sm:$0xff]
      %v6042 = vld [vmem:[%s10 + $0x20] sm:$0xf]
      %v6043 = vld [vmem:[%s10 + $0x24] sm:$0xff]
      %v6044 = vld [vmem:[%s10 + $0x2c] sm:$0xf]
      %v6045 = vld [vmem:[%s10 + $0x30] sm:$0xff]
      %v6046 = vld [vmem:[%s10 + $0x38] sm:$0xf]
      %v6047 = vld [vmem:[%s10 + $0x3c] sm:$0xff]
      %v6048 = vld [vmem:[%s10 + $0x44] sm:$0xf]
      %v6049 = vld [vmem:[%s10 + $0x48] sm:$0xff]
      %v6050 = vld [vmem:[%s10 + $0x50] sm:$0xf]
      %v6051 = vld [vmem:[%s10 + $0x54] sm:$0xff]
      %v6052 = vld [vmem:[%s10 + $0x5c] sm:$0xf]
      %v6053 = vld [vmem:[%s10 + $0x60] sm:$0xff]
      %v6054 = vld [vmem:[%s10 + $0x68] sm:$0xf]
      %v6055 = vld [vmem:[%s10 + $0x6c] sm:$0xff]
      %v6056 = vld [vmem:[%s10 + $0x74] sm:$0xf]
      %v6057 = vld [vmem:[%s10 + $0x78] sm:$0xff]
      %v6058 = vld [vmem:[%s10 + $0x80] sm:$0xf]
      %v6059 = vld [vmem:[%s10 + $0x84] sm:$0xff]
      %v6060 = vld [vmem:[%s10 + $0x8c] sm:$0xf]
      %v6061 = vld [vmem:[%s10 + $0x90] sm:$0xff]
      %v6062 = vld [vmem:[%s10 + $0x98] sm:$0xf]
      %v6063 = vld [vmem:[%s10 + $0x9c] sm:$0xff]
      %v6064 = vld [vmem:[%s10 + $0xa4] sm:$0xf]
      %v6065 = vld [vmem:[%s10 + $0xa8] sm:$0xff]
      %v6066 = vld [vmem:[%s10 + $0xb0] sm:$0xf]
      %v6067 = vld [vmem:[%s10 + $0xb4] sm:$0xff]
      %v6068 = vld [vmem:[%s10 + $0xbc] sm:$0xf]
      %v6101 = vunpack.c.l.b16 %v6037
      %v6102 = vunpack.c.h.b16 %v6037
      %v6103 = vunpack.c.l.b16 %v6038
      %v6104 = vunpack.c.l.b16 %v6039
      %v6105 = vunpack.c.h.b16 %v6039
      %v6106 = vunpack.c.l.b16 %v6040
      %v6107 = vunpack.c.l.b16 %v6041
      %v6108 = vunpack.c.h.b16 %v6041
      %v6109 = vunpack.c.l.b16 %v6042
      %v6110 = vunpack.c.l.b16 %v6043
      %v6111 = vunpack.c.h.b16 %v6043
      %v6112 = vunpack.c.l.b16 %v6044
      %v6113 = vunpack.c.l.b16 %v6045
      %v6114 = vunpack.c.h.b16 %v6045
      %v6115 = vunpack.c.l.b16 %v6046
      %v6116 = vunpack.c.l.b16 %v6047
      %v6117 = vunpack.c.h.b16 %v6047
      %v6118 = vunpack.c.l.b16 %v6048
      %v6119 = vunpack.c.l.b16 %v6049
      %v6120 = vunpack.c.h.b16 %v6049
      %v6121 = vunpack.c.l.b16 %v6050
      %v6122 = vunpack.c.l.b16 %v6051
      %v6123 = vunpack.c.h.b16 %v6051
      %v6124 = vunpack.c.l.b16 %v6052
      %v6125 = vunpack.c.l.b16 %v6053
      %v6126 = vunpack.c.h.b16 %v6053
      %v6127 = vunpack.c.l.b16 %v6054
      %v6128 = vunpack.c.l.b16 %v6055
      %v6129 = vunpack.c.h.b16 %v6055
      %v6130 = vunpack.c.l.b16 %v6056
      %v6131 = vunpack.c.l.b16 %v6057
      %v6132 = vunpack.c.h.b16 %v6057
      %v6133 = vunpack.c.l.b16 %v6058
      %v6134 = vunpack.c.l.b16 %v6059
      %v6135 = vunpack.c.h.b16 %v6059
      %v6136 = vunpack.c.l.b16 %v6060
      %v6137 = vunpack.c.l.b16 %v6061
      %v6138 = vunpack.c.h.b16 %v6061
      %v6139 = vunpack.c.l.b16 %v6062
      %v6140 = vunpack.c.l.b16 %v6063
      %v6141 = vunpack.c.h.b16 %v6063
      %v6142 = vunpack.c.l.b16 %v6064
      %v6143 = vunpack.c.l.b16 %v6065
      %v6144 = vunpack.c.h.b16 %v6065
      %v6145 = vunpack.c.l.b16 %v6066
      %v6146 = vunpack.c.l.b16 %v6067
      %v6147 = vunpack.c.h.b16 %v6067
      %v6148 = vunpack.c.l.b16 %v6068
      %v6149 = vpack.c.b16 %v6104, %v6101
      %v6150 = vpack.c.b16 %v6105, %v6102
      %v6151 = vpack.c.b16 %v6106, %v6103
      %v6152 = vpack.c.b16 %v6110, %v6107
      %v6153 = vpack.c.b16 %v6111, %v6108
      %v6154 = vpack.c.b16 %v6112, %v6109
      %v6155 = vpack.c.b16 %v6116, %v6113
      %v6156 = vpack.c.b16 %v6117, %v6114
      %v6157 = vpack.c.b16 %v6118, %v6115
      %v6158 = vpack.c.b16 %v6122, %v6119
      %v6159 = vpack.c.b16 %v6123, %v6120
      %v6160 = vpack.c.b16 %v6124, %v6121
      %v6161 = vpack.c.b16 %v6128, %v6125
      %v6162 = vpack.c.b16 %v6129, %v6126
      %v6163 = vpack.c.b16 %v6130, %v6127
      %v6164 = vpack.c.b16 %v6134, %v6131
      %v6165 = vpack.c.b16 %v6135, %v6132
      %v6166 = vpack.c.b16 %v6136, %v6133
      %v6167 = vpack.c.b16 %v6140, %v6137
      %v6168 = vpack.c.b16 %v6141, %v6138
      %v6169 = vpack.c.b16 %v6142, %v6139
      %v6170 = vpack.c.b16 %v6146, %v6143
      %v6171 = vpack.c.b16 %v6147, %v6144
      %v6172 = vpack.c.b16 %v6148, %v6145
      %6197 = vmatprep.subr.bf16.mxu0 %v6150
      %6198 = vmatpush1.bf16.msra.mxu0 %v6149
      %6199 = vmatprep.subr.bf16.mxu0 %v6153
      %6200 = vmatpush1.bf16.msra.mxu0 %v6152
      %6201 = vmatprep.subr.bf16.mxu0 %v6156
      %6202 = vmatpush1.bf16.msra.mxu0 %v6155
      %6203 = vmatprep.subr.bf16.mxu0 %v6159
      %6204 = vmatpush1.bf16.msra.mxu0 %v6158
      %6205 = vmatprep.subr.bf16.mxu0 %v6162
      %6206 = vmatpush1.bf16.msra.mxu0 %v6161
      %6207 = vmatprep.subr.bf16.mxu0 %v6165
      %6208 = vmatpush1.bf16.msra.mxu0 %v6164
      %6209 = vmatprep.subr.bf16.mxu0 %v6168
      %6210 = vmatpush1.bf16.msra.mxu0 %v6167
      %6211 = vmatprep.subr.bf16.mxu0 %v6171
      %6212 = vmatpush1.bf16.msra.mxu0 %v6170
      %6213 = vmatprep.subr.bf16.mxu0 0
      %6214 = vmatpush1.bf16.msra.mxu0 0
      %6215 = vmatprep.subr.bf16.mxu0 0
      %6216 = vmatpush1.bf16.msra.mxu0 0
      %6217 = vmatprep.subr.bf16.mxu0 0
      %6218 = vmatpush1.bf16.msra.mxu0 0
      %6219 = vmatprep.subr.bf16.mxu0 0
      %6220 = vmatpush1.bf16.msra.mxu0 0
      %6221 = vmatprep.subr.bf16.mxu0 0
      %6222 = vmatpush1.bf16.msra.mxu0 0
      %6223 = vmatprep.subr.bf16.mxu0 0
      %6224 = vmatpush1.bf16.msra.mxu0 0
      %6225 = vmatprep.subr.bf16.mxu0 0
      %6226 = vmatpush1.bf16.msra.mxu0 0
      %6227 = vmatprep.subr.bf16.mxu0 0
      %6228 = vmatpush1.bf16.msra.mxu0 0
      %6229 = vmatprep.mubr.bf16.mxu0 0
      %6230 = vmatmul.mubr.bf16.gmra.mrb[0].mxu0 %v6023
      %v6231 = vpop.f32.mrb[0].mxu0
      %v6232 = vadd.f32 0.0, %v6231
      %v6233 = vpop.f32.mrb[0].mxu0
      %v6234 = vadd.f32 0.0, %v6233
      %v6235 = vpop.f32.mrb[0].mxu0
      %v6236 = vadd.f32 0.0, %v6235
      %v6237 = vpop.f32.mrb[0].mxu0
      %v6238 = vadd.f32 0.0, %v6237
      %6239 = vmatprep.mubr.bf16.mxu0 0
      %6240 = vmatmul.mubr.bf16.gmra.mrb[0].mxu0 %v6024
      %v6241 = vpop.f32.mrb[0].mxu0
      %v6242 = vadd.f32 0.0, %v6241
      %v6243 = vpop.f32.mrb[0].mxu0
      %v6244 = vadd.f32 0.0, %v6243
      %v6245 = vpop.f32.mrb[0].mxu0
      %v6246 = vadd.f32 0.0, %v6245
      %v6247 = vpop.f32.mrb[0].mxu0
      %v6248 = vadd.f32 0.0, %v6247
      %6249 = vmatprep.mubr.bf16.mxu0 0
      %6250 = vmatmul.mubr.bf16.gmra.mrb[0].mxu0 %v6025
      %v6251 = vpop.f32.mrb[0].mxu0
      %v6252 = vadd.f32 0.0, %v6251
      %v6253 = vpop.f32.mrb[0].mxu0
      %v6254 = vadd.f32 0.0, %v6253
      %v6255 = vpop.f32.mrb[0].mxu0
      %v6256 = vadd.f32 0.0, %v6255
      %v6257 = vpop.f32.mrb[0].mxu0
      %v6258 = vadd.f32 0.0, %v6257
      %6259 = vmatprep.mubr.bf16.mxu0 0
      %6260 = vmatmul.mubr.bf16.gmra.mrb[0].mxu0 %v6026
      %v6261 = vpop.f32.mrb[0].mxu0
      %v6262 = vadd.f32 0.0, %v6261
      %v6263 = vpop.f32.mrb[0].mxu0
      %v6264 = vadd.f32 0.0, %v6263
      %v6265 = vpop.f32.mrb[0].mxu0
      %v6266 = vadd.f32 0.0, %v6265
      %v6267 = vpop.f32.mrb[0].mxu0
      %v6268 = vadd.f32 0.0, %v6267
      %6269 = vmatprep.mubr.bf16.mxu0 0
      %6270 = vmatmul.mubr.bf16.gmra.mrb[0].mxu0 %v6027
      %v6271 = vpop.f32.mrb[0].mxu0
      %v6272 = vadd.f32 0.0, %v6271
      %v6273 = vpop.f32.mrb[0].mxu0
      %v6274 = vadd.f32 0.0, %v6273
      %v6275 = vpop.f32.mrb[0].mxu0
      %v6276 = vadd.f32 0.0, %v6275
      %v6277 = vpop.f32.mrb[0].mxu0
      %v6278 = vadd.f32 0.0, %v6277
      %6279 = vmatprep.mubr.bf16.mxu0 0
      %6280 = vmatmul.mubr.bf16.gmra.mrb[0].mxu0 %v6028
      %v6281 = vpop.f32.mrb[0].mxu0
      %v6282 = vadd.f32 0.0, %v6281
      %v6283 = vpop.f32.mrb[0].mxu0
      %v6284 = vadd.f32 0.0, %v6283
      %v6285 = vpop.f32.mrb[0].mxu0
      %v6286 = vadd.f32 0.0, %v6285
      %v6287 = vpop.f32.mrb[0].mxu0
      %v6288 = vadd.f32 0.0, %v6287
      %6289 = vmatprep.mubr.bf16.mxu0 0
      %6290 = vmatmul.mubr.bf16.gmra.mrb[0].mxu0 %v6029
      %v6291 = vpop.f32.mrb[0].mxu0
      %v6292 = vadd.f32 0.0, %v6291
      %v6293 = vpop.f32.mrb[0].mxu0
      %v6294 = vadd.f32 0.0, %v6293
      %v6295 = vpop.f32.mrb[0].mxu0
      %v6296 = vadd.f32 0.0, %v6295
      %v6297 = vpop.f32.mrb[0].mxu0
      %v6298 = vadd.f32 0.0, %v6297
      %6299 = vmatprep.mubr.bf16.mxu0 0
      %6300 = vmatmul.mubr.bf16.gmra.mrb[0].mxu0 %v6030
      %v6301 = vpop.f32.mrb[0].mxu0
      %v6302 = vadd.f32 0.0, %v6301
      %v6303 = vpop.f32.mrb[0].mxu0
      %v6304 = vadd.f32 0.0, %v6303
      %v6305 = vpop.f32.mrb[0].mxu0
      %v6306 = vadd.f32 0.0, %v6305
      %v6307 = vpop.f32.mrb[0].mxu0
      %v6308 = vadd.f32 0.0, %v6307
      %6309 = vmatprep.mubr.bf16.mxu0 0
      %6310 = vmatmul.mubr.bf16.gmra.mrb[0].mxu0 %v6031
      %v6311 = vpop.f32.mrb[0].mxu0
      %v6312 = vadd.f32 0.0, %v6311
      %v6313 = vpop.f32.mrb[0].mxu0
      %v6314 = vadd.f32 0.0, %v6313
      %v6315 = vpop.f32.mrb[0].mxu0
      %v6316 = vadd.f32 0.0, %v6315
      %v6317 = vpop.f32.mrb[0].mxu0
      %v6318 = vadd.f32 0.0, %v6317
      %6319 = vmatprep.mubr.bf16.mxu0 0
      %6320 = vmatmul.mubr.bf16.gmra.mrb[0].mxu0 %v6032
      %v6321 = vpop.f32.mrb[0].mxu0
      %v6322 = vadd.f32 0.0, %v6321
      %v6323 = vpop.f32.mrb[0].mxu0
      %v6324 = vadd.f32 0.0, %v6323
      %v6325 = vpop.f32.mrb[0].mxu0
      %v6326 = vadd.f32 0.0, %v6325
      %v6327 = vpop.f32.mrb[0].mxu0
      %v6328 = vadd.f32 0.0, %v6327
      %6329 = vmatprep.mubr.bf16.mxu0 0
      %6330 = vmatmul.mubr.bf16.gmra.mrb[0].mxu0 %v6033
      %v6331 = vpop.f32.mrb[0].mxu0
      %v6332 = vadd.f32 0.0, %v6331
      %v6333 = vpop.f32.mrb[0].mxu0
      %v6334 = vadd.f32 0.0, %v6333
      %v6335 = vpop.f32.mrb[0].mxu0
      %v6336 = vadd.f32 0.0, %v6335
      %v6337 = vpop.f32.mrb[0].mxu0
      %v6338 = vadd.f32 0.0, %v6337
      %6339 = vmatprep.mubr.bf16.mxu0 0
      %6340 = vmatmul.mubr.bf16.gmra.mrb[0].mxu0 %v6034
      %v6341 = vpop.f32.mrb[0].mxu0
      %v6342 = vadd.f32 0.0, %v6341
      %v6343 = vpop.f32.mrb[0].mxu0
      %v6344 = vadd.f32 0.0, %v6343
      %v6345 = vpop.f32.mrb[0].mxu0
      %v6346 = vadd.f32 0.0, %v6345
      %v6347 = vpop.f32.mrb[0].mxu0
      %v6348 = vadd.f32 0.0, %v6347
      %6349 = vmatprep.mubr.bf16.mxu0 0
      %6350 = vmatmul.mubr.bf16.gmra.mrb[0].mxu0 %v6035
      %v6351 = vpop.f32.mrb[0].mxu0
      %v6352 = vadd.f32 0.0, %v6351
      %v6353 = vpop.f32.mrb[0].mxu0
      %v6354 = vadd.f32 0.0, %v6353
      %v6355 = vpop.f32.mrb[0].mxu0
      %v6356 = vadd.f32 0.0, %v6355
      %v6357 = vpop.f32.mrb[0].mxu0
      %v6358 = vadd.f32 0.0, %v6357
      %6359 = vmatprep.mubr.bf16.mxu0 0
      %6360 = vmatmul.mubr.bf16.gmra.mrb[0].mxu0 %v6036
      %v6361 = vpop.f32.mrb[0].mxu0
      %v6362 = vadd.f32 0.0, %v6361
      %v6363 = vpop.f32.mrb[0].mxu0
      %v6364 = vadd.f32 0.0, %v6363
      %v6365 = vpop.f32.mrb[0].mxu0
      %v6366 = vadd.f32 0.0, %v6365
      %v6367 = vpop.f32.mrb[0].mxu0
      %v6368 = vadd.f32 0.0, %v6367
      %6369 = vdwg.mxu0
      %6370 = vmatprep.subr.bf16.mxu0 0
      %6371 = vmatpush1.bf16.msra.mxu0 %v6151
      %6372 = vmatprep.subr.bf16.mxu0 0
      %6373 = vmatpush1.bf16.msra.mxu0 %v6154
      %6374 = vmatprep.subr.bf16.mxu0 0
      %6375 = vmatpush1.bf16.msra.mxu0 %v6157
      %6376 = vmatprep.subr.bf16.mxu0 0
      %6377 = vmatpush1.bf16.msra.mxu0 %v6160
      %6378 = vmatprep.subr.bf16.mxu0 0
      %6379 = vmatpush1.bf16.msra.mxu0 %v6163
      %6380 = vmatprep.subr.bf16.mxu0 0
      %6381 = vmatpush1.bf16.msra.mxu0 %v6166
      %6382 = vmatprep.subr.bf16.mxu0 0
      %6383 = vmatpush1.bf16.msra.mxu0 %v6169
      %6384 = vmatprep.subr.bf16.mxu0 0
      %6385 = vmatpush1.bf16.msra.mxu0 %v6172
      %6386 = vmatprep.subr.bf16.mxu0 0
      %6387 = vmatpush1.bf16.msra.mxu0 0
      %6388 = vmatprep.subr.bf16.mxu0 0
      %6389 = vmatpush1.bf16.msra.mxu0 0
      %6390 = vmatprep.subr.bf16.mxu0 0
      %6391 = vmatpush1.bf16.msra.mxu0 0
      %6392 = vmatprep.subr.bf16.mxu0 0
      %6393 = vmatpush1.bf16.msra.mxu0 0
      %6394 = vmatprep.subr.bf16.mxu0 0
      %6395 = vmatpush1.bf16.msra.mxu0 0
      %6396 = vmatprep.subr.bf16.mxu0 0
      %6397 = vmatpush1.bf16.msra.mxu0 0
      %6398 = vmatprep.subr.bf16.mxu0 0
      %6399 = vmatpush1.bf16.msra.mxu0 0
      %6400 = vmatprep.subr.bf16.mxu0 0
      %6401 = vmatpush1.bf16.msra.mxu0 0
      %6402 = vmatprep.mubr.bf16.mxu0 0
      %6403 = vmatmul.mubr.bf16.gmra.mrb[0].mxu0 %v6023
      %v6404 = vpop.f32.mrb[0].mxu0
      %v6405 = vadd.f32 0.0, %v6404
      %v6406 = vpop.f32.mrb[0].mxu0
      %v6407 = vpop.f32.mrb[0].mxu0
      %v6408 = vadd.f32 0.0, %v6407
      %v6409 = vpop.f32.mrb[0].mxu0
      %6410 = vmatprep.mubr.bf16.mxu0 0
      %6411 = vmatmul.mubr.bf16.gmra.mrb[0].mxu0 %v6024
      %v6412 = vpop.f32.mrb[0].mxu0
      %v6413 = vadd.f32 0.0, %v6412
      %v6414 = vpop.f32.mrb[0].mxu0
      %v6415 = vpop.f32.mrb[0].mxu0
      %v6416 = vadd.f32 0.0, %v6415
      %v6417 = vpop.f32.mrb[0].mxu0
      %6418 = vmatprep.mubr.bf16.mxu0 0
      %6419 = vmatmul.mubr.bf16.gmra.mrb[0].mxu0 %v6025
      %v6420 = vpop.f32.mrb[0].mxu0
      %v6421 = vadd.f32 0.0, %v6420
      %v6422 = vpop.f32.mrb[0].mxu0
      %v6423 = vpop.f32.mrb[0].mxu0
      %v6424 = vadd.f32 0.0, %v6423
      %v6425 = vpop.f32.mrb[0].mxu0
      %6426 = vmatprep.mubr.bf16.mxu0 0
      %6427 = vmatmul.mubr.bf16.gmra.mrb[0].mxu0 %v6026
      %v6428 = vpop.f32.mrb[0].mxu0
      %v6429 = vadd.f32 0.0, %v6428
      %v6430 = vpop.f32.mrb[0].mxu0
      %v6431 = vpop.f32.mrb[0].mxu0
      %v6432 = vadd.f32 0.0, %v6431
      %v6433 = vpop.f32.mrb[0].mxu0
      %6434 = vmatprep.mubr.bf16.mxu0 0
      %6435 = vmatmul.mubr.bf16.gmra.mrb[0].mxu0 %v6027
      %v6436 = vpop.f32.mrb[0].mxu0
      %v6437 = vadd.f32 0.0, %v6436
      %v6438 = vpop.f32.mrb[0].mxu0
      %v6439 = vpop.f32.mrb[0].mxu0
      %v6440 = vadd.f32 0.0, %v6439
      %v6441 = vpop.f32.mrb[0].mxu0
      %6442 = vmatprep.mubr.bf16.mxu0 0
      %6443 = vmatmul.mubr.bf16.gmra.mrb[0].mxu0 %v6028
      %v6444 = vpop.f32.mrb[0].mxu0
      %v6445 = vadd.f32 0.0, %v6444
      %v6446 = vpop.f32.mrb[0].mxu0
      %v6447 = vpop.f32.mrb[0].mxu0
      %v6448 = vadd.f32 0.0, %v6447
      %v6449 = vpop.f32.mrb[0].mxu0
      %6450 = vmatprep.mubr.bf16.mxu0 0
      %6451 = vmatmul.mubr.bf16.gmra.mrb[0].mxu0 %v6029
      %v6452 = vpop.f32.mrb[0].mxu0
      %v6453 = vadd.f32 0.0, %v6452
      %v6454 = vpop.f32.mrb[0].mxu0
      %v6455 = vpop.f32.mrb[0].mxu0
      %v6456 = vadd.f32 0.0, %v6455
      %v6457 = vpop.f32.mrb[0].mxu0
      %6458 = vmatprep.mubr.bf16.mxu0 0
      %6459 = vmatmul.mubr.bf16.gmra.mrb[0].mxu0 %v6030
      %v6460 = vpop.f32.mrb[0].mxu0
      %v6461 = vadd.f32 0.0, %v6460
      %v6462 = vpop.f32.mrb[0].mxu0
      %v6463 = vpop.f32.mrb[0].mxu0
      %v6464 = vadd.f32 0.0, %v6463
      %v6465 = vpop.f32.mrb[0].mxu0
      %6466 = vmatprep.mubr.bf16.mxu0 0
      %6467 = vmatmul.mubr.bf16.gmra.mrb[0].mxu0 %v6031
      %v6468 = vpop.f32.mrb[0].mxu0
      %v6469 = vadd.f32 0.0, %v6468
      %v6470 = vpop.f32.mrb[0].mxu0
      %v6471 = vpop.f32.mrb[0].mxu0
      %v6472 = vadd.f32 0.0, %v6471
      %v6473 = vpop.f32.mrb[0].mxu0
      %6474 = vmatprep.mubr.bf16.mxu0 0
      %6475 = vmatmul.mubr.bf16.gmra.mrb[0].mxu0 %v6032
      %v6476 = vpop.f32.mrb[0].mxu0
      %v6477 = vadd.f32 0.0, %v6476
      %v6478 = vpop.f32.mrb[0].mxu0
      %v6479 = vpop.f32.mrb[0].mxu0
      %v6480 = vadd.f32 0.0, %v6479
      %v6481 = vpop.f32.mrb[0].mxu0
      %6482 = vmatprep.mubr.bf16.mxu0 0
      %6483 = vmatmul.mubr.bf16.gmra.mrb[0].mxu0 %v6033
      %v6484 = vpop.f32.mrb[0].mxu0
      %v6485 = vadd.f32 0.0, %v6484
      %v6486 = vpop.f32.mrb[0].mxu0
      %v6487 = vpop.f32.mrb[0].mxu0
      %v6488 = vadd.f32 0.0, %v6487
      %v6489 = vpop.f32.mrb[0].mxu0
      %6490 = vmatprep.mubr.bf16.mxu0 0
      %6491 = vmatmul.mubr.bf16.gmra.mrb[0].mxu0 %v6034
      %v6492 = vpop.f32.mrb[0].mxu0
      %v6493 = vadd.f32 0.0, %v6492
      %v6494 = vpop.f32.mrb[0].mxu0
      %v6495 = vpop.f32.mrb[0].mxu0
      %v6496 = vadd.f32 0.0, %v6495
      %v6497 = vpop.f32.mrb[0].mxu0
      %6498 = vmatprep.mubr.bf16.mxu0 0
      %6499 = vmatmul.mubr.bf16.gmra.mrb[0].mxu0 %v6035
      %v6500 = vpop.f32.mrb[0].mxu0
      %v6501 = vadd.f32 0.0, %v6500
      %v6502 = vpop.f32.mrb[0].mxu0
      %v6503 = vpop.f32.mrb[0].mxu0
      %v6504 = vadd.f32 0.0, %v6503
      %v6505 = vpop.f32.mrb[0].mxu0
      %6506 = vmatprep.mubr.bf16.mxu0 0
      %6507 = vmatmul.mubr.bf16.gmra.mrb[0].mxu0 %v6036
      %v6508 = vpop.f32.mrb[0].mxu0
      %v6509 = vadd.f32 0.0, %v6508
      %v6510 = vpop.f32.mrb[0].mxu0
      %v6511 = vpop.f32.mrb[0].mxu0
      %v6512 = vadd.f32 0.0, %v6511
      %v6513 = vpop.f32.mrb[0].mxu0
      %6514 = vdwg.mxu0
      %v6515 = vrot.slane %v6232, 7
      %v6516 = vrot.slane %v6236, 7
      %v6517 = vrot.slane %v6242, 7
      %v6518 = vrot.slane %v6246, 7
      %v6519 = vrot.slane %v6252, 7
      %v6520 = vrot.slane %v6256, 7
      %v6521 = vrot.slane %v6262, 7
      %v6522 = vrot.slane %v6266, 7
      %v6523 = vrot.slane %v6272, 7
      %v6524 = vrot.slane %v6276, 7
      %v6525 = vrot.slane %v6282, 7
      %v6526 = vrot.slane %v6286, 7
      %v6527 = vrot.slane %v6292, 7
      %v6528 = vrot.slane %v6296, 7
      %v6529 = vrot.slane %v6302, 7
      %v6530 = vrot.slane %v6306, 7
      %v6531 = vrot.slane %v6312, 7
      %v6532 = vrot.slane %v6316, 7
      %v6533 = vrot.slane %v6322, 7
      %v6534 = vrot.slane %v6326, 7
      %v6535 = vrot.slane %v6332, 7
      %v6536 = vrot.slane %v6336, 7
      %v6537 = vrot.slane %v6342, 7
      %v6538 = vrot.slane %v6346, 7
      %v6539 = vrot.slane %v6352, 7
      %v6540 = vrot.slane %v6356, 7
      %v6541 = vrot.slane %v6362, 7
      %v6542 = vrot.slane %v6366, 7
      %v6543 = vsel %vm1698, %v6541, %v6542
      %v6544 = vsel %vm1698, %v6540, %v6541
      %v6545 = vsel %vm1698, %v6539, %v6540
      %v6546 = vsel %vm1698, %v6538, %v6539
      %v6547 = vsel %vm1698, %v6537, %v6538
      %v6548 = vsel %vm1698, %v6536, %v6537
      %v6549 = vsel %vm1698, %v6535, %v6536
      %v6550 = vsel %vm1698, %v6534, %v6535
      %v6551 = vsel %vm1698, %v6533, %v6534
      %v6552 = vsel %vm1698, %v6532, %v6533
      %v6553 = vsel %vm1698, %v6531, %v6532
      %v6554 = vsel %vm1698, %v6530, %v6531
      %v6555 = vsel %vm1698, %v6529, %v6530
      %v6556 = vsel %vm1698, %v6528, %v6529
      %v6557 = vsel %vm1698, %v6527, %v6528
      %v6558 = vsel %vm1698, %v6526, %v6527
      %v6559 = vsel %vm1698, %v6525, %v6526
      %v6560 = vsel %vm1698, %v6524, %v6525
      %v6561 = vsel %vm1698, %v6523, %v6524
      %v6562 = vsel %vm1698, %v6522, %v6523
      %v6563 = vsel %vm1698, %v6521, %v6522
      %v6564 = vsel %vm1698, %v6520, %v6521
      %v6565 = vsel %vm1698, %v6519, %v6520
      %v6566 = vsel %vm1698, %v6518, %v6519
      %v6567 = vsel %vm1698, %v6517, %v6518
      %v6568 = vsel %vm1698, %v6516, %v6517
      %v6569 = vsel %vm1698, %v6515, %v6516
      %v6570 = vsel %vm1698, %v6542, %v6515
      %v6571 = vmul.f32 %v6570, %v5430
      %v6572 = vmul.f32 %v6569, %v5435
      %v6573 = vmul.f32 %v6568, %v5440
      %v6574 = vmul.f32 %v6567, %v5445
      %v6575 = vmul.f32 %v6566, %v5450
      %v6576 = vmul.f32 %v6565, %v5455
      %v6577 = vmul.f32 %v6564, %v5460
      %v6578 = vmul.f32 %v6563, %v5465
      %v6579 = vmul.f32 %v6562, %v5470
      %v6580 = vmul.f32 %v6561, %v5475
      %v6581 = vmul.f32 %v6560, %v5480
      %v6582 = vmul.f32 %v6559, %v5485
      %v6583 = vmul.f32 %v6558, %v5490
      %v6584 = vmul.f32 %v6557, %v5495
      %v6585 = vmul.f32 %v6556, %v5500
      %v6586 = vmul.f32 %v6555, %v5505
      %v6587 = vmul.f32 %v6554, %v5510
      %v6588 = vmul.f32 %v6553, %v5515
      %v6589 = vmul.f32 %v6552, %v5520
      %v6590 = vmul.f32 %v6551, %v5525
      %v6591 = vmul.f32 %v6550, %v5530
      %v6592 = vmul.f32 %v6549, %v5535
      %v6593 = vmul.f32 %v6548, %v5540
      %v6594 = vmul.f32 %v6547, %v5545
      %v6595 = vmul.f32 %v6546, %v5550
      %v6596 = vmul.f32 %v6545, %v5555
      %v6597 = vmul.f32 %v6544, %v5560
      %v6598 = vmul.f32 %v6543, %v5565
      %v6599 = vrot.slane %v6405, 1
      %v6600 = vrot.slane %v6408, 1
      %v6601 = vrot.slane %v6413, 1
      %v6602 = vrot.slane %v6416, 1
      %v6603 = vrot.slane %v6421, 1
      %v6604 = vrot.slane %v6424, 1
      %v6605 = vrot.slane %v6429, 1
      %v6606 = vrot.slane %v6432, 1
      %v6607 = vrot.slane %v6437, 1
      %v6608 = vrot.slane %v6440, 1
      %v6609 = vrot.slane %v6445, 1
      %v6610 = vrot.slane %v6448, 1
      %v6611 = vrot.slane %v6453, 1
      %v6612 = vrot.slane %v6456, 1
      %v6613 = vrot.slane %v6461, 1
      %v6614 = vrot.slane %v6464, 1
      %v6615 = vrot.slane %v6469, 1
      %v6616 = vrot.slane %v6472, 1
      %v6617 = vrot.slane %v6477, 1
      %v6618 = vrot.slane %v6480, 1
      %v6619 = vrot.slane %v6485, 1
      %v6620 = vrot.slane %v6488, 1
      %v6621 = vrot.slane %v6493, 1
      %v6622 = vrot.slane %v6496, 1
      %v6623 = vrot.slane %v6501, 1
      %v6624 = vrot.slane %v6504, 1
      %v6625 = vrot.slane %v6509, 1
      %v6626 = vrot.slane %v6512, 1
      %v6627 = vsel %vm2203, %v6625, %v6626
      %v6628 = vsel %vm2203, %v6624, %v6625
      %v6629 = vsel %vm2203, %v6623, %v6624
      %v6630 = vsel %vm2203, %v6622, %v6623
      %v6631 = vsel %vm2203, %v6621, %v6622
      %v6632 = vsel %vm2203, %v6620, %v6621
      %v6633 = vsel %vm2203, %v6619, %v6620
      %v6634 = vsel %vm2203, %v6618, %v6619
      %v6635 = vsel %vm2203, %v6617, %v6618
      %v6636 = vsel %vm2203, %v6616, %v6617
      %v6637 = vsel %vm2203, %v6615, %v6616
      %v6638 = vsel %vm2203, %v6614, %v6615
      %v6639 = vsel %vm2203, %v6613, %v6614
      %v6640 = vsel %vm2203, %v6612, %v6613
      %v6641 = vsel %vm2203, %v6611, %v6612
      %v6642 = vsel %vm2203, %v6610, %v6611
      %v6643 = vsel %vm2203, %v6609, %v6610
      %v6644 = vsel %vm2203, %v6608, %v6609
      %v6645 = vsel %vm2203, %v6607, %v6608
      %v6646 = vsel %vm2203, %v6606, %v6607
      %v6647 = vsel %vm2203, %v6605, %v6606
      %v6648 = vsel %vm2203, %v6604, %v6605
      %v6649 = vsel %vm2203, %v6603, %v6604
      %v6650 = vsel %vm2203, %v6602, %v6603
      %v6651 = vsel %vm2203, %v6601, %v6602
      %v6652 = vsel %vm2203, %v6600, %v6601
      %v6653 = vsel %vm2203, %v6599, %v6600
      %v6654 = vsel %vm2203, %v6626, %v6599
      %v6655 = vmul.f32 %v6653, %v5683
      %v6656 = vmul.f32 %v6652, %v5688
      %v6657 = vmul.f32 %v6651, %v5693
      %v6658 = vmul.f32 %v6650, %v5698
      %v6659 = vmul.f32 %v6649, %v5703
      %v6660 = vmul.f32 %v6648, %v5708
      %v6661 = vmul.f32 %v6647, %v5713
      %v6662 = vmul.f32 %v6646, %v5718
      %v6663 = vmul.f32 %v6645, %v5723
      %v6664 = vmul.f32 %v6644, %v5728
      %v6665 = vmul.f32 %v6643, %v5733
      %v6666 = vmul.f32 %v6642, %v5738
      %v6667 = vmul.f32 %v6641, %v5743
      %v6668 = vmul.f32 %v6640, %v5748
      %v6669 = vmul.f32 %v6639, %v5753
      %v6670 = vmul.f32 %v6638, %v5758
      %v6671 = vmul.f32 %v6637, %v5763
      %v6672 = vmul.f32 %v6636, %v5768
      %v6673 = vmul.f32 %v6635, %v5773
      %v6674 = vmul.f32 %v6634, %v5778
      %v6675 = vmul.f32 %v6633, %v5783
      %v6676 = vmul.f32 %v6632, %v5788
      %v6677 = vmul.f32 %v6631, %v5793
      %v6678 = vmul.f32 %v6630, %v5798
      %v6679 = vmul.f32 %v6629, %v5803
      %v6680 = vmul.f32 %v6628, %v5808
      %v6681 = vmul.f32 %v6627, %v5813
      %v6682 = vmul.f32 %v6654, %v5818
      %v6683 = vadd.f32 %v6234, %v6571
      %v6684 = vadd.f32 %v6238, %v6572
      %v6685 = vadd.f32 %v6244, %v6573
      %v6686 = vadd.f32 %v6248, %v6574
      %v6687 = vadd.f32 %v6254, %v6575
      %v6688 = vadd.f32 %v6258, %v6576
      %v6689 = vadd.f32 %v6264, %v6577
      %v6690 = vadd.f32 %v6268, %v6578
      %v6691 = vadd.f32 %v6274, %v6579
      %v6692 = vadd.f32 %v6278, %v6580
      %v6693 = vadd.f32 %v6284, %v6581
      %v6694 = vadd.f32 %v6288, %v6582
      %v6695 = vadd.f32 %v6294, %v6583
      %v6696 = vadd.f32 %v6298, %v6584
      %v6697 = vadd.f32 %v6304, %v6585
      %v6698 = vadd.f32 %v6308, %v6586
      %v6699 = vadd.f32 %v6314, %v6587
      %v6700 = vadd.f32 %v6318, %v6588
      %v6701 = vadd.f32 %v6324, %v6589
      %v6702 = vadd.f32 %v6328, %v6590
      %v6703 = vadd.f32 %v6334, %v6591
      %v6704 = vadd.f32 %v6338, %v6592
      %v6705 = vadd.f32 %v6344, %v6593
      %v6706 = vadd.f32 %v6348, %v6594
      %v6707 = vadd.f32 %v6354, %v6595
      %v6708 = vadd.f32 %v6358, %v6596
      %v6709 = vadd.f32 %v6364, %v6597
      %v6710 = vadd.f32 %v6368, %v6598
      %v6711 = vadd.f32 %v6683, %v6655
      %v6712 = vadd.f32 %v6684, %v6656
      %v6713 = vadd.f32 %v6685, %v6657
      %v6714 = vadd.f32 %v6686, %v6658
      %v6715 = vadd.f32 %v6687, %v6659
      %v6716 = vadd.f32 %v6688, %v6660
      %v6717 = vadd.f32 %v6689, %v6661
      %v6718 = vadd.f32 %v6690, %v6662
      %v6719 = vadd.f32 %v6691, %v6663
      %v6720 = vadd.f32 %v6692, %v6664
      %v6721 = vadd.f32 %v6693, %v6665
      %v6722 = vadd.f32 %v6694, %v6666
      %v6723 = vadd.f32 %v6695, %v6667
      %v6724 = vadd.f32 %v6696, %v6668
      %v6725 = vadd.f32 %v6697, %v6669
      %v6726 = vadd.f32 %v6698, %v6670
      %v6727 = vadd.f32 %v6699, %v6671
      %v6728 = vadd.f32 %v6700, %v6672
      %v6729 = vadd.f32 %v6701, %v6673
      %v6730 = vadd.f32 %v6702, %v6674
      %v6731 = vadd.f32 %v6703, %v6675
      %v6732 = vadd.f32 %v6704, %v6676
      %v6733 = vadd.f32 %v6705, %v6677
      %v6734 = vadd.f32 %v6706, %v6678
      %v6735 = vadd.f32 %v6707, %v6679
      %v6736 = vadd.f32 %v6708, %v6680
      %v6737 = vadd.f32 %v6709, %v6681
      %v6738 = vadd.f32 %v6710, %v6682
      %v6739 = vld [vmem:[%s11] sm:$0x1]
      %v6741 = vlaneseq
      %v6742 = vshrl.u32 %v6741, 7
      %v6743 = vsub.s32 0, %v6742
      %v6744 = vrot.slane %v6739, %v6743
      %v6746 = vadd.f32 %v6711, %v6744
      %v6747 = vadd.f32 %v6712, %v6744
      %v6748 = vadd.f32 %v6713, %v6744
      %v6749 = vadd.f32 %v6714, %v6744
      %v6750 = vadd.f32 %v6715, %v6744
      %v6751 = vadd.f32 %v6716, %v6744
      %v6752 = vadd.f32 %v6717, %v6744
      %v6753 = vadd.f32 %v6718, %v6744
      %v6754 = vadd.f32 %v6719, %v6744
      %v6755 = vadd.f32 %v6720, %v6744
      %v6756 = vadd.f32 %v6721, %v6744
      %v6757 = vadd.f32 %v6722, %v6744
      %v6758 = vadd.f32 %v6723, %v6744
      %v6759 = vadd.f32 %v6724, %v6744
      %v6760 = vadd.f32 %v6725, %v6744
      %v6761 = vadd.f32 %v6726, %v6744
      %v6762 = vadd.f32 %v6727, %v6744
      %v6763 = vadd.f32 %v6728, %v6744
      %v6764 = vadd.f32 %v6729, %v6744
      %v6765 = vadd.f32 %v6730, %v6744
      %v6766 = vadd.f32 %v6731, %v6744
      %v6767 = vadd.f32 %v6732, %v6744
      %v6768 = vadd.f32 %v6733, %v6744
      %v6769 = vadd.f32 %v6734, %v6744
      %v6770 = vadd.f32 %v6735, %v6744
      %v6771 = vadd.f32 %v6736, %v6744
      %v6772 = vadd.f32 %v6737, %v6744
      %v6773 = vadd.f32 %v6738, %v6744
      %vm6774 = vcmp.ge.f32.partialorder %v6746, 0.0
      %vm6775 = vcmp.ge.f32.partialorder %v6747, 0.0
      %vm6776 = vcmp.ge.f32.partialorder %v6748, 0.0
      %vm6777 = vcmp.ge.f32.partialorder %v6749, 0.0
      %vm6778 = vcmp.ge.f32.partialorder %v6750, 0.0
      %vm6779 = vcmp.ge.f32.partialorder %v6751, 0.0
      %vm6780 = vcmp.ge.f32.partialorder %v6752, 0.0
      %vm6781 = vcmp.ge.f32.partialorder %v6753, 0.0
      %vm6782 = vcmp.ge.f32.partialorder %v6754, 0.0
      %vm6783 = vcmp.ge.f32.partialorder %v6755, 0.0
      %vm6784 = vcmp.ge.f32.partialorder %v6756, 0.0
      %vm6785 = vcmp.ge.f32.partialorder %v6757, 0.0
      %vm6786 = vcmp.ge.f32.partialorder %v6758, 0.0
      %vm6787 = vcmp.ge.f32.partialorder %v6759, 0.0
      %vm6788 = vcmp.ge.f32.partialorder %v6760, 0.0
      %vm6789 = vcmp.ge.f32.partialorder %v6761, 0.0
      %vm6790 = vcmp.ge.f32.partialorder %v6762, 0.0
      %vm6791 = vcmp.ge.f32.partialorder %v6763, 0.0
      %vm6792 = vcmp.ge.f32.partialorder %v6764, 0.0
      %vm6793 = vcmp.ge.f32.partialorder %v6765, 0.0
      %vm6794 = vcmp.ge.f32.partialorder %v6766, 0.0
      %vm6795 = vcmp.ge.f32.partialorder %v6767, 0.0
      %vm6796 = vcmp.ge.f32.partialorder %v6768, 0.0
      %vm6797 = vcmp.ge.f32.partialorder %v6769, 0.0
      %vm6798 = vcmp.ge.f32.partialorder %v6770, 0.0
      %vm6799 = vcmp.ge.f32.partialorder %v6771, 0.0
      %vm6800 = vcmp.ge.f32.partialorder %v6772, 0.0
      %vm6801 = vcmp.ge.f32.partialorder %v6773, 0.0
      %v6802 = vmul.f32 %v6746, 0.2
      %v6803 = vmul.f32 %v6747, 0.2
      %v6804 = vmul.f32 %v6748, 0.2
      %v6805 = vmul.f32 %v6749, 0.2
      %v6806 = vmul.f32 %v6750, 0.2
      %v6807 = vmul.f32 %v6751, 0.2
      %v6808 = vmul.f32 %v6752, 0.2
      %v6809 = vmul.f32 %v6753, 0.2
      %v6810 = vmul.f32 %v6754, 0.2
      %v6811 = vmul.f32 %v6755, 0.2
      %v6812 = vmul.f32 %v6756, 0.2
      %v6813 = vmul.f32 %v6757, 0.2
      %v6814 = vmul.f32 %v6758, 0.2
      %v6815 = vmul.f32 %v6759, 0.2
      %v6816 = vmul.f32 %v6760, 0.2
      %v6817 = vmul.f32 %v6761, 0.2
      %v6818 = vmul.f32 %v6762, 0.2
      %v6819 = vmul.f32 %v6763, 0.2
      %v6820 = vmul.f32 %v6764, 0.2
      %v6821 = vmul.f32 %v6765, 0.2
      %v6822 = vmul.f32 %v6766, 0.2
      %v6823 = vmul.f32 %v6767, 0.2
      %v6824 = vmul.f32 %v6768, 0.2
      %v6825 = vmul.f32 %v6769, 0.2
      %v6826 = vmul.f32 %v6770, 0.2
      %v6827 = vmul.f32 %v6771, 0.2
      %v6828 = vmul.f32 %v6772, 0.2
      %v6829 = vmul.f32 %v6773, 0.2
      %v6830 = vsel %vm6774, %v6746, %v6802
      %v6831 = vsel %vm6775, %v6747, %v6803
      %v6832 = vsel %vm6776, %v6748, %v6804
      %v6833 = vsel %vm6777, %v6749, %v6805
      %v6834 = vsel %vm6778, %v6750, %v6806
      %v6835 = vsel %vm6779, %v6751, %v6807
      %v6836 = vsel %vm6780, %v6752, %v6808
      %v6837 = vsel %vm6781, %v6753, %v6809
      %v6838 = vsel %vm6782, %v6754, %v6810
      %v6839 = vsel %vm6783, %v6755, %v6811
      %v6840 = vsel %vm6784, %v6756, %v6812
      %v6841 = vsel %vm6785, %v6757, %v6813
      %v6842 = vsel %vm6786, %v6758, %v6814
      %v6843 = vsel %vm6787, %v6759, %v6815
      %v6844 = vsel %vm6788, %v6760, %v6816
      %v6845 = vsel %vm6789, %v6761, %v6817
      %v6846 = vsel %vm6790, %v6762, %v6818
      %v6847 = vsel %vm6791, %v6763, %v6819
      %v6848 = vsel %vm6792, %v6764, %v6820
      %v6849 = vsel %vm6793, %v6765, %v6821
      %v6850 = vsel %vm6794, %v6766, %v6822
      %v6851 = vsel %vm6795, %v6767, %v6823
      %v6852 = vsel %vm6796, %v6768, %v6824
      %v6853 = vsel %vm6797, %v6769, %v6825
      %v6854 = vsel %vm6798, %v6770, %v6826
      %v6855 = vsel %vm6799, %v6771, %v6827
      %v6856 = vsel %vm6800, %v6772, %v6828
      %v6857 = vsel %vm6801, %v6773, %v6829
      %6858 = vst [vmem:[#allocation2] sm:$0xff] %v6830
      %6859 = vst [vmem:[#allocation2 + $0x8] sm:$0xff] %v6831
      %6860 = vst [vmem:[#allocation2 + $0x10] sm:$0xff] %v6832
      %6861 = vst [vmem:[#allocation2 + $0x18] sm:$0xff] %v6833
      %6862 = vst [vmem:[#allocation2 + $0x20] sm:$0xff] %v6834
      %6863 = vst [vmem:[#allocation2 + $0x28] sm:$0xff] %v6835
      %6864 = vst [vmem:[#allocation2 + $0x30] sm:$0xff] %v6836
      %6865 = vst [vmem:[#allocation2 + $0x38] sm:$0xff] %v6837
      %6866 = vst [vmem:[#allocation2 + $0x40] sm:$0xff] %v6838
      %6867 = vst [vmem:[#allocation2 + $0x48] sm:$0xff] %v6839
      %6868 = vst [vmem:[#allocation2 + $0x50] sm:$0xff] %v6840
      %6869 = vst [vmem:[#allocation2 + $0x58] sm:$0xff] %v6841
      %6870 = vst [vmem:[#allocation2 + $0x60] sm:$0xff] %v6842
      %6871 = vst [vmem:[#allocation2 + $0x68] sm:$0xff] %v6843
      %6872 = vst [vmem:[#allocation2 + $0x70] sm:$0xff] %v6844
      %6873 = vst [vmem:[#allocation2 + $0x78] sm:$0xff] %v6845
      %6874 = vst [vmem:[#allocation2 + $0x80] sm:$0xff] %v6846
      %6875 = vst [vmem:[#allocation2 + $0x88] sm:$0xff] %v6847
      %6876 = vst [vmem:[#allocation2 + $0x90] sm:$0xff] %v6848
      %6877 = vst [vmem:[#allocation2 + $0x98] sm:$0xff] %v6849
      %6878 = vst [vmem:[#allocation2 + $0xa0] sm:$0xff] %v6850
      %6879 = vst [vmem:[#allocation2 + $0xa8] sm:$0xff] %v6851
      %6880 = vst [vmem:[#allocation2 + $0xb0] sm:$0xff] %v6852
      %6881 = vst [vmem:[#allocation2 + $0xb8] sm:$0xff] %v6853
      %6882 = vst [vmem:[#allocation2 + $0xc0] sm:$0xff] %v6854
      %6883 = vst [vmem:[#allocation2 + $0xc8] sm:$0xff] %v6855
      %6884 = vst [vmem:[#allocation2 + $0xd0] sm:$0xff] %v6856
      %6885 = vst [vmem:[#allocation2 + $0xd8] sm:$0xff] %v6857
      %v6886 = vld [vmem:[#allocation2] ss:$2 sm:$0xff]
      %s6887 = scalar_lea.vmem [#allocation2], 16
      %v6888 = vld [vmem:[%s6887] ss:$2 sm:$0xff]
      %s6889 = scalar_lea.vmem [#allocation2], 32
      %v6890 = vld [vmem:[%s6889] ss:$2 sm:$0xff]
      %s6891 = scalar_lea.vmem [#allocation2], 48
      %v6892 = vld [vmem:[%s6891] ss:$2 sm:$0xff]
      %s6893 = scalar_lea.vmem [#allocation2], 64
      %v6894 = vld [vmem:[%s6893] ss:$2 sm:$0xff]
      %s6895 = scalar_lea.vmem [#allocation2], 80
      %v6896 = vld [vmem:[%s6895] ss:$2 sm:$0xff]
      %s6897 = scalar_lea.vmem [#allocation2], 96
      %v6898 = vld [vmem:[%s6897] ss:$2 sm:$0xff]
      %s6899 = scalar_lea.vmem [#allocation2], 112
      %v6900 = vld [vmem:[%s6899] ss:$2 sm:$0xff]
      %s6901 = scalar_lea.vmem [#allocation2], 128
      %v6902 = vld [vmem:[%s6901] ss:$2 sm:$0xff]
      %s6903 = scalar_lea.vmem [#allocation2], 144
      %v6904 = vld [vmem:[%s6903] ss:$2 sm:$0xff]
      %s6905 = scalar_lea.vmem [#allocation2], 160
      %v6906 = vld [vmem:[%s6905] ss:$2 sm:$0xff]
      %s6907 = scalar_lea.vmem [#allocation2], 176
      %v6908 = vld [vmem:[%s6907] ss:$2 sm:$0xff]
      %s6909 = scalar_lea.vmem [#allocation2], 192
      %v6910 = vld [vmem:[%s6909] ss:$2 sm:$0xff]
      %s6911 = scalar_lea.vmem [#allocation2], 208
      %v6912 = vld [vmem:[%s6911] ss:$2 sm:$0xff]
      %v6913 = vld [vmem:[%s4544] ss:$2 sm:$0xff]
      %v6914 = vld [vmem:[%s4546] ss:$2 sm:$0xff]
      %v6915 = vld [vmem:[%s4548] ss:$2 sm:$0xff]
      %v6916 = vld [vmem:[%s4550] ss:$2 sm:$0xff]
      %v6917 = vld [vmem:[%s4552] ss:$2 sm:$0xff]
      %v6918 = vld [vmem:[%s4554] ss:$2 sm:$0xff]
      %v6919 = vld [vmem:[%s4556] ss:$2 sm:$0xff]
      %v6920 = vld [vmem:[%s4558] ss:$2 sm:$0xff]
      %v6921 = vld [vmem:[%s4560] ss:$2 sm:$0xff]
      %v6922 = vld [vmem:[%s4562] ss:$2 sm:$0xff]
      %v6923 = vld [vmem:[%s4564] ss:$2 sm:$0xff]
      %v6924 = vld [vmem:[%s4566] ss:$2 sm:$0xff]
      %v6925 = vld [vmem:[%s4568] ss:$2 sm:$0xff]
      %v6926 = vld [vmem:[%s4570] ss:$2 sm:$0xff]
      %v6927 = vadd.f32 %v6886, %v6913
      %v6928 = vadd.f32 %v6888, %v6914
      %v6929 = vadd.f32 %v6890, %v6915
      %v6930 = vadd.f32 %v6892, %v6916
      %v6931 = vadd.f32 %v6894, %v6917
      %v6932 = vadd.f32 %v6896, %v6918
      %v6933 = vadd.f32 %v6898, %v6919
      %v6934 = vadd.f32 %v6900, %v6920
      %v6935 = vadd.f32 %v6902, %v6921
      %v6936 = vadd.f32 %v6904, %v6922
      %v6937 = vadd.f32 %v6906, %v6923
      %v6938 = vadd.f32 %v6908, %v6924
      %v6939 = vadd.f32 %v6910, %v6925
      %v6940 = vadd.f32 %v6912, %v6926
      %v6941 = vpack.c.bf16 %v6928, %v6927
      %v6942 = vpack.c.bf16 %v6930, %v6929
      %v6943 = vpack.c.bf16 %v6932, %v6931
      %v6944 = vpack.c.bf16 %v6934, %v6933
      %v6945 = vpack.c.bf16 %v6936, %v6935
      %v6946 = vpack.c.bf16 %v6938, %v6937
      %v6947 = vpack.c.bf16 %v6940, %v6939
      %v6948 = vld [vmem:[%s17] sm:$0xf]
      %v6949 = vld [vmem:[%s17 + $0x4] sm:$0xf]
      %v6950 = vld [vmem:[%s17 + $0x8] sm:$0xf]
      %v6951 = vld [vmem:[%s17 + $0xc] sm:$0xf]
      %v6952 = vld [vmem:[%s17 + $0x10] sm:$0xf]
      %v6953 = vld [vmem:[%s17 + $0x14] sm:$0xf]
      %v6954 = vld [vmem:[%s17 + $0x18] sm:$0xf]
      %v6955 = vld [vmem:[%s17 + $0x1c] sm:$0xf]
      %v6956 = vld [vmem:[%s17 + $0x20] sm:$0xf]
      %v6957 = vld [vmem:[%s17 + $0x24] sm:$0xf]
      %v6958 = vld [vmem:[%s17 + $0x28] sm:$0xf]
      %v6959 = vld [vmem:[%s17 + $0x2c] sm:$0xf]
      %v6960 = vld [vmem:[%s17 + $0x30] sm:$0xf]
      %v6961 = vld [vmem:[%s17 + $0x34] sm:$0xf]
      %v6962 = vld [vmem:[%s17 + $0x38] sm:$0xf]
      %v6963 = vld [vmem:[%s17 + $0x3c] sm:$0xf]
      %v6980 = vunpack.c.l.b16 %v6948
      %v6981 = vunpack.c.l.b16 %v6949
      %v6982 = vunpack.c.l.b16 %v6950
      %v6983 = vunpack.c.l.b16 %v6951
      %v6984 = vunpack.c.l.b16 %v6952
      %v6985 = vunpack.c.l.b16 %v6953
      %v6986 = vunpack.c.l.b16 %v6954
      %v6987 = vunpack.c.l.b16 %v6955
      %v6988 = vunpack.c.l.b16 %v6956
      %v6989 = vunpack.c.l.b16 %v6957
      %v6990 = vunpack.c.l.b16 %v6958
      %v6991 = vunpack.c.l.b16 %v6959
      %v6992 = vunpack.c.l.b16 %v6960
      %v6993 = vunpack.c.l.b16 %v6961
      %v6994 = vunpack.c.l.b16 %v6962
      %v6995 = vunpack.c.l.b16 %v6963
      %v6996 = vpack.c.b16 %v6981, %v6980
      %v6997 = vpack.c.b16 %v6983, %v6982
      %v6998 = vpack.c.b16 %v6985, %v6984
      %v6999 = vpack.c.b16 %v6987, %v6986
      %v7000 = vpack.c.b16 %v6989, %v6988
      %v7001 = vpack.c.b16 %v6991, %v6990
      %v7002 = vpack.c.b16 %v6993, %v6992
      %v7003 = vpack.c.b16 %v6995, %v6994
      %7012 = vmatprep.subr.bf16.mxu0 0
      %7013 = vmatpush1.bf16.msra.mxu0 %v6996
      %7014 = vmatprep.subr.bf16.mxu0 0
      %7015 = vmatpush1.bf16.msra.mxu0 %v6997
      %7016 = vmatprep.subr.bf16.mxu0 0
      %7017 = vmatpush1.bf16.msra.mxu0 %v6998
      %7018 = vmatprep.subr.bf16.mxu0 0
      %7019 = vmatpush1.bf16.msra.mxu0 %v6999
      %7020 = vmatprep.subr.bf16.mxu0 0
      %7021 = vmatpush1.bf16.msra.mxu0 %v7000
      %7022 = vmatprep.subr.bf16.mxu0 0
      %7023 = vmatpush1.bf16.msra.mxu0 %v7001
      %7024 = vmatprep.subr.bf16.mxu0 0
      %7025 = vmatpush1.bf16.msra.mxu0 %v7002
      %7026 = vmatprep.subr.bf16.mxu0 0
      %7027 = vmatpush1.bf16.msra.mxu0 %v7003
      %7028 = vmatprep.subr.bf16.mxu0 0
      %7029 = vmatpush1.bf16.msra.mxu0 0
      %7030 = vmatprep.subr.bf16.mxu0 0
      %7031 = vmatpush1.bf16.msra.mxu0 0
      %7032 = vmatprep.subr.bf16.mxu0 0
      %7033 = vmatpush1.bf16.msra.mxu0 0
      %7034 = vmatprep.subr.bf16.mxu0 0
      %7035 = vmatpush1.bf16.msra.mxu0 0
      %7036 = vmatprep.subr.bf16.mxu0 0
      %7037 = vmatpush1.bf16.msra.mxu0 0
      %7038 = vmatprep.subr.bf16.mxu0 0
      %7039 = vmatpush1.bf16.msra.mxu0 0
      %7040 = vmatprep.subr.bf16.mxu0 0
      %7041 = vmatpush1.bf16.msra.mxu0 0
      %7042 = vmatprep.subr.bf16.mxu0 0
      %7043 = vmatpush1.bf16.msra.mxu0 0
      %7044 = vmatprep.mubr.bf16.mxu0 0
      %7045 = vmatmul.mubr.bf16.gmra.mrb[0].mxu0 %v6941
      %v7046 = vpop.f32.mrb[0].mxu0
      %v7047 = vadd.f32 0.0, %v7046
      %v7048 = vpop.f32.mrb[0].mxu0
      %v7049 = vpop.f32.mrb[0].mxu0
      %v7050 = vadd.f32 0.0, %v7049
      %v7051 = vpop.f32.mrb[0].mxu0
      %7052 = vmatprep.mubr.bf16.mxu0 0
      %7053 = vmatmul.mubr.bf16.gmra.mrb[0].mxu0 %v6942
      %v7054 = vpop.f32.mrb[0].mxu0
      %v7055 = vadd.f32 0.0, %v7054
      %v7056 = vpop.f32.mrb[0].mxu0
      %v7057 = vpop.f32.mrb[0].mxu0
      %v7058 = vadd.f32 0.0, %v7057
      %v7059 = vpop.f32.mrb[0].mxu0
      %7060 = vmatprep.mubr.bf16.mxu0 0
      %7061 = vmatmul.mubr.bf16.gmra.mrb[0].mxu0 %v6943
      %v7062 = vpop.f32.mrb[0].mxu0
      %v7063 = vadd.f32 0.0, %v7062
      %v7064 = vpop.f32.mrb[0].mxu0
      %v7065 = vpop.f32.mrb[0].mxu0
      %v7066 = vadd.f32 0.0, %v7065
      %v7067 = vpop.f32.mrb[0].mxu0
      %7068 = vmatprep.mubr.bf16.mxu0 0
      %7069 = vmatmul.mubr.bf16.gmra.mrb[0].mxu0 %v6944
      %v7070 = vpop.f32.mrb[0].mxu0
      %v7071 = vadd.f32 0.0, %v7070
      %v7072 = vpop.f32.mrb[0].mxu0
      %v7073 = vpop.f32.mrb[0].mxu0
      %v7074 = vadd.f32 0.0, %v7073
      %v7075 = vpop.f32.mrb[0].mxu0
      %7076 = vmatprep.mubr.bf16.mxu0 0
      %7077 = vmatmul.mubr.bf16.gmra.mrb[0].mxu0 %v6945
      %v7078 = vpop.f32.mrb[0].mxu0
      %v7079 = vadd.f32 0.0, %v7078
      %v7080 = vpop.f32.mrb[0].mxu0
      %v7081 = vpop.f32.mrb[0].mxu0
      %v7082 = vadd.f32 0.0, %v7081
      %v7083 = vpop.f32.mrb[0].mxu0
      %7084 = vmatprep.mubr.bf16.mxu0 0
      %7085 = vmatmul.mubr.bf16.gmra.mrb[0].mxu0 %v6946
      %v7086 = vpop.f32.mrb[0].mxu0
      %v7087 = vadd.f32 0.0, %v7086
      %v7088 = vpop.f32.mrb[0].mxu0
      %v7089 = vpop.f32.mrb[0].mxu0
      %v7090 = vadd.f32 0.0, %v7089
      %v7091 = vpop.f32.mrb[0].mxu0
      %7092 = vmatprep.mubr.bf16.mxu0 0
      %7093 = vmatmul.mubr.bf16.gmra.mrb[0].mxu0 %v6947
      %v7094 = vpop.f32.mrb[0].mxu0
      %v7095 = vadd.f32 0.0, %v7094
      %v7096 = vpop.f32.mrb[0].mxu0
      %v7097 = vpop.f32.mrb[0].mxu0
      %v7098 = vadd.f32 0.0, %v7097
      %v7099 = vpop.f32.mrb[0].mxu0
      %7100 = vdwg.mxu0
      %v7101 = vpack.c.bf16 %v7050, %v7047
      %v7102 = vpack.c.bf16 %v7058, %v7055
      %v7103 = vpack.c.bf16 %v7066, %v7063
      %v7104 = vpack.c.bf16 %v7074, %v7071
      %v7105 = vpack.c.bf16 %v7082, %v7079
      %v7106 = vpack.c.bf16 %v7090, %v7087
      %v7107 = vpack.c.bf16 %v7098, %v7095
      %v7108 = vld [vmem:[%s12] sm:$0xff]
      %v7109 = vld [vmem:[%s12 + $0x8] sm:$0xf]
      %v7110 = vld [vmem:[%s12 + $0xc] sm:$0xff]
      %v7111 = vld [vmem:[%s12 + $0x14] sm:$0xf]
      %v7112 = vld [vmem:[%s12 + $0x18] sm:$0xff]
      %v7113 = vld [vmem:[%s12 + $0x20] sm:$0xf]
      %v7114 = vld [vmem:[%s12 + $0x24] sm:$0xff]
      %v7115 = vld [vmem:[%s12 + $0x2c] sm:$0xf]
      %v7116 = vld [vmem:[%s12 + $0x30] sm:$0xff]
      %v7117 = vld [vmem:[%s12 + $0x38] sm:$0xf]
      %v7118 = vld [vmem:[%s12 + $0x3c] sm:$0xff]
      %v7119 = vld [vmem:[%s12 + $0x44] sm:$0xf]
      %v7120 = vld [vmem:[%s12 + $0x48] sm:$0xff]
      %v7121 = vld [vmem:[%s12 + $0x50] sm:$0xf]
      %v7122 = vld [vmem:[%s12 + $0x54] sm:$0xff]
      %v7123 = vld [vmem:[%s12 + $0x5c] sm:$0xf]
      %v7124 = vld [vmem:[%s12 + $0x60] sm:$0xff]
      %v7125 = vld [vmem:[%s12 + $0x68] sm:$0xf]
      %v7126 = vld [vmem:[%s12 + $0x6c] sm:$0xff]
      %v7127 = vld [vmem:[%s12 + $0x74] sm:$0xf]
      %v7128 = vld [vmem:[%s12 + $0x78] sm:$0xff]
      %v7129 = vld [vmem:[%s12 + $0x80] sm:$0xf]
      %v7130 = vld [vmem:[%s12 + $0x84] sm:$0xff]
      %v7131 = vld [vmem:[%s12 + $0x8c] sm:$0xf]
      %v7132 = vld [vmem:[%s12 + $0x90] sm:$0xff]
      %v7133 = vld [vmem:[%s12 + $0x98] sm:$0xf]
      %v7134 = vld [vmem:[%s12 + $0x9c] sm:$0xff]
      %v7135 = vld [vmem:[%s12 + $0xa4] sm:$0xf]
      %v7136 = vld [vmem:[%s12 + $0xa8] sm:$0xff]
      %v7137 = vld [vmem:[%s12 + $0xb0] sm:$0xf]
      %v7138 = vld [vmem:[%s12 + $0xb4] sm:$0xff]
      %v7139 = vld [vmem:[%s12 + $0xbc] sm:$0xf]
      %v7172 = vunpack.c.l.b16 %v7108
      %v7173 = vunpack.c.h.b16 %v7108
      %v7174 = vunpack.c.l.b16 %v7109
      %v7175 = vunpack.c.l.b16 %v7110
      %v7176 = vunpack.c.h.b16 %v7110
      %v7177 = vunpack.c.l.b16 %v7111
      %v7178 = vunpack.c.l.b16 %v7112
      %v7179 = vunpack.c.h.b16 %v7112
      %v7180 = vunpack.c.l.b16 %v7113
      %v7181 = vunpack.c.l.b16 %v7114
      %v7182 = vunpack.c.h.b16 %v7114
      %v7183 = vunpack.c.l.b16 %v7115
      %v7184 = vunpack.c.l.b16 %v7116
      %v7185 = vunpack.c.h.b16 %v7116
      %v7186 = vunpack.c.l.b16 %v7117
      %v7187 = vunpack.c.l.b16 %v7118
      %v7188 = vunpack.c.h.b16 %v7118
      %v7189 = vunpack.c.l.b16 %v7119
      %v7190 = vunpack.c.l.b16 %v7120
      %v7191 = vunpack.c.h.b16 %v7120
      %v7192 = vunpack.c.l.b16 %v7121
      %v7193 = vunpack.c.l.b16 %v7122
      %v7194 = vunpack.c.h.b16 %v7122
      %v7195 = vunpack.c.l.b16 %v7123
      %v7196 = vunpack.c.l.b16 %v7124
      %v7197 = vunpack.c.h.b16 %v7124
      %v7198 = vunpack.c.l.b16 %v7125
      %v7199 = vunpack.c.l.b16 %v7126
      %v7200 = vunpack.c.h.b16 %v7126
      %v7201 = vunpack.c.l.b16 %v7127
      %v7202 = vunpack.c.l.b16 %v7128
      %v7203 = vunpack.c.h.b16 %v7128
      %v7204 = vunpack.c.l.b16 %v7129
      %v7205 = vunpack.c.l.b16 %v7130
      %v7206 = vunpack.c.h.b16 %v7130
      %v7207 = vunpack.c.l.b16 %v7131
      %v7208 = vunpack.c.l.b16 %v7132
      %v7209 = vunpack.c.h.b16 %v7132
      %v7210 = vunpack.c.l.b16 %v7133
      %v7211 = vunpack.c.l.b16 %v7134
      %v7212 = vunpack.c.h.b16 %v7134
      %v7213 = vunpack.c.l.b16 %v7135
      %v7214 = vunpack.c.l.b16 %v7136
      %v7215 = vunpack.c.h.b16 %v7136
      %v7216 = vunpack.c.l.b16 %v7137
      %v7217 = vunpack.c.l.b16 %v7138
      %v7218 = vunpack.c.h.b16 %v7138
      %v7219 = vunpack.c.l.b16 %v7139
      %v7220 = vpack.c.b16 %v7175, %v7172
      %v7221 = vpack.c.b16 %v7176, %v7173
      %v7222 = vpack.c.b16 %v7177, %v7174
      %v7223 = vpack.c.b16 %v7181, %v7178
      %v7224 = vpack.c.b16 %v7182, %v7179
      %v7225 = vpack.c.b16 %v7183, %v7180
      %v7226 = vpack.c.b16 %v7187, %v7184
      %v7227 = vpack.c.b16 %v7188, %v7185
      %v7228 = vpack.c.b16 %v7189, %v7186
      %v7229 = vpack.c.b16 %v7193, %v7190
      %v7230 = vpack.c.b16 %v7194, %v7191
      %v7231 = vpack.c.b16 %v7195, %v7192
      %v7232 = vpack.c.b16 %v7199, %v7196
      %v7233 = vpack.c.b16 %v7200, %v7197
      %v7234 = vpack.c.b16 %v7201, %v7198
      %v7235 = vpack.c.b16 %v7205, %v7202
      %v7236 = vpack.c.b16 %v7206, %v7203
      %v7237 = vpack.c.b16 %v7207, %v7204
      %v7238 = vpack.c.b16 %v7211, %v7208
      %v7239 = vpack.c.b16 %v7212, %v7209
      %v7240 = vpack.c.b16 %v7213, %v7210
      %v7241 = vpack.c.b16 %v7217, %v7214
      %v7242 = vpack.c.b16 %v7218, %v7215
      %v7243 = vpack.c.b16 %v7219, %v7216
      %7268 = vmatprep.subr.bf16.mxu0 %v7221
      %7269 = vmatpush1.bf16.msra.mxu0 %v7220
      %7270 = vmatprep.subr.bf16.mxu0 %v7224
      %7271 = vmatpush1.bf16.msra.mxu0 %v7223
      %7272 = vmatprep.subr.bf16.mxu0 %v7227
      %7273 = vmatpush1.bf16.msra.mxu0 %v7226
      %7274 = vmatprep.subr.bf16.mxu0 %v7230
      %7275 = vmatpush1.bf16.msra.mxu0 %v7229
      %7276 = vmatprep.subr.bf16.mxu0 %v7233
      %7277 = vmatpush1.bf16.msra.mxu0 %v7232
      %7278 = vmatprep.subr.bf16.mxu0 %v7236
      %7279 = vmatpush1.bf16.msra.mxu0 %v7235
      %7280 = vmatprep.subr.bf16.mxu0 %v7239
      %7281 = vmatpush1.bf16.msra.mxu0 %v7238
      %7282 = vmatprep.subr.bf16.mxu0 %v7242
      %7283 = vmatpush1.bf16.msra.mxu0 %v7241
      %7284 = vmatprep.subr.bf16.mxu0 0
      %7285 = vmatpush1.bf16.msra.mxu0 0
      %7286 = vmatprep.subr.bf16.mxu0 0
      %7287 = vmatpush1.bf16.msra.mxu0 0
      %7288 = vmatprep.subr.bf16.mxu0 0
      %7289 = vmatpush1.bf16.msra.mxu0 0
      %7290 = vmatprep.subr.bf16.mxu0 0
      %7291 = vmatpush1.bf16.msra.mxu0 0
      %7292 = vmatprep.subr.bf16.mxu0 0
      %7293 = vmatpush1.bf16.msra.mxu0 0
      %7294 = vmatprep.subr.bf16.mxu0 0
      %7295 = vmatpush1.bf16.msra.mxu0 0
      %7296 = vmatprep.subr.bf16.mxu0 0
      %7297 = vmatpush1.bf16.msra.mxu0 0
      %7298 = vmatprep.subr.bf16.mxu0 0
      %7299 = vmatpush1.bf16.msra.mxu0 0
      %7300 = vmatprep.mubr.bf16.mxu0 0
      %7301 = vmatmul.mubr.bf16.gmra.mrb[0].mxu0 %v7101
      %v7302 = vpop.f32.mrb[0].mxu0
      %v7303 = vadd.f32 0.0, %v7302
      %v7304 = vpop.f32.mrb[0].mxu0
      %v7305 = vadd.f32 0.0, %v7304
      %v7306 = vpop.f32.mrb[0].mxu0
      %v7307 = vadd.f32 0.0, %v7306
      %v7308 = vpop.f32.mrb[0].mxu0
      %v7309 = vadd.f32 0.0, %v7308
      %7310 = vmatprep.mubr.bf16.mxu0 0
      %7311 = vmatmul.mubr.bf16.gmra.mrb[0].mxu0 %v7102
      %v7312 = vpop.f32.mrb[0].mxu0
      %v7313 = vadd.f32 0.0, %v7312
      %v7314 = vpop.f32.mrb[0].mxu0
      %v7315 = vadd.f32 0.0, %v7314
      %v7316 = vpop.f32.mrb[0].mxu0
      %v7317 = vadd.f32 0.0, %v7316
      %v7318 = vpop.f32.mrb[0].mxu0
      %v7319 = vadd.f32 0.0, %v7318
      %7320 = vmatprep.mubr.bf16.mxu0 0
      %7321 = vmatmul.mubr.bf16.gmra.mrb[0].mxu0 %v7103
      %v7322 = vpop.f32.mrb[0].mxu0
      %v7323 = vadd.f32 0.0, %v7322
      %v7324 = vpop.f32.mrb[0].mxu0
      %v7325 = vadd.f32 0.0, %v7324
      %v7326 = vpop.f32.mrb[0].mxu0
      %v7327 = vadd.f32 0.0, %v7326
      %v7328 = vpop.f32.mrb[0].mxu0
      %v7329 = vadd.f32 0.0, %v7328
      %7330 = vmatprep.mubr.bf16.mxu0 0
      %7331 = vmatmul.mubr.bf16.gmra.mrb[0].mxu0 %v7104
      %v7332 = vpop.f32.mrb[0].mxu0
      %v7333 = vadd.f32 0.0, %v7332
      %v7334 = vpop.f32.mrb[0].mxu0
      %v7335 = vadd.f32 0.0, %v7334
      %v7336 = vpop.f32.mrb[0].mxu0
      %v7337 = vadd.f32 0.0, %v7336
      %v7338 = vpop.f32.mrb[0].mxu0
      %v7339 = vadd.f32 0.0, %v7338
      %7340 = vmatprep.mubr.bf16.mxu0 0
      %7341 = vmatmul.mubr.bf16.gmra.mrb[0].mxu0 %v7105
      %v7342 = vpop.f32.mrb[0].mxu0
      %v7343 = vadd.f32 0.0, %v7342
      %v7344 = vpop.f32.mrb[0].mxu0
      %v7345 = vadd.f32 0.0, %v7344
      %v7346 = vpop.f32.mrb[0].mxu0
      %v7347 = vadd.f32 0.0, %v7346
      %v7348 = vpop.f32.mrb[0].mxu0
      %v7349 = vadd.f32 0.0, %v7348
      %7350 = vmatprep.mubr.bf16.mxu0 0
      %7351 = vmatmul.mubr.bf16.gmra.mrb[0].mxu0 %v7106
      %v7352 = vpop.f32.mrb[0].mxu0
      %v7353 = vadd.f32 0.0, %v7352
      %v7354 = vpop.f32.mrb[0].mxu0
      %v7355 = vadd.f32 0.0, %v7354
      %v7356 = vpop.f32.mrb[0].mxu0
      %v7357 = vadd.f32 0.0, %v7356
      %v7358 = vpop.f32.mrb[0].mxu0
      %v7359 = vadd.f32 0.0, %v7358
      %7360 = vmatprep.mubr.bf16.mxu0 0
      %7361 = vmatmul.mubr.bf16.gmra.mrb[0].mxu0 %v7107
      %v7362 = vpop.f32.mrb[0].mxu0
      %v7363 = vadd.f32 0.0, %v7362
      %v7364 = vpop.f32.mrb[0].mxu0
      %v7365 = vadd.f32 0.0, %v7364
      %v7366 = vpop.f32.mrb[0].mxu0
      %v7367 = vadd.f32 0.0, %v7366
      %v7368 = vpop.f32.mrb[0].mxu0
      %v7369 = vadd.f32 0.0, %v7368
      %7370 = vdwg.mxu0
      %7371 = vmatprep.subr.bf16.mxu0 0
      %7372 = vmatpush1.bf16.msra.mxu0 %v7222
      %7373 = vmatprep.subr.bf16.mxu0 0
      %7374 = vmatpush1.bf16.msra.mxu0 %v7225
      %7375 = vmatprep.subr.bf16.mxu0 0
      %7376 = vmatpush1.bf16.msra.mxu0 %v7228
      %7377 = vmatprep.subr.bf16.mxu0 0
      %7378 = vmatpush1.bf16.msra.mxu0 %v7231
      %7379 = vmatprep.subr.bf16.mxu0 0
      %7380 = vmatpush1.bf16.msra.mxu0 %v7234
      %7381 = vmatprep.subr.bf16.mxu0 0
      %7382 = vmatpush1.bf16.msra.mxu0 %v7237
      %7383 = vmatprep.subr.bf16.mxu0 0
      %7384 = vmatpush1.bf16.msra.mxu0 %v7240
      %7385 = vmatprep.subr.bf16.mxu0 0
      %7386 = vmatpush1.bf16.msra.mxu0 %v7243
      %7387 = vmatprep.subr.bf16.mxu0 0
      %7388 = vmatpush1.bf16.msra.mxu0 0
      %7389 = vmatprep.subr.bf16.mxu0 0
      %7390 = vmatpush1.bf16.msra.mxu0 0
      %7391 = vmatprep.subr.bf16.mxu0 0
      %7392 = vmatpush1.bf16.msra.mxu0 0
      %7393 = vmatprep.subr.bf16.mxu0 0
      %7394 = vmatpush1.bf16.msra.mxu0 0
      %7395 = vmatprep.subr.bf16.mxu0 0
      %7396 = vmatpush1.bf16.msra.mxu0 0
      %7397 = vmatprep.subr.bf16.mxu0 0
      %7398 = vmatpush1.bf16.msra.mxu0 0
      %7399 = vmatprep.subr.bf16.mxu0 0
      %7400 = vmatpush1.bf16.msra.mxu0 0
      %7401 = vmatprep.subr.bf16.mxu0 0
      %7402 = vmatpush1.bf16.msra.mxu0 0
      %7403 = vmatprep.mubr.bf16.mxu0 0
      %7404 = vmatmul.mubr.bf16.gmra.mrb[0].mxu0 %v7101
      %v7405 = vpop.f32.mrb[0].mxu0
      %v7406 = vadd.f32 0.0, %v7405
      %v7407 = vpop.f32.mrb[0].mxu0
      %v7408 = vpop.f32.mrb[0].mxu0
      %v7409 = vadd.f32 0.0, %v7408
      %v7410 = vpop.f32.mrb[0].mxu0
      %7411 = vmatprep.mubr.bf16.mxu0 0
      %7412 = vmatmul.mubr.bf16.gmra.mrb[0].mxu0 %v7102
      %v7413 = vpop.f32.mrb[0].mxu0
      %v7414 = vadd.f32 0.0, %v7413
      %v7415 = vpop.f32.mrb[0].mxu0
      %v7416 = vpop.f32.mrb[0].mxu0
      %v7417 = vadd.f32 0.0, %v7416
      %v7418 = vpop.f32.mrb[0].mxu0
      %7419 = vmatprep.mubr.bf16.mxu0 0
      %7420 = vmatmul.mubr.bf16.gmra.mrb[0].mxu0 %v7103
      %v7421 = vpop.f32.mrb[0].mxu0
      %v7422 = vadd.f32 0.0, %v7421
      %v7423 = vpop.f32.mrb[0].mxu0
      %v7424 = vpop.f32.mrb[0].mxu0
      %v7425 = vadd.f32 0.0, %v7424
      %v7426 = vpop.f32.mrb[0].mxu0
      %7427 = vmatprep.mubr.bf16.mxu0 0
      %7428 = vmatmul.mubr.bf16.gmra.mrb[0].mxu0 %v7104
      %v7429 = vpop.f32.mrb[0].mxu0
      %v7430 = vadd.f32 0.0, %v7429
      %v7431 = vpop.f32.mrb[0].mxu0
      %v7432 = vpop.f32.mrb[0].mxu0
      %v7433 = vadd.f32 0.0, %v7432
      %v7434 = vpop.f32.mrb[0].mxu0
      %7435 = vmatprep.mubr.bf16.mxu0 0
      %7436 = vmatmul.mubr.bf16.gmra.mrb[0].mxu0 %v7105
      %v7437 = vpop.f32.mrb[0].mxu0
      %v7438 = vadd.f32 0.0, %v7437
      %v7439 = vpop.f32.mrb[0].mxu0
      %v7440 = vpop.f32.mrb[0].mxu0
      %v7441 = vadd.f32 0.0, %v7440
      %v7442 = vpop.f32.mrb[0].mxu0
      %7443 = vmatprep.mubr.bf16.mxu0 0
      %7444 = vmatmul.mubr.bf16.gmra.mrb[0].mxu0 %v7106
      %v7445 = vpop.f32.mrb[0].mxu0
      %v7446 = vadd.f32 0.0, %v7445
      %v7447 = vpop.f32.mrb[0].mxu0
      %v7448 = vpop.f32.mrb[0].mxu0
      %v7449 = vadd.f32 0.0, %v7448
      %v7450 = vpop.f32.mrb[0].mxu0
      %7451 = vmatprep.mubr.bf16.mxu0 0
      %7452 = vmatmul.mubr.bf16.gmra.mrb[0].mxu0 %v7107
      %v7453 = vpop.f32.mrb[0].mxu0
      %v7454 = vadd.f32 0.0, %v7453
      %v7455 = vpop.f32.mrb[0].mxu0
      %v7456 = vpop.f32.mrb[0].mxu0
      %v7457 = vadd.f32 0.0, %v7456
      %v7458 = vpop.f32.mrb[0].mxu0
      %7459 = vdwg.mxu0
      %v7460 = vrot.slane %v7303, 7
      %v7461 = vrot.slane %v7307, 7
      %v7462 = vrot.slane %v7313, 7
      %v7463 = vrot.slane %v7317, 7
      %v7464 = vrot.slane %v7323, 7
      %v7465 = vrot.slane %v7327, 7
      %v7466 = vrot.slane %v7333, 7
      %v7467 = vrot.slane %v7337, 7
      %v7468 = vrot.slane %v7343, 7
      %v7469 = vrot.slane %v7347, 7
      %v7470 = vrot.slane %v7353, 7
      %v7471 = vrot.slane %v7357, 7
      %v7472 = vrot.slane %v7363, 7
      %v7473 = vrot.slane %v7367, 7
      %v7474 = vsel %vm1698, %v7472, %v7473
      %v7475 = vsel %vm1698, %v7471, %v7472
      %v7476 = vsel %vm1698, %v7470, %v7471
      %v7477 = vsel %vm1698, %v7469, %v7470
      %v7478 = vsel %vm1698, %v7468, %v7469
      %v7479 = vsel %vm1698, %v7467, %v7468
      %v7480 = vsel %vm1698, %v7466, %v7467
      %v7481 = vsel %vm1698, %v7465, %v7466
      %v7482 = vsel %vm1698, %v7464, %v7465
      %v7483 = vsel %vm1698, %v7463, %v7464
      %v7484 = vsel %vm1698, %v7462, %v7463
      %v7485 = vsel %vm1698, %v7461, %v7462
      %v7486 = vsel %vm1698, %v7460, %v7461
      %v7487 = vsel %vm1698, %v7473, %v7460
      %v7488 = vld [vmem:[%s3] sm:$0xff]
      %v7489 = vld [vmem:[%s3 + $0x8] sm:$0xff]
      %v7490 = vld [vmem:[%s3 + $0x10] sm:$0xff]
      %v7491 = vld [vmem:[%s3 + $0x18] sm:$0xff]
      %v7492 = vld [vmem:[%s3 + $0x20] sm:$0xff]
      %v7493 = vld [vmem:[%s3 + $0x28] sm:$0xff]
      %v7494 = vld [vmem:[%s3 + $0x30] sm:$0xff]
      %v7495 = vld [vmem:[%s3 + $0x38] sm:$0xff]
      %v7496 = vld [vmem:[%s3 + $0x40] sm:$0xff]
      %v7497 = vld [vmem:[%s3 + $0x48] sm:$0xff]
      %v7498 = vld [vmem:[%s3 + $0x50] sm:$0xff]
      %v7499 = vld [vmem:[%s3 + $0x58] sm:$0xff]
      %v7500 = vld [vmem:[%s3 + $0x60] sm:$0xff]
      %v7501 = vld [vmem:[%s3 + $0x68] sm:$0xff]
      %7503 = vset.pattern.permute.xlu0 0
      %7504 = vperm.xlu0 %7503, %v7488
      %v7505 = vpop.permute.xlu0 %7504
      %7508 = vset.pattern.permute.xlu0 0
      %7509 = vperm.xlu0 %7508, %v7489
      %v7510 = vpop.permute.xlu0 %7509
      %7513 = vset.pattern.permute.xlu0 0
      %7514 = vperm.xlu0 %7513, %v7490
      %v7515 = vpop.permute.xlu0 %7514
      %7518 = vset.pattern.permute.xlu0 0
      %7519 = vperm.xlu0 %7518, %v7491
      %v7520 = vpop.permute.xlu0 %7519
      %7523 = vset.pattern.permute.xlu0 0
      %7524 = vperm.xlu0 %7523, %v7492
      %v7525 = vpop.permute.xlu0 %7524
      %7528 = vset.pattern.permute.xlu0 0
      %7529 = vperm.xlu0 %7528, %v7493
      %v7530 = vpop.permute.xlu0 %7529
      %7533 = vset.pattern.permute.xlu0 0
      %7534 = vperm.xlu0 %7533, %v7494
      %v7535 = vpop.permute.xlu0 %7534
      %7538 = vset.pattern.permute.xlu0 0
      %7539 = vperm.xlu0 %7538, %v7495
      %v7540 = vpop.permute.xlu0 %7539
      %7543 = vset.pattern.permute.xlu0 0
      %7544 = vperm.xlu0 %7543, %v7496
      %v7545 = vpop.permute.xlu0 %7544
      %7548 = vset.pattern.permute.xlu0 0
      %7549 = vperm.xlu0 %7548, %v7497
      %v7550 = vpop.permute.xlu0 %7549
      %7553 = vset.pattern.permute.xlu0 0
      %7554 = vperm.xlu0 %7553, %v7498
      %v7555 = vpop.permute.xlu0 %7554
      %7558 = vset.pattern.permute.xlu0 0
      %7559 = vperm.xlu0 %7558, %v7499
      %v7560 = vpop.permute.xlu0 %7559
      %7563 = vset.pattern.permute.xlu0 0
      %7564 = vperm.xlu0 %7563, %v7500
      %v7565 = vpop.permute.xlu0 %7564
      %7568 = vset.pattern.permute.xlu0 0
      %7569 = vperm.xlu0 %7568, %v7501
      %v7570 = vpop.permute.xlu0 %7569
      %v7572 = vmul.f32 %v7487, %v7505
      %v7573 = vmul.f32 %v7486, %v7510
      %v7574 = vmul.f32 %v7485, %v7515
      %v7575 = vmul.f32 %v7484, %v7520
      %v7576 = vmul.f32 %v7483, %v7525
      %v7577 = vmul.f32 %v7482, %v7530
      %v7578 = vmul.f32 %v7481, %v7535
      %v7579 = vmul.f32 %v7480, %v7540
      %v7580 = vmul.f32 %v7479, %v7545
      %v7581 = vmul.f32 %v7478, %v7550
      %v7582 = vmul.f32 %v7477, %v7555
      %v7583 = vmul.f32 %v7476, %v7560
      %v7584 = vmul.f32 %v7475, %v7565
      %v7585 = vmul.f32 %v7474, %v7570
      %v7586 = vrot.slane %v7406, 1
      %v7587 = vrot.slane %v7409, 1
      %v7588 = vrot.slane %v7414, 1
      %v7589 = vrot.slane %v7417, 1
      %v7590 = vrot.slane %v7422, 1
      %v7591 = vrot.slane %v7425, 1
      %v7592 = vrot.slane %v7430, 1
      %v7593 = vrot.slane %v7433, 1
      %v7594 = vrot.slane %v7438, 1
      %v7595 = vrot.slane %v7441, 1
      %v7596 = vrot.slane %v7446, 1
      %v7597 = vrot.slane %v7449, 1
      %v7598 = vrot.slane %v7454, 1
      %v7599 = vrot.slane %v7457, 1
      %v7600 = vsel %vm2203, %v7598, %v7599
      %v7601 = vsel %vm2203, %v7597, %v7598
      %v7602 = vsel %vm2203, %v7596, %v7597
      %v7603 = vsel %vm2203, %v7595, %v7596
      %v7604 = vsel %vm2203, %v7594, %v7595
      %v7605 = vsel %vm2203, %v7593, %v7594
      %v7606 = vsel %vm2203, %v7592, %v7593
      %v7607 = vsel %vm2203, %v7591, %v7592
      %v7608 = vsel %vm2203, %v7590, %v7591
      %v7609 = vsel %vm2203, %v7589, %v7590
      %v7610 = vsel %vm2203, %v7588, %v7589
      %v7611 = vsel %vm2203, %v7587, %v7588
      %v7612 = vsel %vm2203, %v7586, %v7587
      %v7613 = vsel %vm2203, %v7599, %v7586
      %s7614 = scalar_lea.vmem %s3, 112
      %v7615 = vld [vmem:[%s7614] sm:$0xff]
      %v7616 = vld [vmem:[%s7614 + $0x8] sm:$0xff]
      %v7617 = vld [vmem:[%s7614 + $0x10] sm:$0xff]
      %v7618 = vld [vmem:[%s7614 + $0x18] sm:$0xff]
      %v7619 = vld [vmem:[%s7614 + $0x20] sm:$0xff]
      %v7620 = vld [vmem:[%s7614 + $0x28] sm:$0xff]
      %v7621 = vld [vmem:[%s7614 + $0x30] sm:$0xff]
      %v7622 = vld [vmem:[%s7614 + $0x38] sm:$0xff]
      %v7623 = vld [vmem:[%s7614 + $0x40] sm:$0xff]
      %v7624 = vld [vmem:[%s7614 + $0x48] sm:$0xff]
      %v7625 = vld [vmem:[%s7614 + $0x50] sm:$0xff]
      %v7626 = vld [vmem:[%s7614 + $0x58] sm:$0xff]
      %v7627 = vld [vmem:[%s7614 + $0x60] sm:$0xff]
      %v7628 = vld [vmem:[%s7614 + $0x68] sm:$0xff]
      %7630 = vset.pattern.permute.xlu0 0
      %7631 = vperm.xlu0 %7630, %v7615
      %v7632 = vpop.permute.xlu0 %7631
      %7635 = vset.pattern.permute.xlu0 0
      %7636 = vperm.xlu0 %7635, %v7616
      %v7637 = vpop.permute.xlu0 %7636
      %7640 = vset.pattern.permute.xlu0 0
      %7641 = vperm.xlu0 %7640, %v7617
      %v7642 = vpop.permute.xlu0 %7641
      %7645 = vset.pattern.permute.xlu0 0
      %7646 = vperm.xlu0 %7645, %v7618
      %v7647 = vpop.permute.xlu0 %7646
      %7650 = vset.pattern.permute.xlu0 0
      %7651 = vperm.xlu0 %7650, %v7619
      %v7652 = vpop.permute.xlu0 %7651
      %7655 = vset.pattern.permute.xlu0 0
      %7656 = vperm.xlu0 %7655, %v7620
      %v7657 = vpop.permute.xlu0 %7656
      %7660 = vset.pattern.permute.xlu0 0
      %7661 = vperm.xlu0 %7660, %v7621
      %v7662 = vpop.permute.xlu0 %7661
      %7665 = vset.pattern.permute.xlu0 0
      %7666 = vperm.xlu0 %7665, %v7622
      %v7667 = vpop.permute.xlu0 %7666
      %7670 = vset.pattern.permute.xlu0 0
      %7671 = vperm.xlu0 %7670, %v7623
      %v7672 = vpop.permute.xlu0 %7671
      %7675 = vset.pattern.permute.xlu0 0
      %7676 = vperm.xlu0 %7675, %v7624
      %v7677 = vpop.permute.xlu0 %7676
      %7680 = vset.pattern.permute.xlu0 0
      %7681 = vperm.xlu0 %7680, %v7625
      %v7682 = vpop.permute.xlu0 %7681
      %7685 = vset.pattern.permute.xlu0 0
      %7686 = vperm.xlu0 %7685, %v7626
      %v7687 = vpop.permute.xlu0 %7686
      %7690 = vset.pattern.permute.xlu0 0
      %7691 = vperm.xlu0 %7690, %v7627
      %v7692 = vpop.permute.xlu0 %7691
      %7695 = vset.pattern.permute.xlu0 0
      %7696 = vperm.xlu0 %7695, %v7628
      %v7697 = vpop.permute.xlu0 %7696
      %v7699 = vmul.f32 %v7612, %v7632
      %v7700 = vmul.f32 %v7611, %v7637
      %v7701 = vmul.f32 %v7610, %v7642
      %v7702 = vmul.f32 %v7609, %v7647
      %v7703 = vmul.f32 %v7608, %v7652
      %v7704 = vmul.f32 %v7607, %v7657
      %v7705 = vmul.f32 %v7606, %v7662
      %v7706 = vmul.f32 %v7605, %v7667
      %v7707 = vmul.f32 %v7604, %v7672
      %v7708 = vmul.f32 %v7603, %v7677
      %v7709 = vmul.f32 %v7602, %v7682
      %v7710 = vmul.f32 %v7601, %v7687
      %v7711 = vmul.f32 %v7600, %v7692
      %v7712 = vmul.f32 %v7613, %v7697
      %v7713 = vadd.f32 %v7305, %v7572
      %v7714 = vadd.f32 %v7309, %v7573
      %v7715 = vadd.f32 %v7315, %v7574
      %v7716 = vadd.f32 %v7319, %v7575
      %v7717 = vadd.f32 %v7325, %v7576
      %v7718 = vadd.f32 %v7329, %v7577
      %v7719 = vadd.f32 %v7335, %v7578
      %v7720 = vadd.f32 %v7339, %v7579
      %v7721 = vadd.f32 %v7345, %v7580
      %v7722 = vadd.f32 %v7349, %v7581
      %v7723 = vadd.f32 %v7355, %v7582
      %v7724 = vadd.f32 %v7359, %v7583
      %v7725 = vadd.f32 %v7365, %v7584
      %v7726 = vadd.f32 %v7369, %v7585
      %v7727 = vadd.f32 %v7713, %v7699
      %v7728 = vadd.f32 %v7714, %v7700
      %v7729 = vadd.f32 %v7715, %v7701
      %v7730 = vadd.f32 %v7716, %v7702
      %v7731 = vadd.f32 %v7717, %v7703
      %v7732 = vadd.f32 %v7718, %v7704
      %v7733 = vadd.f32 %v7719, %v7705
      %v7734 = vadd.f32 %v7720, %v7706
      %v7735 = vadd.f32 %v7721, %v7707
      %v7736 = vadd.f32 %v7722, %v7708
      %v7737 = vadd.f32 %v7723, %v7709
      %v7738 = vadd.f32 %v7724, %v7710
      %v7739 = vadd.f32 %v7725, %v7711
      %v7740 = vadd.f32 %v7726, %v7712
      %v7741 = vld [vmem:[%s13] sm:$0x1]
      %v7743 = vlaneseq
      %v7744 = vshrl.u32 %v7743, 7
      %v7745 = vsub.s32 0, %v7744
      %v7746 = vrot.slane %v7741, %v7745
      %v7748 = vadd.f32 %v7727, %v7746
      %v7749 = vadd.f32 %v7728, %v7746
      %v7750 = vadd.f32 %v7729, %v7746
      %v7751 = vadd.f32 %v7730, %v7746
      %v7752 = vadd.f32 %v7731, %v7746
      %v7753 = vadd.f32 %v7732, %v7746
      %v7754 = vadd.f32 %v7733, %v7746
      %v7755 = vadd.f32 %v7734, %v7746
      %v7756 = vadd.f32 %v7735, %v7746
      %v7757 = vadd.f32 %v7736, %v7746
      %v7758 = vadd.f32 %v7737, %v7746
      %v7759 = vadd.f32 %v7738, %v7746
      %v7760 = vadd.f32 %v7739, %v7746
      %v7761 = vadd.f32 %v7740, %v7746
      %vm7762 = vcmp.ge.f32.partialorder %v7748, 0.0
      %vm7763 = vcmp.ge.f32.partialorder %v7749, 0.0
      %vm7764 = vcmp.ge.f32.partialorder %v7750, 0.0
      %vm7765 = vcmp.ge.f32.partialorder %v7751, 0.0
      %vm7766 = vcmp.ge.f32.partialorder %v7752, 0.0
      %vm7767 = vcmp.ge.f32.partialorder %v7753, 0.0
      %vm7768 = vcmp.ge.f32.partialorder %v7754, 0.0
      %vm7769 = vcmp.ge.f32.partialorder %v7755, 0.0
      %vm7770 = vcmp.ge.f32.partialorder %v7756, 0.0
      %vm7771 = vcmp.ge.f32.partialorder %v7757, 0.0
      %vm7772 = vcmp.ge.f32.partialorder %v7758, 0.0
      %vm7773 = vcmp.ge.f32.partialorder %v7759, 0.0
      %vm7774 = vcmp.ge.f32.partialorder %v7760, 0.0
      %vm7775 = vcmp.ge.f32.partialorder %v7761, 0.0
      %v7776 = vmul.f32 %v7748, 0.2
      %v7777 = vmul.f32 %v7749, 0.2
      %v7778 = vmul.f32 %v7750, 0.2
      %v7779 = vmul.f32 %v7751, 0.2
      %v7780 = vmul.f32 %v7752, 0.2
      %v7781 = vmul.f32 %v7753, 0.2
      %v7782 = vmul.f32 %v7754, 0.2
      %v7783 = vmul.f32 %v7755, 0.2
      %v7784 = vmul.f32 %v7756, 0.2
      %v7785 = vmul.f32 %v7757, 0.2
      %v7786 = vmul.f32 %v7758, 0.2
      %v7787 = vmul.f32 %v7759, 0.2
      %v7788 = vmul.f32 %v7760, 0.2
      %v7789 = vmul.f32 %v7761, 0.2
      %v7790 = vsel %vm7762, %v7748, %v7776
      %v7791 = vsel %vm7763, %v7749, %v7777
      %v7792 = vsel %vm7764, %v7750, %v7778
      %v7793 = vsel %vm7765, %v7751, %v7779
      %v7794 = vsel %vm7766, %v7752, %v7780
      %v7795 = vsel %vm7767, %v7753, %v7781
      %v7796 = vsel %vm7768, %v7754, %v7782
      %v7797 = vsel %vm7769, %v7755, %v7783
      %v7798 = vsel %vm7770, %v7756, %v7784
      %v7799 = vsel %vm7771, %v7757, %v7785
      %v7800 = vsel %vm7772, %v7758, %v7786
      %v7801 = vsel %vm7773, %v7759, %v7787
      %v7802 = vsel %vm7774, %v7760, %v7788
      %v7803 = vsel %vm7775, %v7761, %v7789
      %v7804 = vpack.c.bf16 %v7791, %v7790
      %v7805 = vpack.c.bf16 %v7793, %v7792
      %v7806 = vpack.c.bf16 %v7795, %v7794
      %v7807 = vpack.c.bf16 %v7797, %v7796
      %v7808 = vpack.c.bf16 %v7799, %v7798
      %v7809 = vpack.c.bf16 %v7801, %v7800
      %v7810 = vpack.c.bf16 %v7803, %v7802
      %v7811 = vld [vmem:[%s14] sm:$0xff]
      %v7812 = vld [vmem:[%s14 + $0x8] sm:$0xf]
      %v7813 = vld [vmem:[%s14 + $0xc] sm:$0xff]
      %v7814 = vld [vmem:[%s14 + $0x14] sm:$0xf]
      %v7815 = vld [vmem:[%s14 + $0x18] sm:$0xff]
      %v7816 = vld [vmem:[%s14 + $0x20] sm:$0xf]
      %v7817 = vld [vmem:[%s14 + $0x24] sm:$0xff]
      %v7818 = vld [vmem:[%s14 + $0x2c] sm:$0xf]
      %v7819 = vld [vmem:[%s14 + $0x30] sm:$0xff]
      %v7820 = vld [vmem:[%s14 + $0x38] sm:$0xf]
      %v7821 = vld [vmem:[%s14 + $0x3c] sm:$0xff]
      %v7822 = vld [vmem:[%s14 + $0x44] sm:$0xf]
      %v7823 = vld [vmem:[%s14 + $0x48] sm:$0xff]
      %v7824 = vld [vmem:[%s14 + $0x50] sm:$0xf]
      %v7825 = vld [vmem:[%s14 + $0x54] sm:$0xff]
      %v7826 = vld [vmem:[%s14 + $0x5c] sm:$0xf]
      %v7827 = vld [vmem:[%s14 + $0x60] sm:$0xff]
      %v7828 = vld [vmem:[%s14 + $0x68] sm:$0xf]
      %v7829 = vld [vmem:[%s14 + $0x6c] sm:$0xff]
      %v7830 = vld [vmem:[%s14 + $0x74] sm:$0xf]
      %v7831 = vld [vmem:[%s14 + $0x78] sm:$0xff]
      %v7832 = vld [vmem:[%s14 + $0x80] sm:$0xf]
      %v7833 = vld [vmem:[%s14 + $0x84] sm:$0xff]
      %v7834 = vld [vmem:[%s14 + $0x8c] sm:$0xf]
      %v7835 = vld [vmem:[%s14 + $0x90] sm:$0xff]
      %v7836 = vld [vmem:[%s14 + $0x98] sm:$0xf]
      %v7837 = vld [vmem:[%s14 + $0x9c] sm:$0xff]
      %v7838 = vld [vmem:[%s14 + $0xa4] sm:$0xf]
      %v7839 = vld [vmem:[%s14 + $0xa8] sm:$0xff]
      %v7840 = vld [vmem:[%s14 + $0xb0] sm:$0xf]
      %v7841 = vld [vmem:[%s14 + $0xb4] sm:$0xff]
      %v7842 = vld [vmem:[%s14 + $0xbc] sm:$0xf]
      %v7875 = vunpack.c.l.b16 %v7811
      %v7876 = vunpack.c.h.b16 %v7811
      %v7877 = vunpack.c.l.b16 %v7812
      %v7878 = vunpack.c.l.b16 %v7813
      %v7879 = vunpack.c.h.b16 %v7813
      %v7880 = vunpack.c.l.b16 %v7814
      %v7881 = vunpack.c.l.b16 %v7815
      %v7882 = vunpack.c.h.b16 %v7815
      %v7883 = vunpack.c.l.b16 %v7816
      %v7884 = vunpack.c.l.b16 %v7817
      %v7885 = vunpack.c.h.b16 %v7817
      %v7886 = vunpack.c.l.b16 %v7818
      %v7887 = vunpack.c.l.b16 %v7819
      %v7888 = vunpack.c.h.b16 %v7819
      %v7889 = vunpack.c.l.b16 %v7820
      %v7890 = vunpack.c.l.b16 %v7821
      %v7891 = vunpack.c.h.b16 %v7821
      %v7892 = vunpack.c.l.b16 %v7822
      %v7893 = vunpack.c.l.b16 %v7823
      %v7894 = vunpack.c.h.b16 %v7823
      %v7895 = vunpack.c.l.b16 %v7824
      %v7896 = vunpack.c.l.b16 %v7825
      %v7897 = vunpack.c.h.b16 %v7825
      %v7898 = vunpack.c.l.b16 %v7826
      %v7899 = vunpack.c.l.b16 %v7827
      %v7900 = vunpack.c.h.b16 %v7827
      %v7901 = vunpack.c.l.b16 %v7828
      %v7902 = vunpack.c.l.b16 %v7829
      %v7903 = vunpack.c.h.b16 %v7829
      %v7904 = vunpack.c.l.b16 %v7830
      %v7905 = vunpack.c.l.b16 %v7831
      %v7906 = vunpack.c.h.b16 %v7831
      %v7907 = vunpack.c.l.b16 %v7832
      %v7908 = vunpack.c.l.b16 %v7833
      %v7909 = vunpack.c.h.b16 %v7833
      %v7910 = vunpack.c.l.b16 %v7834
      %v7911 = vunpack.c.l.b16 %v7835
      %v7912 = vunpack.c.h.b16 %v7835
      %v7913 = vunpack.c.l.b16 %v7836
      %v7914 = vunpack.c.l.b16 %v7837
      %v7915 = vunpack.c.h.b16 %v7837
      %v7916 = vunpack.c.l.b16 %v7838
      %v7917 = vunpack.c.l.b16 %v7839
      %v7918 = vunpack.c.h.b16 %v7839
      %v7919 = vunpack.c.l.b16 %v7840
      %v7920 = vunpack.c.l.b16 %v7841
      %v7921 = vunpack.c.h.b16 %v7841
      %v7922 = vunpack.c.l.b16 %v7842
      %v7923 = vpack.c.b16 %v7878, %v7875
      %v7924 = vpack.c.b16 %v7879, %v7876
      %v7925 = vpack.c.b16 %v7880, %v7877
      %v7926 = vpack.c.b16 %v7884, %v7881
      %v7927 = vpack.c.b16 %v7885, %v7882
      %v7928 = vpack.c.b16 %v7886, %v7883
      %v7929 = vpack.c.b16 %v7890, %v7887
      %v7930 = vpack.c.b16 %v7891, %v7888
      %v7931 = vpack.c.b16 %v7892, %v7889
      %v7932 = vpack.c.b16 %v7896, %v7893
      %v7933 = vpack.c.b16 %v7897, %v7894
      %v7934 = vpack.c.b16 %v7898, %v7895
      %v7935 = vpack.c.b16 %v7902, %v7899
      %v7936 = vpack.c.b16 %v7903, %v7900
      %v7937 = vpack.c.b16 %v7904, %v7901
      %v7938 = vpack.c.b16 %v7908, %v7905
      %v7939 = vpack.c.b16 %v7909, %v7906
      %v7940 = vpack.c.b16 %v7910, %v7907
      %v7941 = vpack.c.b16 %v7914, %v7911
      %v7942 = vpack.c.b16 %v7915, %v7912
      %v7943 = vpack.c.b16 %v7916, %v7913
      %v7944 = vpack.c.b16 %v7920, %v7917
      %v7945 = vpack.c.b16 %v7921, %v7918
      %v7946 = vpack.c.b16 %v7922, %v7919
      %7971 = vmatprep.subr.bf16.mxu0 %v7924
      %7972 = vmatpush1.bf16.msra.mxu0 %v7923
      %7973 = vmatprep.subr.bf16.mxu0 %v7927
      %7974 = vmatpush1.bf16.msra.mxu0 %v7926
      %7975 = vmatprep.subr.bf16.mxu0 %v7930
      %7976 = vmatpush1.bf16.msra.mxu0 %v7929
      %7977 = vmatprep.subr.bf16.mxu0 %v7933
      %7978 = vmatpush1.bf16.msra.mxu0 %v7932
      %7979 = vmatprep.subr.bf16.mxu0 %v7936
      %7980 = vmatpush1.bf16.msra.mxu0 %v7935
      %7981 = vmatprep.subr.bf16.mxu0 %v7939
      %7982 = vmatpush1.bf16.msra.mxu0 %v7938
      %7983 = vmatprep.subr.bf16.mxu0 %v7942
      %7984 = vmatpush1.bf16.msra.mxu0 %v7941
      %7985 = vmatprep.subr.bf16.mxu0 %v7945
      %7986 = vmatpush1.bf16.msra.mxu0 %v7944
      %7987 = vmatprep.subr.bf16.mxu0 0
      %7988 = vmatpush1.bf16.msra.mxu0 0
      %7989 = vmatprep.subr.bf16.mxu0 0
      %7990 = vmatpush1.bf16.msra.mxu0 0
      %7991 = vmatprep.subr.bf16.mxu0 0
      %7992 = vmatpush1.bf16.msra.mxu0 0
      %7993 = vmatprep.subr.bf16.mxu0 0
      %7994 = vmatpush1.bf16.msra.mxu0 0
      %7995 = vmatprep.subr.bf16.mxu0 0
      %7996 = vmatpush1.bf16.msra.mxu0 0
      %7997 = vmatprep.subr.bf16.mxu0 0
      %7998 = vmatpush1.bf16.msra.mxu0 0
      %7999 = vmatprep.subr.bf16.mxu0 0
      %8000 = vmatpush1.bf16.msra.mxu0 0
      %8001 = vmatprep.subr.bf16.mxu0 0
      %8002 = vmatpush1.bf16.msra.mxu0 0
      %8003 = vmatprep.mubr.bf16.mxu0 0
      %8004 = vmatmul.mubr.bf16.gmra.mrb[0].mxu0 %v7804
      %v8005 = vpop.f32.mrb[0].mxu0
      %v8006 = vadd.f32 0.0, %v8005
      %v8007 = vpop.f32.mrb[0].mxu0
      %v8008 = vadd.f32 0.0, %v8007
      %v8009 = vpop.f32.mrb[0].mxu0
      %v8010 = vadd.f32 0.0, %v8009
      %v8011 = vpop.f32.mrb[0].mxu0
      %v8012 = vadd.f32 0.0, %v8011
      %8013 = vmatprep.mubr.bf16.mxu0 0
      %8014 = vmatmul.mubr.bf16.gmra.mrb[0].mxu0 %v7805
      %v8015 = vpop.f32.mrb[0].mxu0
      %v8016 = vadd.f32 0.0, %v8015
      %v8017 = vpop.f32.mrb[0].mxu0
      %v8018 = vadd.f32 0.0, %v8017
      %v8019 = vpop.f32.mrb[0].mxu0
      %v8020 = vadd.f32 0.0, %v8019
      %v8021 = vpop.f32.mrb[0].mxu0
      %v8022 = vadd.f32 0.0, %v8021
      %8023 = vmatprep.mubr.bf16.mxu0 0
      %8024 = vmatmul.mubr.bf16.gmra.mrb[0].mxu0 %v7806
      %v8025 = vpop.f32.mrb[0].mxu0
      %v8026 = vadd.f32 0.0, %v8025
      %v8027 = vpop.f32.mrb[0].mxu0
      %v8028 = vadd.f32 0.0, %v8027
      %v8029 = vpop.f32.mrb[0].mxu0
      %v8030 = vadd.f32 0.0, %v8029
      %v8031 = vpop.f32.mrb[0].mxu0
      %v8032 = vadd.f32 0.0, %v8031
      %8033 = vmatprep.mubr.bf16.mxu0 0
      %8034 = vmatmul.mubr.bf16.gmra.mrb[0].mxu0 %v7807
      %v8035 = vpop.f32.mrb[0].mxu0
      %v8036 = vadd.f32 0.0, %v8035
      %v8037 = vpop.f32.mrb[0].mxu0
      %v8038 = vadd.f32 0.0, %v8037
      %v8039 = vpop.f32.mrb[0].mxu0
      %v8040 = vadd.f32 0.0, %v8039
      %v8041 = vpop.f32.mrb[0].mxu0
      %v8042 = vadd.f32 0.0, %v8041
      %8043 = vmatprep.mubr.bf16.mxu0 0
      %8044 = vmatmul.mubr.bf16.gmra.mrb[0].mxu0 %v7808
      %v8045 = vpop.f32.mrb[0].mxu0
      %v8046 = vadd.f32 0.0, %v8045
      %v8047 = vpop.f32.mrb[0].mxu0
      %v8048 = vadd.f32 0.0, %v8047
      %v8049 = vpop.f32.mrb[0].mxu0
      %v8050 = vadd.f32 0.0, %v8049
      %v8051 = vpop.f32.mrb[0].mxu0
      %v8052 = vadd.f32 0.0, %v8051
      %8053 = vmatprep.mubr.bf16.mxu0 0
      %8054 = vmatmul.mubr.bf16.gmra.mrb[0].mxu0 %v7809
      %v8055 = vpop.f32.mrb[0].mxu0
      %v8056 = vadd.f32 0.0, %v8055
      %v8057 = vpop.f32.mrb[0].mxu0
      %v8058 = vadd.f32 0.0, %v8057
      %v8059 = vpop.f32.mrb[0].mxu0
      %v8060 = vadd.f32 0.0, %v8059
      %v8061 = vpop.f32.mrb[0].mxu0
      %v8062 = vadd.f32 0.0, %v8061
      %8063 = vmatprep.mubr.bf16.mxu0 0
      %8064 = vmatmul.mubr.bf16.gmra.mrb[0].mxu0 %v7810
      %v8065 = vpop.f32.mrb[0].mxu0
      %v8066 = vadd.f32 0.0, %v8065
      %v8067 = vpop.f32.mrb[0].mxu0
      %v8068 = vadd.f32 0.0, %v8067
      %v8069 = vpop.f32.mrb[0].mxu0
      %v8070 = vadd.f32 0.0, %v8069
      %v8071 = vpop.f32.mrb[0].mxu0
      %v8072 = vadd.f32 0.0, %v8071
      %8073 = vdwg.mxu0
      %8074 = vmatprep.subr.bf16.mxu0 0
      %8075 = vmatpush1.bf16.msra.mxu0 %v7925
      %8076 = vmatprep.subr.bf16.mxu0 0
      %8077 = vmatpush1.bf16.msra.mxu0 %v7928
      %8078 = vmatprep.subr.bf16.mxu0 0
      %8079 = vmatpush1.bf16.msra.mxu0 %v7931
      %8080 = vmatprep.subr.bf16.mxu0 0
      %8081 = vmatpush1.bf16.msra.mxu0 %v7934
      %8082 = vmatprep.subr.bf16.mxu0 0
      %8083 = vmatpush1.bf16.msra.mxu0 %v7937
      %8084 = vmatprep.subr.bf16.mxu0 0
      %8085 = vmatpush1.bf16.msra.mxu0 %v7940
      %8086 = vmatprep.subr.bf16.mxu0 0
      %8087 = vmatpush1.bf16.msra.mxu0 %v7943
      %8088 = vmatprep.subr.bf16.mxu0 0
      %8089 = vmatpush1.bf16.msra.mxu0 %v7946
      %8090 = vmatprep.subr.bf16.mxu0 0
      %8091 = vmatpush1.bf16.msra.mxu0 0
      %8092 = vmatprep.subr.bf16.mxu0 0
      %8093 = vmatpush1.bf16.msra.mxu0 0
      %8094 = vmatprep.subr.bf16.mxu0 0
      %8095 = vmatpush1.bf16.msra.mxu0 0
      %8096 = vmatprep.subr.bf16.mxu0 0
      %8097 = vmatpush1.bf16.msra.mxu0 0
      %8098 = vmatprep.subr.bf16.mxu0 0
      %8099 = vmatpush1.bf16.msra.mxu0 0
      %8100 = vmatprep.subr.bf16.mxu0 0
      %8101 = vmatpush1.bf16.msra.mxu0 0
      %8102 = vmatprep.subr.bf16.mxu0 0
      %8103 = vmatpush1.bf16.msra.mxu0 0
      %8104 = vmatprep.subr.bf16.mxu0 0
      %8105 = vmatpush1.bf16.msra.mxu0 0
      %8106 = vmatprep.mubr.bf16.mxu0 0
      %8107 = vmatmul.mubr.bf16.gmra.mrb[0].mxu0 %v7804
      %v8108 = vpop.f32.mrb[0].mxu0
      %v8109 = vadd.f32 0.0, %v8108
      %v8110 = vpop.f32.mrb[0].mxu0
      %v8111 = vpop.f32.mrb[0].mxu0
      %v8112 = vadd.f32 0.0, %v8111
      %v8113 = vpop.f32.mrb[0].mxu0
      %8114 = vmatprep.mubr.bf16.mxu0 0
      %8115 = vmatmul.mubr.bf16.gmra.mrb[0].mxu0 %v7805
      %v8116 = vpop.f32.mrb[0].mxu0
      %v8117 = vadd.f32 0.0, %v8116
      %v8118 = vpop.f32.mrb[0].mxu0
      %v8119 = vpop.f32.mrb[0].mxu0
      %v8120 = vadd.f32 0.0, %v8119
      %v8121 = vpop.f32.mrb[0].mxu0
      %8122 = vmatprep.mubr.bf16.mxu0 0
      %8123 = vmatmul.mubr.bf16.gmra.mrb[0].mxu0 %v7806
      %v8124 = vpop.f32.mrb[0].mxu0
      %v8125 = vadd.f32 0.0, %v8124
      %v8126 = vpop.f32.mrb[0].mxu0
      %v8127 = vpop.f32.mrb[0].mxu0
      %v8128 = vadd.f32 0.0, %v8127
      %v8129 = vpop.f32.mrb[0].mxu0
      %8130 = vmatprep.mubr.bf16.mxu0 0
      %8131 = vmatmul.mubr.bf16.gmra.mrb[0].mxu0 %v7807
      %v8132 = vpop.f32.mrb[0].mxu0
      %v8133 = vadd.f32 0.0, %v8132
      %v8134 = vpop.f32.mrb[0].mxu0
      %v8135 = vpop.f32.mrb[0].mxu0
      %v8136 = vadd.f32 0.0, %v8135
      %v8137 = vpop.f32.mrb[0].mxu0
      %8138 = vmatprep.mubr.bf16.mxu0 0
      %8139 = vmatmul.mubr.bf16.gmra.mrb[0].mxu0 %v7808
      %v8140 = vpop.f32.mrb[0].mxu0
      %v8141 = vadd.f32 0.0, %v8140
      %v8142 = vpop.f32.mrb[0].mxu0
      %v8143 = vpop.f32.mrb[0].mxu0
      %v8144 = vadd.f32 0.0, %v8143
      %v8145 = vpop.f32.mrb[0].mxu0
      %8146 = vmatprep.mubr.bf16.mxu0 0
      %8147 = vmatmul.mubr.bf16.gmra.mrb[0].mxu0 %v7809
      %v8148 = vpop.f32.mrb[0].mxu0
      %v8149 = vadd.f32 0.0, %v8148
      %v8150 = vpop.f32.mrb[0].mxu0
      %v8151 = vpop.f32.mrb[0].mxu0
      %v8152 = vadd.f32 0.0, %v8151
      %v8153 = vpop.f32.mrb[0].mxu0
      %8154 = vmatprep.mubr.bf16.mxu0 0
      %8155 = vmatmul.mubr.bf16.gmra.mrb[0].mxu0 %v7810
      %v8156 = vpop.f32.mrb[0].mxu0
      %v8157 = vadd.f32 0.0, %v8156
      %v8158 = vpop.f32.mrb[0].mxu0
      %v8159 = vpop.f32.mrb[0].mxu0
      %v8160 = vadd.f32 0.0, %v8159
      %v8161 = vpop.f32.mrb[0].mxu0
      %8162 = vdwg.mxu0
      %v8163 = vrot.slane %v8006, 7
      %v8164 = vrot.slane %v8010, 7
      %v8165 = vrot.slane %v8016, 7
      %v8166 = vrot.slane %v8020, 7
      %v8167 = vrot.slane %v8026, 7
      %v8168 = vrot.slane %v8030, 7
      %v8169 = vrot.slane %v8036, 7
      %v8170 = vrot.slane %v8040, 7
      %v8171 = vrot.slane %v8046, 7
      %v8172 = vrot.slane %v8050, 7
      %v8173 = vrot.slane %v8056, 7
      %v8174 = vrot.slane %v8060, 7
      %v8175 = vrot.slane %v8066, 7
      %v8176 = vrot.slane %v8070, 7
      %v8177 = vsel %vm1698, %v8175, %v8176
      %v8178 = vsel %vm1698, %v8174, %v8175
      %v8179 = vsel %vm1698, %v8173, %v8174
      %v8180 = vsel %vm1698, %v8172, %v8173
      %v8181 = vsel %vm1698, %v8171, %v8172
      %v8182 = vsel %vm1698, %v8170, %v8171
      %v8183 = vsel %vm1698, %v8169, %v8170
      %v8184 = vsel %vm1698, %v8168, %v8169
      %v8185 = vsel %vm1698, %v8167, %v8168
      %v8186 = vsel %vm1698, %v8166, %v8167
      %v8187 = vsel %vm1698, %v8165, %v8166
      %v8188 = vsel %vm1698, %v8164, %v8165
      %v8189 = vsel %vm1698, %v8163, %v8164
      %v8190 = vsel %vm1698, %v8176, %v8163
      %v8191 = vmul.f32 %v8190, %v7505
      %v8192 = vmul.f32 %v8189, %v7510
      %v8193 = vmul.f32 %v8188, %v7515
      %v8194 = vmul.f32 %v8187, %v7520
      %v8195 = vmul.f32 %v8186, %v7525
      %v8196 = vmul.f32 %v8185, %v7530
      %v8197 = vmul.f32 %v8184, %v7535
      %v8198 = vmul.f32 %v8183, %v7540
      %v8199 = vmul.f32 %v8182, %v7545
      %v8200 = vmul.f32 %v8181, %v7550
      %v8201 = vmul.f32 %v8180, %v7555
      %v8202 = vmul.f32 %v8179, %v7560
      %v8203 = vmul.f32 %v8178, %v7565
      %v8204 = vmul.f32 %v8177, %v7570
      %v8205 = vrot.slane %v8109, 1
      %v8206 = vrot.slane %v8112, 1
      %v8207 = vrot.slane %v8117, 1
      %v8208 = vrot.slane %v8120, 1
      %v8209 = vrot.slane %v8125, 1
      %v8210 = vrot.slane %v8128, 1
      %v8211 = vrot.slane %v8133, 1
      %v8212 = vrot.slane %v8136, 1
      %v8213 = vrot.slane %v8141, 1
      %v8214 = vrot.slane %v8144, 1
      %v8215 = vrot.slane %v8149, 1
      %v8216 = vrot.slane %v8152, 1
      %v8217 = vrot.slane %v8157, 1
      %v8218 = vrot.slane %v8160, 1
      %v8219 = vsel %vm2203, %v8217, %v8218
      %v8220 = vsel %vm2203, %v8216, %v8217
      %v8221 = vsel %vm2203, %v8215, %v8216
      %v8222 = vsel %vm2203, %v8214, %v8215
      %v8223 = vsel %vm2203, %v8213, %v8214
      %v8224 = vsel %vm2203, %v8212, %v8213
      %v8225 = vsel %vm2203, %v8211, %v8212
      %v8226 = vsel %vm2203, %v8210, %v8211
      %v8227 = vsel %vm2203, %v8209, %v8210
      %v8228 = vsel %vm2203, %v8208, %v8209
      %v8229 = vsel %vm2203, %v8207, %v8208
      %v8230 = vsel %vm2203, %v8206, %v8207
      %v8231 = vsel %vm2203, %v8205, %v8206
      %v8232 = vsel %vm2203, %v8218, %v8205
      %v8233 = vmul.f32 %v8231, %v7632
      %v8234 = vmul.f32 %v8230, %v7637
      %v8235 = vmul.f32 %v8229, %v7642
      %v8236 = vmul.f32 %v8228, %v7647
      %v8237 = vmul.f32 %v8227, %v7652
      %v8238 = vmul.f32 %v8226, %v7657
      %v8239 = vmul.f32 %v8225, %v7662
      %v8240 = vmul.f32 %v8224, %v7667
      %v8241 = vmul.f32 %v8223, %v7672
      %v8242 = vmul.f32 %v8222, %v7677
      %v8243 = vmul.f32 %v8221, %v7682
      %v8244 = vmul.f32 %v8220, %v7687
      %v8245 = vmul.f32 %v8219, %v7692
      %v8246 = vmul.f32 %v8232, %v7697
      %v8247 = vadd.f32 %v8008, %v8191
      %v8248 = vadd.f32 %v8012, %v8192
      %v8249 = vadd.f32 %v8018, %v8193
      %v8250 = vadd.f32 %v8022, %v8194
      %v8251 = vadd.f32 %v8028, %v8195
      %v8252 = vadd.f32 %v8032, %v8196
      %v8253 = vadd.f32 %v8038, %v8197
      %v8254 = vadd.f32 %v8042, %v8198
      %v8255 = vadd.f32 %v8048, %v8199
      %v8256 = vadd.f32 %v8052, %v8200
      %v8257 = vadd.f32 %v8058, %v8201
      %v8258 = vadd.f32 %v8062, %v8202
      %v8259 = vadd.f32 %v8068, %v8203
      %v8260 = vadd.f32 %v8072, %v8204
      %v8261 = vadd.f32 %v8247, %v8233
      %v8262 = vadd.f32 %v8248, %v8234
      %v8263 = vadd.f32 %v8249, %v8235
      %v8264 = vadd.f32 %v8250, %v8236
      %v8265 = vadd.f32 %v8251, %v8237
      %v8266 = vadd.f32 %v8252, %v8238
      %v8267 = vadd.f32 %v8253, %v8239
      %v8268 = vadd.f32 %v8254, %v8240
      %v8269 = vadd.f32 %v8255, %v8241
      %v8270 = vadd.f32 %v8256, %v8242
      %v8271 = vadd.f32 %v8257, %v8243
      %v8272 = vadd.f32 %v8258, %v8244
      %v8273 = vadd.f32 %v8259, %v8245
      %v8274 = vadd.f32 %v8260, %v8246
      %v8275 = vld [vmem:[%s15] sm:$0x1]
      %v8277 = vlaneseq
      %v8278 = vshrl.u32 %v8277, 7
      %v8279 = vsub.s32 0, %v8278
      %v8280 = vrot.slane %v8275, %v8279
      %v8282 = vadd.f32 %v8261, %v8280
      %v8283 = vadd.f32 %v8262, %v8280
      %v8284 = vadd.f32 %v8263, %v8280
      %v8285 = vadd.f32 %v8264, %v8280
      %v8286 = vadd.f32 %v8265, %v8280
      %v8287 = vadd.f32 %v8266, %v8280
      %v8288 = vadd.f32 %v8267, %v8280
      %v8289 = vadd.f32 %v8268, %v8280
      %v8290 = vadd.f32 %v8269, %v8280
      %v8291 = vadd.f32 %v8270, %v8280
      %v8292 = vadd.f32 %v8271, %v8280
      %v8293 = vadd.f32 %v8272, %v8280
      %v8294 = vadd.f32 %v8273, %v8280
      %v8295 = vadd.f32 %v8274, %v8280
      %vm8296 = vcmp.ge.f32.partialorder %v8282, 0.0
      %vm8297 = vcmp.ge.f32.partialorder %v8283, 0.0
      %vm8298 = vcmp.ge.f32.partialorder %v8284, 0.0
      %vm8299 = vcmp.ge.f32.partialorder %v8285, 0.0
      %vm8300 = vcmp.ge.f32.partialorder %v8286, 0.0
      %vm8301 = vcmp.ge.f32.partialorder %v8287, 0.0
      %vm8302 = vcmp.ge.f32.partialorder %v8288, 0.0
      %vm8303 = vcmp.ge.f32.partialorder %v8289, 0.0
      %vm8304 = vcmp.ge.f32.partialorder %v8290, 0.0
      %vm8305 = vcmp.ge.f32.partialorder %v8291, 0.0
      %vm8306 = vcmp.ge.f32.partialorder %v8292, 0.0
      %vm8307 = vcmp.ge.f32.partialorder %v8293, 0.0
      %vm8308 = vcmp.ge.f32.partialorder %v8294, 0.0
      %vm8309 = vcmp.ge.f32.partialorder %v8295, 0.0
      %v8310 = vmul.f32 %v8282, 0.2
      %v8311 = vmul.f32 %v8283, 0.2
      %v8312 = vmul.f32 %v8284, 0.2
      %v8313 = vmul.f32 %v8285, 0.2
      %v8314 = vmul.f32 %v8286, 0.2
      %v8315 = vmul.f32 %v8287, 0.2
      %v8316 = vmul.f32 %v8288, 0.2
      %v8317 = vmul.f32 %v8289, 0.2
      %v8318 = vmul.f32 %v8290, 0.2
      %v8319 = vmul.f32 %v8291, 0.2
      %v8320 = vmul.f32 %v8292, 0.2
      %v8321 = vmul.f32 %v8293, 0.2
      %v8322 = vmul.f32 %v8294, 0.2
      %v8323 = vmul.f32 %v8295, 0.2
      %v8324 = vsel %vm8296, %v8282, %v8310
      %v8325 = vsel %vm8297, %v8283, %v8311
      %v8326 = vsel %vm8298, %v8284, %v8312
      %v8327 = vsel %vm8299, %v8285, %v8313
      %v8328 = vsel %vm8300, %v8286, %v8314
      %v8329 = vsel %vm8301, %v8287, %v8315
      %v8330 = vsel %vm8302, %v8288, %v8316
      %v8331 = vsel %vm8303, %v8289, %v8317
      %v8332 = vsel %vm8304, %v8290, %v8318
      %v8333 = vsel %vm8305, %v8291, %v8319
      %v8334 = vsel %vm8306, %v8292, %v8320
      %v8335 = vsel %vm8307, %v8293, %v8321
      %v8336 = vsel %vm8308, %v8294, %v8322
      %v8337 = vsel %vm8309, %v8295, %v8323
      %v8338 = vld [vmem:[%s18] sm:$0xf]
      %v8339 = vld [vmem:[%s18 + $0x4] sm:$0xf]
      %v8340 = vld [vmem:[%s18 + $0x8] sm:$0xf]
      %v8341 = vld [vmem:[%s18 + $0xc] sm:$0xf]
      %v8342 = vld [vmem:[%s18 + $0x10] sm:$0xf]
      %v8343 = vld [vmem:[%s18 + $0x14] sm:$0xf]
      %v8344 = vld [vmem:[%s18 + $0x18] sm:$0xf]
      %v8345 = vld [vmem:[%s18 + $0x1c] sm:$0xf]
      %v8346 = vpack.c.bf16 %v8325, %v8324
      %v8347 = vpack.c.bf16 %v8327, %v8326
      %v8348 = vpack.c.bf16 %v8329, %v8328
      %v8349 = vpack.c.bf16 %v8331, %v8330
      %v8350 = vpack.c.bf16 %v8333, %v8332
      %v8351 = vpack.c.bf16 %v8335, %v8334
      %v8352 = vpack.c.bf16 %v8337, %v8336
      %v8361 = vunpack.c.l.b16 %v8338
      %v8362 = vunpack.c.l.b16 %v8339
      %v8363 = vunpack.c.l.b16 %v8340
      %v8364 = vunpack.c.l.b16 %v8341
      %v8365 = vunpack.c.l.b16 %v8342
      %v8366 = vunpack.c.l.b16 %v8343
      %v8367 = vunpack.c.l.b16 %v8344
      %v8368 = vunpack.c.l.b16 %v8345
      %v8369 = vpack.c.b16 %v8362, %v8361
      %v8370 = vpack.c.b16 %v8364, %v8363
      %v8371 = vpack.c.b16 %v8366, %v8365
      %v8372 = vpack.c.b16 %v8368, %v8367
      %vm8373 = vcmask 916480
      %v8375 = vsel %vm8373, %v8369, 0
      %v8378 = vsel %vm8373, %v8370, 0
      %v8381 = vsel %vm8373, %v8371, 0
      %v8384 = vsel %vm8373, %v8372, 0
      %8386 = vmatprep.subr.bf16.mxu0 0
      %8387 = vmatpush1.bf16.msra.mxu0 %v8346
      %8388 = vmatprep.subr.bf16.mxu0 0
      %8389 = vmatpush1.bf16.msra.mxu0 %v8347
      %8390 = vmatprep.subr.bf16.mxu0 0
      %8391 = vmatpush1.bf16.msra.mxu0 %v8348
      %8392 = vmatprep.subr.bf16.mxu0 0
      %8393 = vmatpush1.bf16.msra.mxu0 %v8349
      %8394 = vmatprep.subr.bf16.mxu0 0
      %8395 = vmatpush1.bf16.msra.mxu0 %v8350
      %8396 = vmatprep.subr.bf16.mxu0 0
      %8397 = vmatpush1.bf16.msra.mxu0 %v8351
      %8398 = vmatprep.subr.bf16.mxu0 0
      %8399 = vmatpush1.bf16.msra.mxu0 %v8352
      %8400 = vmatprep.subr.bf16.mxu0 0
      %8401 = vmatpush1.bf16.msra.mxu0 0
      %8402 = vmatprep.subr.bf16.mxu0 0
      %8403 = vmatpush1.bf16.msra.mxu0 0
      %8404 = vmatprep.subr.bf16.mxu0 0
      %8405 = vmatpush1.bf16.msra.mxu0 0
      %8406 = vmatprep.subr.bf16.mxu0 0
      %8407 = vmatpush1.bf16.msra.mxu0 0
      %8408 = vmatprep.subr.bf16.mxu0 0
      %8409 = vmatpush1.bf16.msra.mxu0 0
      %8410 = vmatprep.subr.bf16.mxu0 0
      %8411 = vmatpush1.bf16.msra.mxu0 0
      %8412 = vmatprep.subr.bf16.mxu0 0
      %8413 = vmatpush1.bf16.msra.mxu0 0
      %8414 = vmatprep.subr.bf16.mxu0 0
      %8415 = vmatpush1.bf16.msra.mxu0 0
      %8416 = vmatprep.subr.bf16.mxu0 0
      %8417 = vmatpush1.bf16.msra.mxu0 0
      %8418 = vmatprep.mubr.bf16.mxu0 0
      %8419 = vmatmul.mubr.bf16.gmra.mrb[0].mxu0 %v8375
      %v8420 = vpop.f32.mrb[0].mxu0
      %v8421 = vadd.f32 0.0, %v8420
      %v8422 = vpop.f32.mrb[0].mxu0
      %v8423 = vpop.f32.mrb[0].mxu0
      %v8424 = vadd.f32 0.0, %v8423
      %v8425 = vpop.f32.mrb[0].mxu0
      %8426 = vmatprep.mubr.bf16.mxu0 0
      %8427 = vmatmul.mubr.bf16.gmra.mrb[0].mxu0 %v8378
      %v8428 = vpop.f32.mrb[0].mxu0
      %v8429 = vadd.f32 0.0, %v8428
      %v8430 = vpop.f32.mrb[0].mxu0
      %v8431 = vpop.f32.mrb[0].mxu0
      %v8432 = vadd.f32 0.0, %v8431
      %v8433 = vpop.f32.mrb[0].mxu0
      %8434 = vmatprep.mubr.bf16.mxu0 0
      %8435 = vmatmul.mubr.bf16.gmra.mrb[0].mxu0 %v8381
      %v8436 = vpop.f32.mrb[0].mxu0
      %v8437 = vadd.f32 0.0, %v8436
      %v8438 = vpop.f32.mrb[0].mxu0
      %v8439 = vpop.f32.mrb[0].mxu0
      %v8440 = vadd.f32 0.0, %v8439
      %v8441 = vpop.f32.mrb[0].mxu0
      %8442 = vmatprep.mubr.bf16.mxu0 0
      %8443 = vmatmul.mubr.bf16.gmra.mrb[0].mxu0 %v8384
      %v8444 = vpop.f32.mrb[0].mxu0
      %v8445 = vadd.f32 0.0, %v8444
      %v8446 = vpop.f32.mrb[0].mxu0
      %v8447 = vpop.f32.mrb[0].mxu0
      %v8448 = vadd.f32 0.0, %v8447
      %v8449 = vpop.f32.mrb[0].mxu0
      %8450 = vdwg.mxu0
      %v8451 = vpack.c.bf16 %v8424, %v8421
      %v8452 = vpack.c.bf16 %v8432, %v8429
      %v8453 = vpack.c.bf16 %v8440, %v8437
      %v8454 = vpack.c.bf16 %v8448, %v8445
      %v8455 = vld [vmem:[%s19] sm:$0xf]
      %v8456 = vld [vmem:[%s19 + $0x4] sm:$0xf]
      %v8457 = vld [vmem:[%s19 + $0x8] sm:$0xf]
      %v8458 = vld [vmem:[%s19 + $0xc] sm:$0xf]
      %v8459 = vld [vmem:[%s19 + $0x10] sm:$0xf]
      %v8460 = vld [vmem:[%s19 + $0x14] sm:$0xf]
      %v8461 = vld [vmem:[%s19 + $0x18] sm:$0xf]
      %v8462 = vld [vmem:[%s19 + $0x1c] sm:$0xf]
      %v8463 = vld [vmem:[%s19 + $0x20] sm:$0xf]
      %v8464 = vld [vmem:[%s19 + $0x24] sm:$0xf]
      %v8465 = vld [vmem:[%s19 + $0x28] sm:$0xf]
      %v8466 = vld [vmem:[%s19 + $0x2c] sm:$0xf]
      %v8467 = vld [vmem:[%s19 + $0x30] sm:$0xf]
      %v8468 = vld [vmem:[%s19 + $0x34] sm:$0xf]
      %v8469 = vld [vmem:[%s19 + $0x38] sm:$0xf]
      %v8470 = vld [vmem:[%s19 + $0x3c] sm:$0xf]
      %v8487 = vunpack.c.l.b16 %v8455
      %v8488 = vunpack.c.l.b16 %v8456
      %v8489 = vunpack.c.l.b16 %v8457
      %v8490 = vunpack.c.l.b16 %v8458
      %v8491 = vunpack.c.l.b16 %v8459
      %v8492 = vunpack.c.l.b16 %v8460
      %v8493 = vunpack.c.l.b16 %v8461
      %v8494 = vunpack.c.l.b16 %v8462
      %v8495 = vunpack.c.l.b16 %v8463
      %v8496 = vunpack.c.l.b16 %v8464
      %v8497 = vunpack.c.l.b16 %v8465
      %v8498 = vunpack.c.l.b16 %v8466
      %v8499 = vunpack.c.l.b16 %v8467
      %v8500 = vunpack.c.l.b16 %v8468
      %v8501 = vunpack.c.l.b16 %v8469
      %v8502 = vunpack.c.l.b16 %v8470
      %v8503 = vpack.c.b16 %v8488, %v8487
      %v8504 = vpack.c.b16 %v8490, %v8489
      %v8505 = vpack.c.b16 %v8492, %v8491
      %v8506 = vpack.c.b16 %v8494, %v8493
      %v8507 = vpack.c.b16 %v8496, %v8495
      %v8508 = vpack.c.b16 %v8498, %v8497
      %v8509 = vpack.c.b16 %v8500, %v8499
      %v8510 = vpack.c.b16 %v8502, %v8501
      %8519 = vmatprep.subr.bf16.mxu0 0
      %8520 = vmatpush1.bf16.msra.mxu0 %v8503
      %8521 = vmatprep.subr.bf16.mxu0 0
      %8522 = vmatpush1.bf16.msra.mxu0 %v8504
      %8523 = vmatprep.subr.bf16.mxu0 0
      %8524 = vmatpush1.bf16.msra.mxu0 %v8505
      %8525 = vmatprep.subr.bf16.mxu0 0
      %8526 = vmatpush1.bf16.msra.mxu0 %v8506
      %8527 = vmatprep.subr.bf16.mxu0 0
      %8528 = vmatpush1.bf16.msra.mxu0 %v8507
      %8529 = vmatprep.subr.bf16.mxu0 0
      %8530 = vmatpush1.bf16.msra.mxu0 %v8508
      %8531 = vmatprep.subr.bf16.mxu0 0
      %8532 = vmatpush1.bf16.msra.mxu0 %v8509
      %8533 = vmatprep.subr.bf16.mxu0 0
      %8534 = vmatpush1.bf16.msra.mxu0 %v8510
      %8535 = vmatprep.subr.bf16.mxu0 0
      %8536 = vmatpush1.bf16.msra.mxu0 0
      %8537 = vmatprep.subr.bf16.mxu0 0
      %8538 = vmatpush1.bf16.msra.mxu0 0
      %8539 = vmatprep.subr.bf16.mxu0 0
      %8540 = vmatpush1.bf16.msra.mxu0 0
      %8541 = vmatprep.subr.bf16.mxu0 0
      %8542 = vmatpush1.bf16.msra.mxu0 0
      %8543 = vmatprep.subr.bf16.mxu0 0
      %8544 = vmatpush1.bf16.msra.mxu0 0
      %8545 = vmatprep.subr.bf16.mxu0 0
      %8546 = vmatpush1.bf16.msra.mxu0 0
      %8547 = vmatprep.subr.bf16.mxu0 0
      %8548 = vmatpush1.bf16.msra.mxu0 0
      %8549 = vmatprep.subr.bf16.mxu0 0
      %8550 = vmatpush1.bf16.msra.mxu0 0
      %8551 = vmatprep.mubr.bf16.mxu0 0
      %8552 = vmatmul.mubr.bf16.gmra.mrb[0].mxu0 %v8451
      %v8553 = vpop.f32.mrb[0].mxu0
      %v8554 = vadd.f32 0.0, %v8553
      %v8555 = vpop.f32.mrb[0].mxu0
      %v8556 = vpop.f32.mrb[0].mxu0
      %v8557 = vadd.f32 0.0, %v8556
      %v8558 = vpop.f32.mrb[0].mxu0
      %8559 = vmatprep.mubr.bf16.mxu0 0
      %8560 = vmatmul.mubr.bf16.gmra.mrb[0].mxu0 %v8452
      %v8561 = vpop.f32.mrb[0].mxu0
      %v8562 = vadd.f32 0.0, %v8561
      %v8563 = vpop.f32.mrb[0].mxu0
      %v8564 = vpop.f32.mrb[0].mxu0
      %v8565 = vadd.f32 0.0, %v8564
      %v8566 = vpop.f32.mrb[0].mxu0
      %8567 = vmatprep.mubr.bf16.mxu0 0
      %8568 = vmatmul.mubr.bf16.gmra.mrb[0].mxu0 %v8453
      %v8569 = vpop.f32.mrb[0].mxu0
      %v8570 = vadd.f32 0.0, %v8569
      %v8571 = vpop.f32.mrb[0].mxu0
      %v8572 = vpop.f32.mrb[0].mxu0
      %v8573 = vadd.f32 0.0, %v8572
      %v8574 = vpop.f32.mrb[0].mxu0
      %8575 = vmatprep.mubr.bf16.mxu0 0
      %8576 = vmatmul.mubr.bf16.gmra.mrb[0].mxu0 %v8454
      %v8577 = vpop.f32.mrb[0].mxu0
      %v8578 = vadd.f32 0.0, %v8577
      %v8579 = vpop.f32.mrb[0].mxu0
      %v8580 = vpop.f32.mrb[0].mxu0
      %v8581 = vadd.f32 0.0, %v8580
      %v8582 = vpop.f32.mrb[0].mxu0
      %8583 = vdwg.mxu0
      %v8584 = vpack.c.bf16 %v8557, %v8554
      %v8585 = vld [vmem:[%s20] sm:$0xf]
      %v8586 = vld [vmem:[%s20 + $0x4] sm:$0xf]
      %v8587 = vld [vmem:[%s20 + $0x8] sm:$0xf]
      %v8588 = vld [vmem:[%s20 + $0xc] sm:$0xf]
      %v8589 = vld [vmem:[%s20 + $0x10] sm:$0xf]
      %v8590 = vld [vmem:[%s20 + $0x14] sm:$0xf]
      %v8591 = vld [vmem:[%s20 + $0x18] sm:$0xf]
      %v8592 = vld [vmem:[%s20 + $0x1c] sm:$0xf]
      %v8593 = vpack.c.bf16 %v8565, %v8562
      %s8594 = scalar_lea.vmem %s20, 32
      %v8595 = vld [vmem:[%s8594] sm:$0xf]
      %v8596 = vld [vmem:[%s8594 + $0x4] sm:$0xf]
      %v8597 = vld [vmem:[%s8594 + $0x8] sm:$0xf]
      %v8598 = vld [vmem:[%s8594 + $0xc] sm:$0xf]
      %v8599 = vld [vmem:[%s8594 + $0x10] sm:$0xf]
      %v8600 = vld [vmem:[%s8594 + $0x14] sm:$0xf]
      %v8601 = vld [vmem:[%s8594 + $0x18] sm:$0xf]
      %v8602 = vld [vmem:[%s8594 + $0x1c] sm:$0xf]
      %v8611 = vunpack.c.l.b16 %v8595
      %v8612 = vunpack.c.l.b16 %v8596
      %v8613 = vunpack.c.l.b16 %v8597
      %v8614 = vunpack.c.l.b16 %v8598
      %v8615 = vunpack.c.l.b16 %v8599
      %v8616 = vunpack.c.l.b16 %v8600
      %v8617 = vunpack.c.l.b16 %v8601
      %v8618 = vunpack.c.l.b16 %v8602
      %v8619 = vpack.c.b16 %v8612, %v8611
      %v8620 = vpack.c.b16 %v8614, %v8613
      %v8621 = vpack.c.b16 %v8616, %v8615
      %v8622 = vpack.c.b16 %v8618, %v8617
      %vm8627 = vcmask 523264
      %v8629 = vsel %vm8627, %v8593, 0
      %8631 = vmatprep.subr.bf16.mxu0 0
      %8632 = vmatpush1.bf16.msra.mxu0 %v8619
      %8633 = vmatprep.subr.bf16.mxu0 0
      %8634 = vmatpush1.bf16.msra.mxu0 %v8620
      %8635 = vmatprep.subr.bf16.mxu0 0
      %8636 = vmatpush1.bf16.msra.mxu0 %v8621
      %8637 = vmatprep.subr.bf16.mxu0 0
      %8638 = vmatpush1.bf16.msra.mxu0 %v8622
      %8639 = vmatprep.subr.bf16.mxu0 0
      %8640 = vmatpush1.bf16.msra.mxu0 0
      %8641 = vmatprep.subr.bf16.mxu0 0
      %8642 = vmatpush1.bf16.msra.mxu0 0
      %8643 = vmatprep.subr.bf16.mxu0 0
      %8644 = vmatpush1.bf16.msra.mxu0 0
      %8645 = vmatprep.subr.bf16.mxu0 0
      %8646 = vmatpush1.bf16.msra.mxu0 0
      %8647 = vmatprep.subr.bf16.mxu0 0
      %8648 = vmatpush1.bf16.msra.mxu0 0
      %8649 = vmatprep.subr.bf16.mxu0 0
      %8650 = vmatpush1.bf16.msra.mxu0 0
      %8651 = vmatprep.subr.bf16.mxu0 0
      %8652 = vmatpush1.bf16.msra.mxu0 0
      %8653 = vmatprep.subr.bf16.mxu0 0
      %8654 = vmatpush1.bf16.msra.mxu0 0
      %8655 = vmatprep.subr.bf16.mxu0 0
      %8656 = vmatpush1.bf16.msra.mxu0 0
      %8657 = vmatprep.subr.bf16.mxu0 0
      %8658 = vmatpush1.bf16.msra.mxu0 0
      %8659 = vmatprep.subr.bf16.mxu0 0
      %8660 = vmatpush1.bf16.msra.mxu0 0
      %8661 = vmatprep.subr.bf16.mxu0 0
      %8662 = vmatpush1.bf16.msra.mxu0 0
      %8663 = vmatprep.mubr.bf16.mxu0 0
      %8664 = vmatmul.mubr.bf16.gmra.mrb[0].mxu0 %v8629
      %v8665 = vpop.f32.mrb[0].mxu0
      %v8666 = vadd.f32 0.0, %v8665
      %v8667 = vpop.f32.mrb[0].mxu0
      %v8668 = vpop.f32.mrb[0].mxu0
      %v8669 = vadd.f32 0.0, %v8668
      %v8670 = vpop.f32.mrb[0].mxu0
      %8671 = vdwg.mxu0
      %v8680 = vunpack.c.l.b16 %v8585
      %v8681 = vunpack.c.l.b16 %v8586
      %v8682 = vunpack.c.l.b16 %v8587
      %v8683 = vunpack.c.l.b16 %v8588
      %v8684 = vunpack.c.l.b16 %v8589
      %v8685 = vunpack.c.l.b16 %v8590
      %v8686 = vunpack.c.l.b16 %v8591
      %v8687 = vunpack.c.l.b16 %v8592
      %v8688 = vpack.c.b16 %v8681, %v8680
      %v8689 = vpack.c.b16 %v8683, %v8682
      %v8690 = vpack.c.b16 %v8685, %v8684
      %v8691 = vpack.c.b16 %v8687, %v8686
      %v8697 = vsel %vm8627, %v8584, 0
      %8699 = vmatprep.subr.bf16.mxu0 0
      %8700 = vmatpush1.bf16.msra.mxu0 %v8688
      %8701 = vmatprep.subr.bf16.mxu0 0
      %8702 = vmatpush1.bf16.msra.mxu0 %v8689
      %8703 = vmatprep.subr.bf16.mxu0 0
      %8704 = vmatpush1.bf16.msra.mxu0 %v8690
      %8705 = vmatprep.subr.bf16.mxu0 0
      %8706 = vmatpush1.bf16.msra.mxu0 %v8691
      %8707 = vmatprep.subr.bf16.mxu0 0
      %8708 = vmatpush1.bf16.msra.mxu0 0
      %8709 = vmatprep.subr.bf16.mxu0 0
      %8710 = vmatpush1.bf16.msra.mxu0 0
      %8711 = vmatprep.subr.bf16.mxu0 0
      %8712 = vmatpush1.bf16.msra.mxu0 0
      %8713 = vmatprep.subr.bf16.mxu0 0
      %8714 = vmatpush1.bf16.msra.mxu0 0
      %8715 = vmatprep.subr.bf16.mxu0 0
      %8716 = vmatpush1.bf16.msra.mxu0 0
      %8717 = vmatprep.subr.bf16.mxu0 0
      %8718 = vmatpush1.bf16.msra.mxu0 0
      %8719 = vmatprep.subr.bf16.mxu0 0
      %8720 = vmatpush1.bf16.msra.mxu0 0
      %8721 = vmatprep.subr.bf16.mxu0 0
      %8722 = vmatpush1.bf16.msra.mxu0 0
      %8723 = vmatprep.subr.bf16.mxu0 0
      %8724 = vmatpush1.bf16.msra.mxu0 0
      %8725 = vmatprep.subr.bf16.mxu0 0
      %8726 = vmatpush1.bf16.msra.mxu0 0
      %8727 = vmatprep.subr.bf16.mxu0 0
      %8728 = vmatpush1.bf16.msra.mxu0 0
      %8729 = vmatprep.subr.bf16.mxu0 0
      %8730 = vmatpush1.bf16.msra.mxu0 0
      %8731 = vmatprep.mubr.bf16.mxu0 0
      %8732 = vmatmul.mubr.bf16.gmra.mrb[0].mxu0 %v8697
      %v8733 = vpop.f32.mrb[0].mxu0
      %v8734 = vadd.f32 %v8666, %v8733
      %v8735 = vpop.f32.mrb[0].mxu0
      %v8736 = vpop.f32.mrb[0].mxu0
      %v8737 = vadd.f32 %v8669, %v8736
      %v8738 = vpop.f32.mrb[0].mxu0
      %8739 = vdwg.mxu0
      %v8740 = vpack.c.bf16 %v8573, %v8570
      %s8741 = scalar_lea.vmem %s20, 64
      %v8742 = vld [vmem:[%s8741] sm:$0xf]
      %v8743 = vld [vmem:[%s8741 + $0x4] sm:$0xf]
      %v8744 = vld [vmem:[%s8741 + $0x8] sm:$0xf]
      %v8745 = vld [vmem:[%s8741 + $0xc] sm:$0xf]
      %v8746 = vld [vmem:[%s8741 + $0x10] sm:$0xf]
      %v8747 = vld [vmem:[%s8741 + $0x14] sm:$0xf]
      %v8748 = vld [vmem:[%s8741 + $0x18] sm:$0xf]
      %v8749 = vld [vmem:[%s8741 + $0x1c] sm:$0xf]
      %v8758 = vunpack.c.l.b16 %v8742
      %v8759 = vunpack.c.l.b16 %v8743
      %v8760 = vunpack.c.l.b16 %v8744
      %v8761 = vunpack.c.l.b16 %v8745
      %v8762 = vunpack.c.l.b16 %v8746
      %v8763 = vunpack.c.l.b16 %v8747
      %v8764 = vunpack.c.l.b16 %v8748
      %v8765 = vunpack.c.l.b16 %v8749
      %v8766 = vpack.c.b16 %v8759, %v8758
      %v8767 = vpack.c.b16 %v8761, %v8760
      %v8768 = vpack.c.b16 %v8763, %v8762
      %v8769 = vpack.c.b16 %v8765, %v8764
      %v8775 = vsel %vm8627, %v8740, 0
      %8777 = vmatprep.subr.bf16.mxu0 0
      %8778 = vmatpush1.bf16.msra.mxu0 %v8766
      %8779 = vmatprep.subr.bf16.mxu0 0
      %8780 = vmatpush1.bf16.msra.mxu0 %v8767
      %8781 = vmatprep.subr.bf16.mxu0 0
      %8782 = vmatpush1.bf16.msra.mxu0 %v8768
      %8783 = vmatprep.subr.bf16.mxu0 0
      %8784 = vmatpush1.bf16.msra.mxu0 %v8769
      %8785 = vmatprep.subr.bf16.mxu0 0
      %8786 = vmatpush1.bf16.msra.mxu0 0
      %8787 = vmatprep.subr.bf16.mxu0 0
      %8788 = vmatpush1.bf16.msra.mxu0 0
      %8789 = vmatprep.subr.bf16.mxu0 0
      %8790 = vmatpush1.bf16.msra.mxu0 0
      %8791 = vmatprep.subr.bf16.mxu0 0
      %8792 = vmatpush1.bf16.msra.mxu0 0
      %8793 = vmatprep.subr.bf16.mxu0 0
      %8794 = vmatpush1.bf16.msra.mxu0 0
      %8795 = vmatprep.subr.bf16.mxu0 0
      %8796 = vmatpush1.bf16.msra.mxu0 0
      %8797 = vmatprep.subr.bf16.mxu0 0
      %8798 = vmatpush1.bf16.msra.mxu0 0
      %8799 = vmatprep.subr.bf16.mxu0 0
      %8800 = vmatpush1.bf16.msra.mxu0 0
      %8801 = vmatprep.subr.bf16.mxu0 0
      %8802 = vmatpush1.bf16.msra.mxu0 0
      %8803 = vmatprep.subr.bf16.mxu0 0
      %8804 = vmatpush1.bf16.msra.mxu0 0
      %8805 = vmatprep.subr.bf16.mxu0 0
      %8806 = vmatpush1.bf16.msra.mxu0 0
      %8807 = vmatprep.subr.bf16.mxu0 0
      %8808 = vmatpush1.bf16.msra.mxu0 0
      %8809 = vmatprep.mubr.bf16.mxu0 0
      %8810 = vmatmul.mubr.bf16.gmra.mrb[0].mxu0 %v8775
      %v8811 = vpop.f32.mrb[0].mxu0
      %v8812 = vadd.f32 0.0, %v8811
      %v8813 = vpop.f32.mrb[0].mxu0
      %v8814 = vpop.f32.mrb[0].mxu0
      %v8815 = vadd.f32 0.0, %v8814
      %v8816 = vpop.f32.mrb[0].mxu0
      %8817 = vdwg.mxu0
      %v8818 = vadd.f32 %v8734, %v8812
      %v8819 = vadd.f32 %v8737, %v8815
      %v8820 = vpack.c.bf16 %v8581, %v8578
      %s8821 = scalar_lea.vmem %s20, 96
      %v8822 = vld [vmem:[%s8821] sm:$0xf]
      %v8823 = vld [vmem:[%s8821 + $0x4] sm:$0xf]
      %v8824 = vld [vmem:[%s8821 + $0x8] sm:$0xf]
      %v8825 = vld [vmem:[%s8821 + $0xc] sm:$0xf]
      %v8826 = vld [vmem:[%s8821 + $0x10] sm:$0xf]
      %v8827 = vld [vmem:[%s8821 + $0x14] sm:$0xf]
      %v8828 = vld [vmem:[%s8821 + $0x18] sm:$0xf]
      %v8829 = vld [vmem:[%s8821 + $0x1c] sm:$0xf]
      %v8838 = vunpack.c.l.b16 %v8822
      %v8839 = vunpack.c.l.b16 %v8823
      %v8840 = vunpack.c.l.b16 %v8824
      %v8841 = vunpack.c.l.b16 %v8825
      %v8842 = vunpack.c.l.b16 %v8826
      %v8843 = vunpack.c.l.b16 %v8827
      %v8844 = vunpack.c.l.b16 %v8828
      %v8845 = vunpack.c.l.b16 %v8829
      %v8846 = vpack.c.b16 %v8839, %v8838
      %v8847 = vpack.c.b16 %v8841, %v8840
      %v8848 = vpack.c.b16 %v8843, %v8842
      %v8849 = vpack.c.b16 %v8845, %v8844
      %v8855 = vsel %vm8627, %v8820, 0
      %8857 = vmatprep.subr.bf16.mxu0 0
      %8858 = vmatpush1.bf16.msra.mxu0 %v8846
      %8859 = vmatprep.subr.bf16.mxu0 0
      %8860 = vmatpush1.bf16.msra.mxu0 %v8847
      %8861 = vmatprep.subr.bf16.mxu0 0
      %8862 = vmatpush1.bf16.msra.mxu0 %v8848
      %8863 = vmatprep.subr.bf16.mxu0 0
      %8864 = vmatpush1.bf16.msra.mxu0 %v8849
      %8865 = vmatprep.subr.bf16.mxu0 0
      %8866 = vmatpush1.bf16.msra.mxu0 0
      %8867 = vmatprep.subr.bf16.mxu0 0
      %8868 = vmatpush1.bf16.msra.mxu0 0
      %8869 = vmatprep.subr.bf16.mxu0 0
      %8870 = vmatpush1.bf16.msra.mxu0 0
      %8871 = vmatprep.subr.bf16.mxu0 0
      %8872 = vmatpush1.bf16.msra.mxu0 0
      %8873 = vmatprep.subr.bf16.mxu0 0
      %8874 = vmatpush1.bf16.msra.mxu0 0
      %8875 = vmatprep.subr.bf16.mxu0 0
      %8876 = vmatpush1.bf16.msra.mxu0 0
      %8877 = vmatprep.subr.bf16.mxu0 0
      %8878 = vmatpush1.bf16.msra.mxu0 0
      %8879 = vmatprep.subr.bf16.mxu0 0
      %8880 = vmatpush1.bf16.msra.mxu0 0
      %8881 = vmatprep.subr.bf16.mxu0 0
      %8882 = vmatpush1.bf16.msra.mxu0 0
      %8883 = vmatprep.subr.bf16.mxu0 0
      %8884 = vmatpush1.bf16.msra.mxu0 0
      %8885 = vmatprep.subr.bf16.mxu0 0
      %8886 = vmatpush1.bf16.msra.mxu0 0
      %8887 = vmatprep.subr.bf16.mxu0 0
      %8888 = vmatpush1.bf16.msra.mxu0 0
      %8889 = vmatprep.mubr.bf16.mxu0 0
      %8890 = vmatmul.mubr.bf16.gmra.mrb[0].mxu0 %v8855
      %v8891 = vpop.f32.mrb[0].mxu0
      %v8892 = vadd.f32 0.0, %v8891
      %v8893 = vpop.f32.mrb[0].mxu0
      %v8894 = vpop.f32.mrb[0].mxu0
      %v8895 = vadd.f32 0.0, %v8894
      %v8896 = vpop.f32.mrb[0].mxu0
      %8897 = vdwg.mxu0
      %v8898 = vadd.f32 %v8818, %v8892
      %v8899 = vadd.f32 %v8819, %v8895
      %v8900 = vld [vmem:[%s21] sm:$0x1]
      %v8902 = vlaneseq
      %v8903 = vshrl.u32 %v8902, 7
      %v8904 = vsub.s32 0, %v8903
      %v8905 = vrot.slane %v8900, %v8904
      %v8907 = vadd.f32 %v8898, %v8905
      %v8908 = vadd.f32 %v8899, %v8905
      %v8909 = vmax.f32 %v8907, 0.0
      %v8910 = vmax.f32 %v8908, 0.0
      %v8911 = vpack.c.bf16 %v8910, %v8909
      %v8912 = vld [vmem:[%s22] sm:$0xf]
      %v8913 = vld [vmem:[%s22 + $0x4] sm:$0xf]
      %v8914 = vld [vmem:[%s22 + $0x8] sm:$0xf]
      %v8915 = vld [vmem:[%s22 + $0xc] sm:$0xf]
      %v8916 = vld [vmem:[%s23] sm:$0x1]
      %v8918 = vlaneseq
      %v8919 = vshrl.u32 %v8918, 7
      %v8920 = vsub.s32 0, %v8919
      %v8921 = vrot.slane %v8916, %v8920
      %v8927 = vunpack.c.l.b16 %v8912
      %v8928 = vunpack.c.l.b16 %v8913
      %v8929 = vunpack.c.l.b16 %v8914
      %v8930 = vunpack.c.l.b16 %v8915
      %v8931 = vpack.c.b16 %v8928, %v8927
      %v8932 = vpack.c.b16 %v8930, %v8929
      %vm8935 = vcmask 261120
      %v8937 = vsel %vm8935, %v8911, 0
      %8939 = vmatprep.subr.bf16.mxu0 0
      %8940 = vmatpush1.bf16.msra.mxu0 %v8931
      %8941 = vmatprep.subr.bf16.mxu0 0
      %8942 = vmatpush1.bf16.msra.mxu0 %v8932
      %8943 = vmatprep.subr.bf16.mxu0 0
      %8944 = vmatpush1.bf16.msra.mxu0 0
      %8945 = vmatprep.subr.bf16.mxu0 0
      %8946 = vmatpush1.bf16.msra.mxu0 0
      %8947 = vmatprep.subr.bf16.mxu0 0
      %8948 = vmatpush1.bf16.msra.mxu0 0
      %8949 = vmatprep.subr.bf16.mxu0 0
      %8950 = vmatpush1.bf16.msra.mxu0 0
      %8951 = vmatprep.subr.bf16.mxu0 0
      %8952 = vmatpush1.bf16.msra.mxu0 0
      %8953 = vmatprep.subr.bf16.mxu0 0
      %8954 = vmatpush1.bf16.msra.mxu0 0
      %8955 = vmatprep.subr.bf16.mxu0 0
      %8956 = vmatpush1.bf16.msra.mxu0 0
      %8957 = vmatprep.subr.bf16.mxu0 0
      %8958 = vmatpush1.bf16.msra.mxu0 0
      %8959 = vmatprep.subr.bf16.mxu0 0
      %8960 = vmatpush1.bf16.msra.mxu0 0
      %8961 = vmatprep.subr.bf16.mxu0 0
      %8962 = vmatpush1.bf16.msra.mxu0 0
      %8963 = vmatprep.subr.bf16.mxu0 0
      %8964 = vmatpush1.bf16.msra.mxu0 0
      %8965 = vmatprep.subr.bf16.mxu0 0
      %8966 = vmatpush1.bf16.msra.mxu0 0
      %8967 = vmatprep.subr.bf16.mxu0 0
      %8968 = vmatpush1.bf16.msra.mxu0 0
      %8969 = vmatprep.subr.bf16.mxu0 0
      %8970 = vmatpush1.bf16.msra.mxu0 0
      %8971 = vmatprep.mubr.bf16.mxu0 0
      %8972 = vmatmul.mubr.bf16.gmra.mrb[0].mxu0 %v8937
      %v8973 = vpop.f32.mrb[0].mxu0
      %v8974 = vadd.f32 %v8921, %v8973
      %v8975 = vpop.f32.mrb[0].mxu0
      %v8976 = vpop.f32.mrb[0].mxu0
      %v8977 = vadd.f32 %v8921, %v8976
      %v8978 = vpop.f32.mrb[0].mxu0
      %8979 = vdwg.mxu0
      %vm8980 = vcmask 15360
      %8981 = vst.msk [vmem:[%s739] sm:$0xff] %vm8980, %v8974
      %8982 = vst.msk [vmem:[%s739 + $0x8] sm:$0xff] %vm8980, %v8977
      %s8983 = smul.u32 2, %s35
      %p8984 = scmp.lt.s32.totalorder %s8983, 3
      %s8985 = scalar_select %p8984, %s8983, 3
      %s8986 = smul.addr %s8985, 8
      %s8987 = scalar_lea.vmem %s24, %s8986
      // Predicated region
      $region117: #{mnist_encoder_forward.1} parent=115 // pred_check
        %p8988 = pneg %p562
      $region118: #{mnist_encoder_forward.1} parent=115 // pred_check_branch
        %8990 = sbr.rel (%p8988) target = $region120
      $region119: #{mnist_encoder_forward.1} parent=115 // pred_region
        %s8991 = smul.u32 2, %s35
      $region120: #{mnist_encoder_forward.1} parent=115 // pred_fallthru
        _
    $region116: #{mnist_encoder_forward.1} parent=5 // pred_fallthru
      _
    %p8992 = scmp.le.s32.totalorder 2, %s30
    // Predicated region
    $region121: #{mnist_encoder_forward.1} parent=5 // pred_check
      %p8993 = pneg %p8992
    $region122: #{mnist_encoder_forward.1} parent=5 // pred_check_branch
      %8995 = sbr.rel (%p8993) target = $region124
    $region123: #{mnist_encoder_forward.1} parent=5 // pred_region
      %s8996 = ssub.s32 %s30, 2
      // Predicated region
      $region125: #{mnist_encoder_forward.1} parent=123 // pred_check
        %p8997 = pneg %p568
      $region126: #{mnist_encoder_forward.1} parent=123 // pred_check_branch
        %8999 = sbr.rel (%p8997) target = $region128
      $region127: #{mnist_encoder_forward.1} parent=123 // pred_region
        %s9000 = smul.u32 2, %s36
        %p9001 = scmp.lt.s32.totalorder %s9000, 3
        %s9002 = scalar_select %p9001, %s9000, 3
        %s9003 = smul.addr %s9002, 8
        %s9004 = scalar_lea.vmem %s24, %s9003
      $region128: #{mnist_encoder_forward.1} parent=123 // pred_fallthru
        _
    $region124: #{mnist_encoder_forward.1} parent=5 // pred_fallthru
      _
  $region6: #{mnist_encoder_forward.1} parent=0 // loop_footer
    %s34 = sadd.s32 1, %s30
  $region7: #{mnist_encoder_forward.1} parent=0 // loop_footer_branch
    %29 = sbr.rel target = $region3
  $region8: #{mnist_encoder_forward.1} parent=0 // loop_exit
    _

</llo_original>
